<compile_context>
chip_gen: v5e
topology: v5e:2x2
jax: 0.10.0
libtpu: 0.0.40
codegen_flags: <defaults>
</compile_context>

<pallas_src>
import functools

import jax
import jax.numpy as jnp
from jax.experimental import pallas as pl
from jax.experimental.pallas import tpu as pltpu


def _to_f32(a):
    return a if a.dtype == jnp.float32 else a.astype(jnp.float32)


def _corr_kernel(in1_ref, in2_ref, mask_ref, out_ref, *, W, D, WIN, PAD):
    # in1_ref : (Bt, C, HW)          flattened spatial, lane-dense
    # in2_ref : (Bt, C, HW + 2*PAD)  flat zero halo, PAD = D*(W+1)
    # mask_ref: (WIN, HW)            f32 0/1 column-validity mask per dx shift
    # out_ref : (Bt, WIN*WIN, HW)    channel = dy*WIN + dx
    Bt, C, HW = in1_ref.shape

    # Fold the mean's 1/C into x1 once (C multiplies instead of WIN*WIN per pixel).
    x1 = _to_f32(in1_ref[...]) * jnp.float32(1.0 / C)      # (Bt, C, HW)
    # Cast the padded in2 slab once (hoisted out of the displacement loops);
    # no-op when the storage dtype is already f32.
    x2all = _to_f32(in2_ref[...])                          # (Bt, C, HW + 2*PAD)
    masks = mask_ref[...]                                  # (WIN, HW) already f32

    for b in range(Bt):
        x1b = x1[b]                                        # (C, HW)
        x2b = x2all[b]                                     # (C, HW + 2*PAD)
        for dx in range(WIN):
            # Lane-validity mask for this dx shift (zeros the x-boundary wrap).
            m2 = masks[dx:dx + 1, :]                       # (1, HW)
            for dy in range(WIN):
                # Static lane-offset window of the un-expanded slab; the flat
                # zero halo supplies the dy (row) boundary zeros.
                off = PAD + (dy - D) * W + (dx - D)
                x2 = x2b[:, off:off + HW]                  # (C, HW)
                res = jnp.sum(x1b * x2, axis=0, keepdims=True)   # (1, HW)
                ch = dy * WIN + dx
                out_ref[b, ch:ch + 1, :] = (res * m2).astype(out_ref.dtype)


@functools.partial(jax.jit, static_argnames=("max_displacement",))
def corr_pallas(in1, in2, max_displacement=4):
    """Pallas TPU correlation: in-kernel displacement windowing, lane-dense layout."""
    B, C, H, W = in1.shape
    D = max_displacement
    WIN = 2 * D + 1
    HW = H * W
    PAD = D * (W + 1)            # covers offsets dy'*W + dx' for dy',dx' in [-D, D]
    HWp = HW + 2 * PAD

    in1f = in1.reshape(B, C, HW)
    # The ONLY wrapper-side pass over in2: a single flat zero-halo pad.
    in2f = jnp.pad(in2.reshape(B, C, HW), ((0, 0), (0, 0), (PAD, PAD)))

    # (WIN, HW) 0/1 masks: column x is valid for shift dx' iff 0 <= x+dx' < W.
    # Pure function of static shapes -> constant-folded by XLA.
    col = jnp.broadcast_to(jnp.arange(W, dtype=jnp.int32), (H, W)).reshape(HW)
    dxs = jnp.arange(WIN, dtype=jnp.int32)[:, None] - D
    masks = ((col[None, :] + dxs >= 0) & (col[None, :] + dxs < W)).astype(jnp.float32)

    # Batch-tile to amortize per-grid-step overhead; keep blocks well under the
    # default scoped VMEM limits (double-buffered).  For bigger blocks, raise
    # pltpu.CompilerParams(vmem_limit_bytes=...) per generation instead.
    per_batch_bytes = (C * HW + C * HWp + WIN * WIN * HW) * 4   # f32 working set
    budget = 6 * 1024 * 1024
    Bt = 1
    for cand in range(B, 0, -1):
        if B % cand == 0 and cand * per_batch_bytes <= budget:
            Bt = cand
            break

    kernel = functools.partial(_corr_kernel, W=W, D=D, WIN=WIN, PAD=PAD)
    out = pl.pallas_call(
        kernel,
        out_shape=jax.ShapeDtypeStruct((B, WIN * WIN, HW), in1.dtype),
        grid=(B // Bt,),
        in_specs=[
            pl.BlockSpec((Bt, C, HW), lambda g: (g, 0, 0)),
            pl.BlockSpec((Bt, C, HWp), lambda g: (g, 0, 0)),
            pl.BlockSpec((WIN, HW), lambda g: (0, 0)),
        ],
        out_specs=pl.BlockSpec((Bt, WIN * WIN, HW), lambda g: (g, 0, 0)),
        compiler_params=pltpu.CompilerParams(dimension_semantics=("parallel",)),
    )(in1f, in2f, masks)

    # (B, WIN*WIN, HW) -> (B, WIN*WIN, H, W): free row-major reshape.
    return out.reshape(B, WIN * WIN, H, W)


def corr_reference(in1, in2, max_displacement=4):
    """Pure-JAX reference reproducing the PyTorch unfold-based forward."""
    B, C, H, W = in1.shape
    D = max_displacement
    WIN = 2 * D + 1
    in2p = jnp.pad(in2, ((0, 0), (0, 0), (D, D), (D, D)))
    outs = []
    for dy in range(WIN):
        for dx in range(WIN):
            x2 = in2p[:, :, dy:dy + H, dx:dx + W]
            outs.append(jnp.mean(in1 * x2, axis=1))        # mean over channels
    return jnp.stack(outs, axis=1)                         # (B, WIN*WIN, H, W)


if __name__ == "__main__":
    key = jax.random.PRNGKey(0)
    k1, k2 = jax.random.split(key)
    B, C, H, W = 2, 4, 16, 16
    in1 = jax.random.normal(k1, (B, C, H, W), dtype=jnp.float32)
    in2 = jax.random.normal(k2, (B, C, H, W), dtype=jnp.float32)

    out = corr_pallas(in1, in2, max_displacement=4)
    out = jax.block_until_ready(out)

    ref = corr_reference(in1, in2, max_displacement=4)
    assert out.shape == (B, 81, H, W), out.shape
    assert jnp.allclose(out, ref, atol=1e-5, rtol=1e-5), "mismatch vs reference"

    print("KERNEL_OK")
</pallas_src>

<mosaic_0001>
module attributes {stable_mosaic.version = 11 : i64} {
  func.func @_corr_kernel(%arg0: i32, %arg1: memref<2x4x256xf32, #tpu.memory_space<vmem>>, %arg2: memref<2x4x392xf32, #tpu.memory_space<vmem>>, %arg3: memref<9x256xf32, #tpu.memory_space<vmem>>, %arg4: memref<2x81x256xf32, #tpu.memory_space<vmem>>) attributes {dimension_semantics = [#tpu.dimension_semantics<parallel>], iteration_bounds = array<i64: 1>, scalar_prefetch = 0 : i64, scratch_operands = 0 : i64, tpu.core_type = #tpu.core_type<tc>, window_params = [{transform_indices = @transform_0, window_bounds = array<i64: 2, 4, 256>}, {transform_indices = @transform_1, window_bounds = array<i64: 2, 4, 392>}, {pipeline_mode = #tpu.pipeline_mode<synchronous>, transform_indices = @transform_2, window_bounds = array<i64: 9, 256>}, {transform_indices = @transform_3, window_bounds = array<i64: 2, 81, 256>}]} {
    %c0 = arith.constant 0 : index
    %c0_0 = arith.constant 0 : index
    %c0_1 = arith.constant 0 : index
    %0 = vector.load %arg1[%c0, %c0_0, %c0_1] : memref<2x4x256xf32, #tpu.memory_space<vmem>>, vector<2x4x256xf32>
    %cst = arith.constant 2.500000e-01 : f32
    %1 = vector.broadcast %cst : f32 to vector<2x4x256xf32>
    %2 = arith.mulf %0, %1 : vector<2x4x256xf32>
    %c0_2 = arith.constant 0 : index
    %c0_3 = arith.constant 0 : index
    %c0_4 = arith.constant 0 : index
    %3 = vector.load %arg2[%c0_2, %c0_3, %c0_4] : memref<2x4x392xf32, #tpu.memory_space<vmem>>, vector<2x4x392xf32>
    %c0_5 = arith.constant 0 : index
    %c0_6 = arith.constant 0 : index
    %4 = vector.load %arg3[%c0_5, %c0_6] : memref<9x256xf32, #tpu.memory_space<vmem>>, vector<9x256xf32>
    %5 = vector.extract_strided_slice %2 {offsets = [0, 0, 0], sizes = [1, 4, 256], strides = [1, 1, 1]} : vector<2x4x256xf32> to vector<1x4x256xf32>
    %6 = vector.shape_cast %5 : vector<1x4x256xf32> to vector<4x256xf32>
    %7 = vector.extract_strided_slice %3 {offsets = [0, 0, 0], sizes = [1, 4, 392], strides = [1, 1, 1]} : vector<2x4x392xf32> to vector<1x4x392xf32>
    %8 = vector.shape_cast %7 : vector<1x4x392xf32> to vector<4x392xf32>
    %9 = vector.extract_strided_slice %4 {offsets = [0, 0], sizes = [1, 256], strides = [1, 1]} : vector<9x256xf32> to vector<1x256xf32>
    %10 = vector.extract_strided_slice %8 {offsets = [0, 0], sizes = [4, 256], strides = [1, 1]} : vector<4x392xf32> to vector<4x256xf32>
    %11 = arith.mulf %6, %10 : vector<4x256xf32>
    %cst_7 = arith.constant dense<0.000000e+00> : vector<256xf32>
    %12 = vector.multi_reduction <add>, %11, %cst_7 [0] : vector<4x256xf32> to vector<256xf32>
    %13 = vector.shape_cast %12 : vector<256xf32> to vector<1x256xf32>
    %14 = arith.mulf %13, %9 : vector<1x256xf32>
    %c0_8 = arith.constant 0 : index
    %c0_9 = arith.constant 0 : index
    %c0_10 = arith.constant 0 : index
    %15 = vector.load %arg4[%c0_8, %c0_9, %c0_10] : memref<2x81x256xf32, #tpu.memory_space<vmem>>, vector<1x1x256xf32>
    %16 = vector.shape_cast %15 : vector<1x1x256xf32> to vector<1x256xf32>
    %17 = vector.shape_cast %14 : vector<1x256xf32> to vector<1x1x256xf32>
    tpu.vector_store %arg4[%c0_8, %c0_9, %c0_10], %17 {strides = array<i32>} : memref<2x81x256xf32, #tpu.memory_space<vmem>>, vector<1x1x256xf32>,
    %18 = vector.extract_strided_slice %8 {offsets = [0, 16], sizes = [4, 256], strides = [1, 1]} : vector<4x392xf32> to vector<4x256xf32>
    %19 = arith.mulf %6, %18 : vector<4x256xf32>
    %cst_11 = arith.constant dense<0.000000e+00> : vector<256xf32>
    %20 = vector.multi_reduction <add>, %19, %cst_11 [0] : vector<4x256xf32> to vector<256xf32>
    %21 = vector.shape_cast %20 : vector<256xf32> to vector<1x256xf32>
    %22 = arith.mulf %21, %9 : vector<1x256xf32>
    %c0_12 = arith.constant 0 : index
    %c9 = arith.constant 9 : index
    %c0_13 = arith.constant 0 : index
    %23 = vector.load %arg4[%c0_12, %c9, %c0_13] : memref<2x81x256xf32, #tpu.memory_space<vmem>>, vector<1x1x256xf32>
    %24 = vector.shape_cast %23 : vector<1x1x256xf32> to vector<1x256xf32>
    %25 = vector.shape_cast %22 : vector<1x256xf32> to vector<1x1x256xf32>
    tpu.vector_store %arg4[%c0_12, %c9, %c0_13], %25 {strides = array<i32>} : memref<2x81x256xf32, #tpu.memory_space<vmem>>, vector<1x1x256xf32>,
    %26 = vector.extract_strided_slice %8 {offsets = [0, 32], sizes = [4, 256], strides = [1, 1]} : vector<4x392xf32> to vector<4x256xf32>
    %27 = arith.mulf %6, %26 : vector<4x256xf32>
    %cst_14 = arith.constant dense<0.000000e+00> : vector<256xf32>
    %28 = vector.multi_reduction <add>, %27, %cst_14 [0] : vector<4x256xf32> to vector<256xf32>
    %29 = vector.shape_cast %28 : vector<256xf32> to vector<1x256xf32>
    %30 = arith.mulf %29, %9 : vector<1x256xf32>
    %c0_15 = arith.constant 0 : index
    %c18 = arith.constant 18 : index
    %c0_16 = arith.constant 0 : index
    %31 = vector.load %arg4[%c0_15, %c18, %c0_16] : memref<2x81x256xf32, #tpu.memory_space<vmem>>, vector<1x1x256xf32>
    %32 = vector.shape_cast %31 : vector<1x1x256xf32> to vector<1x256xf32>
    %33 = vector.shape_cast %30 : vector<1x256xf32> to vector<1x1x256xf32>
    tpu.vector_store %arg4[%c0_15, %c18, %c0_16], %33 {strides = array<i32>} : memref<2x81x256xf32, #tpu.memory_space<vmem>>, vector<1x1x256xf32>,
    %34 = vector.extract_strided_slice %8 {offsets = [0, 48], sizes = [4, 256], strides = [1, 1]} : vector<4x392xf32> to vector<4x256xf32>
    %35 = arith.mulf %6, %34 : vector<4x256xf32>
    %cst_17 = arith.constant dense<0.000000e+00> : vector<256xf32>
    %36 = vector.multi_reduction <add>, %35, %cst_17 [0] : vector<4x256xf32> to vector<256xf32>
    %37 = vector.shape_cast %36 : vector<256xf32> to vector<1x256xf32>
    %38 = arith.mulf %37, %9 : vector<1x256xf32>
    %c0_18 = arith.constant 0 : index
    %c27 = arith.constant 27 : index
    %c0_19 = arith.constant 0 : index
    %39 = vector.load %arg4[%c0_18, %c27, %c0_19] : memref<2x81x256xf32, #tpu.memory_space<vmem>>, vector<1x1x256xf32>
    %40 = vector.shape_cast %39 : vector<1x1x256xf32> to vector<1x256xf32>
    %41 = vector.shape_cast %38 : vector<1x256xf32> to vector<1x1x256xf32>
    tpu.vector_store %arg4[%c0_18, %c27, %c0_19], %41 {strides = array<i32>} : memref<2x81x256xf32, #tpu.memory_space<vmem>>, vector<1x1x256xf32>,
    %42 = vector.extract_strided_slice %8 {offsets = [0, 64], sizes = [4, 256], strides = [1, 1]} : vector<4x392xf32> to vector<4x256xf32>
    %43 = arith.mulf %6, %42 : vector<4x256xf32>
    %cst_20 = arith.constant dense<0.000000e+00> : vector<256xf32>
    %44 = vector.multi_reduction <add>, %43, %cst_20 [0] : vector<4x256xf32> to vector<256xf32>
    %45 = vector.shape_cast %44 : vector<256xf32> to vector<1x256xf32>
    %46 = arith.mulf %45, %9 : vector<1x256xf32>
    %c0_21 = arith.constant 0 : index
    %c36 = arith.constant 36 : index
    %c0_22 = arith.constant 0 : index
    %47 = vector.load %arg4[%c0_21, %c36, %c0_22] : memref<2x81x256xf32, #tpu.memory_space<vmem>>, vector<1x1x256xf32>
    %48 = vector.shape_cast %47 : vector<1x1x256xf32> to vector<1x256xf32>
    %49 = vector.shape_cast %46 : vector<1x256xf32> to vector<1x1x256xf32>
    tpu.vector_store %arg4[%c0_21, %c36, %c0_22], %49 {strides = array<i32>} : memref<2x81x256xf32, #tpu.memory_space<vmem>>, vector<1x1x256xf32>,
    %50 = vector.extract_strided_slice %8 {offsets = [0, 80], sizes = [4, 256], strides = [1, 1]} : vector<4x392xf32> to vector<4x256xf32>
    %51 = arith.mulf %6, %50 : vector<4x256xf32>
    %cst_23 = arith.constant dense<0.000000e+00> : vector<256xf32>
    %52 = vector.multi_reduction <add>, %51, %cst_23 [0] : vector<4x256xf32> to vector<256xf32>
    %53 = vector.shape_cast %52 : vector<256xf32> to vector<1x256xf32>
    %54 = arith.mulf %53, %9 : vector<1x256xf32>
    %c0_24 = arith.constant 0 : index
    %c45 = arith.constant 45 : index
    %c0_25 = arith.constant 0 : index
    %55 = vector.load %arg4[%c0_24, %c45, %c0_25] : memref<2x81x256xf32, #tpu.memory_space<vmem>>, vector<1x1x256xf32>
    %56 = vector.shape_cast %55 : vector<1x1x256xf32> to vector<1x256xf32>
    %57 = vector.shape_cast %54 : vector<1x256xf32> to vector<1x1x256xf32>
    tpu.vector_store %arg4[%c0_24, %c45, %c0_25], %57 {strides = array<i32>} : memref<2x81x256xf32, #tpu.memory_space<vmem>>, vector<1x1x256xf32>,
    %58 = vector.extract_strided_slice %8 {offsets = [0, 96], sizes = [4, 256], strides = [1, 1]} : vector<4x392xf32> to vector<4x256xf32>
    %59 = arith.mulf %6, %58 : vector<4x256xf32>
    %cst_26 = arith.constant dense<0.000000e+00> : vector<256xf32>
    %60 = vector.multi_reduction <add>, %59, %cst_26 [0] : vector<4x256xf32> to vector<256xf32>
    %61 = vector.shape_cast %60 : vector<256xf32> to vector<1x256xf32>
    %62 = arith.mulf %61, %9 : vector<1x256xf32>
    %c0_27 = arith.constant 0 : index
    %c54 = arith.constant 54 : index
    %c0_28 = arith.constant 0 : index
    %63 = vector.load %arg4[%c0_27, %c54, %c0_28] : memref<2x81x256xf32, #tpu.memory_space<vmem>>, vector<1x1x256xf32>
    %64 = vector.shape_cast %63 : vector<1x1x256xf32> to vector<1x256xf32>
    %65 = vector.shape_cast %62 : vector<1x256xf32> to vector<1x1x256xf32>
    tpu.vector_store %arg4[%c0_27, %c54, %c0_28], %65 {strides = array<i32>} : memref<2x81x256xf32, #tpu.memory_space<vmem>>, vector<1x1x256xf32>,
    %66 = vector.extract_strided_slice %8 {offsets = [0, 112], sizes = [4, 256], strides = [1, 1]} : vector<4x392xf32> to vector<4x256xf32>
    %67 = arith.mulf %6, %66 : vector<4x256xf32>
    %cst_29 = arith.constant dense<0.000000e+00> : vector<256xf32>
    %68 = vector.multi_reduction <add>, %67, %cst_29 [0] : vector<4x256xf32> to vector<256xf32>
    %69 = vector.shape_cast %68 : vector<256xf32> to vector<1x256xf32>
    %70 = arith.mulf %69, %9 : vector<1x256xf32>
    %c0_30 = arith.constant 0 : index
    %c63 = arith.constant 63 : index
    %c0_31 = arith.constant 0 : index
    %71 = vector.load %arg4[%c0_30, %c63, %c0_31] : memref<2x81x256xf32, #tpu.memory_space<vmem>>, vector<1x1x256xf32>
    %72 = vector.shape_cast %71 : vector<1x1x256xf32> to vector<1x256xf32>
    %73 = vector.shape_cast %70 : vector<1x256xf32> to vector<1x1x256xf32>
    tpu.vector_store %arg4[%c0_30, %c63, %c0_31], %73 {strides = array<i32>} : memref<2x81x256xf32, #tpu.memory_space<vmem>>, vector<1x1x256xf32>,
    %74 = vector.extract_strided_slice %8 {offsets = [0, 128], sizes = [4, 256], strides = [1, 1]} : vector<4x392xf32> to vector<4x256xf32>
    %75 = arith.mulf %6, %74 : vector<4x256xf32>
    %cst_32 = arith.constant dense<0.000000e+00> : vector<256xf32>
    %76 = vector.multi_reduction <add>, %75, %cst_32 [0] : vector<4x256xf32> to vector<256xf32>
    %77 = vector.shape_cast %76 : vector<256xf32> to vector<1x256xf32>
    %78 = arith.mulf %77, %9 : vector<1x256xf32>
    %c0_33 = arith.constant 0 : index
    %c72 = arith.constant 72 : index
    %c0_34 = arith.constant 0 : index
    %79 = vector.load %arg4[%c0_33, %c72, %c0_34] : memref<2x81x256xf32, #tpu.memory_space<vmem>>, vector<1x1x256xf32>
    %80 = vector.shape_cast %79 : vector<1x1x256xf32> to vector<1x256xf32>
    %81 = vector.shape_cast %78 : vector<1x256xf32> to vector<1x1x256xf32>
    tpu.vector_store %arg4[%c0_33, %c72, %c0_34], %81 {strides = array<i32>} : memref<2x81x256xf32, #tpu.memory_space<vmem>>, vector<1x1x256xf32>,
    %82 = vector.extract_strided_slice %4 {offsets = [1, 0], sizes = [1, 256], strides = [1, 1]} : vector<9x256xf32> to vector<1x256xf32>
    %83 = vector.extract_strided_slice %8 {offsets = [0, 1], sizes = [4, 256], strides = [1, 1]} : vector<4x392xf32> to vector<4x256xf32>
    %84 = arith.mulf %6, %83 : vector<4x256xf32>
    %cst_35 = arith.constant dense<0.000000e+00> : vector<256xf32>
    %85 = vector.multi_reduction <add>, %84, %cst_35 [0] : vector<4x256xf32> to vector<256xf32>
    %86 = vector.shape_cast %85 : vector<256xf32> to vector<1x256xf32>
    %87 = arith.mulf %86, %82 : vector<1x256xf32>
    %c0_36 = arith.constant 0 : index
    %c1 = arith.constant 1 : index
    %c0_37 = arith.constant 0 : index
    %88 = vector.load %arg4[%c0_36, %c1, %c0_37] : memref<2x81x256xf32, #tpu.memory_space<vmem>>, vector<1x1x256xf32>
    %89 = vector.shape_cast %88 : vector<1x1x256xf32> to vector<1x256xf32>
    %90 = vector.shape_cast %87 : vector<1x256xf32> to vector<1x1x256xf32>
    tpu.vector_store %arg4[%c0_36, %c1, %c0_37], %90 {strides = array<i32>} : memref<2x81x256xf32, #tpu.memory_space<vmem>>, vector<1x1x256xf32>,
    %91 = vector.extract_strided_slice %8 {offsets = [0, 17], sizes = [4, 256], strides = [1, 1]} : vector<4x392xf32> to vector<4x256xf32>
    %92 = arith.mulf %6, %91 : vector<4x256xf32>
    %cst_38 = arith.constant dense<0.000000e+00> : vector<256xf32>
    %93 = vector.multi_reduction <add>, %92, %cst_38 [0] : vector<4x256xf32> to vector<256xf32>
    %94 = vector.shape_cast %93 : vector<256xf32> to vector<1x256xf32>
    %95 = arith.mulf %94, %82 : vector<1x256xf32>
    %c0_39 = arith.constant 0 : index
    %c10 = arith.constant 10 : index
    %c0_40 = arith.constant 0 : index
    %96 = vector.load %arg4[%c0_39, %c10, %c0_40] : memref<2x81x256xf32, #tpu.memory_space<vmem>>, vector<1x1x256xf32>
    %97 = vector.shape_cast %96 : vector<1x1x256xf32> to vector<1x256xf32>
    %98 = vector.shape_cast %95 : vector<1x256xf32> to vector<1x1x256xf32>
    tpu.vector_store %arg4[%c0_39, %c10, %c0_40], %98 {strides = array<i32>} : memref<2x81x256xf32, #tpu.memory_space<vmem>>, vector<1x1x256xf32>,
    %99 = vector.extract_strided_slice %8 {offsets = [0, 33], sizes = [4, 256], strides = [1, 1]} : vector<4x392xf32> to vector<4x256xf32>
    %100 = arith.mulf %6, %99 : vector<4x256xf32>
    %cst_41 = arith.constant dense<0.000000e+00> : vector<256xf32>
    %101 = vector.multi_reduction <add>, %100, %cst_41 [0] : vector<4x256xf32> to vector<256xf32>
    %102 = vector.shape_cast %101 : vector<256xf32> to vector<1x256xf32>
    %103 = arith.mulf %102, %82 : vector<1x256xf32>
    %c0_42 = arith.constant 0 : index
    %c19 = arith.constant 19 : index
    %c0_43 = arith.constant 0 : index
    %104 = vector.load %arg4[%c0_42, %c19, %c0_43] : memref<2x81x256xf32, #tpu.memory_space<vmem>>, vector<1x1x256xf32>
    %105 = vector.shape_cast %104 : vector<1x1x256xf32> to vector<1x256xf32>
    %106 = vector.shape_cast %103 : vector<1x256xf32> to vector<1x1x256xf32>
    tpu.vector_store %arg4[%c0_42, %c19, %c0_43], %106 {strides = array<i32>} : memref<2x81x256xf32, #tpu.memory_space<vmem>>, vector<1x1x256xf32>,
    %107 = vector.extract_strided_slice %8 {offsets = [0, 49], sizes = [4, 256], strides = [1, 1]} : vector<4x392xf32> to vector<4x256xf32>
    %108 = arith.mulf %6, %107 : vector<4x256xf32>
    %cst_44 = arith.constant dense<0.000000e+00> : vector<256xf32>
    %109 = vector.multi_reduction <add>, %108, %cst_44 [0] : vector<4x256xf32> to vector<256xf32>
    %110 = vector.shape_cast %109 : vector<256xf32> to vector<1x256xf32>
    %111 = arith.mulf %110, %82 : vector<1x256xf32>
    %c0_45 = arith.constant 0 : index
    %c28 = arith.constant 28 : index
    %c0_46 = arith.constant 0 : index
    %112 = vector.load %arg4[%c0_45, %c28, %c0_46] : memref<2x81x256xf32, #tpu.memory_space<vmem>>, vector<1x1x256xf32>
    %113 = vector.shape_cast %112 : vector<1x1x256xf32> to vector<1x256xf32>
    %114 = vector.shape_cast %111 : vector<1x256xf32> to vector<1x1x256xf32>
    tpu.vector_store %arg4[%c0_45, %c28, %c0_46], %114 {strides = array<i32>} : memref<2x81x256xf32, #tpu.memory_space<vmem>>, vector<1x1x256xf32>,
    %115 = vector.extract_strided_slice %8 {offsets = [0, 65], sizes = [4, 256], strides = [1, 1]} : vector<4x392xf32> to vector<4x256xf32>
    %116 = arith.mulf %6, %115 : vector<4x256xf32>
    %cst_47 = arith.constant dense<0.000000e+00> : vector<256xf32>
    %117 = vector.multi_reduction <add>, %116, %cst_47 [0] : vector<4x256xf32> to vector<256xf32>
    %118 = vector.shape_cast %117 : vector<256xf32> to vector<1x256xf32>
    %119 = arith.mulf %118, %82 : vector<1x256xf32>
    %c0_48 = arith.constant 0 : index
    %c37 = arith.constant 37 : index
    %c0_49 = arith.constant 0 : index
    %120 = vector.load %arg4[%c0_48, %c37, %c0_49] : memref<2x81x256xf32, #tpu.memory_space<vmem>>, vector<1x1x256xf32>
    %121 = vector.shape_cast %120 : vector<1x1x256xf32> to vector<1x256xf32>
    %122 = vector.shape_cast %119 : vector<1x256xf32> to vector<1x1x256xf32>
    tpu.vector_store %arg4[%c0_48, %c37, %c0_49], %122 {strides = array<i32>} : memref<2x81x256xf32, #tpu.memory_space<vmem>>, vector<1x1x256xf32>,
    %123 = vector.extract_strided_slice %8 {offsets = [0, 81], sizes = [4, 256], strides = [1, 1]} : vector<4x392xf32> to vector<4x256xf32>
    %124 = arith.mulf %6, %123 : vector<4x256xf32>
    %cst_50 = arith.constant dense<0.000000e+00> : vector<256xf32>
    %125 = vector.multi_reduction <add>, %124, %cst_50 [0] : vector<4x256xf32> to vector<256xf32>
    %126 = vector.shape_cast %125 : vector<256xf32> to vector<1x256xf32>
    %127 = arith.mulf %126, %82 : vector<1x256xf32>
    %c0_51 = arith.constant 0 : index
    %c46 = arith.constant 46 : index
    %c0_52 = arith.constant 0 : index
    %128 = vector.load %arg4[%c0_51, %c46, %c0_52] : memref<2x81x256xf32, #tpu.memory_space<vmem>>, vector<1x1x256xf32>
    %129 = vector.shape_cast %128 : vector<1x1x256xf32> to vector<1x256xf32>
    %130 = vector.shape_cast %127 : vector<1x256xf32> to vector<1x1x256xf32>
    tpu.vector_store %arg4[%c0_51, %c46, %c0_52], %130 {strides = array<i32>} : memref<2x81x256xf32, #tpu.memory_space<vmem>>, vector<1x1x256xf32>,
    %131 = vector.extract_strided_slice %8 {offsets = [0, 97], sizes = [4, 256], strides = [1, 1]} : vector<4x392xf32> to vector<4x256xf32>
    %132 = arith.mulf %6, %131 : vector<4x256xf32>
    %cst_53 = arith.constant dense<0.000000e+00> : vector<256xf32>
    %133 = vector.multi_reduction <add>, %132, %cst_53 [0] : vector<4x256xf32> to vector<256xf32>
    %134 = vector.shape_cast %133 : vector<256xf32> to vector<1x256xf32>
    %135 = arith.mulf %134, %82 : vector<1x256xf32>
    %c0_54 = arith.constant 0 : index
    %c55 = arith.constant 55 : index
    %c0_55 = arith.constant 0 : index
    %136 = vector.load %arg4[%c0_54, %c55, %c0_55] : memref<2x81x256xf32, #tpu.memory_space<vmem>>, vector<1x1x256xf32>
    %137 = vector.shape_cast %136 : vector<1x1x256xf32> to vector<1x256xf32>
    %138 = vector.shape_cast %135 : vector<1x256xf32> to vector<1x1x256xf32>
    tpu.vector_store %arg4[%c0_54, %c55, %c0_55], %138 {strides = array<i32>} : memref<2x81x256xf32, #tpu.memory_space<vmem>>, vector<1x1x256xf32>,
    %139 = vector.extract_strided_slice %8 {offsets = [0, 113], sizes = [4, 256], strides = [1, 1]} : vector<4x392xf32> to vector<4x256xf32>
    %140 = arith.mulf %6, %139 : vector<4x256xf32>
    %cst_56 = arith.constant dense<0.000000e+00> : vector<256xf32>
    %141 = vector.multi_reduction <add>, %140, %cst_56 [0] : vector<4x256xf32> to vector<256xf32>
    %142 = vector.shape_cast %141 : vector<256xf32> to vector<1x256xf32>
    %143 = arith.mulf %142, %82 : vector<1x256xf32>
    %c0_57 = arith.constant 0 : index
    %c64 = arith.constant 64 : index
    %c0_58 = arith.constant 0 : index
    %144 = vector.load %arg4[%c0_57, %c64, %c0_58] : memref<2x81x256xf32, #tpu.memory_space<vmem>>, vector<1x1x256xf32>
    %145 = vector.shape_cast %144 : vector<1x1x256xf32> to vector<1x256xf32>
    %146 = vector.shape_cast %143 : vector<1x256xf32> to vector<1x1x256xf32>
    tpu.vector_store %arg4[%c0_57, %c64, %c0_58], %146 {strides = array<i32>} : memref<2x81x256xf32, #tpu.memory_space<vmem>>, vector<1x1x256xf32>,
    %147 = vector.extract_strided_slice %8 {offsets = [0, 129], sizes = [4, 256], strides = [1, 1]} : vector<4x392xf32> to vector<4x256xf32>
    %148 = arith.mulf %6, %147 : vector<4x256xf32>
    %cst_59 = arith.constant dense<0.000000e+00> : vector<256xf32>
    %149 = vector.multi_reduction <add>, %148, %cst_59 [0] : vector<4x256xf32> to vector<256xf32>
    %150 = vector.shape_cast %149 : vector<256xf32> to vector<1x256xf32>
    %151 = arith.mulf %150, %82 : vector<1x256xf32>
    %c0_60 = arith.constant 0 : index
    %c73 = arith.constant 73 : index
    %c0_61 = arith.constant 0 : index
    %152 = vector.load %arg4[%c0_60, %c73, %c0_61] : memref<2x81x256xf32, #tpu.memory_space<vmem>>, vector<1x1x256xf32>
    %153 = vector.shape_cast %152 : vector<1x1x256xf32> to vector<1x256xf32>
    %154 = vector.shape_cast %151 : vector<1x256xf32> to vector<1x1x256xf32>
    tpu.vector_store %arg4[%c0_60, %c73, %c0_61], %154 {strides = array<i32>} : memref<2x81x256xf32, #tpu.memory_space<vmem>>, vector<1x1x256xf32>,
    %155 = vector.extract_strided_slice %4 {offsets = [2, 0], sizes = [1, 256], strides = [1, 1]} : vector<9x256xf32> to vector<1x256xf32>
    %156 = vector.extract_strided_slice %8 {offsets = [0, 2], sizes = [4, 256], strides = [1, 1]} : vector<4x392xf32> to vector<4x256xf32>
    %157 = arith.mulf %6, %156 : vector<4x256xf32>
    %cst_62 = arith.constant dense<0.000000e+00> : vector<256xf32>
    %158 = vector.multi_reduction <add>, %157, %cst_62 [0] : vector<4x256xf32> to vector<256xf32>
    %159 = vector.shape_cast %158 : vector<256xf32> to vector<1x256xf32>
    %160 = arith.mulf %159, %155 : vector<1x256xf32>
    %c0_63 = arith.constant 0 : index
    %c2 = arith.constant 2 : index
    %c0_64 = arith.constant 0 : index
    %161 = vector.load %arg4[%c0_63, %c2, %c0_64] : memref<2x81x256xf32, #tpu.memory_space<vmem>>, vector<1x1x256xf32>
    %162 = vector.shape_cast %161 : vector<1x1x256xf32> to vector<1x256xf32>
    %163 = vector.shape_cast %160 : vector<1x256xf32> to vector<1x1x256xf32>
    tpu.vector_store %arg4[%c0_63, %c2, %c0_64], %163 {strides = array<i32>} : memref<2x81x256xf32, #tpu.memory_space<vmem>>, vector<1x1x256xf32>,
    %164 = vector.extract_strided_slice %8 {offsets = [0, 18], sizes = [4, 256], strides = [1, 1]} : vector<4x392xf32> to vector<4x256xf32>
    %165 = arith.mulf %6, %164 : vector<4x256xf32>
    %cst_65 = arith.constant dense<0.000000e+00> : vector<256xf32>
    %166 = vector.multi_reduction <add>, %165, %cst_65 [0] : vector<4x256xf32> to vector<256xf32>
    %167 = vector.shape_cast %166 : vector<256xf32> to vector<1x256xf32>
    %168 = arith.mulf %167, %155 : vector<1x256xf32>
    %c0_66 = arith.constant 0 : index
    %c11 = arith.constant 11 : index
    %c0_67 = arith.constant 0 : index
    %169 = vector.load %arg4[%c0_66, %c11, %c0_67] : memref<2x81x256xf32, #tpu.memory_space<vmem>>, vector<1x1x256xf32>
    %170 = vector.shape_cast %169 : vector<1x1x256xf32> to vector<1x256xf32>
    %171 = vector.shape_cast %168 : vector<1x256xf32> to vector<1x1x256xf32>
    tpu.vector_store %arg4[%c0_66, %c11, %c0_67], %171 {strides = array<i32>} : memref<2x81x256xf32, #tpu.memory_space<vmem>>, vector<1x1x256xf32>,
    %172 = vector.extract_strided_slice %8 {offsets = [0, 34], sizes = [4, 256], strides = [1, 1]} : vector<4x392xf32> to vector<4x256xf32>
    %173 = arith.mulf %6, %172 : vector<4x256xf32>
    %cst_68 = arith.constant dense<0.000000e+00> : vector<256xf32>
    %174 = vector.multi_reduction <add>, %173, %cst_68 [0] : vector<4x256xf32> to vector<256xf32>
    %175 = vector.shape_cast %174 : vector<256xf32> to vector<1x256xf32>
    %176 = arith.mulf %175, %155 : vector<1x256xf32>
    %c0_69 = arith.constant 0 : index
    %c20 = arith.constant 20 : index
    %c0_70 = arith.constant 0 : index
    %177 = vector.load %arg4[%c0_69, %c20, %c0_70] : memref<2x81x256xf32, #tpu.memory_space<vmem>>, vector<1x1x256xf32>
    %178 = vector.shape_cast %177 : vector<1x1x256xf32> to vector<1x256xf32>
    %179 = vector.shape_cast %176 : vector<1x256xf32> to vector<1x1x256xf32>
    tpu.vector_store %arg4[%c0_69, %c20, %c0_70], %179 {strides = array<i32>} : memref<2x81x256xf32, #tpu.memory_space<vmem>>, vector<1x1x256xf32>,
    %180 = vector.extract_strided_slice %8 {offsets = [0, 50], sizes = [4, 256], strides = [1, 1]} : vector<4x392xf32> to vector<4x256xf32>
    %181 = arith.mulf %6, %180 : vector<4x256xf32>
    %cst_71 = arith.constant dense<0.000000e+00> : vector<256xf32>
    %182 = vector.multi_reduction <add>, %181, %cst_71 [0] : vector<4x256xf32> to vector<256xf32>
    %183 = vector.shape_cast %182 : vector<256xf32> to vector<1x256xf32>
    %184 = arith.mulf %183, %155 : vector<1x256xf32>
    %c0_72 = arith.constant 0 : index
    %c29 = arith.constant 29 : index
    %c0_73 = arith.constant 0 : index
    %185 = vector.load %arg4[%c0_72, %c29, %c0_73] : memref<2x81x256xf32, #tpu.memory_space<vmem>>, vector<1x1x256xf32>
    %186 = vector.shape_cast %185 : vector<1x1x256xf32> to vector<1x256xf32>
    %187 = vector.shape_cast %184 : vector<1x256xf32> to vector<1x1x256xf32>
    tpu.vector_store %arg4[%c0_72, %c29, %c0_73], %187 {strides = array<i32>} : memref<2x81x256xf32, #tpu.memory_space<vmem>>, vector<1x1x256xf32>,
    %188 = vector.extract_strided_slice %8 {offsets = [0, 66], sizes = [4, 256], strides = [1, 1]} : vector<4x392xf32> to vector<4x256xf32>
    %189 = arith.mulf %6, %188 : vector<4x256xf32>
    %cst_74 = arith.constant dense<0.000000e+00> : vector<256xf32>
    %190 = vector.multi_reduction <add>, %189, %cst_74 [0] : vector<4x256xf32> to vector<256xf32>
    %191 = vector.shape_cast %190 : vector<256xf32> to vector<1x256xf32>
    %192 = arith.mulf %191, %155 : vector<1x256xf32>
    %c0_75 = arith.constant 0 : index
    %c38 = arith.constant 38 : index
    %c0_76 = arith.constant 0 : index
    %193 = vector.load %arg4[%c0_75, %c38, %c0_76] : memref<2x81x256xf32, #tpu.memory_space<vmem>>, vector<1x1x256xf32>
    %194 = vector.shape_cast %193 : vector<1x1x256xf32> to vector<1x256xf32>
    %195 = vector.shape_cast %192 : vector<1x256xf32> to vector<1x1x256xf32>
    tpu.vector_store %arg4[%c0_75, %c38, %c0_76], %195 {strides = array<i32>} : memref<2x81x256xf32, #tpu.memory_space<vmem>>, vector<1x1x256xf32>,
    %196 = vector.extract_strided_slice %8 {offsets = [0, 82], sizes = [4, 256], strides = [1, 1]} : vector<4x392xf32> to vector<4x256xf32>
    %197 = arith.mulf %6, %196 : vector<4x256xf32>
    %cst_77 = arith.constant dense<0.000000e+00> : vector<256xf32>
    %198 = vector.multi_reduction <add>, %197, %cst_77 [0] : vector<4x256xf32> to vector<256xf32>
    %199 = vector.shape_cast %198 : vector<256xf32> to vector<1x256xf32>
    %200 = arith.mulf %199, %155 : vector<1x256xf32>
    %c0_78 = arith.constant 0 : index
    %c47 = arith.constant 47 : index
    %c0_79 = arith.constant 0 : index
    %201 = vector.load %arg4[%c0_78, %c47, %c0_79] : memref<2x81x256xf32, #tpu.memory_space<vmem>>, vector<1x1x256xf32>
    %202 = vector.shape_cast %201 : vector<1x1x256xf32> to vector<1x256xf32>
    %203 = vector.shape_cast %200 : vector<1x256xf32> to vector<1x1x256xf32>
    tpu.vector_store %arg4[%c0_78, %c47, %c0_79], %203 {strides = array<i32>} : memref<2x81x256xf32, #tpu.memory_space<vmem>>, vector<1x1x256xf32>,
    %204 = vector.extract_strided_slice %8 {offsets = [0, 98], sizes = [4, 256], strides = [1, 1]} : vector<4x392xf32> to vector<4x256xf32>
    %205 = arith.mulf %6, %204 : vector<4x256xf32>
    %cst_80 = arith.constant dense<0.000000e+00> : vector<256xf32>
    %206 = vector.multi_reduction <add>, %205, %cst_80 [0] : vector<4x256xf32> to vector<256xf32>
    %207 = vector.shape_cast %206 : vector<256xf32> to vector<1x256xf32>
    %208 = arith.mulf %207, %155 : vector<1x256xf32>
    %c0_81 = arith.constant 0 : index
    %c56 = arith.constant 56 : index
    %c0_82 = arith.constant 0 : index
    %209 = vector.load %arg4[%c0_81, %c56, %c0_82] : memref<2x81x256xf32, #tpu.memory_space<vmem>>, vector<1x1x256xf32>
    %210 = vector.shape_cast %209 : vector<1x1x256xf32> to vector<1x256xf32>
    %211 = vector.shape_cast %208 : vector<1x256xf32> to vector<1x1x256xf32>
    tpu.vector_store %arg4[%c0_81, %c56, %c0_82], %211 {strides = array<i32>} : memref<2x81x256xf32, #tpu.memory_space<vmem>>, vector<1x1x256xf32>,
    %212 = vector.extract_strided_slice %8 {offsets = [0, 114], sizes = [4, 256], strides = [1, 1]} : vector<4x392xf32> to vector<4x256xf32>
    %213 = arith.mulf %6, %212 : vector<4x256xf32>
    %cst_83 = arith.constant dense<0.000000e+00> : vector<256xf32>
    %214 = vector.multi_reduction <add>, %213, %cst_83 [0] : vector<4x256xf32> to vector<256xf32>
    %215 = vector.shape_cast %214 : vector<256xf32> to vector<1x256xf32>
    %216 = arith.mulf %215, %155 : vector<1x256xf32>
    %c0_84 = arith.constant 0 : index
    %c65 = arith.constant 65 : index
    %c0_85 = arith.constant 0 : index
    %217 = vector.load %arg4[%c0_84, %c65, %c0_85] : memref<2x81x256xf32, #tpu.memory_space<vmem>>, vector<1x1x256xf32>
    %218 = vector.shape_cast %217 : vector<1x1x256xf32> to vector<1x256xf32>
    %219 = vector.shape_cast %216 : vector<1x256xf32> to vector<1x1x256xf32>
    tpu.vector_store %arg4[%c0_84, %c65, %c0_85], %219 {strides = array<i32>} : memref<2x81x256xf32, #tpu.memory_space<vmem>>, vector<1x1x256xf32>,
    %220 = vector.extract_strided_slice %8 {offsets = [0, 130], sizes = [4, 256], strides = [1, 1]} : vector<4x392xf32> to vector<4x256xf32>
    %221 = arith.mulf %6, %220 : vector<4x256xf32>
    %cst_86 = arith.constant dense<0.000000e+00> : vector<256xf32>
    %222 = vector.multi_reduction <add>, %221, %cst_86 [0] : vector<4x256xf32> to vector<256xf32>
    %223 = vector.shape_cast %222 : vector<256xf32> to vector<1x256xf32>
    %224 = arith.mulf %223, %155 : vector<1x256xf32>
    %c0_87 = arith.constant 0 : index
    %c74 = arith.constant 74 : index
    %c0_88 = arith.constant 0 : index
    %225 = vector.load %arg4[%c0_87, %c74, %c0_88] : memref<2x81x256xf32, #tpu.memory_space<vmem>>, vector<1x1x256xf32>
    %226 = vector.shape_cast %225 : vector<1x1x256xf32> to vector<1x256xf32>
    %227 = vector.shape_cast %224 : vector<1x256xf32> to vector<1x1x256xf32>
    tpu.vector_store %arg4[%c0_87, %c74, %c0_88], %227 {strides = array<i32>} : memref<2x81x256xf32, #tpu.memory_space<vmem>>, vector<1x1x256xf32>,
    %228 = vector.extract_strided_slice %4 {offsets = [3, 0], sizes = [1, 256], strides = [1, 1]} : vector<9x256xf32> to vector<1x256xf32>
    %229 = vector.extract_strided_slice %8 {offsets = [0, 3], sizes = [4, 256], strides = [1, 1]} : vector<4x392xf32> to vector<4x256xf32>
    %230 = arith.mulf %6, %229 : vector<4x256xf32>
    %cst_89 = arith.constant dense<0.000000e+00> : vector<256xf32>
    %231 = vector.multi_reduction <add>, %230, %cst_89 [0] : vector<4x256xf32> to vector<256xf32>
    %232 = vector.shape_cast %231 : vector<256xf32> to vector<1x256xf32>
    %233 = arith.mulf %232, %228 : vector<1x256xf32>
    %c0_90 = arith.constant 0 : index
    %c3 = arith.constant 3 : index
    %c0_91 = arith.constant 0 : index
    %234 = vector.load %arg4[%c0_90, %c3, %c0_91] : memref<2x81x256xf32, #tpu.memory_space<vmem>>, vector<1x1x256xf32>
    %235 = vector.shape_cast %234 : vector<1x1x256xf32> to vector<1x256xf32>
    %236 = vector.shape_cast %233 : vector<1x256xf32> to vector<1x1x256xf32>
    tpu.vector_store %arg4[%c0_90, %c3, %c0_91], %236 {strides = array<i32>} : memref<2x81x256xf32, #tpu.memory_space<vmem>>, vector<1x1x256xf32>,
    %237 = vector.extract_strided_slice %8 {offsets = [0, 19], sizes = [4, 256], strides = [1, 1]} : vector<4x392xf32> to vector<4x256xf32>
    %238 = arith.mulf %6, %237 : vector<4x256xf32>
    %cst_92 = arith.constant dense<0.000000e+00> : vector<256xf32>
    %239 = vector.multi_reduction <add>, %238, %cst_92 [0] : vector<4x256xf32> to vector<256xf32>
    %240 = vector.shape_cast %239 : vector<256xf32> to vector<1x256xf32>
    %241 = arith.mulf %240, %228 : vector<1x256xf32>
    %c0_93 = arith.constant 0 : index
    %c12 = arith.constant 12 : index
    %c0_94 = arith.constant 0 : index
    %242 = vector.load %arg4[%c0_93, %c12, %c0_94] : memref<2x81x256xf32, #tpu.memory_space<vmem>>, vector<1x1x256xf32>
    %243 = vector.shape_cast %242 : vector<1x1x256xf32> to vector<1x256xf32>
    %244 = vector.shape_cast %241 : vector<1x256xf32> to vector<1x1x256xf32>
    tpu.vector_store %arg4[%c0_93, %c12, %c0_94], %244 {strides = array<i32>} : memref<2x81x256xf32, #tpu.memory_space<vmem>>, vector<1x1x256xf32>,
    %245 = vector.extract_strided_slice %8 {offsets = [0, 35], sizes = [4, 256], strides = [1, 1]} : vector<4x392xf32> to vector<4x256xf32>
    %246 = arith.mulf %6, %245 : vector<4x256xf32>
    %cst_95 = arith.constant dense<0.000000e+00> : vector<256xf32>
    %247 = vector.multi_reduction <add>, %246, %cst_95 [0] : vector<4x256xf32> to vector<256xf32>
    %248 = vector.shape_cast %247 : vector<256xf32> to vector<1x256xf32>
    %249 = arith.mulf %248, %228 : vector<1x256xf32>
    %c0_96 = arith.constant 0 : index
    %c21 = arith.constant 21 : index
    %c0_97 = arith.constant 0 : index
    %250 = vector.load %arg4[%c0_96, %c21, %c0_97] : memref<2x81x256xf32, #tpu.memory_space<vmem>>, vector<1x1x256xf32>
    %251 = vector.shape_cast %250 : vector<1x1x256xf32> to vector<1x256xf32>
    %252 = vector.shape_cast %249 : vector<1x256xf32> to vector<1x1x256xf32>
    tpu.vector_store %arg4[%c0_96, %c21, %c0_97], %252 {strides = array<i32>} : memref<2x81x256xf32, #tpu.memory_space<vmem>>, vector<1x1x256xf32>,
    %253 = vector.extract_strided_slice %8 {offsets = [0, 51], sizes = [4, 256], strides = [1, 1]} : vector<4x392xf32> to vector<4x256xf32>
    %254 = arith.mulf %6, %253 : vector<4x256xf32>
    %cst_98 = arith.constant dense<0.000000e+00> : vector<256xf32>
    %255 = vector.multi_reduction <add>, %254, %cst_98 [0] : vector<4x256xf32> to vector<256xf32>
    %256 = vector.shape_cast %255 : vector<256xf32> to vector<1x256xf32>
    %257 = arith.mulf %256, %228 : vector<1x256xf32>
    %c0_99 = arith.constant 0 : index
    %c30 = arith.constant 30 : index
    %c0_100 = arith.constant 0 : index
    %258 = vector.load %arg4[%c0_99, %c30, %c0_100] : memref<2x81x256xf32, #tpu.memory_space<vmem>>, vector<1x1x256xf32>
    %259 = vector.shape_cast %258 : vector<1x1x256xf32> to vector<1x256xf32>
    %260 = vector.shape_cast %257 : vector<1x256xf32> to vector<1x1x256xf32>
    tpu.vector_store %arg4[%c0_99, %c30, %c0_100], %260 {strides = array<i32>} : memref<2x81x256xf32, #tpu.memory_space<vmem>>, vector<1x1x256xf32>,
    %261 = vector.extract_strided_slice %8 {offsets = [0, 67], sizes = [4, 256], strides = [1, 1]} : vector<4x392xf32> to vector<4x256xf32>
    %262 = arith.mulf %6, %261 : vector<4x256xf32>
    %cst_101 = arith.constant dense<0.000000e+00> : vector<256xf32>
    %263 = vector.multi_reduction <add>, %262, %cst_101 [0] : vector<4x256xf32> to vector<256xf32>
    %264 = vector.shape_cast %263 : vector<256xf32> to vector<1x256xf32>
    %265 = arith.mulf %264, %228 : vector<1x256xf32>
    %c0_102 = arith.constant 0 : index
    %c39 = arith.constant 39 : index
    %c0_103 = arith.constant 0 : index
    %266 = vector.load %arg4[%c0_102, %c39, %c0_103] : memref<2x81x256xf32, #tpu.memory_space<vmem>>, vector<1x1x256xf32>
    %267 = vector.shape_cast %266 : vector<1x1x256xf32> to vector<1x256xf32>
    %268 = vector.shape_cast %265 : vector<1x256xf32> to vector<1x1x256xf32>
    tpu.vector_store %arg4[%c0_102, %c39, %c0_103], %268 {strides = array<i32>} : memref<2x81x256xf32, #tpu.memory_space<vmem>>, vector<1x1x256xf32>,
    %269 = vector.extract_strided_slice %8 {offsets = [0, 83], sizes = [4, 256], strides = [1, 1]} : vector<4x392xf32> to vector<4x256xf32>
    %270 = arith.mulf %6, %269 : vector<4x256xf32>
    %cst_104 = arith.constant dense<0.000000e+00> : vector<256xf32>
    %271 = vector.multi_reduction <add>, %270, %cst_104 [0] : vector<4x256xf32> to vector<256xf32>
    %272 = vector.shape_cast %271 : vector<256xf32> to vector<1x256xf32>
    %273 = arith.mulf %272, %228 : vector<1x256xf32>
    %c0_105 = arith.constant 0 : index
    %c48 = arith.constant 48 : index
    %c0_106 = arith.constant 0 : index
    %274 = vector.load %arg4[%c0_105, %c48, %c0_106] : memref<2x81x256xf32, #tpu.memory_space<vmem>>, vector<1x1x256xf32>
    %275 = vector.shape_cast %274 : vector<1x1x256xf32> to vector<1x256xf32>
    %276 = vector.shape_cast %273 : vector<1x256xf32> to vector<1x1x256xf32>
    tpu.vector_store %arg4[%c0_105, %c48, %c0_106], %276 {strides = array<i32>} : memref<2x81x256xf32, #tpu.memory_space<vmem>>, vector<1x1x256xf32>,
    %277 = vector.extract_strided_slice %8 {offsets = [0, 99], sizes = [4, 256], strides = [1, 1]} : vector<4x392xf32> to vector<4x256xf32>
    %278 = arith.mulf %6, %277 : vector<4x256xf32>
    %cst_107 = arith.constant dense<0.000000e+00> : vector<256xf32>
    %279 = vector.multi_reduction <add>, %278, %cst_107 [0] : vector<4x256xf32> to vector<256xf32>
    %280 = vector.shape_cast %279 : vector<256xf32> to vector<1x256xf32>
    %281 = arith.mulf %280, %228 : vector<1x256xf32>
    %c0_108 = arith.constant 0 : index
    %c57 = arith.constant 57 : index
    %c0_109 = arith.constant 0 : index
    %282 = vector.load %arg4[%c0_108, %c57, %c0_109] : memref<2x81x256xf32, #tpu.memory_space<vmem>>, vector<1x1x256xf32>
    %283 = vector.shape_cast %282 : vector<1x1x256xf32> to vector<1x256xf32>
    %284 = vector.shape_cast %281 : vector<1x256xf32> to vector<1x1x256xf32>
    tpu.vector_store %arg4[%c0_108, %c57, %c0_109], %284 {strides = array<i32>} : memref<2x81x256xf32, #tpu.memory_space<vmem>>, vector<1x1x256xf32>,
    %285 = vector.extract_strided_slice %8 {offsets = [0, 115], sizes = [4, 256], strides = [1, 1]} : vector<4x392xf32> to vector<4x256xf32>
    %286 = arith.mulf %6, %285 : vector<4x256xf32>
    %cst_110 = arith.constant dense<0.000000e+00> : vector<256xf32>
    %287 = vector.multi_reduction <add>, %286, %cst_110 [0] : vector<4x256xf32> to vector<256xf32>
    %288 = vector.shape_cast %287 : vector<256xf32> to vector<1x256xf32>
    %289 = arith.mulf %288, %228 : vector<1x256xf32>
    %c0_111 = arith.constant 0 : index
    %c66 = arith.constant 66 : index
    %c0_112 = arith.constant 0 : index
    %290 = vector.load %arg4[%c0_111, %c66, %c0_112] : memref<2x81x256xf32, #tpu.memory_space<vmem>>, vector<1x1x256xf32>
    %291 = vector.shape_cast %290 : vector<1x1x256xf32> to vector<1x256xf32>
    %292 = vector.shape_cast %289 : vector<1x256xf32> to vector<1x1x256xf32>
    tpu.vector_store %arg4[%c0_111, %c66, %c0_112], %292 {strides = array<i32>} : memref<2x81x256xf32, #tpu.memory_space<vmem>>, vector<1x1x256xf32>,
    %293 = vector.extract_strided_slice %8 {offsets = [0, 131], sizes = [4, 256], strides = [1, 1]} : vector<4x392xf32> to vector<4x256xf32>
    %294 = arith.mulf %6, %293 : vector<4x256xf32>
    %cst_113 = arith.constant dense<0.000000e+00> : vector<256xf32>
    %295 = vector.multi_reduction <add>, %294, %cst_113 [0] : vector<4x256xf32> to vector<256xf32>
    %296 = vector.shape_cast %295 : vector<256xf32> to vector<1x256xf32>
    %297 = arith.mulf %296, %228 : vector<1x256xf32>
    %c0_114 = arith.constant 0 : index
    %c75 = arith.constant 75 : index
    %c0_115 = arith.constant 0 : index
    %298 = vector.load %arg4[%c0_114, %c75, %c0_115] : memref<2x81x256xf32, #tpu.memory_space<vmem>>, vector<1x1x256xf32>
    %299 = vector.shape_cast %298 : vector<1x1x256xf32> to vector<1x256xf32>
    %300 = vector.shape_cast %297 : vector<1x256xf32> to vector<1x1x256xf32>
    tpu.vector_store %arg4[%c0_114, %c75, %c0_115], %300 {strides = array<i32>} : memref<2x81x256xf32, #tpu.memory_space<vmem>>, vector<1x1x256xf32>,
    %301 = vector.extract_strided_slice %4 {offsets = [4, 0], sizes = [1, 256], strides = [1, 1]} : vector<9x256xf32> to vector<1x256xf32>
    %302 = vector.extract_strided_slice %8 {offsets = [0, 4], sizes = [4, 256], strides = [1, 1]} : vector<4x392xf32> to vector<4x256xf32>
    %303 = arith.mulf %6, %302 : vector<4x256xf32>
    %cst_116 = arith.constant dense<0.000000e+00> : vector<256xf32>
    %304 = vector.multi_reduction <add>, %303, %cst_116 [0] : vector<4x256xf32> to vector<256xf32>
    %305 = vector.shape_cast %304 : vector<256xf32> to vector<1x256xf32>
    %306 = arith.mulf %305, %301 : vector<1x256xf32>
    %c0_117 = arith.constant 0 : index
    %c4 = arith.constant 4 : index
    %c0_118 = arith.constant 0 : index
    %307 = vector.load %arg4[%c0_117, %c4, %c0_118] : memref<2x81x256xf32, #tpu.memory_space<vmem>>, vector<1x1x256xf32>
    %308 = vector.shape_cast %307 : vector<1x1x256xf32> to vector<1x256xf32>
    %309 = vector.shape_cast %306 : vector<1x256xf32> to vector<1x1x256xf32>
    tpu.vector_store %arg4[%c0_117, %c4, %c0_118], %309 {strides = array<i32>} : memref<2x81x256xf32, #tpu.memory_space<vmem>>, vector<1x1x256xf32>,
    %310 = vector.extract_strided_slice %8 {offsets = [0, 20], sizes = [4, 256], strides = [1, 1]} : vector<4x392xf32> to vector<4x256xf32>
    %311 = arith.mulf %6, %310 : vector<4x256xf32>
    %cst_119 = arith.constant dense<0.000000e+00> : vector<256xf32>
    %312 = vector.multi_reduction <add>, %311, %cst_119 [0] : vector<4x256xf32> to vector<256xf32>
    %313 = vector.shape_cast %312 : vector<256xf32> to vector<1x256xf32>
    %314 = arith.mulf %313, %301 : vector<1x256xf32>
    %c0_120 = arith.constant 0 : index
    %c13 = arith.constant 13 : index
    %c0_121 = arith.constant 0 : index
    %315 = vector.load %arg4[%c0_120, %c13, %c0_121] : memref<2x81x256xf32, #tpu.memory_space<vmem>>, vector<1x1x256xf32>
    %316 = vector.shape_cast %315 : vector<1x1x256xf32> to vector<1x256xf32>
    %317 = vector.shape_cast %314 : vector<1x256xf32> to vector<1x1x256xf32>
    tpu.vector_store %arg4[%c0_120, %c13, %c0_121], %317 {strides = array<i32>} : memref<2x81x256xf32, #tpu.memory_space<vmem>>, vector<1x1x256xf32>,
    %318 = vector.extract_strided_slice %8 {offsets = [0, 36], sizes = [4, 256], strides = [1, 1]} : vector<4x392xf32> to vector<4x256xf32>
    %319 = arith.mulf %6, %318 : vector<4x256xf32>
    %cst_122 = arith.constant dense<0.000000e+00> : vector<256xf32>
    %320 = vector.multi_reduction <add>, %319, %cst_122 [0] : vector<4x256xf32> to vector<256xf32>
    %321 = vector.shape_cast %320 : vector<256xf32> to vector<1x256xf32>
    %322 = arith.mulf %321, %301 : vector<1x256xf32>
    %c0_123 = arith.constant 0 : index
    %c22 = arith.constant 22 : index
    %c0_124 = arith.constant 0 : index
    %323 = vector.load %arg4[%c0_123, %c22, %c0_124] : memref<2x81x256xf32, #tpu.memory_space<vmem>>, vector<1x1x256xf32>
    %324 = vector.shape_cast %323 : vector<1x1x256xf32> to vector<1x256xf32>
    %325 = vector.shape_cast %322 : vector<1x256xf32> to vector<1x1x256xf32>
    tpu.vector_store %arg4[%c0_123, %c22, %c0_124], %325 {strides = array<i32>} : memref<2x81x256xf32, #tpu.memory_space<vmem>>, vector<1x1x256xf32>,
    %326 = vector.extract_strided_slice %8 {offsets = [0, 52], sizes = [4, 256], strides = [1, 1]} : vector<4x392xf32> to vector<4x256xf32>
    %327 = arith.mulf %6, %326 : vector<4x256xf32>
    %cst_125 = arith.constant dense<0.000000e+00> : vector<256xf32>
    %328 = vector.multi_reduction <add>, %327, %cst_125 [0] : vector<4x256xf32> to vector<256xf32>
    %329 = vector.shape_cast %328 : vector<256xf32> to vector<1x256xf32>
    %330 = arith.mulf %329, %301 : vector<1x256xf32>
    %c0_126 = arith.constant 0 : index
    %c31 = arith.constant 31 : index
    %c0_127 = arith.constant 0 : index
    %331 = vector.load %arg4[%c0_126, %c31, %c0_127] : memref<2x81x256xf32, #tpu.memory_space<vmem>>, vector<1x1x256xf32>
    %332 = vector.shape_cast %331 : vector<1x1x256xf32> to vector<1x256xf32>
    %333 = vector.shape_cast %330 : vector<1x256xf32> to vector<1x1x256xf32>
    tpu.vector_store %arg4[%c0_126, %c31, %c0_127], %333 {strides = array<i32>} : memref<2x81x256xf32, #tpu.memory_space<vmem>>, vector<1x1x256xf32>,
    %334 = vector.extract_strided_slice %8 {offsets = [0, 68], sizes = [4, 256], strides = [1, 1]} : vector<4x392xf32> to vector<4x256xf32>
    %335 = arith.mulf %6, %334 : vector<4x256xf32>
    %cst_128 = arith.constant dense<0.000000e+00> : vector<256xf32>
    %336 = vector.multi_reduction <add>, %335, %cst_128 [0] : vector<4x256xf32> to vector<256xf32>
    %337 = vector.shape_cast %336 : vector<256xf32> to vector<1x256xf32>
    %338 = arith.mulf %337, %301 : vector<1x256xf32>
    %c0_129 = arith.constant 0 : index
    %c40 = arith.constant 40 : index
    %c0_130 = arith.constant 0 : index
    %339 = vector.load %arg4[%c0_129, %c40, %c0_130] : memref<2x81x256xf32, #tpu.memory_space<vmem>>, vector<1x1x256xf32>
    %340 = vector.shape_cast %339 : vector<1x1x256xf32> to vector<1x256xf32>
    %341 = vector.shape_cast %338 : vector<1x256xf32> to vector<1x1x256xf32>
    tpu.vector_store %arg4[%c0_129, %c40, %c0_130], %341 {strides = array<i32>} : memref<2x81x256xf32, #tpu.memory_space<vmem>>, vector<1x1x256xf32>,
    %342 = vector.extract_strided_slice %8 {offsets = [0, 84], sizes = [4, 256], strides = [1, 1]} : vector<4x392xf32> to vector<4x256xf32>
    %343 = arith.mulf %6, %342 : vector<4x256xf32>
    %cst_131 = arith.constant dense<0.000000e+00> : vector<256xf32>
    %344 = vector.multi_reduction <add>, %343, %cst_131 [0] : vector<4x256xf32> to vector<256xf32>
    %345 = vector.shape_cast %344 : vector<256xf32> to vector<1x256xf32>
    %346 = arith.mulf %345, %301 : vector<1x256xf32>
    %c0_132 = arith.constant 0 : index
    %c49 = arith.constant 49 : index
    %c0_133 = arith.constant 0 : index
    %347 = vector.load %arg4[%c0_132, %c49, %c0_133] : memref<2x81x256xf32, #tpu.memory_space<vmem>>, vector<1x1x256xf32>
    %348 = vector.shape_cast %347 : vector<1x1x256xf32> to vector<1x256xf32>
    %349 = vector.shape_cast %346 : vector<1x256xf32> to vector<1x1x256xf32>
    tpu.vector_store %arg4[%c0_132, %c49, %c0_133], %349 {strides = array<i32>} : memref<2x81x256xf32, #tpu.memory_space<vmem>>, vector<1x1x256xf32>,
    %350 = vector.extract_strided_slice %8 {offsets = [0, 100], sizes = [4, 256], strides = [1, 1]} : vector<4x392xf32> to vector<4x256xf32>
    %351 = arith.mulf %6, %350 : vector<4x256xf32>
    %cst_134 = arith.constant dense<0.000000e+00> : vector<256xf32>
    %352 = vector.multi_reduction <add>, %351, %cst_134 [0] : vector<4x256xf32> to vector<256xf32>
    %353 = vector.shape_cast %352 : vector<256xf32> to vector<1x256xf32>
    %354 = arith.mulf %353, %301 : vector<1x256xf32>
    %c0_135 = arith.constant 0 : index
    %c58 = arith.constant 58 : index
    %c0_136 = arith.constant 0 : index
    %355 = vector.load %arg4[%c0_135, %c58, %c0_136] : memref<2x81x256xf32, #tpu.memory_space<vmem>>, vector<1x1x256xf32>
    %356 = vector.shape_cast %355 : vector<1x1x256xf32> to vector<1x256xf32>
    %357 = vector.shape_cast %354 : vector<1x256xf32> to vector<1x1x256xf32>
    tpu.vector_store %arg4[%c0_135, %c58, %c0_136], %357 {strides = array<i32>} : memref<2x81x256xf32, #tpu.memory_space<vmem>>, vector<1x1x256xf32>,
    %358 = vector.extract_strided_slice %8 {offsets = [0, 116], sizes = [4, 256], strides = [1, 1]} : vector<4x392xf32> to vector<4x256xf32>
    %359 = arith.mulf %6, %358 : vector<4x256xf32>
    %cst_137 = arith.constant dense<0.000000e+00> : vector<256xf32>
    %360 = vector.multi_reduction <add>, %359, %cst_137 [0] : vector<4x256xf32> to vector<256xf32>
    %361 = vector.shape_cast %360 : vector<256xf32> to vector<1x256xf32>
    %362 = arith.mulf %361, %301 : vector<1x256xf32>
    %c0_138 = arith.constant 0 : index
    %c67 = arith.constant 67 : index
    %c0_139 = arith.constant 0 : index
    %363 = vector.load %arg4[%c0_138, %c67, %c0_139] : memref<2x81x256xf32, #tpu.memory_space<vmem>>, vector<1x1x256xf32>
    %364 = vector.shape_cast %363 : vector<1x1x256xf32> to vector<1x256xf32>
    %365 = vector.shape_cast %362 : vector<1x256xf32> to vector<1x1x256xf32>
    tpu.vector_store %arg4[%c0_138, %c67, %c0_139], %365 {strides = array<i32>} : memref<2x81x256xf32, #tpu.memory_space<vmem>>, vector<1x1x256xf32>,
    %366 = vector.extract_strided_slice %8 {offsets = [0, 132], sizes = [4, 256], strides = [1, 1]} : vector<4x392xf32> to vector<4x256xf32>
    %367 = arith.mulf %6, %366 : vector<4x256xf32>
    %cst_140 = arith.constant dense<0.000000e+00> : vector<256xf32>
    %368 = vector.multi_reduction <add>, %367, %cst_140 [0] : vector<4x256xf32> to vector<256xf32>
    %369 = vector.shape_cast %368 : vector<256xf32> to vector<1x256xf32>
    %370 = arith.mulf %369, %301 : vector<1x256xf32>
    %c0_141 = arith.constant 0 : index
    %c76 = arith.constant 76 : index
    %c0_142 = arith.constant 0 : index
    %371 = vector.load %arg4[%c0_141, %c76, %c0_142] : memref<2x81x256xf32, #tpu.memory_space<vmem>>, vector<1x1x256xf32>
    %372 = vector.shape_cast %371 : vector<1x1x256xf32> to vector<1x256xf32>
    %373 = vector.shape_cast %370 : vector<1x256xf32> to vector<1x1x256xf32>
    tpu.vector_store %arg4[%c0_141, %c76, %c0_142], %373 {strides = array<i32>} : memref<2x81x256xf32, #tpu.memory_space<vmem>>, vector<1x1x256xf32>,
    %374 = vector.extract_strided_slice %4 {offsets = [5, 0], sizes = [1, 256], strides = [1, 1]} : vector<9x256xf32> to vector<1x256xf32>
    %375 = vector.extract_strided_slice %8 {offsets = [0, 5], sizes = [4, 256], strides = [1, 1]} : vector<4x392xf32> to vector<4x256xf32>
    %376 = arith.mulf %6, %375 : vector<4x256xf32>
    %cst_143 = arith.constant dense<0.000000e+00> : vector<256xf32>
    %377 = vector.multi_reduction <add>, %376, %cst_143 [0] : vector<4x256xf32> to vector<256xf32>
    %378 = vector.shape_cast %377 : vector<256xf32> to vector<1x256xf32>
    %379 = arith.mulf %378, %374 : vector<1x256xf32>
    %c0_144 = arith.constant 0 : index
    %c5 = arith.constant 5 : index
    %c0_145 = arith.constant 0 : index
    %380 = vector.load %arg4[%c0_144, %c5, %c0_145] : memref<2x81x256xf32, #tpu.memory_space<vmem>>, vector<1x1x256xf32>
    %381 = vector.shape_cast %380 : vector<1x1x256xf32> to vector<1x256xf32>
    %382 = vector.shape_cast %379 : vector<1x256xf32> to vector<1x1x256xf32>
    tpu.vector_store %arg4[%c0_144, %c5, %c0_145], %382 {strides = array<i32>} : memref<2x81x256xf32, #tpu.memory_space<vmem>>, vector<1x1x256xf32>,
    %383 = vector.extract_strided_slice %8 {offsets = [0, 21], sizes = [4, 256], strides = [1, 1]} : vector<4x392xf32> to vector<4x256xf32>
    %384 = arith.mulf %6, %383 : vector<4x256xf32>
    %cst_146 = arith.constant dense<0.000000e+00> : vector<256xf32>
    %385 = vector.multi_reduction <add>, %384, %cst_146 [0] : vector<4x256xf32> to vector<256xf32>
    %386 = vector.shape_cast %385 : vector<256xf32> to vector<1x256xf32>
    %387 = arith.mulf %386, %374 : vector<1x256xf32>
    %c0_147 = arith.constant 0 : index
    %c14 = arith.constant 14 : index
    %c0_148 = arith.constant 0 : index
    %388 = vector.load %arg4[%c0_147, %c14, %c0_148] : memref<2x81x256xf32, #tpu.memory_space<vmem>>, vector<1x1x256xf32>
    %389 = vector.shape_cast %388 : vector<1x1x256xf32> to vector<1x256xf32>
    %390 = vector.shape_cast %387 : vector<1x256xf32> to vector<1x1x256xf32>
    tpu.vector_store %arg4[%c0_147, %c14, %c0_148], %390 {strides = array<i32>} : memref<2x81x256xf32, #tpu.memory_space<vmem>>, vector<1x1x256xf32>,
    %391 = vector.extract_strided_slice %8 {offsets = [0, 37], sizes = [4, 256], strides = [1, 1]} : vector<4x392xf32> to vector<4x256xf32>
    %392 = arith.mulf %6, %391 : vector<4x256xf32>
    %cst_149 = arith.constant dense<0.000000e+00> : vector<256xf32>
    %393 = vector.multi_reduction <add>, %392, %cst_149 [0] : vector<4x256xf32> to vector<256xf32>
    %394 = vector.shape_cast %393 : vector<256xf32> to vector<1x256xf32>
    %395 = arith.mulf %394, %374 : vector<1x256xf32>
    %c0_150 = arith.constant 0 : index
    %c23 = arith.constant 23 : index
    %c0_151 = arith.constant 0 : index
    %396 = vector.load %arg4[%c0_150, %c23, %c0_151] : memref<2x81x256xf32, #tpu.memory_space<vmem>>, vector<1x1x256xf32>
    %397 = vector.shape_cast %396 : vector<1x1x256xf32> to vector<1x256xf32>
    %398 = vector.shape_cast %395 : vector<1x256xf32> to vector<1x1x256xf32>
    tpu.vector_store %arg4[%c0_150, %c23, %c0_151], %398 {strides = array<i32>} : memref<2x81x256xf32, #tpu.memory_space<vmem>>, vector<1x1x256xf32>,
    %399 = vector.extract_strided_slice %8 {offsets = [0, 53], sizes = [4, 256], strides = [1, 1]} : vector<4x392xf32> to vector<4x256xf32>
    %400 = arith.mulf %6, %399 : vector<4x256xf32>
    %cst_152 = arith.constant dense<0.000000e+00> : vector<256xf32>
    %401 = vector.multi_reduction <add>, %400, %cst_152 [0] : vector<4x256xf32> to vector<256xf32>
    %402 = vector.shape_cast %401 : vector<256xf32> to vector<1x256xf32>
    %403 = arith.mulf %402, %374 : vector<1x256xf32>
    %c0_153 = arith.constant 0 : index
    %c32 = arith.constant 32 : index
    %c0_154 = arith.constant 0 : index
    %404 = vector.load %arg4[%c0_153, %c32, %c0_154] : memref<2x81x256xf32, #tpu.memory_space<vmem>>, vector<1x1x256xf32>
    %405 = vector.shape_cast %404 : vector<1x1x256xf32> to vector<1x256xf32>
    %406 = vector.shape_cast %403 : vector<1x256xf32> to vector<1x1x256xf32>
    tpu.vector_store %arg4[%c0_153, %c32, %c0_154], %406 {strides = array<i32>} : memref<2x81x256xf32, #tpu.memory_space<vmem>>, vector<1x1x256xf32>,
    %407 = vector.extract_strided_slice %8 {offsets = [0, 69], sizes = [4, 256], strides = [1, 1]} : vector<4x392xf32> to vector<4x256xf32>
    %408 = arith.mulf %6, %407 : vector<4x256xf32>
    %cst_155 = arith.constant dense<0.000000e+00> : vector<256xf32>
    %409 = vector.multi_reduction <add>, %408, %cst_155 [0] : vector<4x256xf32> to vector<256xf32>
    %410 = vector.shape_cast %409 : vector<256xf32> to vector<1x256xf32>
    %411 = arith.mulf %410, %374 : vector<1x256xf32>
    %c0_156 = arith.constant 0 : index
    %c41 = arith.constant 41 : index
    %c0_157 = arith.constant 0 : index
    %412 = vector.load %arg4[%c0_156, %c41, %c0_157] : memref<2x81x256xf32, #tpu.memory_space<vmem>>, vector<1x1x256xf32>
    %413 = vector.shape_cast %412 : vector<1x1x256xf32> to vector<1x256xf32>
    %414 = vector.shape_cast %411 : vector<1x256xf32> to vector<1x1x256xf32>
    tpu.vector_store %arg4[%c0_156, %c41, %c0_157], %414 {strides = array<i32>} : memref<2x81x256xf32, #tpu.memory_space<vmem>>, vector<1x1x256xf32>,
    %415 = vector.extract_strided_slice %8 {offsets = [0, 85], sizes = [4, 256], strides = [1, 1]} : vector<4x392xf32> to vector<4x256xf32>
    %416 = arith.mulf %6, %415 : vector<4x256xf32>
    %cst_158 = arith.constant dense<0.000000e+00> : vector<256xf32>
    %417 = vector.multi_reduction <add>, %416, %cst_158 [0] : vector<4x256xf32> to vector<256xf32>
    %418 = vector.shape_cast %417 : vector<256xf32> to vector<1x256xf32>
    %419 = arith.mulf %418, %374 : vector<1x256xf32>
    %c0_159 = arith.constant 0 : index
    %c50 = arith.constant 50 : index
    %c0_160 = arith.constant 0 : index
    %420 = vector.load %arg4[%c0_159, %c50, %c0_160] : memref<2x81x256xf32, #tpu.memory_space<vmem>>, vector<1x1x256xf32>
    %421 = vector.shape_cast %420 : vector<1x1x256xf32> to vector<1x256xf32>
    %422 = vector.shape_cast %419 : vector<1x256xf32> to vector<1x1x256xf32>
    tpu.vector_store %arg4[%c0_159, %c50, %c0_160], %422 {strides = array<i32>} : memref<2x81x256xf32, #tpu.memory_space<vmem>>, vector<1x1x256xf32>,
    %423 = vector.extract_strided_slice %8 {offsets = [0, 101], sizes = [4, 256], strides = [1, 1]} : vector<4x392xf32> to vector<4x256xf32>
    %424 = arith.mulf %6, %423 : vector<4x256xf32>
    %cst_161 = arith.constant dense<0.000000e+00> : vector<256xf32>
    %425 = vector.multi_reduction <add>, %424, %cst_161 [0] : vector<4x256xf32> to vector<256xf32>
    %426 = vector.shape_cast %425 : vector<256xf32> to vector<1x256xf32>
    %427 = arith.mulf %426, %374 : vector<1x256xf32>
    %c0_162 = arith.constant 0 : index
    %c59 = arith.constant 59 : index
    %c0_163 = arith.constant 0 : index
    %428 = vector.load %arg4[%c0_162, %c59, %c0_163] : memref<2x81x256xf32, #tpu.memory_space<vmem>>, vector<1x1x256xf32>
    %429 = vector.shape_cast %428 : vector<1x1x256xf32> to vector<1x256xf32>
    %430 = vector.shape_cast %427 : vector<1x256xf32> to vector<1x1x256xf32>
    tpu.vector_store %arg4[%c0_162, %c59, %c0_163], %430 {strides = array<i32>} : memref<2x81x256xf32, #tpu.memory_space<vmem>>, vector<1x1x256xf32>,
    %431 = vector.extract_strided_slice %8 {offsets = [0, 117], sizes = [4, 256], strides = [1, 1]} : vector<4x392xf32> to vector<4x256xf32>
    %432 = arith.mulf %6, %431 : vector<4x256xf32>
    %cst_164 = arith.constant dense<0.000000e+00> : vector<256xf32>
    %433 = vector.multi_reduction <add>, %432, %cst_164 [0] : vector<4x256xf32> to vector<256xf32>
    %434 = vector.shape_cast %433 : vector<256xf32> to vector<1x256xf32>
    %435 = arith.mulf %434, %374 : vector<1x256xf32>
    %c0_165 = arith.constant 0 : index
    %c68 = arith.constant 68 : index
    %c0_166 = arith.constant 0 : index
    %436 = vector.load %arg4[%c0_165, %c68, %c0_166] : memref<2x81x256xf32, #tpu.memory_space<vmem>>, vector<1x1x256xf32>
    %437 = vector.shape_cast %436 : vector<1x1x256xf32> to vector<1x256xf32>
    %438 = vector.shape_cast %435 : vector<1x256xf32> to vector<1x1x256xf32>
    tpu.vector_store %arg4[%c0_165, %c68, %c0_166], %438 {strides = array<i32>} : memref<2x81x256xf32, #tpu.memory_space<vmem>>, vector<1x1x256xf32>,
    %439 = vector.extract_strided_slice %8 {offsets = [0, 133], sizes = [4, 256], strides = [1, 1]} : vector<4x392xf32> to vector<4x256xf32>
    %440 = arith.mulf %6, %439 : vector<4x256xf32>
    %cst_167 = arith.constant dense<0.000000e+00> : vector<256xf32>
    %441 = vector.multi_reduction <add>, %440, %cst_167 [0] : vector<4x256xf32> to vector<256xf32>
    %442 = vector.shape_cast %441 : vector<256xf32> to vector<1x256xf32>
    %443 = arith.mulf %442, %374 : vector<1x256xf32>
    %c0_168 = arith.constant 0 : index
    %c77 = arith.constant 77 : index
    %c0_169 = arith.constant 0 : index
    %444 = vector.load %arg4[%c0_168, %c77, %c0_169] : memref<2x81x256xf32, #tpu.memory_space<vmem>>, vector<1x1x256xf32>
    %445 = vector.shape_cast %444 : vector<1x1x256xf32> to vector<1x256xf32>
    %446 = vector.shape_cast %443 : vector<1x256xf32> to vector<1x1x256xf32>
    tpu.vector_store %arg4[%c0_168, %c77, %c0_169], %446 {strides = array<i32>} : memref<2x81x256xf32, #tpu.memory_space<vmem>>, vector<1x1x256xf32>,
    %447 = vector.extract_strided_slice %4 {offsets = [6, 0], sizes = [1, 256], strides = [1, 1]} : vector<9x256xf32> to vector<1x256xf32>
    %448 = vector.extract_strided_slice %8 {offsets = [0, 6], sizes = [4, 256], strides = [1, 1]} : vector<4x392xf32> to vector<4x256xf32>
    %449 = arith.mulf %6, %448 : vector<4x256xf32>
    %cst_170 = arith.constant dense<0.000000e+00> : vector<256xf32>
    %450 = vector.multi_reduction <add>, %449, %cst_170 [0] : vector<4x256xf32> to vector<256xf32>
    %451 = vector.shape_cast %450 : vector<256xf32> to vector<1x256xf32>
    %452 = arith.mulf %451, %447 : vector<1x256xf32>
    %c0_171 = arith.constant 0 : index
    %c6 = arith.constant 6 : index
    %c0_172 = arith.constant 0 : index
    %453 = vector.load %arg4[%c0_171, %c6, %c0_172] : memref<2x81x256xf32, #tpu.memory_space<vmem>>, vector<1x1x256xf32>
    %454 = vector.shape_cast %453 : vector<1x1x256xf32> to vector<1x256xf32>
    %455 = vector.shape_cast %452 : vector<1x256xf32> to vector<1x1x256xf32>
    tpu.vector_store %arg4[%c0_171, %c6, %c0_172], %455 {strides = array<i32>} : memref<2x81x256xf32, #tpu.memory_space<vmem>>, vector<1x1x256xf32>,
    %456 = vector.extract_strided_slice %8 {offsets = [0, 22], sizes = [4, 256], strides = [1, 1]} : vector<4x392xf32> to vector<4x256xf32>
    %457 = arith.mulf %6, %456 : vector<4x256xf32>
    %cst_173 = arith.constant dense<0.000000e+00> : vector<256xf32>
    %458 = vector.multi_reduction <add>, %457, %cst_173 [0] : vector<4x256xf32> to vector<256xf32>
    %459 = vector.shape_cast %458 : vector<256xf32> to vector<1x256xf32>
    %460 = arith.mulf %459, %447 : vector<1x256xf32>
    %c0_174 = arith.constant 0 : index
    %c15 = arith.constant 15 : index
    %c0_175 = arith.constant 0 : index
    %461 = vector.load %arg4[%c0_174, %c15, %c0_175] : memref<2x81x256xf32, #tpu.memory_space<vmem>>, vector<1x1x256xf32>
    %462 = vector.shape_cast %461 : vector<1x1x256xf32> to vector<1x256xf32>
    %463 = vector.shape_cast %460 : vector<1x256xf32> to vector<1x1x256xf32>
    tpu.vector_store %arg4[%c0_174, %c15, %c0_175], %463 {strides = array<i32>} : memref<2x81x256xf32, #tpu.memory_space<vmem>>, vector<1x1x256xf32>,
    %464 = vector.extract_strided_slice %8 {offsets = [0, 38], sizes = [4, 256], strides = [1, 1]} : vector<4x392xf32> to vector<4x256xf32>
    %465 = arith.mulf %6, %464 : vector<4x256xf32>
    %cst_176 = arith.constant dense<0.000000e+00> : vector<256xf32>
    %466 = vector.multi_reduction <add>, %465, %cst_176 [0] : vector<4x256xf32> to vector<256xf32>
    %467 = vector.shape_cast %466 : vector<256xf32> to vector<1x256xf32>
    %468 = arith.mulf %467, %447 : vector<1x256xf32>
    %c0_177 = arith.constant 0 : index
    %c24 = arith.constant 24 : index
    %c0_178 = arith.constant 0 : index
    %469 = vector.load %arg4[%c0_177, %c24, %c0_178] : memref<2x81x256xf32, #tpu.memory_space<vmem>>, vector<1x1x256xf32>
    %470 = vector.shape_cast %469 : vector<1x1x256xf32> to vector<1x256xf32>
    %471 = vector.shape_cast %468 : vector<1x256xf32> to vector<1x1x256xf32>
    tpu.vector_store %arg4[%c0_177, %c24, %c0_178], %471 {strides = array<i32>} : memref<2x81x256xf32, #tpu.memory_space<vmem>>, vector<1x1x256xf32>,
    %472 = vector.extract_strided_slice %8 {offsets = [0, 54], sizes = [4, 256], strides = [1, 1]} : vector<4x392xf32> to vector<4x256xf32>
    %473 = arith.mulf %6, %472 : vector<4x256xf32>
    %cst_179 = arith.constant dense<0.000000e+00> : vector<256xf32>
    %474 = vector.multi_reduction <add>, %473, %cst_179 [0] : vector<4x256xf32> to vector<256xf32>
    %475 = vector.shape_cast %474 : vector<256xf32> to vector<1x256xf32>
    %476 = arith.mulf %475, %447 : vector<1x256xf32>
    %c0_180 = arith.constant 0 : index
    %c33 = arith.constant 33 : index
    %c0_181 = arith.constant 0 : index
    %477 = vector.load %arg4[%c0_180, %c33, %c0_181] : memref<2x81x256xf32, #tpu.memory_space<vmem>>, vector<1x1x256xf32>
    %478 = vector.shape_cast %477 : vector<1x1x256xf32> to vector<1x256xf32>
    %479 = vector.shape_cast %476 : vector<1x256xf32> to vector<1x1x256xf32>
    tpu.vector_store %arg4[%c0_180, %c33, %c0_181], %479 {strides = array<i32>} : memref<2x81x256xf32, #tpu.memory_space<vmem>>, vector<1x1x256xf32>,
    %480 = vector.extract_strided_slice %8 {offsets = [0, 70], sizes = [4, 256], strides = [1, 1]} : vector<4x392xf32> to vector<4x256xf32>
    %481 = arith.mulf %6, %480 : vector<4x256xf32>
    %cst_182 = arith.constant dense<0.000000e+00> : vector<256xf32>
    %482 = vector.multi_reduction <add>, %481, %cst_182 [0] : vector<4x256xf32> to vector<256xf32>
    %483 = vector.shape_cast %482 : vector<256xf32> to vector<1x256xf32>
    %484 = arith.mulf %483, %447 : vector<1x256xf32>
    %c0_183 = arith.constant 0 : index
    %c42 = arith.constant 42 : index
    %c0_184 = arith.constant 0 : index
    %485 = vector.load %arg4[%c0_183, %c42, %c0_184] : memref<2x81x256xf32, #tpu.memory_space<vmem>>, vector<1x1x256xf32>
    %486 = vector.shape_cast %485 : vector<1x1x256xf32> to vector<1x256xf32>
    %487 = vector.shape_cast %484 : vector<1x256xf32> to vector<1x1x256xf32>
    tpu.vector_store %arg4[%c0_183, %c42, %c0_184], %487 {strides = array<i32>} : memref<2x81x256xf32, #tpu.memory_space<vmem>>, vector<1x1x256xf32>,
    %488 = vector.extract_strided_slice %8 {offsets = [0, 86], sizes = [4, 256], strides = [1, 1]} : vector<4x392xf32> to vector<4x256xf32>
    %489 = arith.mulf %6, %488 : vector<4x256xf32>
    %cst_185 = arith.constant dense<0.000000e+00> : vector<256xf32>
    %490 = vector.multi_reduction <add>, %489, %cst_185 [0] : vector<4x256xf32> to vector<256xf32>
    %491 = vector.shape_cast %490 : vector<256xf32> to vector<1x256xf32>
    %492 = arith.mulf %491, %447 : vector<1x256xf32>
    %c0_186 = arith.constant 0 : index
    %c51 = arith.constant 51 : index
    %c0_187 = arith.constant 0 : index
    %493 = vector.load %arg4[%c0_186, %c51, %c0_187] : memref<2x81x256xf32, #tpu.memory_space<vmem>>, vector<1x1x256xf32>
    %494 = vector.shape_cast %493 : vector<1x1x256xf32> to vector<1x256xf32>
    %495 = vector.shape_cast %492 : vector<1x256xf32> to vector<1x1x256xf32>
    tpu.vector_store %arg4[%c0_186, %c51, %c0_187], %495 {strides = array<i32>} : memref<2x81x256xf32, #tpu.memory_space<vmem>>, vector<1x1x256xf32>,
    %496 = vector.extract_strided_slice %8 {offsets = [0, 102], sizes = [4, 256], strides = [1, 1]} : vector<4x392xf32> to vector<4x256xf32>
    %497 = arith.mulf %6, %496 : vector<4x256xf32>
    %cst_188 = arith.constant dense<0.000000e+00> : vector<256xf32>
    %498 = vector.multi_reduction <add>, %497, %cst_188 [0] : vector<4x256xf32> to vector<256xf32>
    %499 = vector.shape_cast %498 : vector<256xf32> to vector<1x256xf32>
    %500 = arith.mulf %499, %447 : vector<1x256xf32>
    %c0_189 = arith.constant 0 : index
    %c60 = arith.constant 60 : index
    %c0_190 = arith.constant 0 : index
    %501 = vector.load %arg4[%c0_189, %c60, %c0_190] : memref<2x81x256xf32, #tpu.memory_space<vmem>>, vector<1x1x256xf32>
    %502 = vector.shape_cast %501 : vector<1x1x256xf32> to vector<1x256xf32>
    %503 = vector.shape_cast %500 : vector<1x256xf32> to vector<1x1x256xf32>
    tpu.vector_store %arg4[%c0_189, %c60, %c0_190], %503 {strides = array<i32>} : memref<2x81x256xf32, #tpu.memory_space<vmem>>, vector<1x1x256xf32>,
    %504 = vector.extract_strided_slice %8 {offsets = [0, 118], sizes = [4, 256], strides = [1, 1]} : vector<4x392xf32> to vector<4x256xf32>
    %505 = arith.mulf %6, %504 : vector<4x256xf32>
    %cst_191 = arith.constant dense<0.000000e+00> : vector<256xf32>
    %506 = vector.multi_reduction <add>, %505, %cst_191 [0] : vector<4x256xf32> to vector<256xf32>
    %507 = vector.shape_cast %506 : vector<256xf32> to vector<1x256xf32>
    %508 = arith.mulf %507, %447 : vector<1x256xf32>
    %c0_192 = arith.constant 0 : index
    %c69 = arith.constant 69 : index
    %c0_193 = arith.constant 0 : index
    %509 = vector.load %arg4[%c0_192, %c69, %c0_193] : memref<2x81x256xf32, #tpu.memory_space<vmem>>, vector<1x1x256xf32>
    %510 = vector.shape_cast %509 : vector<1x1x256xf32> to vector<1x256xf32>
    %511 = vector.shape_cast %508 : vector<1x256xf32> to vector<1x1x256xf32>
    tpu.vector_store %arg4[%c0_192, %c69, %c0_193], %511 {strides = array<i32>} : memref<2x81x256xf32, #tpu.memory_space<vmem>>, vector<1x1x256xf32>,
    %512 = vector.extract_strided_slice %8 {offsets = [0, 134], sizes = [4, 256], strides = [1, 1]} : vector<4x392xf32> to vector<4x256xf32>
    %513 = arith.mulf %6, %512 : vector<4x256xf32>
    %cst_194 = arith.constant dense<0.000000e+00> : vector<256xf32>
    %514 = vector.multi_reduction <add>, %513, %cst_194 [0] : vector<4x256xf32> to vector<256xf32>
    %515 = vector.shape_cast %514 : vector<256xf32> to vector<1x256xf32>
    %516 = arith.mulf %515, %447 : vector<1x256xf32>
    %c0_195 = arith.constant 0 : index
    %c78 = arith.constant 78 : index
    %c0_196 = arith.constant 0 : index
    %517 = vector.load %arg4[%c0_195, %c78, %c0_196] : memref<2x81x256xf32, #tpu.memory_space<vmem>>, vector<1x1x256xf32>
    %518 = vector.shape_cast %517 : vector<1x1x256xf32> to vector<1x256xf32>
    %519 = vector.shape_cast %516 : vector<1x256xf32> to vector<1x1x256xf32>
    tpu.vector_store %arg4[%c0_195, %c78, %c0_196], %519 {strides = array<i32>} : memref<2x81x256xf32, #tpu.memory_space<vmem>>, vector<1x1x256xf32>,
    %520 = vector.extract_strided_slice %4 {offsets = [7, 0], sizes = [1, 256], strides = [1, 1]} : vector<9x256xf32> to vector<1x256xf32>
    %521 = vector.extract_strided_slice %8 {offsets = [0, 7], sizes = [4, 256], strides = [1, 1]} : vector<4x392xf32> to vector<4x256xf32>
    %522 = arith.mulf %6, %521 : vector<4x256xf32>
    %cst_197 = arith.constant dense<0.000000e+00> : vector<256xf32>
    %523 = vector.multi_reduction <add>, %522, %cst_197 [0] : vector<4x256xf32> to vector<256xf32>
    %524 = vector.shape_cast %523 : vector<256xf32> to vector<1x256xf32>
    %525 = arith.mulf %524, %520 : vector<1x256xf32>
    %c0_198 = arith.constant 0 : index
    %c7 = arith.constant 7 : index
    %c0_199 = arith.constant 0 : index
    %526 = vector.load %arg4[%c0_198, %c7, %c0_199] : memref<2x81x256xf32, #tpu.memory_space<vmem>>, vector<1x1x256xf32>
    %527 = vector.shape_cast %526 : vector<1x1x256xf32> to vector<1x256xf32>
    %528 = vector.shape_cast %525 : vector<1x256xf32> to vector<1x1x256xf32>
    tpu.vector_store %arg4[%c0_198, %c7, %c0_199], %528 {strides = array<i32>} : memref<2x81x256xf32, #tpu.memory_space<vmem>>, vector<1x1x256xf32>,
    %529 = vector.extract_strided_slice %8 {offsets = [0, 23], sizes = [4, 256], strides = [1, 1]} : vector<4x392xf32> to vector<4x256xf32>
    %530 = arith.mulf %6, %529 : vector<4x256xf32>
    %cst_200 = arith.constant dense<0.000000e+00> : vector<256xf32>
    %531 = vector.multi_reduction <add>, %530, %cst_200 [0] : vector<4x256xf32> to vector<256xf32>
    %532 = vector.shape_cast %531 : vector<256xf32> to vector<1x256xf32>
    %533 = arith.mulf %532, %520 : vector<1x256xf32>
    %c0_201 = arith.constant 0 : index
    %c16 = arith.constant 16 : index
    %c0_202 = arith.constant 0 : index
    %534 = vector.load %arg4[%c0_201, %c16, %c0_202] : memref<2x81x256xf32, #tpu.memory_space<vmem>>, vector<1x1x256xf32>
    %535 = vector.shape_cast %534 : vector<1x1x256xf32> to vector<1x256xf32>
    %536 = vector.shape_cast %533 : vector<1x256xf32> to vector<1x1x256xf32>
    tpu.vector_store %arg4[%c0_201, %c16, %c0_202], %536 {strides = array<i32>} : memref<2x81x256xf32, #tpu.memory_space<vmem>>, vector<1x1x256xf32>,
    %537 = vector.extract_strided_slice %8 {offsets = [0, 39], sizes = [4, 256], strides = [1, 1]} : vector<4x392xf32> to vector<4x256xf32>
    %538 = arith.mulf %6, %537 : vector<4x256xf32>
    %cst_203 = arith.constant dense<0.000000e+00> : vector<256xf32>
    %539 = vector.multi_reduction <add>, %538, %cst_203 [0] : vector<4x256xf32> to vector<256xf32>
    %540 = vector.shape_cast %539 : vector<256xf32> to vector<1x256xf32>
    %541 = arith.mulf %540, %520 : vector<1x256xf32>
    %c0_204 = arith.constant 0 : index
    %c25 = arith.constant 25 : index
    %c0_205 = arith.constant 0 : index
    %542 = vector.load %arg4[%c0_204, %c25, %c0_205] : memref<2x81x256xf32, #tpu.memory_space<vmem>>, vector<1x1x256xf32>
    %543 = vector.shape_cast %542 : vector<1x1x256xf32> to vector<1x256xf32>
    %544 = vector.shape_cast %541 : vector<1x256xf32> to vector<1x1x256xf32>
    tpu.vector_store %arg4[%c0_204, %c25, %c0_205], %544 {strides = array<i32>} : memref<2x81x256xf32, #tpu.memory_space<vmem>>, vector<1x1x256xf32>,
    %545 = vector.extract_strided_slice %8 {offsets = [0, 55], sizes = [4, 256], strides = [1, 1]} : vector<4x392xf32> to vector<4x256xf32>
    %546 = arith.mulf %6, %545 : vector<4x256xf32>
    %cst_206 = arith.constant dense<0.000000e+00> : vector<256xf32>
    %547 = vector.multi_reduction <add>, %546, %cst_206 [0] : vector<4x256xf32> to vector<256xf32>
    %548 = vector.shape_cast %547 : vector<256xf32> to vector<1x256xf32>
    %549 = arith.mulf %548, %520 : vector<1x256xf32>
    %c0_207 = arith.constant 0 : index
    %c34 = arith.constant 34 : index
    %c0_208 = arith.constant 0 : index
    %550 = vector.load %arg4[%c0_207, %c34, %c0_208] : memref<2x81x256xf32, #tpu.memory_space<vmem>>, vector<1x1x256xf32>
    %551 = vector.shape_cast %550 : vector<1x1x256xf32> to vector<1x256xf32>
    %552 = vector.shape_cast %549 : vector<1x256xf32> to vector<1x1x256xf32>
    tpu.vector_store %arg4[%c0_207, %c34, %c0_208], %552 {strides = array<i32>} : memref<2x81x256xf32, #tpu.memory_space<vmem>>, vector<1x1x256xf32>,
    %553 = vector.extract_strided_slice %8 {offsets = [0, 71], sizes = [4, 256], strides = [1, 1]} : vector<4x392xf32> to vector<4x256xf32>
    %554 = arith.mulf %6, %553 : vector<4x256xf32>
    %cst_209 = arith.constant dense<0.000000e+00> : vector<256xf32>
    %555 = vector.multi_reduction <add>, %554, %cst_209 [0] : vector<4x256xf32> to vector<256xf32>
    %556 = vector.shape_cast %555 : vector<256xf32> to vector<1x256xf32>
    %557 = arith.mulf %556, %520 : vector<1x256xf32>
    %c0_210 = arith.constant 0 : index
    %c43 = arith.constant 43 : index
    %c0_211 = arith.constant 0 : index
    %558 = vector.load %arg4[%c0_210, %c43, %c0_211] : memref<2x81x256xf32, #tpu.memory_space<vmem>>, vector<1x1x256xf32>
    %559 = vector.shape_cast %558 : vector<1x1x256xf32> to vector<1x256xf32>
    %560 = vector.shape_cast %557 : vector<1x256xf32> to vector<1x1x256xf32>
    tpu.vector_store %arg4[%c0_210, %c43, %c0_211], %560 {strides = array<i32>} : memref<2x81x256xf32, #tpu.memory_space<vmem>>, vector<1x1x256xf32>,
    %561 = vector.extract_strided_slice %8 {offsets = [0, 87], sizes = [4, 256], strides = [1, 1]} : vector<4x392xf32> to vector<4x256xf32>
    %562 = arith.mulf %6, %561 : vector<4x256xf32>
    %cst_212 = arith.constant dense<0.000000e+00> : vector<256xf32>
    %563 = vector.multi_reduction <add>, %562, %cst_212 [0] : vector<4x256xf32> to vector<256xf32>
    %564 = vector.shape_cast %563 : vector<256xf32> to vector<1x256xf32>
    %565 = arith.mulf %564, %520 : vector<1x256xf32>
    %c0_213 = arith.constant 0 : index
    %c52 = arith.constant 52 : index
    %c0_214 = arith.constant 0 : index
    %566 = vector.load %arg4[%c0_213, %c52, %c0_214] : memref<2x81x256xf32, #tpu.memory_space<vmem>>, vector<1x1x256xf32>
    %567 = vector.shape_cast %566 : vector<1x1x256xf32> to vector<1x256xf32>
    %568 = vector.shape_cast %565 : vector<1x256xf32> to vector<1x1x256xf32>
    tpu.vector_store %arg4[%c0_213, %c52, %c0_214], %568 {strides = array<i32>} : memref<2x81x256xf32, #tpu.memory_space<vmem>>, vector<1x1x256xf32>,
    %569 = vector.extract_strided_slice %8 {offsets = [0, 103], sizes = [4, 256], strides = [1, 1]} : vector<4x392xf32> to vector<4x256xf32>
    %570 = arith.mulf %6, %569 : vector<4x256xf32>
    %cst_215 = arith.constant dense<0.000000e+00> : vector<256xf32>
    %571 = vector.multi_reduction <add>, %570, %cst_215 [0] : vector<4x256xf32> to vector<256xf32>
    %572 = vector.shape_cast %571 : vector<256xf32> to vector<1x256xf32>
    %573 = arith.mulf %572, %520 : vector<1x256xf32>
    %c0_216 = arith.constant 0 : index
    %c61 = arith.constant 61 : index
    %c0_217 = arith.constant 0 : index
    %574 = vector.load %arg4[%c0_216, %c61, %c0_217] : memref<2x81x256xf32, #tpu.memory_space<vmem>>, vector<1x1x256xf32>
    %575 = vector.shape_cast %574 : vector<1x1x256xf32> to vector<1x256xf32>
    %576 = vector.shape_cast %573 : vector<1x256xf32> to vector<1x1x256xf32>
    tpu.vector_store %arg4[%c0_216, %c61, %c0_217], %576 {strides = array<i32>} : memref<2x81x256xf32, #tpu.memory_space<vmem>>, vector<1x1x256xf32>,
    %577 = vector.extract_strided_slice %8 {offsets = [0, 119], sizes = [4, 256], strides = [1, 1]} : vector<4x392xf32> to vector<4x256xf32>
    %578 = arith.mulf %6, %577 : vector<4x256xf32>
    %cst_218 = arith.constant dense<0.000000e+00> : vector<256xf32>
    %579 = vector.multi_reduction <add>, %578, %cst_218 [0] : vector<4x256xf32> to vector<256xf32>
    %580 = vector.shape_cast %579 : vector<256xf32> to vector<1x256xf32>
    %581 = arith.mulf %580, %520 : vector<1x256xf32>
    %c0_219 = arith.constant 0 : index
    %c70 = arith.constant 70 : index
    %c0_220 = arith.constant 0 : index
    %582 = vector.load %arg4[%c0_219, %c70, %c0_220] : memref<2x81x256xf32, #tpu.memory_space<vmem>>, vector<1x1x256xf32>
    %583 = vector.shape_cast %582 : vector<1x1x256xf32> to vector<1x256xf32>
    %584 = vector.shape_cast %581 : vector<1x256xf32> to vector<1x1x256xf32>
    tpu.vector_store %arg4[%c0_219, %c70, %c0_220], %584 {strides = array<i32>} : memref<2x81x256xf32, #tpu.memory_space<vmem>>, vector<1x1x256xf32>,
    %585 = vector.extract_strided_slice %8 {offsets = [0, 135], sizes = [4, 256], strides = [1, 1]} : vector<4x392xf32> to vector<4x256xf32>
    %586 = arith.mulf %6, %585 : vector<4x256xf32>
    %cst_221 = arith.constant dense<0.000000e+00> : vector<256xf32>
    %587 = vector.multi_reduction <add>, %586, %cst_221 [0] : vector<4x256xf32> to vector<256xf32>
    %588 = vector.shape_cast %587 : vector<256xf32> to vector<1x256xf32>
    %589 = arith.mulf %588, %520 : vector<1x256xf32>
    %c0_222 = arith.constant 0 : index
    %c79 = arith.constant 79 : index
    %c0_223 = arith.constant 0 : index
    %590 = vector.load %arg4[%c0_222, %c79, %c0_223] : memref<2x81x256xf32, #tpu.memory_space<vmem>>, vector<1x1x256xf32>
    %591 = vector.shape_cast %590 : vector<1x1x256xf32> to vector<1x256xf32>
    %592 = vector.shape_cast %589 : vector<1x256xf32> to vector<1x1x256xf32>
    tpu.vector_store %arg4[%c0_222, %c79, %c0_223], %592 {strides = array<i32>} : memref<2x81x256xf32, #tpu.memory_space<vmem>>, vector<1x1x256xf32>,
    %593 = vector.extract_strided_slice %4 {offsets = [8, 0], sizes = [1, 256], strides = [1, 1]} : vector<9x256xf32> to vector<1x256xf32>
    %594 = vector.extract_strided_slice %8 {offsets = [0, 8], sizes = [4, 256], strides = [1, 1]} : vector<4x392xf32> to vector<4x256xf32>
    %595 = arith.mulf %6, %594 : vector<4x256xf32>
    %cst_224 = arith.constant dense<0.000000e+00> : vector<256xf32>
    %596 = vector.multi_reduction <add>, %595, %cst_224 [0] : vector<4x256xf32> to vector<256xf32>
    %597 = vector.shape_cast %596 : vector<256xf32> to vector<1x256xf32>
    %598 = arith.mulf %597, %593 : vector<1x256xf32>
    %c0_225 = arith.constant 0 : index
    %c8 = arith.constant 8 : index
    %c0_226 = arith.constant 0 : index
    %599 = vector.load %arg4[%c0_225, %c8, %c0_226] : memref<2x81x256xf32, #tpu.memory_space<vmem>>, vector<1x1x256xf32>
    %600 = vector.shape_cast %599 : vector<1x1x256xf32> to vector<1x256xf32>
    %601 = vector.shape_cast %598 : vector<1x256xf32> to vector<1x1x256xf32>
    tpu.vector_store %arg4[%c0_225, %c8, %c0_226], %601 {strides = array<i32>} : memref<2x81x256xf32, #tpu.memory_space<vmem>>, vector<1x1x256xf32>,
    %602 = vector.extract_strided_slice %8 {offsets = [0, 24], sizes = [4, 256], strides = [1, 1]} : vector<4x392xf32> to vector<4x256xf32>
    %603 = arith.mulf %6, %602 : vector<4x256xf32>
    %cst_227 = arith.constant dense<0.000000e+00> : vector<256xf32>
    %604 = vector.multi_reduction <add>, %603, %cst_227 [0] : vector<4x256xf32> to vector<256xf32>
    %605 = vector.shape_cast %604 : vector<256xf32> to vector<1x256xf32>
    %606 = arith.mulf %605, %593 : vector<1x256xf32>
    %c0_228 = arith.constant 0 : index
    %c17 = arith.constant 17 : index
    %c0_229 = arith.constant 0 : index
    %607 = vector.load %arg4[%c0_228, %c17, %c0_229] : memref<2x81x256xf32, #tpu.memory_space<vmem>>, vector<1x1x256xf32>
    %608 = vector.shape_cast %607 : vector<1x1x256xf32> to vector<1x256xf32>
    %609 = vector.shape_cast %606 : vector<1x256xf32> to vector<1x1x256xf32>
    tpu.vector_store %arg4[%c0_228, %c17, %c0_229], %609 {strides = array<i32>} : memref<2x81x256xf32, #tpu.memory_space<vmem>>, vector<1x1x256xf32>,
    %610 = vector.extract_strided_slice %8 {offsets = [0, 40], sizes = [4, 256], strides = [1, 1]} : vector<4x392xf32> to vector<4x256xf32>
    %611 = arith.mulf %6, %610 : vector<4x256xf32>
    %cst_230 = arith.constant dense<0.000000e+00> : vector<256xf32>
    %612 = vector.multi_reduction <add>, %611, %cst_230 [0] : vector<4x256xf32> to vector<256xf32>
    %613 = vector.shape_cast %612 : vector<256xf32> to vector<1x256xf32>
    %614 = arith.mulf %613, %593 : vector<1x256xf32>
    %c0_231 = arith.constant 0 : index
    %c26 = arith.constant 26 : index
    %c0_232 = arith.constant 0 : index
    %615 = vector.load %arg4[%c0_231, %c26, %c0_232] : memref<2x81x256xf32, #tpu.memory_space<vmem>>, vector<1x1x256xf32>
    %616 = vector.shape_cast %615 : vector<1x1x256xf32> to vector<1x256xf32>
    %617 = vector.shape_cast %614 : vector<1x256xf32> to vector<1x1x256xf32>
    tpu.vector_store %arg4[%c0_231, %c26, %c0_232], %617 {strides = array<i32>} : memref<2x81x256xf32, #tpu.memory_space<vmem>>, vector<1x1x256xf32>,
    %618 = vector.extract_strided_slice %8 {offsets = [0, 56], sizes = [4, 256], strides = [1, 1]} : vector<4x392xf32> to vector<4x256xf32>
    %619 = arith.mulf %6, %618 : vector<4x256xf32>
    %cst_233 = arith.constant dense<0.000000e+00> : vector<256xf32>
    %620 = vector.multi_reduction <add>, %619, %cst_233 [0] : vector<4x256xf32> to vector<256xf32>
    %621 = vector.shape_cast %620 : vector<256xf32> to vector<1x256xf32>
    %622 = arith.mulf %621, %593 : vector<1x256xf32>
    %c0_234 = arith.constant 0 : index
    %c35 = arith.constant 35 : index
    %c0_235 = arith.constant 0 : index
    %623 = vector.load %arg4[%c0_234, %c35, %c0_235] : memref<2x81x256xf32, #tpu.memory_space<vmem>>, vector<1x1x256xf32>
    %624 = vector.shape_cast %623 : vector<1x1x256xf32> to vector<1x256xf32>
    %625 = vector.shape_cast %622 : vector<1x256xf32> to vector<1x1x256xf32>
    tpu.vector_store %arg4[%c0_234, %c35, %c0_235], %625 {strides = array<i32>} : memref<2x81x256xf32, #tpu.memory_space<vmem>>, vector<1x1x256xf32>,
    %626 = vector.extract_strided_slice %8 {offsets = [0, 72], sizes = [4, 256], strides = [1, 1]} : vector<4x392xf32> to vector<4x256xf32>
    %627 = arith.mulf %6, %626 : vector<4x256xf32>
    %cst_236 = arith.constant dense<0.000000e+00> : vector<256xf32>
    %628 = vector.multi_reduction <add>, %627, %cst_236 [0] : vector<4x256xf32> to vector<256xf32>
    %629 = vector.shape_cast %628 : vector<256xf32> to vector<1x256xf32>
    %630 = arith.mulf %629, %593 : vector<1x256xf32>
    %c0_237 = arith.constant 0 : index
    %c44 = arith.constant 44 : index
    %c0_238 = arith.constant 0 : index
    %631 = vector.load %arg4[%c0_237, %c44, %c0_238] : memref<2x81x256xf32, #tpu.memory_space<vmem>>, vector<1x1x256xf32>
    %632 = vector.shape_cast %631 : vector<1x1x256xf32> to vector<1x256xf32>
    %633 = vector.shape_cast %630 : vector<1x256xf32> to vector<1x1x256xf32>
    tpu.vector_store %arg4[%c0_237, %c44, %c0_238], %633 {strides = array<i32>} : memref<2x81x256xf32, #tpu.memory_space<vmem>>, vector<1x1x256xf32>,
    %634 = vector.extract_strided_slice %8 {offsets = [0, 88], sizes = [4, 256], strides = [1, 1]} : vector<4x392xf32> to vector<4x256xf32>
    %635 = arith.mulf %6, %634 : vector<4x256xf32>
    %cst_239 = arith.constant dense<0.000000e+00> : vector<256xf32>
    %636 = vector.multi_reduction <add>, %635, %cst_239 [0] : vector<4x256xf32> to vector<256xf32>
    %637 = vector.shape_cast %636 : vector<256xf32> to vector<1x256xf32>
    %638 = arith.mulf %637, %593 : vector<1x256xf32>
    %c0_240 = arith.constant 0 : index
    %c53 = arith.constant 53 : index
    %c0_241 = arith.constant 0 : index
    %639 = vector.load %arg4[%c0_240, %c53, %c0_241] : memref<2x81x256xf32, #tpu.memory_space<vmem>>, vector<1x1x256xf32>
    %640 = vector.shape_cast %639 : vector<1x1x256xf32> to vector<1x256xf32>
    %641 = vector.shape_cast %638 : vector<1x256xf32> to vector<1x1x256xf32>
    tpu.vector_store %arg4[%c0_240, %c53, %c0_241], %641 {strides = array<i32>} : memref<2x81x256xf32, #tpu.memory_space<vmem>>, vector<1x1x256xf32>,
    %642 = vector.extract_strided_slice %8 {offsets = [0, 104], sizes = [4, 256], strides = [1, 1]} : vector<4x392xf32> to vector<4x256xf32>
    %643 = arith.mulf %6, %642 : vector<4x256xf32>
    %cst_242 = arith.constant dense<0.000000e+00> : vector<256xf32>
    %644 = vector.multi_reduction <add>, %643, %cst_242 [0] : vector<4x256xf32> to vector<256xf32>
    %645 = vector.shape_cast %644 : vector<256xf32> to vector<1x256xf32>
    %646 = arith.mulf %645, %593 : vector<1x256xf32>
    %c0_243 = arith.constant 0 : index
    %c62 = arith.constant 62 : index
    %c0_244 = arith.constant 0 : index
    %647 = vector.load %arg4[%c0_243, %c62, %c0_244] : memref<2x81x256xf32, #tpu.memory_space<vmem>>, vector<1x1x256xf32>
    %648 = vector.shape_cast %647 : vector<1x1x256xf32> to vector<1x256xf32>
    %649 = vector.shape_cast %646 : vector<1x256xf32> to vector<1x1x256xf32>
    tpu.vector_store %arg4[%c0_243, %c62, %c0_244], %649 {strides = array<i32>} : memref<2x81x256xf32, #tpu.memory_space<vmem>>, vector<1x1x256xf32>,
    %650 = vector.extract_strided_slice %8 {offsets = [0, 120], sizes = [4, 256], strides = [1, 1]} : vector<4x392xf32> to vector<4x256xf32>
    %651 = arith.mulf %6, %650 : vector<4x256xf32>
    %cst_245 = arith.constant dense<0.000000e+00> : vector<256xf32>
    %652 = vector.multi_reduction <add>, %651, %cst_245 [0] : vector<4x256xf32> to vector<256xf32>
    %653 = vector.shape_cast %652 : vector<256xf32> to vector<1x256xf32>
    %654 = arith.mulf %653, %593 : vector<1x256xf32>
    %c0_246 = arith.constant 0 : index
    %c71 = arith.constant 71 : index
    %c0_247 = arith.constant 0 : index
    %655 = vector.load %arg4[%c0_246, %c71, %c0_247] : memref<2x81x256xf32, #tpu.memory_space<vmem>>, vector<1x1x256xf32>
    %656 = vector.shape_cast %655 : vector<1x1x256xf32> to vector<1x256xf32>
    %657 = vector.shape_cast %654 : vector<1x256xf32> to vector<1x1x256xf32>
    tpu.vector_store %arg4[%c0_246, %c71, %c0_247], %657 {strides = array<i32>} : memref<2x81x256xf32, #tpu.memory_space<vmem>>, vector<1x1x256xf32>,
    %658 = vector.extract_strided_slice %8 {offsets = [0, 136], sizes = [4, 256], strides = [1, 1]} : vector<4x392xf32> to vector<4x256xf32>
    %659 = arith.mulf %6, %658 : vector<4x256xf32>
    %cst_248 = arith.constant dense<0.000000e+00> : vector<256xf32>
    %660 = vector.multi_reduction <add>, %659, %cst_248 [0] : vector<4x256xf32> to vector<256xf32>
    %661 = vector.shape_cast %660 : vector<256xf32> to vector<1x256xf32>
    %662 = arith.mulf %661, %593 : vector<1x256xf32>
    %c0_249 = arith.constant 0 : index
    %c80 = arith.constant 80 : index
    %c0_250 = arith.constant 0 : index
    %663 = vector.load %arg4[%c0_249, %c80, %c0_250] : memref<2x81x256xf32, #tpu.memory_space<vmem>>, vector<1x1x256xf32>
    %664 = vector.shape_cast %663 : vector<1x1x256xf32> to vector<1x256xf32>
    %665 = vector.shape_cast %662 : vector<1x256xf32> to vector<1x1x256xf32>
    tpu.vector_store %arg4[%c0_249, %c80, %c0_250], %665 {strides = array<i32>} : memref<2x81x256xf32, #tpu.memory_space<vmem>>, vector<1x1x256xf32>,
    %666 = vector.extract_strided_slice %2 {offsets = [1, 0, 0], sizes = [1, 4, 256], strides = [1, 1, 1]} : vector<2x4x256xf32> to vector<1x4x256xf32>
    %667 = vector.shape_cast %666 : vector<1x4x256xf32> to vector<4x256xf32>
    %668 = vector.extract_strided_slice %3 {offsets = [1, 0, 0], sizes = [1, 4, 392], strides = [1, 1, 1]} : vector<2x4x392xf32> to vector<1x4x392xf32>
    %669 = vector.shape_cast %668 : vector<1x4x392xf32> to vector<4x392xf32>
    %670 = vector.extract_strided_slice %4 {offsets = [0, 0], sizes = [1, 256], strides = [1, 1]} : vector<9x256xf32> to vector<1x256xf32>
    %671 = vector.extract_strided_slice %669 {offsets = [0, 0], sizes = [4, 256], strides = [1, 1]} : vector<4x392xf32> to vector<4x256xf32>
    %672 = arith.mulf %667, %671 : vector<4x256xf32>
    %cst_251 = arith.constant dense<0.000000e+00> : vector<256xf32>
    %673 = vector.multi_reduction <add>, %672, %cst_251 [0] : vector<4x256xf32> to vector<256xf32>
    %674 = vector.shape_cast %673 : vector<256xf32> to vector<1x256xf32>
    %675 = arith.mulf %674, %670 : vector<1x256xf32>
    %c1_252 = arith.constant 1 : index
    %c0_253 = arith.constant 0 : index
    %c0_254 = arith.constant 0 : index
    %676 = vector.load %arg4[%c1_252, %c0_253, %c0_254] : memref<2x81x256xf32, #tpu.memory_space<vmem>>, vector<1x1x256xf32>
    %677 = vector.shape_cast %676 : vector<1x1x256xf32> to vector<1x256xf32>
    %678 = vector.shape_cast %675 : vector<1x256xf32> to vector<1x1x256xf32>
    tpu.vector_store %arg4[%c1_252, %c0_253, %c0_254], %678 {strides = array<i32>} : memref<2x81x256xf32, #tpu.memory_space<vmem>>, vector<1x1x256xf32>,
    %679 = vector.extract_strided_slice %669 {offsets = [0, 16], sizes = [4, 256], strides = [1, 1]} : vector<4x392xf32> to vector<4x256xf32>
    %680 = arith.mulf %667, %679 : vector<4x256xf32>
    %cst_255 = arith.constant dense<0.000000e+00> : vector<256xf32>
    %681 = vector.multi_reduction <add>, %680, %cst_255 [0] : vector<4x256xf32> to vector<256xf32>
    %682 = vector.shape_cast %681 : vector<256xf32> to vector<1x256xf32>
    %683 = arith.mulf %682, %670 : vector<1x256xf32>
    %c1_256 = arith.constant 1 : index
    %c9_257 = arith.constant 9 : index
    %c0_258 = arith.constant 0 : index
    %684 = vector.load %arg4[%c1_256, %c9_257, %c0_258] : memref<2x81x256xf32, #tpu.memory_space<vmem>>, vector<1x1x256xf32>
    %685 = vector.shape_cast %684 : vector<1x1x256xf32> to vector<1x256xf32>
    %686 = vector.shape_cast %683 : vector<1x256xf32> to vector<1x1x256xf32>
    tpu.vector_store %arg4[%c1_256, %c9_257, %c0_258], %686 {strides = array<i32>} : memref<2x81x256xf32, #tpu.memory_space<vmem>>, vector<1x1x256xf32>,
    %687 = vector.extract_strided_slice %669 {offsets = [0, 32], sizes = [4, 256], strides = [1, 1]} : vector<4x392xf32> to vector<4x256xf32>
    %688 = arith.mulf %667, %687 : vector<4x256xf32>
    %cst_259 = arith.constant dense<0.000000e+00> : vector<256xf32>
    %689 = vector.multi_reduction <add>, %688, %cst_259 [0] : vector<4x256xf32> to vector<256xf32>
    %690 = vector.shape_cast %689 : vector<256xf32> to vector<1x256xf32>
    %691 = arith.mulf %690, %670 : vector<1x256xf32>
    %c1_260 = arith.constant 1 : index
    %c18_261 = arith.constant 18 : index
    %c0_262 = arith.constant 0 : index
    %692 = vector.load %arg4[%c1_260, %c18_261, %c0_262] : memref<2x81x256xf32, #tpu.memory_space<vmem>>, vector<1x1x256xf32>
    %693 = vector.shape_cast %692 : vector<1x1x256xf32> to vector<1x256xf32>
    %694 = vector.shape_cast %691 : vector<1x256xf32> to vector<1x1x256xf32>
    tpu.vector_store %arg4[%c1_260, %c18_261, %c0_262], %694 {strides = array<i32>} : memref<2x81x256xf32, #tpu.memory_space<vmem>>, vector<1x1x256xf32>,
    %695 = vector.extract_strided_slice %669 {offsets = [0, 48], sizes = [4, 256], strides = [1, 1]} : vector<4x392xf32> to vector<4x256xf32>
    %696 = arith.mulf %667, %695 : vector<4x256xf32>
    %cst_263 = arith.constant dense<0.000000e+00> : vector<256xf32>
    %697 = vector.multi_reduction <add>, %696, %cst_263 [0] : vector<4x256xf32> to vector<256xf32>
    %698 = vector.shape_cast %697 : vector<256xf32> to vector<1x256xf32>
    %699 = arith.mulf %698, %670 : vector<1x256xf32>
    %c1_264 = arith.constant 1 : index
    %c27_265 = arith.constant 27 : index
    %c0_266 = arith.constant 0 : index
    %700 = vector.load %arg4[%c1_264, %c27_265, %c0_266] : memref<2x81x256xf32, #tpu.memory_space<vmem>>, vector<1x1x256xf32>
    %701 = vector.shape_cast %700 : vector<1x1x256xf32> to vector<1x256xf32>
    %702 = vector.shape_cast %699 : vector<1x256xf32> to vector<1x1x256xf32>
    tpu.vector_store %arg4[%c1_264, %c27_265, %c0_266], %702 {strides = array<i32>} : memref<2x81x256xf32, #tpu.memory_space<vmem>>, vector<1x1x256xf32>,
    %703 = vector.extract_strided_slice %669 {offsets = [0, 64], sizes = [4, 256], strides = [1, 1]} : vector<4x392xf32> to vector<4x256xf32>
    %704 = arith.mulf %667, %703 : vector<4x256xf32>
    %cst_267 = arith.constant dense<0.000000e+00> : vector<256xf32>
    %705 = vector.multi_reduction <add>, %704, %cst_267 [0] : vector<4x256xf32> to vector<256xf32>
    %706 = vector.shape_cast %705 : vector<256xf32> to vector<1x256xf32>
    %707 = arith.mulf %706, %670 : vector<1x256xf32>
    %c1_268 = arith.constant 1 : index
    %c36_269 = arith.constant 36 : index
    %c0_270 = arith.constant 0 : index
    %708 = vector.load %arg4[%c1_268, %c36_269, %c0_270] : memref<2x81x256xf32, #tpu.memory_space<vmem>>, vector<1x1x256xf32>
    %709 = vector.shape_cast %708 : vector<1x1x256xf32> to vector<1x256xf32>
    %710 = vector.shape_cast %707 : vector<1x256xf32> to vector<1x1x256xf32>
    tpu.vector_store %arg4[%c1_268, %c36_269, %c0_270], %710 {strides = array<i32>} : memref<2x81x256xf32, #tpu.memory_space<vmem>>, vector<1x1x256xf32>,
    %711 = vector.extract_strided_slice %669 {offsets = [0, 80], sizes = [4, 256], strides = [1, 1]} : vector<4x392xf32> to vector<4x256xf32>
    %712 = arith.mulf %667, %711 : vector<4x256xf32>
    %cst_271 = arith.constant dense<0.000000e+00> : vector<256xf32>
    %713 = vector.multi_reduction <add>, %712, %cst_271 [0] : vector<4x256xf32> to vector<256xf32>
    %714 = vector.shape_cast %713 : vector<256xf32> to vector<1x256xf32>
    %715 = arith.mulf %714, %670 : vector<1x256xf32>
    %c1_272 = arith.constant 1 : index
    %c45_273 = arith.constant 45 : index
    %c0_274 = arith.constant 0 : index
    %716 = vector.load %arg4[%c1_272, %c45_273, %c0_274] : memref<2x81x256xf32, #tpu.memory_space<vmem>>, vector<1x1x256xf32>
    %717 = vector.shape_cast %716 : vector<1x1x256xf32> to vector<1x256xf32>
    %718 = vector.shape_cast %715 : vector<1x256xf32> to vector<1x1x256xf32>
    tpu.vector_store %arg4[%c1_272, %c45_273, %c0_274], %718 {strides = array<i32>} : memref<2x81x256xf32, #tpu.memory_space<vmem>>, vector<1x1x256xf32>,
    %719 = vector.extract_strided_slice %669 {offsets = [0, 96], sizes = [4, 256], strides = [1, 1]} : vector<4x392xf32> to vector<4x256xf32>
    %720 = arith.mulf %667, %719 : vector<4x256xf32>
    %cst_275 = arith.constant dense<0.000000e+00> : vector<256xf32>
    %721 = vector.multi_reduction <add>, %720, %cst_275 [0] : vector<4x256xf32> to vector<256xf32>
    %722 = vector.shape_cast %721 : vector<256xf32> to vector<1x256xf32>
    %723 = arith.mulf %722, %670 : vector<1x256xf32>
    %c1_276 = arith.constant 1 : index
    %c54_277 = arith.constant 54 : index
    %c0_278 = arith.constant 0 : index
    %724 = vector.load %arg4[%c1_276, %c54_277, %c0_278] : memref<2x81x256xf32, #tpu.memory_space<vmem>>, vector<1x1x256xf32>
    %725 = vector.shape_cast %724 : vector<1x1x256xf32> to vector<1x256xf32>
    %726 = vector.shape_cast %723 : vector<1x256xf32> to vector<1x1x256xf32>
    tpu.vector_store %arg4[%c1_276, %c54_277, %c0_278], %726 {strides = array<i32>} : memref<2x81x256xf32, #tpu.memory_space<vmem>>, vector<1x1x256xf32>,
    %727 = vector.extract_strided_slice %669 {offsets = [0, 112], sizes = [4, 256], strides = [1, 1]} : vector<4x392xf32> to vector<4x256xf32>
    %728 = arith.mulf %667, %727 : vector<4x256xf32>
    %cst_279 = arith.constant dense<0.000000e+00> : vector<256xf32>
    %729 = vector.multi_reduction <add>, %728, %cst_279 [0] : vector<4x256xf32> to vector<256xf32>
    %730 = vector.shape_cast %729 : vector<256xf32> to vector<1x256xf32>
    %731 = arith.mulf %730, %670 : vector<1x256xf32>
    %c1_280 = arith.constant 1 : index
    %c63_281 = arith.constant 63 : index
    %c0_282 = arith.constant 0 : index
    %732 = vector.load %arg4[%c1_280, %c63_281, %c0_282] : memref<2x81x256xf32, #tpu.memory_space<vmem>>, vector<1x1x256xf32>
    %733 = vector.shape_cast %732 : vector<1x1x256xf32> to vector<1x256xf32>
    %734 = vector.shape_cast %731 : vector<1x256xf32> to vector<1x1x256xf32>
    tpu.vector_store %arg4[%c1_280, %c63_281, %c0_282], %734 {strides = array<i32>} : memref<2x81x256xf32, #tpu.memory_space<vmem>>, vector<1x1x256xf32>,
    %735 = vector.extract_strided_slice %669 {offsets = [0, 128], sizes = [4, 256], strides = [1, 1]} : vector<4x392xf32> to vector<4x256xf32>
    %736 = arith.mulf %667, %735 : vector<4x256xf32>
    %cst_283 = arith.constant dense<0.000000e+00> : vector<256xf32>
    %737 = vector.multi_reduction <add>, %736, %cst_283 [0] : vector<4x256xf32> to vector<256xf32>
    %738 = vector.shape_cast %737 : vector<256xf32> to vector<1x256xf32>
    %739 = arith.mulf %738, %670 : vector<1x256xf32>
    %c1_284 = arith.constant 1 : index
    %c72_285 = arith.constant 72 : index
    %c0_286 = arith.constant 0 : index
    %740 = vector.load %arg4[%c1_284, %c72_285, %c0_286] : memref<2x81x256xf32, #tpu.memory_space<vmem>>, vector<1x1x256xf32>
    %741 = vector.shape_cast %740 : vector<1x1x256xf32> to vector<1x256xf32>
    %742 = vector.shape_cast %739 : vector<1x256xf32> to vector<1x1x256xf32>
    tpu.vector_store %arg4[%c1_284, %c72_285, %c0_286], %742 {strides = array<i32>} : memref<2x81x256xf32, #tpu.memory_space<vmem>>, vector<1x1x256xf32>,
    %743 = vector.extract_strided_slice %4 {offsets = [1, 0], sizes = [1, 256], strides = [1, 1]} : vector<9x256xf32> to vector<1x256xf32>
    %744 = vector.extract_strided_slice %669 {offsets = [0, 1], sizes = [4, 256], strides = [1, 1]} : vector<4x392xf32> to vector<4x256xf32>
    %745 = arith.mulf %667, %744 : vector<4x256xf32>
    %cst_287 = arith.constant dense<0.000000e+00> : vector<256xf32>
    %746 = vector.multi_reduction <add>, %745, %cst_287 [0] : vector<4x256xf32> to vector<256xf32>
    %747 = vector.shape_cast %746 : vector<256xf32> to vector<1x256xf32>
    %748 = arith.mulf %747, %743 : vector<1x256xf32>
    %c1_288 = arith.constant 1 : index
    %c1_289 = arith.constant 1 : index
    %c0_290 = arith.constant 0 : index
    %749 = vector.load %arg4[%c1_288, %c1_289, %c0_290] : memref<2x81x256xf32, #tpu.memory_space<vmem>>, vector<1x1x256xf32>
    %750 = vector.shape_cast %749 : vector<1x1x256xf32> to vector<1x256xf32>
    %751 = vector.shape_cast %748 : vector<1x256xf32> to vector<1x1x256xf32>
    tpu.vector_store %arg4[%c1_288, %c1_289, %c0_290], %751 {strides = array<i32>} : memref<2x81x256xf32, #tpu.memory_space<vmem>>, vector<1x1x256xf32>,
    %752 = vector.extract_strided_slice %669 {offsets = [0, 17], sizes = [4, 256], strides = [1, 1]} : vector<4x392xf32> to vector<4x256xf32>
    %753 = arith.mulf %667, %752 : vector<4x256xf32>
    %cst_291 = arith.constant dense<0.000000e+00> : vector<256xf32>
    %754 = vector.multi_reduction <add>, %753, %cst_291 [0] : vector<4x256xf32> to vector<256xf32>
    %755 = vector.shape_cast %754 : vector<256xf32> to vector<1x256xf32>
    %756 = arith.mulf %755, %743 : vector<1x256xf32>
    %c1_292 = arith.constant 1 : index
    %c10_293 = arith.constant 10 : index
    %c0_294 = arith.constant 0 : index
    %757 = vector.load %arg4[%c1_292, %c10_293, %c0_294] : memref<2x81x256xf32, #tpu.memory_space<vmem>>, vector<1x1x256xf32>
    %758 = vector.shape_cast %757 : vector<1x1x256xf32> to vector<1x256xf32>
    %759 = vector.shape_cast %756 : vector<1x256xf32> to vector<1x1x256xf32>
    tpu.vector_store %arg4[%c1_292, %c10_293, %c0_294], %759 {strides = array<i32>} : memref<2x81x256xf32, #tpu.memory_space<vmem>>, vector<1x1x256xf32>,
    %760 = vector.extract_strided_slice %669 {offsets = [0, 33], sizes = [4, 256], strides = [1, 1]} : vector<4x392xf32> to vector<4x256xf32>
    %761 = arith.mulf %667, %760 : vector<4x256xf32>
    %cst_295 = arith.constant dense<0.000000e+00> : vector<256xf32>
    %762 = vector.multi_reduction <add>, %761, %cst_295 [0] : vector<4x256xf32> to vector<256xf32>
    %763 = vector.shape_cast %762 : vector<256xf32> to vector<1x256xf32>
    %764 = arith.mulf %763, %743 : vector<1x256xf32>
    %c1_296 = arith.constant 1 : index
    %c19_297 = arith.constant 19 : index
    %c0_298 = arith.constant 0 : index
    %765 = vector.load %arg4[%c1_296, %c19_297, %c0_298] : memref<2x81x256xf32, #tpu.memory_space<vmem>>, vector<1x1x256xf32>
    %766 = vector.shape_cast %765 : vector<1x1x256xf32> to vector<1x256xf32>
    %767 = vector.shape_cast %764 : vector<1x256xf32> to vector<1x1x256xf32>
    tpu.vector_store %arg4[%c1_296, %c19_297, %c0_298], %767 {strides = array<i32>} : memref<2x81x256xf32, #tpu.memory_space<vmem>>, vector<1x1x256xf32>,
    %768 = vector.extract_strided_slice %669 {offsets = [0, 49], sizes = [4, 256], strides = [1, 1]} : vector<4x392xf32> to vector<4x256xf32>
    %769 = arith.mulf %667, %768 : vector<4x256xf32>
    %cst_299 = arith.constant dense<0.000000e+00> : vector<256xf32>
    %770 = vector.multi_reduction <add>, %769, %cst_299 [0] : vector<4x256xf32> to vector<256xf32>
    %771 = vector.shape_cast %770 : vector<256xf32> to vector<1x256xf32>
    %772 = arith.mulf %771, %743 : vector<1x256xf32>
    %c1_300 = arith.constant 1 : index
    %c28_301 = arith.constant 28 : index
    %c0_302 = arith.constant 0 : index
    %773 = vector.load %arg4[%c1_300, %c28_301, %c0_302] : memref<2x81x256xf32, #tpu.memory_space<vmem>>, vector<1x1x256xf32>
    %774 = vector.shape_cast %773 : vector<1x1x256xf32> to vector<1x256xf32>
    %775 = vector.shape_cast %772 : vector<1x256xf32> to vector<1x1x256xf32>
    tpu.vector_store %arg4[%c1_300, %c28_301, %c0_302], %775 {strides = array<i32>} : memref<2x81x256xf32, #tpu.memory_space<vmem>>, vector<1x1x256xf32>,
    %776 = vector.extract_strided_slice %669 {offsets = [0, 65], sizes = [4, 256], strides = [1, 1]} : vector<4x392xf32> to vector<4x256xf32>
    %777 = arith.mulf %667, %776 : vector<4x256xf32>
    %cst_303 = arith.constant dense<0.000000e+00> : vector<256xf32>
    %778 = vector.multi_reduction <add>, %777, %cst_303 [0] : vector<4x256xf32> to vector<256xf32>
    %779 = vector.shape_cast %778 : vector<256xf32> to vector<1x256xf32>
    %780 = arith.mulf %779, %743 : vector<1x256xf32>
    %c1_304 = arith.constant 1 : index
    %c37_305 = arith.constant 37 : index
    %c0_306 = arith.constant 0 : index
    %781 = vector.load %arg4[%c1_304, %c37_305, %c0_306] : memref<2x81x256xf32, #tpu.memory_space<vmem>>, vector<1x1x256xf32>
    %782 = vector.shape_cast %781 : vector<1x1x256xf32> to vector<1x256xf32>
    %783 = vector.shape_cast %780 : vector<1x256xf32> to vector<1x1x256xf32>
    tpu.vector_store %arg4[%c1_304, %c37_305, %c0_306], %783 {strides = array<i32>} : memref<2x81x256xf32, #tpu.memory_space<vmem>>, vector<1x1x256xf32>,
    %784 = vector.extract_strided_slice %669 {offsets = [0, 81], sizes = [4, 256], strides = [1, 1]} : vector<4x392xf32> to vector<4x256xf32>
    %785 = arith.mulf %667, %784 : vector<4x256xf32>
    %cst_307 = arith.constant dense<0.000000e+00> : vector<256xf32>
    %786 = vector.multi_reduction <add>, %785, %cst_307 [0] : vector<4x256xf32> to vector<256xf32>
    %787 = vector.shape_cast %786 : vector<256xf32> to vector<1x256xf32>
    %788 = arith.mulf %787, %743 : vector<1x256xf32>
    %c1_308 = arith.constant 1 : index
    %c46_309 = arith.constant 46 : index
    %c0_310 = arith.constant 0 : index
    %789 = vector.load %arg4[%c1_308, %c46_309, %c0_310] : memref<2x81x256xf32, #tpu.memory_space<vmem>>, vector<1x1x256xf32>
    %790 = vector.shape_cast %789 : vector<1x1x256xf32> to vector<1x256xf32>
    %791 = vector.shape_cast %788 : vector<1x256xf32> to vector<1x1x256xf32>
    tpu.vector_store %arg4[%c1_308, %c46_309, %c0_310], %791 {strides = array<i32>} : memref<2x81x256xf32, #tpu.memory_space<vmem>>, vector<1x1x256xf32>,
    %792 = vector.extract_strided_slice %669 {offsets = [0, 97], sizes = [4, 256], strides = [1, 1]} : vector<4x392xf32> to vector<4x256xf32>
    %793 = arith.mulf %667, %792 : vector<4x256xf32>
    %cst_311 = arith.constant dense<0.000000e+00> : vector<256xf32>
    %794 = vector.multi_reduction <add>, %793, %cst_311 [0] : vector<4x256xf32> to vector<256xf32>
    %795 = vector.shape_cast %794 : vector<256xf32> to vector<1x256xf32>
    %796 = arith.mulf %795, %743 : vector<1x256xf32>
    %c1_312 = arith.constant 1 : index
    %c55_313 = arith.constant 55 : index
    %c0_314 = arith.constant 0 : index
    %797 = vector.load %arg4[%c1_312, %c55_313, %c0_314] : memref<2x81x256xf32, #tpu.memory_space<vmem>>, vector<1x1x256xf32>
    %798 = vector.shape_cast %797 : vector<1x1x256xf32> to vector<1x256xf32>
    %799 = vector.shape_cast %796 : vector<1x256xf32> to vector<1x1x256xf32>
    tpu.vector_store %arg4[%c1_312, %c55_313, %c0_314], %799 {strides = array<i32>} : memref<2x81x256xf32, #tpu.memory_space<vmem>>, vector<1x1x256xf32>,
    %800 = vector.extract_strided_slice %669 {offsets = [0, 113], sizes = [4, 256], strides = [1, 1]} : vector<4x392xf32> to vector<4x256xf32>
    %801 = arith.mulf %667, %800 : vector<4x256xf32>
    %cst_315 = arith.constant dense<0.000000e+00> : vector<256xf32>
    %802 = vector.multi_reduction <add>, %801, %cst_315 [0] : vector<4x256xf32> to vector<256xf32>
    %803 = vector.shape_cast %802 : vector<256xf32> to vector<1x256xf32>
    %804 = arith.mulf %803, %743 : vector<1x256xf32>
    %c1_316 = arith.constant 1 : index
    %c64_317 = arith.constant 64 : index
    %c0_318 = arith.constant 0 : index
    %805 = vector.load %arg4[%c1_316, %c64_317, %c0_318] : memref<2x81x256xf32, #tpu.memory_space<vmem>>, vector<1x1x256xf32>
    %806 = vector.shape_cast %805 : vector<1x1x256xf32> to vector<1x256xf32>
    %807 = vector.shape_cast %804 : vector<1x256xf32> to vector<1x1x256xf32>
    tpu.vector_store %arg4[%c1_316, %c64_317, %c0_318], %807 {strides = array<i32>} : memref<2x81x256xf32, #tpu.memory_space<vmem>>, vector<1x1x256xf32>,
    %808 = vector.extract_strided_slice %669 {offsets = [0, 129], sizes = [4, 256], strides = [1, 1]} : vector<4x392xf32> to vector<4x256xf32>
    %809 = arith.mulf %667, %808 : vector<4x256xf32>
    %cst_319 = arith.constant dense<0.000000e+00> : vector<256xf32>
    %810 = vector.multi_reduction <add>, %809, %cst_319 [0] : vector<4x256xf32> to vector<256xf32>
    %811 = vector.shape_cast %810 : vector<256xf32> to vector<1x256xf32>
    %812 = arith.mulf %811, %743 : vector<1x256xf32>
    %c1_320 = arith.constant 1 : index
    %c73_321 = arith.constant 73 : index
    %c0_322 = arith.constant 0 : index
    %813 = vector.load %arg4[%c1_320, %c73_321, %c0_322] : memref<2x81x256xf32, #tpu.memory_space<vmem>>, vector<1x1x256xf32>
    %814 = vector.shape_cast %813 : vector<1x1x256xf32> to vector<1x256xf32>
    %815 = vector.shape_cast %812 : vector<1x256xf32> to vector<1x1x256xf32>
    tpu.vector_store %arg4[%c1_320, %c73_321, %c0_322], %815 {strides = array<i32>} : memref<2x81x256xf32, #tpu.memory_space<vmem>>, vector<1x1x256xf32>,
    %816 = vector.extract_strided_slice %4 {offsets = [2, 0], sizes = [1, 256], strides = [1, 1]} : vector<9x256xf32> to vector<1x256xf32>
    %817 = vector.extract_strided_slice %669 {offsets = [0, 2], sizes = [4, 256], strides = [1, 1]} : vector<4x392xf32> to vector<4x256xf32>
    %818 = arith.mulf %667, %817 : vector<4x256xf32>
    %cst_323 = arith.constant dense<0.000000e+00> : vector<256xf32>
    %819 = vector.multi_reduction <add>, %818, %cst_323 [0] : vector<4x256xf32> to vector<256xf32>
    %820 = vector.shape_cast %819 : vector<256xf32> to vector<1x256xf32>
    %821 = arith.mulf %820, %816 : vector<1x256xf32>
    %c1_324 = arith.constant 1 : index
    %c2_325 = arith.constant 2 : index
    %c0_326 = arith.constant 0 : index
    %822 = vector.load %arg4[%c1_324, %c2_325, %c0_326] : memref<2x81x256xf32, #tpu.memory_space<vmem>>, vector<1x1x256xf32>
    %823 = vector.shape_cast %822 : vector<1x1x256xf32> to vector<1x256xf32>
    %824 = vector.shape_cast %821 : vector<1x256xf32> to vector<1x1x256xf32>
    tpu.vector_store %arg4[%c1_324, %c2_325, %c0_326], %824 {strides = array<i32>} : memref<2x81x256xf32, #tpu.memory_space<vmem>>, vector<1x1x256xf32>,
    %825 = vector.extract_strided_slice %669 {offsets = [0, 18], sizes = [4, 256], strides = [1, 1]} : vector<4x392xf32> to vector<4x256xf32>
    %826 = arith.mulf %667, %825 : vector<4x256xf32>
    %cst_327 = arith.constant dense<0.000000e+00> : vector<256xf32>
    %827 = vector.multi_reduction <add>, %826, %cst_327 [0] : vector<4x256xf32> to vector<256xf32>
    %828 = vector.shape_cast %827 : vector<256xf32> to vector<1x256xf32>
    %829 = arith.mulf %828, %816 : vector<1x256xf32>
    %c1_328 = arith.constant 1 : index
    %c11_329 = arith.constant 11 : index
    %c0_330 = arith.constant 0 : index
    %830 = vector.load %arg4[%c1_328, %c11_329, %c0_330] : memref<2x81x256xf32, #tpu.memory_space<vmem>>, vector<1x1x256xf32>
    %831 = vector.shape_cast %830 : vector<1x1x256xf32> to vector<1x256xf32>
    %832 = vector.shape_cast %829 : vector<1x256xf32> to vector<1x1x256xf32>
    tpu.vector_store %arg4[%c1_328, %c11_329, %c0_330], %832 {strides = array<i32>} : memref<2x81x256xf32, #tpu.memory_space<vmem>>, vector<1x1x256xf32>,
    %833 = vector.extract_strided_slice %669 {offsets = [0, 34], sizes = [4, 256], strides = [1, 1]} : vector<4x392xf32> to vector<4x256xf32>
    %834 = arith.mulf %667, %833 : vector<4x256xf32>
    %cst_331 = arith.constant dense<0.000000e+00> : vector<256xf32>
    %835 = vector.multi_reduction <add>, %834, %cst_331 [0] : vector<4x256xf32> to vector<256xf32>
    %836 = vector.shape_cast %835 : vector<256xf32> to vector<1x256xf32>
    %837 = arith.mulf %836, %816 : vector<1x256xf32>
    %c1_332 = arith.constant 1 : index
    %c20_333 = arith.constant 20 : index
    %c0_334 = arith.constant 0 : index
    %838 = vector.load %arg4[%c1_332, %c20_333, %c0_334] : memref<2x81x256xf32, #tpu.memory_space<vmem>>, vector<1x1x256xf32>
    %839 = vector.shape_cast %838 : vector<1x1x256xf32> to vector<1x256xf32>
    %840 = vector.shape_cast %837 : vector<1x256xf32> to vector<1x1x256xf32>
    tpu.vector_store %arg4[%c1_332, %c20_333, %c0_334], %840 {strides = array<i32>} : memref<2x81x256xf32, #tpu.memory_space<vmem>>, vector<1x1x256xf32>,
    %841 = vector.extract_strided_slice %669 {offsets = [0, 50], sizes = [4, 256], strides = [1, 1]} : vector<4x392xf32> to vector<4x256xf32>
    %842 = arith.mulf %667, %841 : vector<4x256xf32>
    %cst_335 = arith.constant dense<0.000000e+00> : vector<256xf32>
    %843 = vector.multi_reduction <add>, %842, %cst_335 [0] : vector<4x256xf32> to vector<256xf32>
    %844 = vector.shape_cast %843 : vector<256xf32> to vector<1x256xf32>
    %845 = arith.mulf %844, %816 : vector<1x256xf32>
    %c1_336 = arith.constant 1 : index
    %c29_337 = arith.constant 29 : index
    %c0_338 = arith.constant 0 : index
    %846 = vector.load %arg4[%c1_336, %c29_337, %c0_338] : memref<2x81x256xf32, #tpu.memory_space<vmem>>, vector<1x1x256xf32>
    %847 = vector.shape_cast %846 : vector<1x1x256xf32> to vector<1x256xf32>
    %848 = vector.shape_cast %845 : vector<1x256xf32> to vector<1x1x256xf32>
    tpu.vector_store %arg4[%c1_336, %c29_337, %c0_338], %848 {strides = array<i32>} : memref<2x81x256xf32, #tpu.memory_space<vmem>>, vector<1x1x256xf32>,
    %849 = vector.extract_strided_slice %669 {offsets = [0, 66], sizes = [4, 256], strides = [1, 1]} : vector<4x392xf32> to vector<4x256xf32>
    %850 = arith.mulf %667, %849 : vector<4x256xf32>
    %cst_339 = arith.constant dense<0.000000e+00> : vector<256xf32>
    %851 = vector.multi_reduction <add>, %850, %cst_339 [0] : vector<4x256xf32> to vector<256xf32>
    %852 = vector.shape_cast %851 : vector<256xf32> to vector<1x256xf32>
    %853 = arith.mulf %852, %816 : vector<1x256xf32>
    %c1_340 = arith.constant 1 : index
    %c38_341 = arith.constant 38 : index
    %c0_342 = arith.constant 0 : index
    %854 = vector.load %arg4[%c1_340, %c38_341, %c0_342] : memref<2x81x256xf32, #tpu.memory_space<vmem>>, vector<1x1x256xf32>
    %855 = vector.shape_cast %854 : vector<1x1x256xf32> to vector<1x256xf32>
    %856 = vector.shape_cast %853 : vector<1x256xf32> to vector<1x1x256xf32>
    tpu.vector_store %arg4[%c1_340, %c38_341, %c0_342], %856 {strides = array<i32>} : memref<2x81x256xf32, #tpu.memory_space<vmem>>, vector<1x1x256xf32>,
    %857 = vector.extract_strided_slice %669 {offsets = [0, 82], sizes = [4, 256], strides = [1, 1]} : vector<4x392xf32> to vector<4x256xf32>
    %858 = arith.mulf %667, %857 : vector<4x256xf32>
    %cst_343 = arith.constant dense<0.000000e+00> : vector<256xf32>
    %859 = vector.multi_reduction <add>, %858, %cst_343 [0] : vector<4x256xf32> to vector<256xf32>
    %860 = vector.shape_cast %859 : vector<256xf32> to vector<1x256xf32>
    %861 = arith.mulf %860, %816 : vector<1x256xf32>
    %c1_344 = arith.constant 1 : index
    %c47_345 = arith.constant 47 : index
    %c0_346 = arith.constant 0 : index
    %862 = vector.load %arg4[%c1_344, %c47_345, %c0_346] : memref<2x81x256xf32, #tpu.memory_space<vmem>>, vector<1x1x256xf32>
    %863 = vector.shape_cast %862 : vector<1x1x256xf32> to vector<1x256xf32>
    %864 = vector.shape_cast %861 : vector<1x256xf32> to vector<1x1x256xf32>
    tpu.vector_store %arg4[%c1_344, %c47_345, %c0_346], %864 {strides = array<i32>} : memref<2x81x256xf32, #tpu.memory_space<vmem>>, vector<1x1x256xf32>,
    %865 = vector.extract_strided_slice %669 {offsets = [0, 98], sizes = [4, 256], strides = [1, 1]} : vector<4x392xf32> to vector<4x256xf32>
    %866 = arith.mulf %667, %865 : vector<4x256xf32>
    %cst_347 = arith.constant dense<0.000000e+00> : vector<256xf32>
    %867 = vector.multi_reduction <add>, %866, %cst_347 [0] : vector<4x256xf32> to vector<256xf32>
    %868 = vector.shape_cast %867 : vector<256xf32> to vector<1x256xf32>
    %869 = arith.mulf %868, %816 : vector<1x256xf32>
    %c1_348 = arith.constant 1 : index
    %c56_349 = arith.constant 56 : index
    %c0_350 = arith.constant 0 : index
    %870 = vector.load %arg4[%c1_348, %c56_349, %c0_350] : memref<2x81x256xf32, #tpu.memory_space<vmem>>, vector<1x1x256xf32>
    %871 = vector.shape_cast %870 : vector<1x1x256xf32> to vector<1x256xf32>
    %872 = vector.shape_cast %869 : vector<1x256xf32> to vector<1x1x256xf32>
    tpu.vector_store %arg4[%c1_348, %c56_349, %c0_350], %872 {strides = array<i32>} : memref<2x81x256xf32, #tpu.memory_space<vmem>>, vector<1x1x256xf32>,
    %873 = vector.extract_strided_slice %669 {offsets = [0, 114], sizes = [4, 256], strides = [1, 1]} : vector<4x392xf32> to vector<4x256xf32>
    %874 = arith.mulf %667, %873 : vector<4x256xf32>
    %cst_351 = arith.constant dense<0.000000e+00> : vector<256xf32>
    %875 = vector.multi_reduction <add>, %874, %cst_351 [0] : vector<4x256xf32> to vector<256xf32>
    %876 = vector.shape_cast %875 : vector<256xf32> to vector<1x256xf32>
    %877 = arith.mulf %876, %816 : vector<1x256xf32>
    %c1_352 = arith.constant 1 : index
    %c65_353 = arith.constant 65 : index
    %c0_354 = arith.constant 0 : index
    %878 = vector.load %arg4[%c1_352, %c65_353, %c0_354] : memref<2x81x256xf32, #tpu.memory_space<vmem>>, vector<1x1x256xf32>
    %879 = vector.shape_cast %878 : vector<1x1x256xf32> to vector<1x256xf32>
    %880 = vector.shape_cast %877 : vector<1x256xf32> to vector<1x1x256xf32>
    tpu.vector_store %arg4[%c1_352, %c65_353, %c0_354], %880 {strides = array<i32>} : memref<2x81x256xf32, #tpu.memory_space<vmem>>, vector<1x1x256xf32>,
    %881 = vector.extract_strided_slice %669 {offsets = [0, 130], sizes = [4, 256], strides = [1, 1]} : vector<4x392xf32> to vector<4x256xf32>
    %882 = arith.mulf %667, %881 : vector<4x256xf32>
    %cst_355 = arith.constant dense<0.000000e+00> : vector<256xf32>
    %883 = vector.multi_reduction <add>, %882, %cst_355 [0] : vector<4x256xf32> to vector<256xf32>
    %884 = vector.shape_cast %883 : vector<256xf32> to vector<1x256xf32>
    %885 = arith.mulf %884, %816 : vector<1x256xf32>
    %c1_356 = arith.constant 1 : index
    %c74_357 = arith.constant 74 : index
    %c0_358 = arith.constant 0 : index
    %886 = vector.load %arg4[%c1_356, %c74_357, %c0_358] : memref<2x81x256xf32, #tpu.memory_space<vmem>>, vector<1x1x256xf32>
    %887 = vector.shape_cast %886 : vector<1x1x256xf32> to vector<1x256xf32>
    %888 = vector.shape_cast %885 : vector<1x256xf32> to vector<1x1x256xf32>
    tpu.vector_store %arg4[%c1_356, %c74_357, %c0_358], %888 {strides = array<i32>} : memref<2x81x256xf32, #tpu.memory_space<vmem>>, vector<1x1x256xf32>,
    %889 = vector.extract_strided_slice %4 {offsets = [3, 0], sizes = [1, 256], strides = [1, 1]} : vector<9x256xf32> to vector<1x256xf32>
    %890 = vector.extract_strided_slice %669 {offsets = [0, 3], sizes = [4, 256], strides = [1, 1]} : vector<4x392xf32> to vector<4x256xf32>
    %891 = arith.mulf %667, %890 : vector<4x256xf32>
    %cst_359 = arith.constant dense<0.000000e+00> : vector<256xf32>
    %892 = vector.multi_reduction <add>, %891, %cst_359 [0] : vector<4x256xf32> to vector<256xf32>
    %893 = vector.shape_cast %892 : vector<256xf32> to vector<1x256xf32>
    %894 = arith.mulf %893, %889 : vector<1x256xf32>
    %c1_360 = arith.constant 1 : index
    %c3_361 = arith.constant 3 : index
    %c0_362 = arith.constant 0 : index
    %895 = vector.load %arg4[%c1_360, %c3_361, %c0_362] : memref<2x81x256xf32, #tpu.memory_space<vmem>>, vector<1x1x256xf32>
    %896 = vector.shape_cast %895 : vector<1x1x256xf32> to vector<1x256xf32>
    %897 = vector.shape_cast %894 : vector<1x256xf32> to vector<1x1x256xf32>
    tpu.vector_store %arg4[%c1_360, %c3_361, %c0_362], %897 {strides = array<i32>} : memref<2x81x256xf32, #tpu.memory_space<vmem>>, vector<1x1x256xf32>,
    %898 = vector.extract_strided_slice %669 {offsets = [0, 19], sizes = [4, 256], strides = [1, 1]} : vector<4x392xf32> to vector<4x256xf32>
    %899 = arith.mulf %667, %898 : vector<4x256xf32>
    %cst_363 = arith.constant dense<0.000000e+00> : vector<256xf32>
    %900 = vector.multi_reduction <add>, %899, %cst_363 [0] : vector<4x256xf32> to vector<256xf32>
    %901 = vector.shape_cast %900 : vector<256xf32> to vector<1x256xf32>
    %902 = arith.mulf %901, %889 : vector<1x256xf32>
    %c1_364 = arith.constant 1 : index
    %c12_365 = arith.constant 12 : index
    %c0_366 = arith.constant 0 : index
    %903 = vector.load %arg4[%c1_364, %c12_365, %c0_366] : memref<2x81x256xf32, #tpu.memory_space<vmem>>, vector<1x1x256xf32>
    %904 = vector.shape_cast %903 : vector<1x1x256xf32> to vector<1x256xf32>
    %905 = vector.shape_cast %902 : vector<1x256xf32> to vector<1x1x256xf32>
    tpu.vector_store %arg4[%c1_364, %c12_365, %c0_366], %905 {strides = array<i32>} : memref<2x81x256xf32, #tpu.memory_space<vmem>>, vector<1x1x256xf32>,
    %906 = vector.extract_strided_slice %669 {offsets = [0, 35], sizes = [4, 256], strides = [1, 1]} : vector<4x392xf32> to vector<4x256xf32>
    %907 = arith.mulf %667, %906 : vector<4x256xf32>
    %cst_367 = arith.constant dense<0.000000e+00> : vector<256xf32>
    %908 = vector.multi_reduction <add>, %907, %cst_367 [0] : vector<4x256xf32> to vector<256xf32>
    %909 = vector.shape_cast %908 : vector<256xf32> to vector<1x256xf32>
    %910 = arith.mulf %909, %889 : vector<1x256xf32>
    %c1_368 = arith.constant 1 : index
    %c21_369 = arith.constant 21 : index
    %c0_370 = arith.constant 0 : index
    %911 = vector.load %arg4[%c1_368, %c21_369, %c0_370] : memref<2x81x256xf32, #tpu.memory_space<vmem>>, vector<1x1x256xf32>
    %912 = vector.shape_cast %911 : vector<1x1x256xf32> to vector<1x256xf32>
    %913 = vector.shape_cast %910 : vector<1x256xf32> to vector<1x1x256xf32>
    tpu.vector_store %arg4[%c1_368, %c21_369, %c0_370], %913 {strides = array<i32>} : memref<2x81x256xf32, #tpu.memory_space<vmem>>, vector<1x1x256xf32>,
    %914 = vector.extract_strided_slice %669 {offsets = [0, 51], sizes = [4, 256], strides = [1, 1]} : vector<4x392xf32> to vector<4x256xf32>
    %915 = arith.mulf %667, %914 : vector<4x256xf32>
    %cst_371 = arith.constant dense<0.000000e+00> : vector<256xf32>
    %916 = vector.multi_reduction <add>, %915, %cst_371 [0] : vector<4x256xf32> to vector<256xf32>
    %917 = vector.shape_cast %916 : vector<256xf32> to vector<1x256xf32>
    %918 = arith.mulf %917, %889 : vector<1x256xf32>
    %c1_372 = arith.constant 1 : index
    %c30_373 = arith.constant 30 : index
    %c0_374 = arith.constant 0 : index
    %919 = vector.load %arg4[%c1_372, %c30_373, %c0_374] : memref<2x81x256xf32, #tpu.memory_space<vmem>>, vector<1x1x256xf32>
    %920 = vector.shape_cast %919 : vector<1x1x256xf32> to vector<1x256xf32>
    %921 = vector.shape_cast %918 : vector<1x256xf32> to vector<1x1x256xf32>
    tpu.vector_store %arg4[%c1_372, %c30_373, %c0_374], %921 {strides = array<i32>} : memref<2x81x256xf32, #tpu.memory_space<vmem>>, vector<1x1x256xf32>,
    %922 = vector.extract_strided_slice %669 {offsets = [0, 67], sizes = [4, 256], strides = [1, 1]} : vector<4x392xf32> to vector<4x256xf32>
    %923 = arith.mulf %667, %922 : vector<4x256xf32>
    %cst_375 = arith.constant dense<0.000000e+00> : vector<256xf32>
    %924 = vector.multi_reduction <add>, %923, %cst_375 [0] : vector<4x256xf32> to vector<256xf32>
    %925 = vector.shape_cast %924 : vector<256xf32> to vector<1x256xf32>
    %926 = arith.mulf %925, %889 : vector<1x256xf32>
    %c1_376 = arith.constant 1 : index
    %c39_377 = arith.constant 39 : index
    %c0_378 = arith.constant 0 : index
    %927 = vector.load %arg4[%c1_376, %c39_377, %c0_378] : memref<2x81x256xf32, #tpu.memory_space<vmem>>, vector<1x1x256xf32>
    %928 = vector.shape_cast %927 : vector<1x1x256xf32> to vector<1x256xf32>
    %929 = vector.shape_cast %926 : vector<1x256xf32> to vector<1x1x256xf32>
    tpu.vector_store %arg4[%c1_376, %c39_377, %c0_378], %929 {strides = array<i32>} : memref<2x81x256xf32, #tpu.memory_space<vmem>>, vector<1x1x256xf32>,
    %930 = vector.extract_strided_slice %669 {offsets = [0, 83], sizes = [4, 256], strides = [1, 1]} : vector<4x392xf32> to vector<4x256xf32>
    %931 = arith.mulf %667, %930 : vector<4x256xf32>
    %cst_379 = arith.constant dense<0.000000e+00> : vector<256xf32>
    %932 = vector.multi_reduction <add>, %931, %cst_379 [0] : vector<4x256xf32> to vector<256xf32>
    %933 = vector.shape_cast %932 : vector<256xf32> to vector<1x256xf32>
    %934 = arith.mulf %933, %889 : vector<1x256xf32>
    %c1_380 = arith.constant 1 : index
    %c48_381 = arith.constant 48 : index
    %c0_382 = arith.constant 0 : index
    %935 = vector.load %arg4[%c1_380, %c48_381, %c0_382] : memref<2x81x256xf32, #tpu.memory_space<vmem>>, vector<1x1x256xf32>
    %936 = vector.shape_cast %935 : vector<1x1x256xf32> to vector<1x256xf32>
    %937 = vector.shape_cast %934 : vector<1x256xf32> to vector<1x1x256xf32>
    tpu.vector_store %arg4[%c1_380, %c48_381, %c0_382], %937 {strides = array<i32>} : memref<2x81x256xf32, #tpu.memory_space<vmem>>, vector<1x1x256xf32>,
    %938 = vector.extract_strided_slice %669 {offsets = [0, 99], sizes = [4, 256], strides = [1, 1]} : vector<4x392xf32> to vector<4x256xf32>
    %939 = arith.mulf %667, %938 : vector<4x256xf32>
    %cst_383 = arith.constant dense<0.000000e+00> : vector<256xf32>
    %940 = vector.multi_reduction <add>, %939, %cst_383 [0] : vector<4x256xf32> to vector<256xf32>
    %941 = vector.shape_cast %940 : vector<256xf32> to vector<1x256xf32>
    %942 = arith.mulf %941, %889 : vector<1x256xf32>
    %c1_384 = arith.constant 1 : index
    %c57_385 = arith.constant 57 : index
    %c0_386 = arith.constant 0 : index
    %943 = vector.load %arg4[%c1_384, %c57_385, %c0_386] : memref<2x81x256xf32, #tpu.memory_space<vmem>>, vector<1x1x256xf32>
    %944 = vector.shape_cast %943 : vector<1x1x256xf32> to vector<1x256xf32>
    %945 = vector.shape_cast %942 : vector<1x256xf32> to vector<1x1x256xf32>
    tpu.vector_store %arg4[%c1_384, %c57_385, %c0_386], %945 {strides = array<i32>} : memref<2x81x256xf32, #tpu.memory_space<vmem>>, vector<1x1x256xf32>,
    %946 = vector.extract_strided_slice %669 {offsets = [0, 115], sizes = [4, 256], strides = [1, 1]} : vector<4x392xf32> to vector<4x256xf32>
    %947 = arith.mulf %667, %946 : vector<4x256xf32>
    %cst_387 = arith.constant dense<0.000000e+00> : vector<256xf32>
    %948 = vector.multi_reduction <add>, %947, %cst_387 [0] : vector<4x256xf32> to vector<256xf32>
    %949 = vector.shape_cast %948 : vector<256xf32> to vector<1x256xf32>
    %950 = arith.mulf %949, %889 : vector<1x256xf32>
    %c1_388 = arith.constant 1 : index
    %c66_389 = arith.constant 66 : index
    %c0_390 = arith.constant 0 : index
    %951 = vector.load %arg4[%c1_388, %c66_389, %c0_390] : memref<2x81x256xf32, #tpu.memory_space<vmem>>, vector<1x1x256xf32>
    %952 = vector.shape_cast %951 : vector<1x1x256xf32> to vector<1x256xf32>
    %953 = vector.shape_cast %950 : vector<1x256xf32> to vector<1x1x256xf32>
    tpu.vector_store %arg4[%c1_388, %c66_389, %c0_390], %953 {strides = array<i32>} : memref<2x81x256xf32, #tpu.memory_space<vmem>>, vector<1x1x256xf32>,
    %954 = vector.extract_strided_slice %669 {offsets = [0, 131], sizes = [4, 256], strides = [1, 1]} : vector<4x392xf32> to vector<4x256xf32>
    %955 = arith.mulf %667, %954 : vector<4x256xf32>
    %cst_391 = arith.constant dense<0.000000e+00> : vector<256xf32>
    %956 = vector.multi_reduction <add>, %955, %cst_391 [0] : vector<4x256xf32> to vector<256xf32>
    %957 = vector.shape_cast %956 : vector<256xf32> to vector<1x256xf32>
    %958 = arith.mulf %957, %889 : vector<1x256xf32>
    %c1_392 = arith.constant 1 : index
    %c75_393 = arith.constant 75 : index
    %c0_394 = arith.constant 0 : index
    %959 = vector.load %arg4[%c1_392, %c75_393, %c0_394] : memref<2x81x256xf32, #tpu.memory_space<vmem>>, vector<1x1x256xf32>
    %960 = vector.shape_cast %959 : vector<1x1x256xf32> to vector<1x256xf32>
    %961 = vector.shape_cast %958 : vector<1x256xf32> to vector<1x1x256xf32>
    tpu.vector_store %arg4[%c1_392, %c75_393, %c0_394], %961 {strides = array<i32>} : memref<2x81x256xf32, #tpu.memory_space<vmem>>, vector<1x1x256xf32>,
    %962 = vector.extract_strided_slice %4 {offsets = [4, 0], sizes = [1, 256], strides = [1, 1]} : vector<9x256xf32> to vector<1x256xf32>
    %963 = vector.extract_strided_slice %669 {offsets = [0, 4], sizes = [4, 256], strides = [1, 1]} : vector<4x392xf32> to vector<4x256xf32>
    %964 = arith.mulf %667, %963 : vector<4x256xf32>
    %cst_395 = arith.constant dense<0.000000e+00> : vector<256xf32>
    %965 = vector.multi_reduction <add>, %964, %cst_395 [0] : vector<4x256xf32> to vector<256xf32>
    %966 = vector.shape_cast %965 : vector<256xf32> to vector<1x256xf32>
    %967 = arith.mulf %966, %962 : vector<1x256xf32>
    %c1_396 = arith.constant 1 : index
    %c4_397 = arith.constant 4 : index
    %c0_398 = arith.constant 0 : index
    %968 = vector.load %arg4[%c1_396, %c4_397, %c0_398] : memref<2x81x256xf32, #tpu.memory_space<vmem>>, vector<1x1x256xf32>
    %969 = vector.shape_cast %968 : vector<1x1x256xf32> to vector<1x256xf32>
    %970 = vector.shape_cast %967 : vector<1x256xf32> to vector<1x1x256xf32>
    tpu.vector_store %arg4[%c1_396, %c4_397, %c0_398], %970 {strides = array<i32>} : memref<2x81x256xf32, #tpu.memory_space<vmem>>, vector<1x1x256xf32>,
    %971 = vector.extract_strided_slice %669 {offsets = [0, 20], sizes = [4, 256], strides = [1, 1]} : vector<4x392xf32> to vector<4x256xf32>
    %972 = arith.mulf %667, %971 : vector<4x256xf32>
    %cst_399 = arith.constant dense<0.000000e+00> : vector<256xf32>
    %973 = vector.multi_reduction <add>, %972, %cst_399 [0] : vector<4x256xf32> to vector<256xf32>
    %974 = vector.shape_cast %973 : vector<256xf32> to vector<1x256xf32>
    %975 = arith.mulf %974, %962 : vector<1x256xf32>
    %c1_400 = arith.constant 1 : index
    %c13_401 = arith.constant 13 : index
    %c0_402 = arith.constant 0 : index
    %976 = vector.load %arg4[%c1_400, %c13_401, %c0_402] : memref<2x81x256xf32, #tpu.memory_space<vmem>>, vector<1x1x256xf32>
    %977 = vector.shape_cast %976 : vector<1x1x256xf32> to vector<1x256xf32>
    %978 = vector.shape_cast %975 : vector<1x256xf32> to vector<1x1x256xf32>
    tpu.vector_store %arg4[%c1_400, %c13_401, %c0_402], %978 {strides = array<i32>} : memref<2x81x256xf32, #tpu.memory_space<vmem>>, vector<1x1x256xf32>,
    %979 = vector.extract_strided_slice %669 {offsets = [0, 36], sizes = [4, 256], strides = [1, 1]} : vector<4x392xf32> to vector<4x256xf32>
    %980 = arith.mulf %667, %979 : vector<4x256xf32>
    %cst_403 = arith.constant dense<0.000000e+00> : vector<256xf32>
    %981 = vector.multi_reduction <add>, %980, %cst_403 [0] : vector<4x256xf32> to vector<256xf32>
    %982 = vector.shape_cast %981 : vector<256xf32> to vector<1x256xf32>
    %983 = arith.mulf %982, %962 : vector<1x256xf32>
    %c1_404 = arith.constant 1 : index
    %c22_405 = arith.constant 22 : index
    %c0_406 = arith.constant 0 : index
    %984 = vector.load %arg4[%c1_404, %c22_405, %c0_406] : memref<2x81x256xf32, #tpu.memory_space<vmem>>, vector<1x1x256xf32>
    %985 = vector.shape_cast %984 : vector<1x1x256xf32> to vector<1x256xf32>
    %986 = vector.shape_cast %983 : vector<1x256xf32> to vector<1x1x256xf32>
    tpu.vector_store %arg4[%c1_404, %c22_405, %c0_406], %986 {strides = array<i32>} : memref<2x81x256xf32, #tpu.memory_space<vmem>>, vector<1x1x256xf32>,
    %987 = vector.extract_strided_slice %669 {offsets = [0, 52], sizes = [4, 256], strides = [1, 1]} : vector<4x392xf32> to vector<4x256xf32>
    %988 = arith.mulf %667, %987 : vector<4x256xf32>
    %cst_407 = arith.constant dense<0.000000e+00> : vector<256xf32>
    %989 = vector.multi_reduction <add>, %988, %cst_407 [0] : vector<4x256xf32> to vector<256xf32>
    %990 = vector.shape_cast %989 : vector<256xf32> to vector<1x256xf32>
    %991 = arith.mulf %990, %962 : vector<1x256xf32>
    %c1_408 = arith.constant 1 : index
    %c31_409 = arith.constant 31 : index
    %c0_410 = arith.constant 0 : index
    %992 = vector.load %arg4[%c1_408, %c31_409, %c0_410] : memref<2x81x256xf32, #tpu.memory_space<vmem>>, vector<1x1x256xf32>
    %993 = vector.shape_cast %992 : vector<1x1x256xf32> to vector<1x256xf32>
    %994 = vector.shape_cast %991 : vector<1x256xf32> to vector<1x1x256xf32>
    tpu.vector_store %arg4[%c1_408, %c31_409, %c0_410], %994 {strides = array<i32>} : memref<2x81x256xf32, #tpu.memory_space<vmem>>, vector<1x1x256xf32>,
    %995 = vector.extract_strided_slice %669 {offsets = [0, 68], sizes = [4, 256], strides = [1, 1]} : vector<4x392xf32> to vector<4x256xf32>
    %996 = arith.mulf %667, %995 : vector<4x256xf32>
    %cst_411 = arith.constant dense<0.000000e+00> : vector<256xf32>
    %997 = vector.multi_reduction <add>, %996, %cst_411 [0] : vector<4x256xf32> to vector<256xf32>
    %998 = vector.shape_cast %997 : vector<256xf32> to vector<1x256xf32>
    %999 = arith.mulf %998, %962 : vector<1x256xf32>
    %c1_412 = arith.constant 1 : index
    %c40_413 = arith.constant 40 : index
    %c0_414 = arith.constant 0 : index
    %1000 = vector.load %arg4[%c1_412, %c40_413, %c0_414] : memref<2x81x256xf32, #tpu.memory_space<vmem>>, vector<1x1x256xf32>
    %1001 = vector.shape_cast %1000 : vector<1x1x256xf32> to vector<1x256xf32>
    %1002 = vector.shape_cast %999 : vector<1x256xf32> to vector<1x1x256xf32>
    tpu.vector_store %arg4[%c1_412, %c40_413, %c0_414], %1002 {strides = array<i32>} : memref<2x81x256xf32, #tpu.memory_space<vmem>>, vector<1x1x256xf32>,
    %1003 = vector.extract_strided_slice %669 {offsets = [0, 84], sizes = [4, 256], strides = [1, 1]} : vector<4x392xf32> to vector<4x256xf32>
    %1004 = arith.mulf %667, %1003 : vector<4x256xf32>
    %cst_415 = arith.constant dense<0.000000e+00> : vector<256xf32>
    %1005 = vector.multi_reduction <add>, %1004, %cst_415 [0] : vector<4x256xf32> to vector<256xf32>
    %1006 = vector.shape_cast %1005 : vector<256xf32> to vector<1x256xf32>
    %1007 = arith.mulf %1006, %962 : vector<1x256xf32>
    %c1_416 = arith.constant 1 : index
    %c49_417 = arith.constant 49 : index
    %c0_418 = arith.constant 0 : index
    %1008 = vector.load %arg4[%c1_416, %c49_417, %c0_418] : memref<2x81x256xf32, #tpu.memory_space<vmem>>, vector<1x1x256xf32>
    %1009 = vector.shape_cast %1008 : vector<1x1x256xf32> to vector<1x256xf32>
    %1010 = vector.shape_cast %1007 : vector<1x256xf32> to vector<1x1x256xf32>
    tpu.vector_store %arg4[%c1_416, %c49_417, %c0_418], %1010 {strides = array<i32>} : memref<2x81x256xf32, #tpu.memory_space<vmem>>, vector<1x1x256xf32>,
    %1011 = vector.extract_strided_slice %669 {offsets = [0, 100], sizes = [4, 256], strides = [1, 1]} : vector<4x392xf32> to vector<4x256xf32>
    %1012 = arith.mulf %667, %1011 : vector<4x256xf32>
    %cst_419 = arith.constant dense<0.000000e+00> : vector<256xf32>
    %1013 = vector.multi_reduction <add>, %1012, %cst_419 [0] : vector<4x256xf32> to vector<256xf32>
    %1014 = vector.shape_cast %1013 : vector<256xf32> to vector<1x256xf32>
    %1015 = arith.mulf %1014, %962 : vector<1x256xf32>
    %c1_420 = arith.constant 1 : index
    %c58_421 = arith.constant 58 : index
    %c0_422 = arith.constant 0 : index
    %1016 = vector.load %arg4[%c1_420, %c58_421, %c0_422] : memref<2x81x256xf32, #tpu.memory_space<vmem>>, vector<1x1x256xf32>
    %1017 = vector.shape_cast %1016 : vector<1x1x256xf32> to vector<1x256xf32>
    %1018 = vector.shape_cast %1015 : vector<1x256xf32> to vector<1x1x256xf32>
    tpu.vector_store %arg4[%c1_420, %c58_421, %c0_422], %1018 {strides = array<i32>} : memref<2x81x256xf32, #tpu.memory_space<vmem>>, vector<1x1x256xf32>,
    %1019 = vector.extract_strided_slice %669 {offsets = [0, 116], sizes = [4, 256], strides = [1, 1]} : vector<4x392xf32> to vector<4x256xf32>
    %1020 = arith.mulf %667, %1019 : vector<4x256xf32>
    %cst_423 = arith.constant dense<0.000000e+00> : vector<256xf32>
    %1021 = vector.multi_reduction <add>, %1020, %cst_423 [0] : vector<4x256xf32> to vector<256xf32>
    %1022 = vector.shape_cast %1021 : vector<256xf32> to vector<1x256xf32>
    %1023 = arith.mulf %1022, %962 : vector<1x256xf32>
    %c1_424 = arith.constant 1 : index
    %c67_425 = arith.constant 67 : index
    %c0_426 = arith.constant 0 : index
    %1024 = vector.load %arg4[%c1_424, %c67_425, %c0_426] : memref<2x81x256xf32, #tpu.memory_space<vmem>>, vector<1x1x256xf32>
    %1025 = vector.shape_cast %1024 : vector<1x1x256xf32> to vector<1x256xf32>
    %1026 = vector.shape_cast %1023 : vector<1x256xf32> to vector<1x1x256xf32>
    tpu.vector_store %arg4[%c1_424, %c67_425, %c0_426], %1026 {strides = array<i32>} : memref<2x81x256xf32, #tpu.memory_space<vmem>>, vector<1x1x256xf32>,
    %1027 = vector.extract_strided_slice %669 {offsets = [0, 132], sizes = [4, 256], strides = [1, 1]} : vector<4x392xf32> to vector<4x256xf32>
    %1028 = arith.mulf %667, %1027 : vector<4x256xf32>
    %cst_427 = arith.constant dense<0.000000e+00> : vector<256xf32>
    %1029 = vector.multi_reduction <add>, %1028, %cst_427 [0] : vector<4x256xf32> to vector<256xf32>
    %1030 = vector.shape_cast %1029 : vector<256xf32> to vector<1x256xf32>
    %1031 = arith.mulf %1030, %962 : vector<1x256xf32>
    %c1_428 = arith.constant 1 : index
    %c76_429 = arith.constant 76 : index
    %c0_430 = arith.constant 0 : index
    %1032 = vector.load %arg4[%c1_428, %c76_429, %c0_430] : memref<2x81x256xf32, #tpu.memory_space<vmem>>, vector<1x1x256xf32>
    %1033 = vector.shape_cast %1032 : vector<1x1x256xf32> to vector<1x256xf32>
    %1034 = vector.shape_cast %1031 : vector<1x256xf32> to vector<1x1x256xf32>
    tpu.vector_store %arg4[%c1_428, %c76_429, %c0_430], %1034 {strides = array<i32>} : memref<2x81x256xf32, #tpu.memory_space<vmem>>, vector<1x1x256xf32>,
    %1035 = vector.extract_strided_slice %4 {offsets = [5, 0], sizes = [1, 256], strides = [1, 1]} : vector<9x256xf32> to vector<1x256xf32>
    %1036 = vector.extract_strided_slice %669 {offsets = [0, 5], sizes = [4, 256], strides = [1, 1]} : vector<4x392xf32> to vector<4x256xf32>
    %1037 = arith.mulf %667, %1036 : vector<4x256xf32>
    %cst_431 = arith.constant dense<0.000000e+00> : vector<256xf32>
    %1038 = vector.multi_reduction <add>, %1037, %cst_431 [0] : vector<4x256xf32> to vector<256xf32>
    %1039 = vector.shape_cast %1038 : vector<256xf32> to vector<1x256xf32>
    %1040 = arith.mulf %1039, %1035 : vector<1x256xf32>
    %c1_432 = arith.constant 1 : index
    %c5_433 = arith.constant 5 : index
    %c0_434 = arith.constant 0 : index
    %1041 = vector.load %arg4[%c1_432, %c5_433, %c0_434] : memref<2x81x256xf32, #tpu.memory_space<vmem>>, vector<1x1x256xf32>
    %1042 = vector.shape_cast %1041 : vector<1x1x256xf32> to vector<1x256xf32>
    %1043 = vector.shape_cast %1040 : vector<1x256xf32> to vector<1x1x256xf32>
    tpu.vector_store %arg4[%c1_432, %c5_433, %c0_434], %1043 {strides = array<i32>} : memref<2x81x256xf32, #tpu.memory_space<vmem>>, vector<1x1x256xf32>,
    %1044 = vector.extract_strided_slice %669 {offsets = [0, 21], sizes = [4, 256], strides = [1, 1]} : vector<4x392xf32> to vector<4x256xf32>
    %1045 = arith.mulf %667, %1044 : vector<4x256xf32>
    %cst_435 = arith.constant dense<0.000000e+00> : vector<256xf32>
    %1046 = vector.multi_reduction <add>, %1045, %cst_435 [0] : vector<4x256xf32> to vector<256xf32>
    %1047 = vector.shape_cast %1046 : vector<256xf32> to vector<1x256xf32>
    %1048 = arith.mulf %1047, %1035 : vector<1x256xf32>
    %c1_436 = arith.constant 1 : index
    %c14_437 = arith.constant 14 : index
    %c0_438 = arith.constant 0 : index
    %1049 = vector.load %arg4[%c1_436, %c14_437, %c0_438] : memref<2x81x256xf32, #tpu.memory_space<vmem>>, vector<1x1x256xf32>
    %1050 = vector.shape_cast %1049 : vector<1x1x256xf32> to vector<1x256xf32>
    %1051 = vector.shape_cast %1048 : vector<1x256xf32> to vector<1x1x256xf32>
    tpu.vector_store %arg4[%c1_436, %c14_437, %c0_438], %1051 {strides = array<i32>} : memref<2x81x256xf32, #tpu.memory_space<vmem>>, vector<1x1x256xf32>,
    %1052 = vector.extract_strided_slice %669 {offsets = [0, 37], sizes = [4, 256], strides = [1, 1]} : vector<4x392xf32> to vector<4x256xf32>
    %1053 = arith.mulf %667, %1052 : vector<4x256xf32>
    %cst_439 = arith.constant dense<0.000000e+00> : vector<256xf32>
    %1054 = vector.multi_reduction <add>, %1053, %cst_439 [0] : vector<4x256xf32> to vector<256xf32>
    %1055 = vector.shape_cast %1054 : vector<256xf32> to vector<1x256xf32>
    %1056 = arith.mulf %1055, %1035 : vector<1x256xf32>
    %c1_440 = arith.constant 1 : index
    %c23_441 = arith.constant 23 : index
    %c0_442 = arith.constant 0 : index
    %1057 = vector.load %arg4[%c1_440, %c23_441, %c0_442] : memref<2x81x256xf32, #tpu.memory_space<vmem>>, vector<1x1x256xf32>
    %1058 = vector.shape_cast %1057 : vector<1x1x256xf32> to vector<1x256xf32>
    %1059 = vector.shape_cast %1056 : vector<1x256xf32> to vector<1x1x256xf32>
    tpu.vector_store %arg4[%c1_440, %c23_441, %c0_442], %1059 {strides = array<i32>} : memref<2x81x256xf32, #tpu.memory_space<vmem>>, vector<1x1x256xf32>,
    %1060 = vector.extract_strided_slice %669 {offsets = [0, 53], sizes = [4, 256], strides = [1, 1]} : vector<4x392xf32> to vector<4x256xf32>
    %1061 = arith.mulf %667, %1060 : vector<4x256xf32>
    %cst_443 = arith.constant dense<0.000000e+00> : vector<256xf32>
    %1062 = vector.multi_reduction <add>, %1061, %cst_443 [0] : vector<4x256xf32> to vector<256xf32>
    %1063 = vector.shape_cast %1062 : vector<256xf32> to vector<1x256xf32>
    %1064 = arith.mulf %1063, %1035 : vector<1x256xf32>
    %c1_444 = arith.constant 1 : index
    %c32_445 = arith.constant 32 : index
    %c0_446 = arith.constant 0 : index
    %1065 = vector.load %arg4[%c1_444, %c32_445, %c0_446] : memref<2x81x256xf32, #tpu.memory_space<vmem>>, vector<1x1x256xf32>
    %1066 = vector.shape_cast %1065 : vector<1x1x256xf32> to vector<1x256xf32>
    %1067 = vector.shape_cast %1064 : vector<1x256xf32> to vector<1x1x256xf32>
    tpu.vector_store %arg4[%c1_444, %c32_445, %c0_446], %1067 {strides = array<i32>} : memref<2x81x256xf32, #tpu.memory_space<vmem>>, vector<1x1x256xf32>,
    %1068 = vector.extract_strided_slice %669 {offsets = [0, 69], sizes = [4, 256], strides = [1, 1]} : vector<4x392xf32> to vector<4x256xf32>
    %1069 = arith.mulf %667, %1068 : vector<4x256xf32>
    %cst_447 = arith.constant dense<0.000000e+00> : vector<256xf32>
    %1070 = vector.multi_reduction <add>, %1069, %cst_447 [0] : vector<4x256xf32> to vector<256xf32>
    %1071 = vector.shape_cast %1070 : vector<256xf32> to vector<1x256xf32>
    %1072 = arith.mulf %1071, %1035 : vector<1x256xf32>
    %c1_448 = arith.constant 1 : index
    %c41_449 = arith.constant 41 : index
    %c0_450 = arith.constant 0 : index
    %1073 = vector.load %arg4[%c1_448, %c41_449, %c0_450] : memref<2x81x256xf32, #tpu.memory_space<vmem>>, vector<1x1x256xf32>
    %1074 = vector.shape_cast %1073 : vector<1x1x256xf32> to vector<1x256xf32>
    %1075 = vector.shape_cast %1072 : vector<1x256xf32> to vector<1x1x256xf32>
    tpu.vector_store %arg4[%c1_448, %c41_449, %c0_450], %1075 {strides = array<i32>} : memref<2x81x256xf32, #tpu.memory_space<vmem>>, vector<1x1x256xf32>,
    %1076 = vector.extract_strided_slice %669 {offsets = [0, 85], sizes = [4, 256], strides = [1, 1]} : vector<4x392xf32> to vector<4x256xf32>
    %1077 = arith.mulf %667, %1076 : vector<4x256xf32>
    %cst_451 = arith.constant dense<0.000000e+00> : vector<256xf32>
    %1078 = vector.multi_reduction <add>, %1077, %cst_451 [0] : vector<4x256xf32> to vector<256xf32>
    %1079 = vector.shape_cast %1078 : vector<256xf32> to vector<1x256xf32>
    %1080 = arith.mulf %1079, %1035 : vector<1x256xf32>
    %c1_452 = arith.constant 1 : index
    %c50_453 = arith.constant 50 : index
    %c0_454 = arith.constant 0 : index
    %1081 = vector.load %arg4[%c1_452, %c50_453, %c0_454] : memref<2x81x256xf32, #tpu.memory_space<vmem>>, vector<1x1x256xf32>
    %1082 = vector.shape_cast %1081 : vector<1x1x256xf32> to vector<1x256xf32>
    %1083 = vector.shape_cast %1080 : vector<1x256xf32> to vector<1x1x256xf32>
    tpu.vector_store %arg4[%c1_452, %c50_453, %c0_454], %1083 {strides = array<i32>} : memref<2x81x256xf32, #tpu.memory_space<vmem>>, vector<1x1x256xf32>,
    %1084 = vector.extract_strided_slice %669 {offsets = [0, 101], sizes = [4, 256], strides = [1, 1]} : vector<4x392xf32> to vector<4x256xf32>
    %1085 = arith.mulf %667, %1084 : vector<4x256xf32>
    %cst_455 = arith.constant dense<0.000000e+00> : vector<256xf32>
    %1086 = vector.multi_reduction <add>, %1085, %cst_455 [0] : vector<4x256xf32> to vector<256xf32>
    %1087 = vector.shape_cast %1086 : vector<256xf32> to vector<1x256xf32>
    %1088 = arith.mulf %1087, %1035 : vector<1x256xf32>
    %c1_456 = arith.constant 1 : index
    %c59_457 = arith.constant 59 : index
    %c0_458 = arith.constant 0 : index
    %1089 = vector.load %arg4[%c1_456, %c59_457, %c0_458] : memref<2x81x256xf32, #tpu.memory_space<vmem>>, vector<1x1x256xf32>
    %1090 = vector.shape_cast %1089 : vector<1x1x256xf32> to vector<1x256xf32>
    %1091 = vector.shape_cast %1088 : vector<1x256xf32> to vector<1x1x256xf32>
    tpu.vector_store %arg4[%c1_456, %c59_457, %c0_458], %1091 {strides = array<i32>} : memref<2x81x256xf32, #tpu.memory_space<vmem>>, vector<1x1x256xf32>,
    %1092 = vector.extract_strided_slice %669 {offsets = [0, 117], sizes = [4, 256], strides = [1, 1]} : vector<4x392xf32> to vector<4x256xf32>
    %1093 = arith.mulf %667, %1092 : vector<4x256xf32>
    %cst_459 = arith.constant dense<0.000000e+00> : vector<256xf32>
    %1094 = vector.multi_reduction <add>, %1093, %cst_459 [0] : vector<4x256xf32> to vector<256xf32>
    %1095 = vector.shape_cast %1094 : vector<256xf32> to vector<1x256xf32>
    %1096 = arith.mulf %1095, %1035 : vector<1x256xf32>
    %c1_460 = arith.constant 1 : index
    %c68_461 = arith.constant 68 : index
    %c0_462 = arith.constant 0 : index
    %1097 = vector.load %arg4[%c1_460, %c68_461, %c0_462] : memref<2x81x256xf32, #tpu.memory_space<vmem>>, vector<1x1x256xf32>
    %1098 = vector.shape_cast %1097 : vector<1x1x256xf32> to vector<1x256xf32>
    %1099 = vector.shape_cast %1096 : vector<1x256xf32> to vector<1x1x256xf32>
    tpu.vector_store %arg4[%c1_460, %c68_461, %c0_462], %1099 {strides = array<i32>} : memref<2x81x256xf32, #tpu.memory_space<vmem>>, vector<1x1x256xf32>,
    %1100 = vector.extract_strided_slice %669 {offsets = [0, 133], sizes = [4, 256], strides = [1, 1]} : vector<4x392xf32> to vector<4x256xf32>
    %1101 = arith.mulf %667, %1100 : vector<4x256xf32>
    %cst_463 = arith.constant dense<0.000000e+00> : vector<256xf32>
    %1102 = vector.multi_reduction <add>, %1101, %cst_463 [0] : vector<4x256xf32> to vector<256xf32>
    %1103 = vector.shape_cast %1102 : vector<256xf32> to vector<1x256xf32>
    %1104 = arith.mulf %1103, %1035 : vector<1x256xf32>
    %c1_464 = arith.constant 1 : index
    %c77_465 = arith.constant 77 : index
    %c0_466 = arith.constant 0 : index
    %1105 = vector.load %arg4[%c1_464, %c77_465, %c0_466] : memref<2x81x256xf32, #tpu.memory_space<vmem>>, vector<1x1x256xf32>
    %1106 = vector.shape_cast %1105 : vector<1x1x256xf32> to vector<1x256xf32>
    %1107 = vector.shape_cast %1104 : vector<1x256xf32> to vector<1x1x256xf32>
    tpu.vector_store %arg4[%c1_464, %c77_465, %c0_466], %1107 {strides = array<i32>} : memref<2x81x256xf32, #tpu.memory_space<vmem>>, vector<1x1x256xf32>,
    %1108 = vector.extract_strided_slice %4 {offsets = [6, 0], sizes = [1, 256], strides = [1, 1]} : vector<9x256xf32> to vector<1x256xf32>
    %1109 = vector.extract_strided_slice %669 {offsets = [0, 6], sizes = [4, 256], strides = [1, 1]} : vector<4x392xf32> to vector<4x256xf32>
    %1110 = arith.mulf %667, %1109 : vector<4x256xf32>
    %cst_467 = arith.constant dense<0.000000e+00> : vector<256xf32>
    %1111 = vector.multi_reduction <add>, %1110, %cst_467 [0] : vector<4x256xf32> to vector<256xf32>
    %1112 = vector.shape_cast %1111 : vector<256xf32> to vector<1x256xf32>
    %1113 = arith.mulf %1112, %1108 : vector<1x256xf32>
    %c1_468 = arith.constant 1 : index
    %c6_469 = arith.constant 6 : index
    %c0_470 = arith.constant 0 : index
    %1114 = vector.load %arg4[%c1_468, %c6_469, %c0_470] : memref<2x81x256xf32, #tpu.memory_space<vmem>>, vector<1x1x256xf32>
    %1115 = vector.shape_cast %1114 : vector<1x1x256xf32> to vector<1x256xf32>
    %1116 = vector.shape_cast %1113 : vector<1x256xf32> to vector<1x1x256xf32>
    tpu.vector_store %arg4[%c1_468, %c6_469, %c0_470], %1116 {strides = array<i32>} : memref<2x81x256xf32, #tpu.memory_space<vmem>>, vector<1x1x256xf32>,
    %1117 = vector.extract_strided_slice %669 {offsets = [0, 22], sizes = [4, 256], strides = [1, 1]} : vector<4x392xf32> to vector<4x256xf32>
    %1118 = arith.mulf %667, %1117 : vector<4x256xf32>
    %cst_471 = arith.constant dense<0.000000e+00> : vector<256xf32>
    %1119 = vector.multi_reduction <add>, %1118, %cst_471 [0] : vector<4x256xf32> to vector<256xf32>
    %1120 = vector.shape_cast %1119 : vector<256xf32> to vector<1x256xf32>
    %1121 = arith.mulf %1120, %1108 : vector<1x256xf32>
    %c1_472 = arith.constant 1 : index
    %c15_473 = arith.constant 15 : index
    %c0_474 = arith.constant 0 : index
    %1122 = vector.load %arg4[%c1_472, %c15_473, %c0_474] : memref<2x81x256xf32, #tpu.memory_space<vmem>>, vector<1x1x256xf32>
    %1123 = vector.shape_cast %1122 : vector<1x1x256xf32> to vector<1x256xf32>
    %1124 = vector.shape_cast %1121 : vector<1x256xf32> to vector<1x1x256xf32>
    tpu.vector_store %arg4[%c1_472, %c15_473, %c0_474], %1124 {strides = array<i32>} : memref<2x81x256xf32, #tpu.memory_space<vmem>>, vector<1x1x256xf32>,
    %1125 = vector.extract_strided_slice %669 {offsets = [0, 38], sizes = [4, 256], strides = [1, 1]} : vector<4x392xf32> to vector<4x256xf32>
    %1126 = arith.mulf %667, %1125 : vector<4x256xf32>
    %cst_475 = arith.constant dense<0.000000e+00> : vector<256xf32>
    %1127 = vector.multi_reduction <add>, %1126, %cst_475 [0] : vector<4x256xf32> to vector<256xf32>
    %1128 = vector.shape_cast %1127 : vector<256xf32> to vector<1x256xf32>
    %1129 = arith.mulf %1128, %1108 : vector<1x256xf32>
    %c1_476 = arith.constant 1 : index
    %c24_477 = arith.constant 24 : index
    %c0_478 = arith.constant 0 : index
    %1130 = vector.load %arg4[%c1_476, %c24_477, %c0_478] : memref<2x81x256xf32, #tpu.memory_space<vmem>>, vector<1x1x256xf32>
    %1131 = vector.shape_cast %1130 : vector<1x1x256xf32> to vector<1x256xf32>
    %1132 = vector.shape_cast %1129 : vector<1x256xf32> to vector<1x1x256xf32>
    tpu.vector_store %arg4[%c1_476, %c24_477, %c0_478], %1132 {strides = array<i32>} : memref<2x81x256xf32, #tpu.memory_space<vmem>>, vector<1x1x256xf32>,
    %1133 = vector.extract_strided_slice %669 {offsets = [0, 54], sizes = [4, 256], strides = [1, 1]} : vector<4x392xf32> to vector<4x256xf32>
    %1134 = arith.mulf %667, %1133 : vector<4x256xf32>
    %cst_479 = arith.constant dense<0.000000e+00> : vector<256xf32>
    %1135 = vector.multi_reduction <add>, %1134, %cst_479 [0] : vector<4x256xf32> to vector<256xf32>
    %1136 = vector.shape_cast %1135 : vector<256xf32> to vector<1x256xf32>
    %1137 = arith.mulf %1136, %1108 : vector<1x256xf32>
    %c1_480 = arith.constant 1 : index
    %c33_481 = arith.constant 33 : index
    %c0_482 = arith.constant 0 : index
    %1138 = vector.load %arg4[%c1_480, %c33_481, %c0_482] : memref<2x81x256xf32, #tpu.memory_space<vmem>>, vector<1x1x256xf32>
    %1139 = vector.shape_cast %1138 : vector<1x1x256xf32> to vector<1x256xf32>
    %1140 = vector.shape_cast %1137 : vector<1x256xf32> to vector<1x1x256xf32>
    tpu.vector_store %arg4[%c1_480, %c33_481, %c0_482], %1140 {strides = array<i32>} : memref<2x81x256xf32, #tpu.memory_space<vmem>>, vector<1x1x256xf32>,
    %1141 = vector.extract_strided_slice %669 {offsets = [0, 70], sizes = [4, 256], strides = [1, 1]} : vector<4x392xf32> to vector<4x256xf32>
    %1142 = arith.mulf %667, %1141 : vector<4x256xf32>
    %cst_483 = arith.constant dense<0.000000e+00> : vector<256xf32>
    %1143 = vector.multi_reduction <add>, %1142, %cst_483 [0] : vector<4x256xf32> to vector<256xf32>
    %1144 = vector.shape_cast %1143 : vector<256xf32> to vector<1x256xf32>
    %1145 = arith.mulf %1144, %1108 : vector<1x256xf32>
    %c1_484 = arith.constant 1 : index
    %c42_485 = arith.constant 42 : index
    %c0_486 = arith.constant 0 : index
    %1146 = vector.load %arg4[%c1_484, %c42_485, %c0_486] : memref<2x81x256xf32, #tpu.memory_space<vmem>>, vector<1x1x256xf32>
    %1147 = vector.shape_cast %1146 : vector<1x1x256xf32> to vector<1x256xf32>
    %1148 = vector.shape_cast %1145 : vector<1x256xf32> to vector<1x1x256xf32>
    tpu.vector_store %arg4[%c1_484, %c42_485, %c0_486], %1148 {strides = array<i32>} : memref<2x81x256xf32, #tpu.memory_space<vmem>>, vector<1x1x256xf32>,
    %1149 = vector.extract_strided_slice %669 {offsets = [0, 86], sizes = [4, 256], strides = [1, 1]} : vector<4x392xf32> to vector<4x256xf32>
    %1150 = arith.mulf %667, %1149 : vector<4x256xf32>
    %cst_487 = arith.constant dense<0.000000e+00> : vector<256xf32>
    %1151 = vector.multi_reduction <add>, %1150, %cst_487 [0] : vector<4x256xf32> to vector<256xf32>
    %1152 = vector.shape_cast %1151 : vector<256xf32> to vector<1x256xf32>
    %1153 = arith.mulf %1152, %1108 : vector<1x256xf32>
    %c1_488 = arith.constant 1 : index
    %c51_489 = arith.constant 51 : index
    %c0_490 = arith.constant 0 : index
    %1154 = vector.load %arg4[%c1_488, %c51_489, %c0_490] : memref<2x81x256xf32, #tpu.memory_space<vmem>>, vector<1x1x256xf32>
    %1155 = vector.shape_cast %1154 : vector<1x1x256xf32> to vector<1x256xf32>
    %1156 = vector.shape_cast %1153 : vector<1x256xf32> to vector<1x1x256xf32>
    tpu.vector_store %arg4[%c1_488, %c51_489, %c0_490], %1156 {strides = array<i32>} : memref<2x81x256xf32, #tpu.memory_space<vmem>>, vector<1x1x256xf32>,
    %1157 = vector.extract_strided_slice %669 {offsets = [0, 102], sizes = [4, 256], strides = [1, 1]} : vector<4x392xf32> to vector<4x256xf32>
    %1158 = arith.mulf %667, %1157 : vector<4x256xf32>
    %cst_491 = arith.constant dense<0.000000e+00> : vector<256xf32>
    %1159 = vector.multi_reduction <add>, %1158, %cst_491 [0] : vector<4x256xf32> to vector<256xf32>
    %1160 = vector.shape_cast %1159 : vector<256xf32> to vector<1x256xf32>
    %1161 = arith.mulf %1160, %1108 : vector<1x256xf32>
    %c1_492 = arith.constant 1 : index
    %c60_493 = arith.constant 60 : index
    %c0_494 = arith.constant 0 : index
    %1162 = vector.load %arg4[%c1_492, %c60_493, %c0_494] : memref<2x81x256xf32, #tpu.memory_space<vmem>>, vector<1x1x256xf32>
    %1163 = vector.shape_cast %1162 : vector<1x1x256xf32> to vector<1x256xf32>
    %1164 = vector.shape_cast %1161 : vector<1x256xf32> to vector<1x1x256xf32>
    tpu.vector_store %arg4[%c1_492, %c60_493, %c0_494], %1164 {strides = array<i32>} : memref<2x81x256xf32, #tpu.memory_space<vmem>>, vector<1x1x256xf32>,
    %1165 = vector.extract_strided_slice %669 {offsets = [0, 118], sizes = [4, 256], strides = [1, 1]} : vector<4x392xf32> to vector<4x256xf32>
    %1166 = arith.mulf %667, %1165 : vector<4x256xf32>
    %cst_495 = arith.constant dense<0.000000e+00> : vector<256xf32>
    %1167 = vector.multi_reduction <add>, %1166, %cst_495 [0] : vector<4x256xf32> to vector<256xf32>
    %1168 = vector.shape_cast %1167 : vector<256xf32> to vector<1x256xf32>
    %1169 = arith.mulf %1168, %1108 : vector<1x256xf32>
    %c1_496 = arith.constant 1 : index
    %c69_497 = arith.constant 69 : index
    %c0_498 = arith.constant 0 : index
    %1170 = vector.load %arg4[%c1_496, %c69_497, %c0_498] : memref<2x81x256xf32, #tpu.memory_space<vmem>>, vector<1x1x256xf32>
    %1171 = vector.shape_cast %1170 : vector<1x1x256xf32> to vector<1x256xf32>
    %1172 = vector.shape_cast %1169 : vector<1x256xf32> to vector<1x1x256xf32>
    tpu.vector_store %arg4[%c1_496, %c69_497, %c0_498], %1172 {strides = array<i32>} : memref<2x81x256xf32, #tpu.memory_space<vmem>>, vector<1x1x256xf32>,
    %1173 = vector.extract_strided_slice %669 {offsets = [0, 134], sizes = [4, 256], strides = [1, 1]} : vector<4x392xf32> to vector<4x256xf32>
    %1174 = arith.mulf %667, %1173 : vector<4x256xf32>
    %cst_499 = arith.constant dense<0.000000e+00> : vector<256xf32>
    %1175 = vector.multi_reduction <add>, %1174, %cst_499 [0] : vector<4x256xf32> to vector<256xf32>
    %1176 = vector.shape_cast %1175 : vector<256xf32> to vector<1x256xf32>
    %1177 = arith.mulf %1176, %1108 : vector<1x256xf32>
    %c1_500 = arith.constant 1 : index
    %c78_501 = arith.constant 78 : index
    %c0_502 = arith.constant 0 : index
    %1178 = vector.load %arg4[%c1_500, %c78_501, %c0_502] : memref<2x81x256xf32, #tpu.memory_space<vmem>>, vector<1x1x256xf32>
    %1179 = vector.shape_cast %1178 : vector<1x1x256xf32> to vector<1x256xf32>
    %1180 = vector.shape_cast %1177 : vector<1x256xf32> to vector<1x1x256xf32>
    tpu.vector_store %arg4[%c1_500, %c78_501, %c0_502], %1180 {strides = array<i32>} : memref<2x81x256xf32, #tpu.memory_space<vmem>>, vector<1x1x256xf32>,
    %1181 = vector.extract_strided_slice %4 {offsets = [7, 0], sizes = [1, 256], strides = [1, 1]} : vector<9x256xf32> to vector<1x256xf32>
    %1182 = vector.extract_strided_slice %669 {offsets = [0, 7], sizes = [4, 256], strides = [1, 1]} : vector<4x392xf32> to vector<4x256xf32>
    %1183 = arith.mulf %667, %1182 : vector<4x256xf32>
    %cst_503 = arith.constant dense<0.000000e+00> : vector<256xf32>
    %1184 = vector.multi_reduction <add>, %1183, %cst_503 [0] : vector<4x256xf32> to vector<256xf32>
    %1185 = vector.shape_cast %1184 : vector<256xf32> to vector<1x256xf32>
    %1186 = arith.mulf %1185, %1181 : vector<1x256xf32>
    %c1_504 = arith.constant 1 : index
    %c7_505 = arith.constant 7 : index
    %c0_506 = arith.constant 0 : index
    %1187 = vector.load %arg4[%c1_504, %c7_505, %c0_506] : memref<2x81x256xf32, #tpu.memory_space<vmem>>, vector<1x1x256xf32>
    %1188 = vector.shape_cast %1187 : vector<1x1x256xf32> to vector<1x256xf32>
    %1189 = vector.shape_cast %1186 : vector<1x256xf32> to vector<1x1x256xf32>
    tpu.vector_store %arg4[%c1_504, %c7_505, %c0_506], %1189 {strides = array<i32>} : memref<2x81x256xf32, #tpu.memory_space<vmem>>, vector<1x1x256xf32>,
    %1190 = vector.extract_strided_slice %669 {offsets = [0, 23], sizes = [4, 256], strides = [1, 1]} : vector<4x392xf32> to vector<4x256xf32>
    %1191 = arith.mulf %667, %1190 : vector<4x256xf32>
    %cst_507 = arith.constant dense<0.000000e+00> : vector<256xf32>
    %1192 = vector.multi_reduction <add>, %1191, %cst_507 [0] : vector<4x256xf32> to vector<256xf32>
    %1193 = vector.shape_cast %1192 : vector<256xf32> to vector<1x256xf32>
    %1194 = arith.mulf %1193, %1181 : vector<1x256xf32>
    %c1_508 = arith.constant 1 : index
    %c16_509 = arith.constant 16 : index
    %c0_510 = arith.constant 0 : index
    %1195 = vector.load %arg4[%c1_508, %c16_509, %c0_510] : memref<2x81x256xf32, #tpu.memory_space<vmem>>, vector<1x1x256xf32>
    %1196 = vector.shape_cast %1195 : vector<1x1x256xf32> to vector<1x256xf32>
    %1197 = vector.shape_cast %1194 : vector<1x256xf32> to vector<1x1x256xf32>
    tpu.vector_store %arg4[%c1_508, %c16_509, %c0_510], %1197 {strides = array<i32>} : memref<2x81x256xf32, #tpu.memory_space<vmem>>, vector<1x1x256xf32>,
    %1198 = vector.extract_strided_slice %669 {offsets = [0, 39], sizes = [4, 256], strides = [1, 1]} : vector<4x392xf32> to vector<4x256xf32>
    %1199 = arith.mulf %667, %1198 : vector<4x256xf32>
    %cst_511 = arith.constant dense<0.000000e+00> : vector<256xf32>
    %1200 = vector.multi_reduction <add>, %1199, %cst_511 [0] : vector<4x256xf32> to vector<256xf32>
    %1201 = vector.shape_cast %1200 : vector<256xf32> to vector<1x256xf32>
    %1202 = arith.mulf %1201, %1181 : vector<1x256xf32>
    %c1_512 = arith.constant 1 : index
    %c25_513 = arith.constant 25 : index
    %c0_514 = arith.constant 0 : index
    %1203 = vector.load %arg4[%c1_512, %c25_513, %c0_514] : memref<2x81x256xf32, #tpu.memory_space<vmem>>, vector<1x1x256xf32>
    %1204 = vector.shape_cast %1203 : vector<1x1x256xf32> to vector<1x256xf32>
    %1205 = vector.shape_cast %1202 : vector<1x256xf32> to vector<1x1x256xf32>
    tpu.vector_store %arg4[%c1_512, %c25_513, %c0_514], %1205 {strides = array<i32>} : memref<2x81x256xf32, #tpu.memory_space<vmem>>, vector<1x1x256xf32>,
    %1206 = vector.extract_strided_slice %669 {offsets = [0, 55], sizes = [4, 256], strides = [1, 1]} : vector<4x392xf32> to vector<4x256xf32>
    %1207 = arith.mulf %667, %1206 : vector<4x256xf32>
    %cst_515 = arith.constant dense<0.000000e+00> : vector<256xf32>
    %1208 = vector.multi_reduction <add>, %1207, %cst_515 [0] : vector<4x256xf32> to vector<256xf32>
    %1209 = vector.shape_cast %1208 : vector<256xf32> to vector<1x256xf32>
    %1210 = arith.mulf %1209, %1181 : vector<1x256xf32>
    %c1_516 = arith.constant 1 : index
    %c34_517 = arith.constant 34 : index
    %c0_518 = arith.constant 0 : index
    %1211 = vector.load %arg4[%c1_516, %c34_517, %c0_518] : memref<2x81x256xf32, #tpu.memory_space<vmem>>, vector<1x1x256xf32>
    %1212 = vector.shape_cast %1211 : vector<1x1x256xf32> to vector<1x256xf32>
    %1213 = vector.shape_cast %1210 : vector<1x256xf32> to vector<1x1x256xf32>
    tpu.vector_store %arg4[%c1_516, %c34_517, %c0_518], %1213 {strides = array<i32>} : memref<2x81x256xf32, #tpu.memory_space<vmem>>, vector<1x1x256xf32>,
    %1214 = vector.extract_strided_slice %669 {offsets = [0, 71], sizes = [4, 256], strides = [1, 1]} : vector<4x392xf32> to vector<4x256xf32>
    %1215 = arith.mulf %667, %1214 : vector<4x256xf32>
    %cst_519 = arith.constant dense<0.000000e+00> : vector<256xf32>
    %1216 = vector.multi_reduction <add>, %1215, %cst_519 [0] : vector<4x256xf32> to vector<256xf32>
    %1217 = vector.shape_cast %1216 : vector<256xf32> to vector<1x256xf32>
    %1218 = arith.mulf %1217, %1181 : vector<1x256xf32>
    %c1_520 = arith.constant 1 : index
    %c43_521 = arith.constant 43 : index
    %c0_522 = arith.constant 0 : index
    %1219 = vector.load %arg4[%c1_520, %c43_521, %c0_522] : memref<2x81x256xf32, #tpu.memory_space<vmem>>, vector<1x1x256xf32>
    %1220 = vector.shape_cast %1219 : vector<1x1x256xf32> to vector<1x256xf32>
    %1221 = vector.shape_cast %1218 : vector<1x256xf32> to vector<1x1x256xf32>
    tpu.vector_store %arg4[%c1_520, %c43_521, %c0_522], %1221 {strides = array<i32>} : memref<2x81x256xf32, #tpu.memory_space<vmem>>, vector<1x1x256xf32>,
    %1222 = vector.extract_strided_slice %669 {offsets = [0, 87], sizes = [4, 256], strides = [1, 1]} : vector<4x392xf32> to vector<4x256xf32>
    %1223 = arith.mulf %667, %1222 : vector<4x256xf32>
    %cst_523 = arith.constant dense<0.000000e+00> : vector<256xf32>
    %1224 = vector.multi_reduction <add>, %1223, %cst_523 [0] : vector<4x256xf32> to vector<256xf32>
    %1225 = vector.shape_cast %1224 : vector<256xf32> to vector<1x256xf32>
    %1226 = arith.mulf %1225, %1181 : vector<1x256xf32>
    %c1_524 = arith.constant 1 : index
    %c52_525 = arith.constant 52 : index
    %c0_526 = arith.constant 0 : index
    %1227 = vector.load %arg4[%c1_524, %c52_525, %c0_526] : memref<2x81x256xf32, #tpu.memory_space<vmem>>, vector<1x1x256xf32>
    %1228 = vector.shape_cast %1227 : vector<1x1x256xf32> to vector<1x256xf32>
    %1229 = vector.shape_cast %1226 : vector<1x256xf32> to vector<1x1x256xf32>
    tpu.vector_store %arg4[%c1_524, %c52_525, %c0_526], %1229 {strides = array<i32>} : memref<2x81x256xf32, #tpu.memory_space<vmem>>, vector<1x1x256xf32>,
    %1230 = vector.extract_strided_slice %669 {offsets = [0, 103], sizes = [4, 256], strides = [1, 1]} : vector<4x392xf32> to vector<4x256xf32>
    %1231 = arith.mulf %667, %1230 : vector<4x256xf32>
    %cst_527 = arith.constant dense<0.000000e+00> : vector<256xf32>
    %1232 = vector.multi_reduction <add>, %1231, %cst_527 [0] : vector<4x256xf32> to vector<256xf32>
    %1233 = vector.shape_cast %1232 : vector<256xf32> to vector<1x256xf32>
    %1234 = arith.mulf %1233, %1181 : vector<1x256xf32>
    %c1_528 = arith.constant 1 : index
    %c61_529 = arith.constant 61 : index
    %c0_530 = arith.constant 0 : index
    %1235 = vector.load %arg4[%c1_528, %c61_529, %c0_530] : memref<2x81x256xf32, #tpu.memory_space<vmem>>, vector<1x1x256xf32>
    %1236 = vector.shape_cast %1235 : vector<1x1x256xf32> to vector<1x256xf32>
    %1237 = vector.shape_cast %1234 : vector<1x256xf32> to vector<1x1x256xf32>
    tpu.vector_store %arg4[%c1_528, %c61_529, %c0_530], %1237 {strides = array<i32>} : memref<2x81x256xf32, #tpu.memory_space<vmem>>, vector<1x1x256xf32>,
    %1238 = vector.extract_strided_slice %669 {offsets = [0, 119], sizes = [4, 256], strides = [1, 1]} : vector<4x392xf32> to vector<4x256xf32>
    %1239 = arith.mulf %667, %1238 : vector<4x256xf32>
    %cst_531 = arith.constant dense<0.000000e+00> : vector<256xf32>
    %1240 = vector.multi_reduction <add>, %1239, %cst_531 [0] : vector<4x256xf32> to vector<256xf32>
    %1241 = vector.shape_cast %1240 : vector<256xf32> to vector<1x256xf32>
    %1242 = arith.mulf %1241, %1181 : vector<1x256xf32>
    %c1_532 = arith.constant 1 : index
    %c70_533 = arith.constant 70 : index
    %c0_534 = arith.constant 0 : index
    %1243 = vector.load %arg4[%c1_532, %c70_533, %c0_534] : memref<2x81x256xf32, #tpu.memory_space<vmem>>, vector<1x1x256xf32>
    %1244 = vector.shape_cast %1243 : vector<1x1x256xf32> to vector<1x256xf32>
    %1245 = vector.shape_cast %1242 : vector<1x256xf32> to vector<1x1x256xf32>
    tpu.vector_store %arg4[%c1_532, %c70_533, %c0_534], %1245 {strides = array<i32>} : memref<2x81x256xf32, #tpu.memory_space<vmem>>, vector<1x1x256xf32>,
    %1246 = vector.extract_strided_slice %669 {offsets = [0, 135], sizes = [4, 256], strides = [1, 1]} : vector<4x392xf32> to vector<4x256xf32>
    %1247 = arith.mulf %667, %1246 : vector<4x256xf32>
    %cst_535 = arith.constant dense<0.000000e+00> : vector<256xf32>
    %1248 = vector.multi_reduction <add>, %1247, %cst_535 [0] : vector<4x256xf32> to vector<256xf32>
    %1249 = vector.shape_cast %1248 : vector<256xf32> to vector<1x256xf32>
    %1250 = arith.mulf %1249, %1181 : vector<1x256xf32>
    %c1_536 = arith.constant 1 : index
    %c79_537 = arith.constant 79 : index
    %c0_538 = arith.constant 0 : index
    %1251 = vector.load %arg4[%c1_536, %c79_537, %c0_538] : memref<2x81x256xf32, #tpu.memory_space<vmem>>, vector<1x1x256xf32>
    %1252 = vector.shape_cast %1251 : vector<1x1x256xf32> to vector<1x256xf32>
    %1253 = vector.shape_cast %1250 : vector<1x256xf32> to vector<1x1x256xf32>
    tpu.vector_store %arg4[%c1_536, %c79_537, %c0_538], %1253 {strides = array<i32>} : memref<2x81x256xf32, #tpu.memory_space<vmem>>, vector<1x1x256xf32>,
    %1254 = vector.extract_strided_slice %4 {offsets = [8, 0], sizes = [1, 256], strides = [1, 1]} : vector<9x256xf32> to vector<1x256xf32>
    %1255 = vector.extract_strided_slice %669 {offsets = [0, 8], sizes = [4, 256], strides = [1, 1]} : vector<4x392xf32> to vector<4x256xf32>
    %1256 = arith.mulf %667, %1255 : vector<4x256xf32>
    %cst_539 = arith.constant dense<0.000000e+00> : vector<256xf32>
    %1257 = vector.multi_reduction <add>, %1256, %cst_539 [0] : vector<4x256xf32> to vector<256xf32>
    %1258 = vector.shape_cast %1257 : vector<256xf32> to vector<1x256xf32>
    %1259 = arith.mulf %1258, %1254 : vector<1x256xf32>
    %c1_540 = arith.constant 1 : index
    %c8_541 = arith.constant 8 : index
    %c0_542 = arith.constant 0 : index
    %1260 = vector.load %arg4[%c1_540, %c8_541, %c0_542] : memref<2x81x256xf32, #tpu.memory_space<vmem>>, vector<1x1x256xf32>
    %1261 = vector.shape_cast %1260 : vector<1x1x256xf32> to vector<1x256xf32>
    %1262 = vector.shape_cast %1259 : vector<1x256xf32> to vector<1x1x256xf32>
    tpu.vector_store %arg4[%c1_540, %c8_541, %c0_542], %1262 {strides = array<i32>} : memref<2x81x256xf32, #tpu.memory_space<vmem>>, vector<1x1x256xf32>,
    %1263 = vector.extract_strided_slice %669 {offsets = [0, 24], sizes = [4, 256], strides = [1, 1]} : vector<4x392xf32> to vector<4x256xf32>
    %1264 = arith.mulf %667, %1263 : vector<4x256xf32>
    %cst_543 = arith.constant dense<0.000000e+00> : vector<256xf32>
    %1265 = vector.multi_reduction <add>, %1264, %cst_543 [0] : vector<4x256xf32> to vector<256xf32>
    %1266 = vector.shape_cast %1265 : vector<256xf32> to vector<1x256xf32>
    %1267 = arith.mulf %1266, %1254 : vector<1x256xf32>
    %c1_544 = arith.constant 1 : index
    %c17_545 = arith.constant 17 : index
    %c0_546 = arith.constant 0 : index
    %1268 = vector.load %arg4[%c1_544, %c17_545, %c0_546] : memref<2x81x256xf32, #tpu.memory_space<vmem>>, vector<1x1x256xf32>
    %1269 = vector.shape_cast %1268 : vector<1x1x256xf32> to vector<1x256xf32>
    %1270 = vector.shape_cast %1267 : vector<1x256xf32> to vector<1x1x256xf32>
    tpu.vector_store %arg4[%c1_544, %c17_545, %c0_546], %1270 {strides = array<i32>} : memref<2x81x256xf32, #tpu.memory_space<vmem>>, vector<1x1x256xf32>,
    %1271 = vector.extract_strided_slice %669 {offsets = [0, 40], sizes = [4, 256], strides = [1, 1]} : vector<4x392xf32> to vector<4x256xf32>
    %1272 = arith.mulf %667, %1271 : vector<4x256xf32>
    %cst_547 = arith.constant dense<0.000000e+00> : vector<256xf32>
    %1273 = vector.multi_reduction <add>, %1272, %cst_547 [0] : vector<4x256xf32> to vector<256xf32>
    %1274 = vector.shape_cast %1273 : vector<256xf32> to vector<1x256xf32>
    %1275 = arith.mulf %1274, %1254 : vector<1x256xf32>
    %c1_548 = arith.constant 1 : index
    %c26_549 = arith.constant 26 : index
    %c0_550 = arith.constant 0 : index
    %1276 = vector.load %arg4[%c1_548, %c26_549, %c0_550] : memref<2x81x256xf32, #tpu.memory_space<vmem>>, vector<1x1x256xf32>
    %1277 = vector.shape_cast %1276 : vector<1x1x256xf32> to vector<1x256xf32>
    %1278 = vector.shape_cast %1275 : vector<1x256xf32> to vector<1x1x256xf32>
    tpu.vector_store %arg4[%c1_548, %c26_549, %c0_550], %1278 {strides = array<i32>} : memref<2x81x256xf32, #tpu.memory_space<vmem>>, vector<1x1x256xf32>,
    %1279 = vector.extract_strided_slice %669 {offsets = [0, 56], sizes = [4, 256], strides = [1, 1]} : vector<4x392xf32> to vector<4x256xf32>
    %1280 = arith.mulf %667, %1279 : vector<4x256xf32>
    %cst_551 = arith.constant dense<0.000000e+00> : vector<256xf32>
    %1281 = vector.multi_reduction <add>, %1280, %cst_551 [0] : vector<4x256xf32> to vector<256xf32>
    %1282 = vector.shape_cast %1281 : vector<256xf32> to vector<1x256xf32>
    %1283 = arith.mulf %1282, %1254 : vector<1x256xf32>
    %c1_552 = arith.constant 1 : index
    %c35_553 = arith.constant 35 : index
    %c0_554 = arith.constant 0 : index
    %1284 = vector.load %arg4[%c1_552, %c35_553, %c0_554] : memref<2x81x256xf32, #tpu.memory_space<vmem>>, vector<1x1x256xf32>
    %1285 = vector.shape_cast %1284 : vector<1x1x256xf32> to vector<1x256xf32>
    %1286 = vector.shape_cast %1283 : vector<1x256xf32> to vector<1x1x256xf32>
    tpu.vector_store %arg4[%c1_552, %c35_553, %c0_554], %1286 {strides = array<i32>} : memref<2x81x256xf32, #tpu.memory_space<vmem>>, vector<1x1x256xf32>,
    %1287 = vector.extract_strided_slice %669 {offsets = [0, 72], sizes = [4, 256], strides = [1, 1]} : vector<4x392xf32> to vector<4x256xf32>
    %1288 = arith.mulf %667, %1287 : vector<4x256xf32>
    %cst_555 = arith.constant dense<0.000000e+00> : vector<256xf32>
    %1289 = vector.multi_reduction <add>, %1288, %cst_555 [0] : vector<4x256xf32> to vector<256xf32>
    %1290 = vector.shape_cast %1289 : vector<256xf32> to vector<1x256xf32>
    %1291 = arith.mulf %1290, %1254 : vector<1x256xf32>
    %c1_556 = arith.constant 1 : index
    %c44_557 = arith.constant 44 : index
    %c0_558 = arith.constant 0 : index
    %1292 = vector.load %arg4[%c1_556, %c44_557, %c0_558] : memref<2x81x256xf32, #tpu.memory_space<vmem>>, vector<1x1x256xf32>
    %1293 = vector.shape_cast %1292 : vector<1x1x256xf32> to vector<1x256xf32>
    %1294 = vector.shape_cast %1291 : vector<1x256xf32> to vector<1x1x256xf32>
    tpu.vector_store %arg4[%c1_556, %c44_557, %c0_558], %1294 {strides = array<i32>} : memref<2x81x256xf32, #tpu.memory_space<vmem>>, vector<1x1x256xf32>,
    %1295 = vector.extract_strided_slice %669 {offsets = [0, 88], sizes = [4, 256], strides = [1, 1]} : vector<4x392xf32> to vector<4x256xf32>
    %1296 = arith.mulf %667, %1295 : vector<4x256xf32>
    %cst_559 = arith.constant dense<0.000000e+00> : vector<256xf32>
    %1297 = vector.multi_reduction <add>, %1296, %cst_559 [0] : vector<4x256xf32> to vector<256xf32>
    %1298 = vector.shape_cast %1297 : vector<256xf32> to vector<1x256xf32>
    %1299 = arith.mulf %1298, %1254 : vector<1x256xf32>
    %c1_560 = arith.constant 1 : index
    %c53_561 = arith.constant 53 : index
    %c0_562 = arith.constant 0 : index
    %1300 = vector.load %arg4[%c1_560, %c53_561, %c0_562] : memref<2x81x256xf32, #tpu.memory_space<vmem>>, vector<1x1x256xf32>
    %1301 = vector.shape_cast %1300 : vector<1x1x256xf32> to vector<1x256xf32>
    %1302 = vector.shape_cast %1299 : vector<1x256xf32> to vector<1x1x256xf32>
    tpu.vector_store %arg4[%c1_560, %c53_561, %c0_562], %1302 {strides = array<i32>} : memref<2x81x256xf32, #tpu.memory_space<vmem>>, vector<1x1x256xf32>,
    %1303 = vector.extract_strided_slice %669 {offsets = [0, 104], sizes = [4, 256], strides = [1, 1]} : vector<4x392xf32> to vector<4x256xf32>
    %1304 = arith.mulf %667, %1303 : vector<4x256xf32>
    %cst_563 = arith.constant dense<0.000000e+00> : vector<256xf32>
    %1305 = vector.multi_reduction <add>, %1304, %cst_563 [0] : vector<4x256xf32> to vector<256xf32>
    %1306 = vector.shape_cast %1305 : vector<256xf32> to vector<1x256xf32>
    %1307 = arith.mulf %1306, %1254 : vector<1x256xf32>
    %c1_564 = arith.constant 1 : index
    %c62_565 = arith.constant 62 : index
    %c0_566 = arith.constant 0 : index
    %1308 = vector.load %arg4[%c1_564, %c62_565, %c0_566] : memref<2x81x256xf32, #tpu.memory_space<vmem>>, vector<1x1x256xf32>
    %1309 = vector.shape_cast %1308 : vector<1x1x256xf32> to vector<1x256xf32>
    %1310 = vector.shape_cast %1307 : vector<1x256xf32> to vector<1x1x256xf32>
    tpu.vector_store %arg4[%c1_564, %c62_565, %c0_566], %1310 {strides = array<i32>} : memref<2x81x256xf32, #tpu.memory_space<vmem>>, vector<1x1x256xf32>,
    %1311 = vector.extract_strided_slice %669 {offsets = [0, 120], sizes = [4, 256], strides = [1, 1]} : vector<4x392xf32> to vector<4x256xf32>
    %1312 = arith.mulf %667, %1311 : vector<4x256xf32>
    %cst_567 = arith.constant dense<0.000000e+00> : vector<256xf32>
    %1313 = vector.multi_reduction <add>, %1312, %cst_567 [0] : vector<4x256xf32> to vector<256xf32>
    %1314 = vector.shape_cast %1313 : vector<256xf32> to vector<1x256xf32>
    %1315 = arith.mulf %1314, %1254 : vector<1x256xf32>
    %c1_568 = arith.constant 1 : index
    %c71_569 = arith.constant 71 : index
    %c0_570 = arith.constant 0 : index
    %1316 = vector.load %arg4[%c1_568, %c71_569, %c0_570] : memref<2x81x256xf32, #tpu.memory_space<vmem>>, vector<1x1x256xf32>
    %1317 = vector.shape_cast %1316 : vector<1x1x256xf32> to vector<1x256xf32>
    %1318 = vector.shape_cast %1315 : vector<1x256xf32> to vector<1x1x256xf32>
    tpu.vector_store %arg4[%c1_568, %c71_569, %c0_570], %1318 {strides = array<i32>} : memref<2x81x256xf32, #tpu.memory_space<vmem>>, vector<1x1x256xf32>,
    %1319 = vector.extract_strided_slice %669 {offsets = [0, 136], sizes = [4, 256], strides = [1, 1]} : vector<4x392xf32> to vector<4x256xf32>
    %1320 = arith.mulf %667, %1319 : vector<4x256xf32>
    %cst_571 = arith.constant dense<0.000000e+00> : vector<256xf32>
    %1321 = vector.multi_reduction <add>, %1320, %cst_571 [0] : vector<4x256xf32> to vector<256xf32>
    %1322 = vector.shape_cast %1321 : vector<256xf32> to vector<1x256xf32>
    %1323 = arith.mulf %1322, %1254 : vector<1x256xf32>
    %c1_572 = arith.constant 1 : index
    %c80_573 = arith.constant 80 : index
    %c0_574 = arith.constant 0 : index
    %1324 = vector.load %arg4[%c1_572, %c80_573, %c0_574] : memref<2x81x256xf32, #tpu.memory_space<vmem>>, vector<1x1x256xf32>
    %1325 = vector.shape_cast %1324 : vector<1x1x256xf32> to vector<1x256xf32>
    %1326 = vector.shape_cast %1323 : vector<1x256xf32> to vector<1x1x256xf32>
    tpu.vector_store %arg4[%c1_572, %c80_573, %c0_574], %1326 {strides = array<i32>} : memref<2x81x256xf32, #tpu.memory_space<vmem>>, vector<1x1x256xf32>,
    return
  }
  func.func @transform_0(%arg0: i32) -> (i32, i32, i32) {
    %c0_i32 = arith.constant 0 : i32
    %c0_i32_0 = arith.constant 0 : i32
    %c0_i32_1 = arith.constant 0 : i32
    return %arg0, %c0_i32, %c0_i32_0 : i32, i32, i32
  }
  func.func @transform_1(%arg0: i32) -> (i32, i32, i32) {
    %c0_i32 = arith.constant 0 : i32
    %c0_i32_0 = arith.constant 0 : i32
    %c0_i32_1 = arith.constant 0 : i32
    return %arg0, %c0_i32, %c0_i32_0 : i32, i32, i32
  }
  func.func @transform_2(%arg0: i32) -> (i32, i32) {
    %c0_i32 = arith.constant 0 : i32
    %c0_i32_0 = arith.constant 0 : i32
    %c0_i32_1 = arith.constant 0 : i32
    return %c0_i32, %c0_i32_0 : i32, i32
  }
  func.func @transform_3(%arg0: i32) -> (i32, i32, i32) {
    %c0_i32 = arith.constant 0 : i32
    %c0_i32_0 = arith.constant 0 : i32
    %c0_i32_1 = arith.constant 0 : i32
    return %arg0, %c0_i32, %c0_i32_0 : i32, i32, i32
  }
}

</mosaic_0001>

<llo_original>
// kernel: corr_pallas.1
$region0: #{corr_pallas.1}
  #allocation0 [shape = 'u32[]', space=smem, size = 0x4, offset = 0x4, fixed_abs, tag = 'smem constant byte address 0x4 - core index']
  #allocation1 [shape = 'u32[72,128]{1,0:T(1,128)}', space=vmem, size = 0x9000, scoped, tag = 'internal scratch']
  %s0 = inlined_call_operand.vmem [shape: f32[2,4,256], index: 0, kind: input, shape index: {}]
  %s1 = inlined_call_operand.vmem [shape: f32[2,4,392], index: 1, kind: input, shape index: {}]
  %s2 = inlined_call_operand.vmem [shape: f32[9,256], index: 2, kind: input, shape index: {}]
  %s3 = inlined_call_operand.vmem [shape: f32[2,81,256], index: 3, kind: output, shape index: {}]
  %s4 = sld [smem:[#allocation0]]
  $region22: #{corr_pallas.1} parent=0
    _
  %s6 = ssub.s32 1, %s4
  %s7 = scalar_select 0, %s6, %s4
  // Predicated region
  $region2: #{corr_pallas.1} parent=0 // pred_check
    _
  $region3: #{corr_pallas.1} parent=0 // pred_check_branch
    %9 = sbr.rel (0) target = $region5
  $region4: #{corr_pallas.1} parent=0 // pred_region
    _
  $region5: #{corr_pallas.1} parent=0 // pred_fallthru
    _
  // Predicated region
  $region6: #{corr_pallas.1} parent=0 // pred_check
    _
  $region7: #{corr_pallas.1} parent=0 // pred_check_branch
    %11 = sbr.rel (0) target = $region9
  $region8: #{corr_pallas.1} parent=0 // pred_region
    _
  $region9: #{corr_pallas.1} parent=0 // pred_fallthru
    _
  // Predicated region
  $region10: #{corr_pallas.1} parent=0 // pred_check
    _
  $region11: #{corr_pallas.1} parent=0 // pred_check_branch
    %13 = sbr.rel (0) target = $region13
  $region12: #{corr_pallas.1} parent=0 // pred_region
    _
  $region13: #{corr_pallas.1} parent=0 // pred_fallthru
    _
  %v14 = vld [vmem:[%s0] sm:$0xff]
  %v15 = vld [vmem:[%s0 + $0x8] sm:$0xff]
  %v16 = vmul.f32 %v14, 0.25
  %v17 = vmul.f32 %v15, 0.25
  %v18 = vld [vmem:[%s1] sm:$0xff]
  %v19 = vld [vmem:[%s1 + $0x8] sm:$0xff]
  %v20 = vld [vmem:[%s1 + $0x10] sm:$0xff]
  %v21 = vld [vmem:[%s1 + $0x18] sm:$0xff]
  %v22 = vld [vmem:[%s2] sm:$0xff]
  %v23 = vld [vmem:[%s2 + $0x8] sm:$0xff]
  %v24 = vld [vmem:[%s2 + $0x10] sm:$0x1]
  %v25 = vld [vmem:[%s2 + $0x18] sm:$0x1]
  %v26 = vmul.f32 %v16, %v18
  %28 = vst [vmem:[#allocation1] ss:$2 sm:$0xff] %v26
  %v29 = vld.sshfl [vmem:[#allocation1] sm:$0xff pattern:$0x75316420]
  %v30 = vld.sshfl [vmem:[#allocation1 + $0x8] sm:$0xff pattern:$0x75316420]
  %vm33 = vcmask 1043456
  %v34 = vsel %vm33, %v29, 0.0
  %v35 = vrot.slane %v34, 4
  %v36 = vadd.f32 %v34, %v35
  %v37 = vrot.slane %v36, 2
  %v38 = vadd.f32 %v36, %v37
  %v39 = vrot.slane %v38, 1
  %v40 = vadd.f32 %v38, %v39
  %v41 = vsel %vm33, %v30, 0.0
  %v42 = vrot.slane %v41, 4
  %v43 = vadd.f32 %v41, %v42
  %v44 = vrot.slane %v43, 2
  %v45 = vadd.f32 %v43, %v44
  %v46 = vrot.slane %v45, 1
  %v47 = vadd.f32 %v45, %v46
  %v48 = vmul.f32 %v40, %v22
  %v49 = vmul.f32 %v47, %v23
  %v52 = vrot.slane %v49, 7
  %vm53 = vcmask 1040384
  %v54 = vsel %vm53, %v48, %v52
  %v56 = vlaneseq
  %vm57 = vcmp.ge.s32.totalorder %v56, 0
  %vm58 = vcmp.lt.s32.totalorder %v56, 256
  %vm59 = vmand %vm57, %vm58
  %60 = vst.msk [vmem:[%s3] ss:$8 sm:$0x3] %vm59, %v54
  %61 = vst.msk [vmem:[%s3] ss:$8 sm:$0x0] %vm59, %v54
  %64 = vrot.lane.b32.xlu0 %v18, 112
  %v65 = vpop.permute.xlu0 %64
  %66 = vrot.lane.b32.xlu0 %v19, 112
  %v67 = vpop.permute.xlu0 %66
  %v68 = vrot.slane %v65, 4
  %v69 = vrot.slane %v67, 4
  %v70 = vsel %vm33, %v68, %v69
  %vm71 = vcmask 916480
  %v72 = vsel %vm71, %v65, %v70
  %v74 = vmul.f32 %v16, %v72
  %76 = vst [vmem:[#allocation1] ss:$2 sm:$0xff] %v74
  %v77 = vld.sshfl [vmem:[#allocation1] sm:$0xff pattern:$0x75316420]
  %v78 = vld.sshfl [vmem:[#allocation1 + $0x8] sm:$0xff pattern:$0x75316420]
  %v81 = vsel %vm33, %v77, 0.0
  %v82 = vrot.slane %v81, 4
  %v83 = vadd.f32 %v81, %v82
  %v84 = vrot.slane %v83, 2
  %v85 = vadd.f32 %v83, %v84
  %v86 = vrot.slane %v85, 1
  %v87 = vadd.f32 %v85, %v86
  %v88 = vsel %vm33, %v78, 0.0
  %v89 = vrot.slane %v88, 4
  %v90 = vadd.f32 %v88, %v89
  %v91 = vrot.slane %v90, 2
  %v92 = vadd.f32 %v90, %v91
  %v93 = vrot.slane %v92, 1
  %v94 = vadd.f32 %v92, %v93
  %v95 = vmul.f32 %v87, %v22
  %v96 = vmul.f32 %v94, %v23
  %v99 = vrot.slane %v96, 7
  %v100 = vsel %vm53, %v95, %v99
  %s102 = scalar_lea.vmem %s3, 17
  %103 = vst.msk [vmem:[%s102] ss:$8 sm:$0x3] %vm59, %v100
  %104 = vst.msk [vmem:[%s102] ss:$8 sm:$0x0] %vm59, %v100
  %105 = vrot.lane.b32.xlu0 %v18, 96
  %v106 = vpop.permute.xlu0 %105
  %107 = vrot.lane.b32.xlu0 %v19, 96
  %v108 = vpop.permute.xlu0 %107
  %v109 = vrot.slane %v106, 4
  %v110 = vrot.slane %v108, 4
  %v111 = vsel %vm33, %v109, %v110
  %vm112 = vcmask 785408
  %v113 = vsel %vm112, %v106, %v111
  %v115 = vmul.f32 %v16, %v113
  %117 = vst [vmem:[#allocation1] ss:$2 sm:$0xff] %v115
  %v118 = vld.sshfl [vmem:[#allocation1] sm:$0xff pattern:$0x75316420]
  %v119 = vld.sshfl [vmem:[#allocation1 + $0x8] sm:$0xff pattern:$0x75316420]
  %v122 = vsel %vm33, %v118, 0.0
  %v123 = vrot.slane %v122, 4
  %v124 = vadd.f32 %v122, %v123
  %v125 = vrot.slane %v124, 2
  %v126 = vadd.f32 %v124, %v125
  %v127 = vrot.slane %v126, 1
  %v128 = vadd.f32 %v126, %v127
  %v129 = vsel %vm33, %v119, 0.0
  %v130 = vrot.slane %v129, 4
  %v131 = vadd.f32 %v129, %v130
  %v132 = vrot.slane %v131, 2
  %v133 = vadd.f32 %v131, %v132
  %v134 = vrot.slane %v133, 1
  %v135 = vadd.f32 %v133, %v134
  %v136 = vmul.f32 %v128, %v22
  %v137 = vmul.f32 %v135, %v23
  %v140 = vrot.slane %v137, 7
  %v141 = vsel %vm53, %v136, %v140
  %s143 = scalar_lea.vmem %s3, 34
  %144 = vst.msk [vmem:[%s143] ss:$8 sm:$0x3] %vm59, %v141
  %145 = vst.msk [vmem:[%s143] ss:$8 sm:$0x0] %vm59, %v141
  %146 = vrot.lane.b32.xlu0 %v18, 80
  %v147 = vpop.permute.xlu0 %146
  %148 = vrot.lane.b32.xlu0 %v19, 80
  %v149 = vpop.permute.xlu0 %148
  %v150 = vrot.slane %v147, 4
  %v151 = vrot.slane %v149, 4
  %v152 = vsel %vm33, %v150, %v151
  %vm153 = vcmask 654336
  %v154 = vsel %vm153, %v147, %v152
  %v156 = vmul.f32 %v16, %v154
  %158 = vst [vmem:[#allocation1] ss:$2 sm:$0xff] %v156
  %v159 = vld.sshfl [vmem:[#allocation1] sm:$0xff pattern:$0x75316420]
  %v160 = vld.sshfl [vmem:[#allocation1 + $0x8] sm:$0xff pattern:$0x75316420]
  %v163 = vsel %vm33, %v159, 0.0
  %v164 = vrot.slane %v163, 4
  %v165 = vadd.f32 %v163, %v164
  %v166 = vrot.slane %v165, 2
  %v167 = vadd.f32 %v165, %v166
  %v168 = vrot.slane %v167, 1
  %v169 = vadd.f32 %v167, %v168
  %v170 = vsel %vm33, %v160, 0.0
  %v171 = vrot.slane %v170, 4
  %v172 = vadd.f32 %v170, %v171
  %v173 = vrot.slane %v172, 2
  %v174 = vadd.f32 %v172, %v173
  %v175 = vrot.slane %v174, 1
  %v176 = vadd.f32 %v174, %v175
  %v177 = vmul.f32 %v169, %v22
  %v178 = vmul.f32 %v176, %v23
  %v181 = vrot.slane %v178, 7
  %v182 = vsel %vm53, %v177, %v181
  %s184 = scalar_lea.vmem %s3, 51
  %185 = vst.msk [vmem:[%s184] ss:$8 sm:$0x3] %vm59, %v182
  %186 = vst.msk [vmem:[%s184] ss:$8 sm:$0x0] %vm59, %v182
  %187 = vrot.lane.b32.xlu0 %v18, 64
  %v188 = vpop.permute.xlu0 %187
  %189 = vrot.lane.b32.xlu0 %v19, 64
  %v190 = vpop.permute.xlu0 %189
  %v191 = vrot.slane %v188, 4
  %v192 = vrot.slane %v190, 4
  %v193 = vsel %vm33, %v191, %v192
  %vm194 = vcmask 523264
  %v195 = vsel %vm194, %v188, %v193
  %v197 = vmul.f32 %v16, %v195
  %199 = vst [vmem:[#allocation1] ss:$2 sm:$0xff] %v197
  %v200 = vld.sshfl [vmem:[#allocation1] sm:$0xff pattern:$0x75316420]
  %v201 = vld.sshfl [vmem:[#allocation1 + $0x8] sm:$0xff pattern:$0x75316420]
  %v204 = vsel %vm33, %v200, 0.0
  %v205 = vrot.slane %v204, 4
  %v206 = vadd.f32 %v204, %v205
  %v207 = vrot.slane %v206, 2
  %v208 = vadd.f32 %v206, %v207
  %v209 = vrot.slane %v208, 1
  %v210 = vadd.f32 %v208, %v209
  %v211 = vsel %vm33, %v201, 0.0
  %v212 = vrot.slane %v211, 4
  %v213 = vadd.f32 %v211, %v212
  %v214 = vrot.slane %v213, 2
  %v215 = vadd.f32 %v213, %v214
  %v216 = vrot.slane %v215, 1
  %v217 = vadd.f32 %v215, %v216
  %v218 = vmul.f32 %v210, %v22
  %v219 = vmul.f32 %v217, %v23
  %v222 = vrot.slane %v219, 7
  %v223 = vsel %vm53, %v218, %v222
  %s225 = scalar_lea.vmem %s3, 68
  %226 = vst.msk [vmem:[%s225] ss:$8 sm:$0x3] %vm59, %v223
  %227 = vst.msk [vmem:[%s225] ss:$8 sm:$0x0] %vm59, %v223
  %228 = vrot.lane.b32.xlu0 %v18, 48
  %v229 = vpop.permute.xlu0 %228
  %230 = vrot.lane.b32.xlu0 %v19, 48
  %v231 = vpop.permute.xlu0 %230
  %v232 = vrot.slane %v229, 4
  %v233 = vrot.slane %v231, 4
  %v234 = vsel %vm33, %v232, %v233
  %vm235 = vcmask 392192
  %v236 = vsel %vm235, %v229, %v234
  %v238 = vmul.f32 %v16, %v236
  %240 = vst [vmem:[#allocation1] ss:$2 sm:$0xff] %v238
  %v241 = vld.sshfl [vmem:[#allocation1] sm:$0xff pattern:$0x75316420]
  %v242 = vld.sshfl [vmem:[#allocation1 + $0x8] sm:$0xff pattern:$0x75316420]
  %v245 = vsel %vm33, %v241, 0.0
  %v246 = vrot.slane %v245, 4
  %v247 = vadd.f32 %v245, %v246
  %v248 = vrot.slane %v247, 2
  %v249 = vadd.f32 %v247, %v248
  %v250 = vrot.slane %v249, 1
  %v251 = vadd.f32 %v249, %v250
  %v252 = vsel %vm33, %v242, 0.0
  %v253 = vrot.slane %v252, 4
  %v254 = vadd.f32 %v252, %v253
  %v255 = vrot.slane %v254, 2
  %v256 = vadd.f32 %v254, %v255
  %v257 = vrot.slane %v256, 1
  %v258 = vadd.f32 %v256, %v257
  %v259 = vmul.f32 %v251, %v22
  %v260 = vmul.f32 %v258, %v23
  %v263 = vrot.slane %v260, 7
  %v264 = vsel %vm53, %v259, %v263
  %s266 = scalar_lea.vmem %s3, 85
  %267 = vst.msk [vmem:[%s266] ss:$8 sm:$0x3] %vm59, %v264
  %268 = vst.msk [vmem:[%s266] ss:$8 sm:$0x0] %vm59, %v264
  %269 = vrot.lane.b32.xlu0 %v18, 32
  %v270 = vpop.permute.xlu0 %269
  %271 = vrot.lane.b32.xlu0 %v19, 32
  %v272 = vpop.permute.xlu0 %271
  %v273 = vrot.slane %v270, 4
  %v274 = vrot.slane %v272, 4
  %v275 = vsel %vm33, %v273, %v274
  %vm276 = vcmask 261120
  %v277 = vsel %vm276, %v270, %v275
  %v279 = vmul.f32 %v16, %v277
  %281 = vst [vmem:[#allocation1] ss:$2 sm:$0xff] %v279
  %v282 = vld.sshfl [vmem:[#allocation1] sm:$0xff pattern:$0x75316420]
  %v283 = vld.sshfl [vmem:[#allocation1 + $0x8] sm:$0xff pattern:$0x75316420]
  %v286 = vsel %vm33, %v282, 0.0
  %v287 = vrot.slane %v286, 4
  %v288 = vadd.f32 %v286, %v287
  %v289 = vrot.slane %v288, 2
  %v290 = vadd.f32 %v288, %v289
  %v291 = vrot.slane %v290, 1
  %v292 = vadd.f32 %v290, %v291
  %v293 = vsel %vm33, %v283, 0.0
  %v294 = vrot.slane %v293, 4
  %v295 = vadd.f32 %v293, %v294
  %v296 = vrot.slane %v295, 2
  %v297 = vadd.f32 %v295, %v296
  %v298 = vrot.slane %v297, 1
  %v299 = vadd.f32 %v297, %v298
  %v300 = vmul.f32 %v292, %v22
  %v301 = vmul.f32 %v299, %v23
  %v304 = vrot.slane %v301, 7
  %v305 = vsel %vm53, %v300, %v304
  %s307 = scalar_lea.vmem %s3, 102
  %308 = vst.msk [vmem:[%s307] ss:$8 sm:$0x3] %vm59, %v305
  %309 = vst.msk [vmem:[%s307] ss:$8 sm:$0x0] %vm59, %v305
  %310 = vrot.lane.b32.xlu0 %v18, 16
  %v311 = vpop.permute.xlu0 %310
  %312 = vrot.lane.b32.xlu0 %v19, 16
  %v313 = vpop.permute.xlu0 %312
  %v314 = vrot.slane %v311, 4
  %v315 = vrot.slane %v313, 4
  %v316 = vsel %vm33, %v314, %v315
  %vm317 = vcmask 130048
  %v318 = vsel %vm317, %v311, %v316
  %v320 = vmul.f32 %v16, %v318
  %322 = vst [vmem:[#allocation1] ss:$2 sm:$0xff] %v320
  %v323 = vld.sshfl [vmem:[#allocation1] sm:$0xff pattern:$0x75316420]
  %v324 = vld.sshfl [vmem:[#allocation1 + $0x8] sm:$0xff pattern:$0x75316420]
  %v327 = vsel %vm33, %v323, 0.0
  %v328 = vrot.slane %v327, 4
  %v329 = vadd.f32 %v327, %v328
  %v330 = vrot.slane %v329, 2
  %v331 = vadd.f32 %v329, %v330
  %v332 = vrot.slane %v331, 1
  %v333 = vadd.f32 %v331, %v332
  %v334 = vsel %vm33, %v324, 0.0
  %v335 = vrot.slane %v334, 4
  %v336 = vadd.f32 %v334, %v335
  %v337 = vrot.slane %v336, 2
  %v338 = vadd.f32 %v336, %v337
  %v339 = vrot.slane %v338, 1
  %v340 = vadd.f32 %v338, %v339
  %v341 = vmul.f32 %v333, %v22
  %v342 = vmul.f32 %v340, %v23
  %v345 = vrot.slane %v342, 7
  %v346 = vsel %vm53, %v341, %v345
  %s348 = scalar_lea.vmem %s3, 119
  %349 = vst.msk [vmem:[%s348] ss:$8 sm:$0x3] %vm59, %v346
  %350 = vst.msk [vmem:[%s348] ss:$8 sm:$0x0] %vm59, %v346
  %v351 = vrot.slane %v18, 4
  %v352 = vrot.slane %v19, 4
  %v353 = vsel %vm33, %v351, %v352
  %v355 = vmul.f32 %v16, %v353
  %357 = vst [vmem:[#allocation1] ss:$2 sm:$0xff] %v355
  %v358 = vld.sshfl [vmem:[#allocation1] sm:$0xff pattern:$0x75316420]
  %v359 = vld.sshfl [vmem:[#allocation1 + $0x8] sm:$0xff pattern:$0x75316420]
  %v362 = vsel %vm33, %v358, 0.0
  %v363 = vrot.slane %v362, 4
  %v364 = vadd.f32 %v362, %v363
  %v365 = vrot.slane %v364, 2
  %v366 = vadd.f32 %v364, %v365
  %v367 = vrot.slane %v366, 1
  %v368 = vadd.f32 %v366, %v367
  %v369 = vsel %vm33, %v359, 0.0
  %v370 = vrot.slane %v369, 4
  %v371 = vadd.f32 %v369, %v370
  %v372 = vrot.slane %v371, 2
  %v373 = vadd.f32 %v371, %v372
  %v374 = vrot.slane %v373, 1
  %v375 = vadd.f32 %v373, %v374
  %v376 = vmul.f32 %v368, %v22
  %v377 = vmul.f32 %v375, %v23
  %v380 = vrot.slane %v377, 7
  %v381 = vsel %vm53, %v376, %v380
  %s383 = scalar_lea.vmem %s3, 144
  %384 = vst.msk [vmem:[%s383] ss:$8 sm:$0x3] %vm59, %v381
  %385 = vst.msk [vmem:[%s383] ss:$8 sm:$0x0] %vm59, %v381
  %386 = vrot.lane.b32.xlu0 %v18, 127
  %v387 = vpop.permute.xlu0 %386
  %388 = vrot.lane.b32.xlu0 %v19, 127
  %v389 = vpop.permute.xlu0 %388
  %v390 = vrot.slane %v387, 4
  %v391 = vrot.slane %v389, 4
  %v392 = vsel %vm33, %v390, %v391
  %vm393 = vcmask 1039360
  %v394 = vsel %vm393, %v387, %v392
  %v396 = vmul.f32 %v16, %v394
  %398 = vst [vmem:[#allocation1] ss:$2 sm:$0xff] %v396
  %v399 = vld.sshfl [vmem:[#allocation1] sm:$0xff pattern:$0x75316420]
  %v400 = vld.sshfl [vmem:[#allocation1 + $0x8] sm:$0xff pattern:$0x75316420]
  %v403 = vsel %vm33, %v399, 0.0
  %v404 = vrot.slane %v403, 4
  %v405 = vadd.f32 %v403, %v404
  %v406 = vrot.slane %v405, 2
  %v407 = vadd.f32 %v405, %v406
  %v408 = vrot.slane %v407, 1
  %v409 = vadd.f32 %v407, %v408
  %v410 = vsel %vm33, %v400, 0.0
  %v411 = vrot.slane %v410, 4
  %v412 = vadd.f32 %v410, %v411
  %v413 = vrot.slane %v412, 2
  %v414 = vadd.f32 %v412, %v413
  %v415 = vrot.slane %v414, 1
  %v416 = vadd.f32 %v414, %v415
  %v417 = vmul.f32 %v409, %v22
  %v418 = vmul.f32 %v416, %v23
  %421 = vst [vmem:[#allocation1] sm:$0xff] %v417
  %422 = vst [vmem:[#allocation1 + $0x9] sm:$0xff] %v418
  %s423 = scalar_lea.vmem [#allocation1], 1
  %v424 = vld [vmem:[%s423] ss:$9 sm:$0xff]
  %s426 = scalar_lea.vmem %s3, 1
  %427 = vst.msk [vmem:[%s426] ss:$8 sm:$0x3] %vm59, %v424
  %428 = vst.msk [vmem:[%s426] ss:$8 sm:$0x0] %vm59, %v424
  %429 = vrot.lane.b32.xlu0 %v18, 111
  %v430 = vpop.permute.xlu0 %429
  %431 = vrot.lane.b32.xlu0 %v19, 111
  %v432 = vpop.permute.xlu0 %431
  %v433 = vrot.slane %v430, 4
  %v434 = vrot.slane %v432, 4
  %v435 = vsel %vm33, %v433, %v434
  %vm436 = vcmask 908288
  %v437 = vsel %vm436, %v430, %v435
  %v439 = vmul.f32 %v16, %v437
  %441 = vst [vmem:[#allocation1] ss:$2 sm:$0xff] %v439
  %v442 = vld.sshfl [vmem:[#allocation1] sm:$0xff pattern:$0x75316420]
  %v443 = vld.sshfl [vmem:[#allocation1 + $0x8] sm:$0xff pattern:$0x75316420]
  %v446 = vsel %vm33, %v442, 0.0
  %v447 = vrot.slane %v446, 4
  %v448 = vadd.f32 %v446, %v447
  %v449 = vrot.slane %v448, 2
  %v450 = vadd.f32 %v448, %v449
  %v451 = vrot.slane %v450, 1
  %v452 = vadd.f32 %v450, %v451
  %v453 = vsel %vm33, %v443, 0.0
  %v454 = vrot.slane %v453, 4
  %v455 = vadd.f32 %v453, %v454
  %v456 = vrot.slane %v455, 2
  %v457 = vadd.f32 %v455, %v456
  %v458 = vrot.slane %v457, 1
  %v459 = vadd.f32 %v457, %v458
  %v460 = vmul.f32 %v452, %v22
  %v461 = vmul.f32 %v459, %v23
  %464 = vst [vmem:[#allocation1] sm:$0xff] %v460
  %465 = vst [vmem:[#allocation1 + $0x9] sm:$0xff] %v461
  %s466 = scalar_lea.vmem [#allocation1], 1
  %v467 = vld [vmem:[%s466] ss:$9 sm:$0xff]
  %s469 = scalar_lea.vmem %s3, 18
  %470 = vst.msk [vmem:[%s469] ss:$8 sm:$0x3] %vm59, %v467
  %471 = vst.msk [vmem:[%s469] ss:$8 sm:$0x0] %vm59, %v467
  %472 = vrot.lane.b32.xlu0 %v18, 95
  %v473 = vpop.permute.xlu0 %472
  %474 = vrot.lane.b32.xlu0 %v19, 95
  %v475 = vpop.permute.xlu0 %474
  %v476 = vrot.slane %v473, 4
  %v477 = vrot.slane %v475, 4
  %v478 = vsel %vm33, %v476, %v477
  %vm479 = vcmask 777216
  %v480 = vsel %vm479, %v473, %v478
  %v482 = vmul.f32 %v16, %v480
  %484 = vst [vmem:[#allocation1] ss:$2 sm:$0xff] %v482
  %v485 = vld.sshfl [vmem:[#allocation1] sm:$0xff pattern:$0x75316420]
  %v486 = vld.sshfl [vmem:[#allocation1 + $0x8] sm:$0xff pattern:$0x75316420]
  %v489 = vsel %vm33, %v485, 0.0
  %v490 = vrot.slane %v489, 4
  %v491 = vadd.f32 %v489, %v490
  %v492 = vrot.slane %v491, 2
  %v493 = vadd.f32 %v491, %v492
  %v494 = vrot.slane %v493, 1
  %v495 = vadd.f32 %v493, %v494
  %v496 = vsel %vm33, %v486, 0.0
  %v497 = vrot.slane %v496, 4
  %v498 = vadd.f32 %v496, %v497
  %v499 = vrot.slane %v498, 2
  %v500 = vadd.f32 %v498, %v499
  %v501 = vrot.slane %v500, 1
  %v502 = vadd.f32 %v500, %v501
  %v503 = vmul.f32 %v495, %v22
  %v504 = vmul.f32 %v502, %v23
  %507 = vst [vmem:[#allocation1] sm:$0xff] %v503
  %508 = vst [vmem:[#allocation1 + $0x9] sm:$0xff] %v504
  %s509 = scalar_lea.vmem [#allocation1], 1
  %v510 = vld [vmem:[%s509] ss:$9 sm:$0xff]
  %s512 = scalar_lea.vmem %s3, 35
  %513 = vst.msk [vmem:[%s512] ss:$8 sm:$0x3] %vm59, %v510
  %514 = vst.msk [vmem:[%s512] ss:$8 sm:$0x0] %vm59, %v510
  %515 = vrot.lane.b32.xlu0 %v18, 79
  %v516 = vpop.permute.xlu0 %515
  %517 = vrot.lane.b32.xlu0 %v19, 79
  %v518 = vpop.permute.xlu0 %517
  %v519 = vrot.slane %v516, 4
  %v520 = vrot.slane %v518, 4
  %v521 = vsel %vm33, %v519, %v520
  %vm522 = vcmask 646144
  %v523 = vsel %vm522, %v516, %v521
  %v525 = vmul.f32 %v16, %v523
  %527 = vst [vmem:[#allocation1] ss:$2 sm:$0xff] %v525
  %v528 = vld.sshfl [vmem:[#allocation1] sm:$0xff pattern:$0x75316420]
  %v529 = vld.sshfl [vmem:[#allocation1 + $0x8] sm:$0xff pattern:$0x75316420]
  %v532 = vsel %vm33, %v528, 0.0
  %v533 = vrot.slane %v532, 4
  %v534 = vadd.f32 %v532, %v533
  %v535 = vrot.slane %v534, 2
  %v536 = vadd.f32 %v534, %v535
  %v537 = vrot.slane %v536, 1
  %v538 = vadd.f32 %v536, %v537
  %v539 = vsel %vm33, %v529, 0.0
  %v540 = vrot.slane %v539, 4
  %v541 = vadd.f32 %v539, %v540
  %v542 = vrot.slane %v541, 2
  %v543 = vadd.f32 %v541, %v542
  %v544 = vrot.slane %v543, 1
  %v545 = vadd.f32 %v543, %v544
  %v546 = vmul.f32 %v538, %v22
  %v547 = vmul.f32 %v545, %v23
  %550 = vst [vmem:[#allocation1] sm:$0xff] %v546
  %551 = vst [vmem:[#allocation1 + $0x9] sm:$0xff] %v547
  %s552 = scalar_lea.vmem [#allocation1], 1
  %v553 = vld [vmem:[%s552] ss:$9 sm:$0xff]
  %s555 = scalar_lea.vmem %s3, 52
  %556 = vst.msk [vmem:[%s555] ss:$8 sm:$0x3] %vm59, %v553
  %557 = vst.msk [vmem:[%s555] ss:$8 sm:$0x0] %vm59, %v553
  %558 = vrot.lane.b32.xlu0 %v18, 63
  %v559 = vpop.permute.xlu0 %558
  %560 = vrot.lane.b32.xlu0 %v19, 63
  %v561 = vpop.permute.xlu0 %560
  %v562 = vrot.slane %v559, 4
  %v563 = vrot.slane %v561, 4
  %v564 = vsel %vm33, %v562, %v563
  %vm565 = vcmask 515072
  %v566 = vsel %vm565, %v559, %v564
  %v568 = vmul.f32 %v16, %v566
  %570 = vst [vmem:[#allocation1] ss:$2 sm:$0xff] %v568
  %v571 = vld.sshfl [vmem:[#allocation1] sm:$0xff pattern:$0x75316420]
  %v572 = vld.sshfl [vmem:[#allocation1 + $0x8] sm:$0xff pattern:$0x75316420]
  %v575 = vsel %vm33, %v571, 0.0
  %v576 = vrot.slane %v575, 4
  %v577 = vadd.f32 %v575, %v576
  %v578 = vrot.slane %v577, 2
  %v579 = vadd.f32 %v577, %v578
  %v580 = vrot.slane %v579, 1
  %v581 = vadd.f32 %v579, %v580
  %v582 = vsel %vm33, %v572, 0.0
  %v583 = vrot.slane %v582, 4
  %v584 = vadd.f32 %v582, %v583
  %v585 = vrot.slane %v584, 2
  %v586 = vadd.f32 %v584, %v585
  %v587 = vrot.slane %v586, 1
  %v588 = vadd.f32 %v586, %v587
  %v589 = vmul.f32 %v581, %v22
  %v590 = vmul.f32 %v588, %v23
  %593 = vst [vmem:[#allocation1] sm:$0xff] %v589
  %594 = vst [vmem:[#allocation1 + $0x9] sm:$0xff] %v590
  %s595 = scalar_lea.vmem [#allocation1], 1
  %v596 = vld [vmem:[%s595] ss:$9 sm:$0xff]
  %s598 = scalar_lea.vmem %s3, 69
  %599 = vst.msk [vmem:[%s598] ss:$8 sm:$0x3] %vm59, %v596
  %600 = vst.msk [vmem:[%s598] ss:$8 sm:$0x0] %vm59, %v596
  %601 = vrot.lane.b32.xlu0 %v18, 47
  %v602 = vpop.permute.xlu0 %601
  %603 = vrot.lane.b32.xlu0 %v19, 47
  %v604 = vpop.permute.xlu0 %603
  %v605 = vrot.slane %v602, 4
  %v606 = vrot.slane %v604, 4
  %v607 = vsel %vm33, %v605, %v606
  %vm608 = vcmask 384000
  %v609 = vsel %vm608, %v602, %v607
  %v611 = vmul.f32 %v16, %v609
  %613 = vst [vmem:[#allocation1] ss:$2 sm:$0xff] %v611
  %v614 = vld.sshfl [vmem:[#allocation1] sm:$0xff pattern:$0x75316420]
  %v615 = vld.sshfl [vmem:[#allocation1 + $0x8] sm:$0xff pattern:$0x75316420]
  %v618 = vsel %vm33, %v614, 0.0
  %v619 = vrot.slane %v618, 4
  %v620 = vadd.f32 %v618, %v619
  %v621 = vrot.slane %v620, 2
  %v622 = vadd.f32 %v620, %v621
  %v623 = vrot.slane %v622, 1
  %v624 = vadd.f32 %v622, %v623
  %v625 = vsel %vm33, %v615, 0.0
  %v626 = vrot.slane %v625, 4
  %v627 = vadd.f32 %v625, %v626
  %v628 = vrot.slane %v627, 2
  %v629 = vadd.f32 %v627, %v628
  %v630 = vrot.slane %v629, 1
  %v631 = vadd.f32 %v629, %v630
  %v632 = vmul.f32 %v624, %v22
  %v633 = vmul.f32 %v631, %v23
  %636 = vst [vmem:[#allocation1] sm:$0xff] %v632
  %637 = vst [vmem:[#allocation1 + $0x9] sm:$0xff] %v633
  %s638 = scalar_lea.vmem [#allocation1], 1
  %v639 = vld [vmem:[%s638] ss:$9 sm:$0xff]
  %s641 = scalar_lea.vmem %s3, 86
  %642 = vst.msk [vmem:[%s641] ss:$8 sm:$0x3] %vm59, %v639
  %643 = vst.msk [vmem:[%s641] ss:$8 sm:$0x0] %vm59, %v639
  %644 = vrot.lane.b32.xlu0 %v18, 31
  %v645 = vpop.permute.xlu0 %644
  %646 = vrot.lane.b32.xlu0 %v19, 31
  %v647 = vpop.permute.xlu0 %646
  %v648 = vrot.slane %v645, 4
  %v649 = vrot.slane %v647, 4
  %v650 = vsel %vm33, %v648, %v649
  %vm651 = vcmask 252928
  %v652 = vsel %vm651, %v645, %v650
  %v654 = vmul.f32 %v16, %v652
  %656 = vst [vmem:[#allocation1] ss:$2 sm:$0xff] %v654
  %v657 = vld.sshfl [vmem:[#allocation1] sm:$0xff pattern:$0x75316420]
  %v658 = vld.sshfl [vmem:[#allocation1 + $0x8] sm:$0xff pattern:$0x75316420]
  %v661 = vsel %vm33, %v657, 0.0
  %v662 = vrot.slane %v661, 4
  %v663 = vadd.f32 %v661, %v662
  %v664 = vrot.slane %v663, 2
  %v665 = vadd.f32 %v663, %v664
  %v666 = vrot.slane %v665, 1
  %v667 = vadd.f32 %v665, %v666
  %v668 = vsel %vm33, %v658, 0.0
  %v669 = vrot.slane %v668, 4
  %v670 = vadd.f32 %v668, %v669
  %v671 = vrot.slane %v670, 2
  %v672 = vadd.f32 %v670, %v671
  %v673 = vrot.slane %v672, 1
  %v674 = vadd.f32 %v672, %v673
  %v675 = vmul.f32 %v667, %v22
  %v676 = vmul.f32 %v674, %v23
  %679 = vst [vmem:[#allocation1] sm:$0xff] %v675
  %680 = vst [vmem:[#allocation1 + $0x9] sm:$0xff] %v676
  %s681 = scalar_lea.vmem [#allocation1], 1
  %v682 = vld [vmem:[%s681] ss:$9 sm:$0xff]
  %s684 = scalar_lea.vmem %s3, 103
  %685 = vst.msk [vmem:[%s684] ss:$8 sm:$0x3] %vm59, %v682
  %686 = vst.msk [vmem:[%s684] ss:$8 sm:$0x0] %vm59, %v682
  %687 = vrot.lane.b32.xlu0 %v18, 15
  %v688 = vpop.permute.xlu0 %687
  %689 = vrot.lane.b32.xlu0 %v19, 15
  %v690 = vpop.permute.xlu0 %689
  %v691 = vrot.slane %v688, 4
  %v692 = vrot.slane %v690, 4
  %v693 = vsel %vm33, %v691, %v692
  %vm694 = vcmask 121856
  %v695 = vsel %vm694, %v688, %v693
  %v697 = vmul.f32 %v16, %v695
  %699 = vst [vmem:[#allocation1] ss:$2 sm:$0xff] %v697
  %v700 = vld.sshfl [vmem:[#allocation1] sm:$0xff pattern:$0x75316420]
  %v701 = vld.sshfl [vmem:[#allocation1 + $0x8] sm:$0xff pattern:$0x75316420]
  %v704 = vsel %vm33, %v700, 0.0
  %v705 = vrot.slane %v704, 4
  %v706 = vadd.f32 %v704, %v705
  %v707 = vrot.slane %v706, 2
  %v708 = vadd.f32 %v706, %v707
  %v709 = vrot.slane %v708, 1
  %v710 = vadd.f32 %v708, %v709
  %v711 = vsel %vm33, %v701, 0.0
  %v712 = vrot.slane %v711, 4
  %v713 = vadd.f32 %v711, %v712
  %v714 = vrot.slane %v713, 2
  %v715 = vadd.f32 %v713, %v714
  %v716 = vrot.slane %v715, 1
  %v717 = vadd.f32 %v715, %v716
  %v718 = vmul.f32 %v710, %v22
  %v719 = vmul.f32 %v717, %v23
  %722 = vst [vmem:[#allocation1] sm:$0xff] %v718
  %723 = vst [vmem:[#allocation1 + $0x9] sm:$0xff] %v719
  %s724 = scalar_lea.vmem [#allocation1], 1
  %v725 = vld [vmem:[%s724] ss:$9 sm:$0xff]
  %s727 = scalar_lea.vmem %s3, 128
  %728 = vst.msk [vmem:[%s727] ss:$8 sm:$0x3] %vm59, %v725
  %729 = vst.msk [vmem:[%s727] ss:$8 sm:$0x0] %vm59, %v725
  %v730 = vsel %vm393, %v392, %v389
  %v732 = vmul.f32 %v16, %v730
  %734 = vst [vmem:[#allocation1] ss:$2 sm:$0xff] %v732
  %v735 = vld.sshfl [vmem:[#allocation1] sm:$0xff pattern:$0x75316420]
  %v736 = vld.sshfl [vmem:[#allocation1 + $0x8] sm:$0xff pattern:$0x75316420]
  %v739 = vsel %vm33, %v735, 0.0
  %v740 = vrot.slane %v739, 4
  %v741 = vadd.f32 %v739, %v740
  %v742 = vrot.slane %v741, 2
  %v743 = vadd.f32 %v741, %v742
  %v744 = vrot.slane %v743, 1
  %v745 = vadd.f32 %v743, %v744
  %v746 = vsel %vm33, %v736, 0.0
  %v747 = vrot.slane %v746, 4
  %v748 = vadd.f32 %v746, %v747
  %v749 = vrot.slane %v748, 2
  %v750 = vadd.f32 %v748, %v749
  %v751 = vrot.slane %v750, 1
  %v752 = vadd.f32 %v750, %v751
  %v753 = vmul.f32 %v745, %v22
  %v754 = vmul.f32 %v752, %v23
  %757 = vst [vmem:[#allocation1] sm:$0xff] %v753
  %758 = vst [vmem:[#allocation1 + $0x9] sm:$0xff] %v754
  %s759 = scalar_lea.vmem [#allocation1], 1
  %v760 = vld [vmem:[%s759] ss:$9 sm:$0xff]
  %s762 = scalar_lea.vmem %s3, 145
  %763 = vst.msk [vmem:[%s762] ss:$8 sm:$0x3] %vm59, %v760
  %764 = vst.msk [vmem:[%s762] ss:$8 sm:$0x0] %vm59, %v760
  %765 = vrot.lane.b32.xlu0 %v18, 126
  %v766 = vpop.permute.xlu0 %765
  %767 = vrot.lane.b32.xlu0 %v19, 126
  %v768 = vpop.permute.xlu0 %767
  %v769 = vrot.slane %v766, 4
  %v770 = vrot.slane %v768, 4
  %v771 = vsel %vm33, %v769, %v770
  %vm772 = vcmask 1031168
  %v773 = vsel %vm772, %v766, %v771
  %v775 = vmul.f32 %v16, %v773
  %777 = vst [vmem:[#allocation1] ss:$2 sm:$0xff] %v775
  %v778 = vld.sshfl [vmem:[#allocation1] sm:$0xff pattern:$0x75316420]
  %v779 = vld.sshfl [vmem:[#allocation1 + $0x8] sm:$0xff pattern:$0x75316420]
  %v782 = vsel %vm33, %v778, 0.0
  %v783 = vrot.slane %v782, 4
  %v784 = vadd.f32 %v782, %v783
  %v785 = vrot.slane %v784, 2
  %v786 = vadd.f32 %v784, %v785
  %v787 = vrot.slane %v786, 1
  %v788 = vadd.f32 %v786, %v787
  %v789 = vsel %vm33, %v779, 0.0
  %v790 = vrot.slane %v789, 4
  %v791 = vadd.f32 %v789, %v790
  %v792 = vrot.slane %v791, 2
  %v793 = vadd.f32 %v791, %v792
  %v794 = vrot.slane %v793, 1
  %v795 = vadd.f32 %v793, %v794
  %v796 = vmul.f32 %v788, %v22
  %v797 = vmul.f32 %v795, %v23
  %800 = vst [vmem:[#allocation1] sm:$0xff] %v796
  %801 = vst [vmem:[#allocation1 + $0x9] sm:$0xff] %v797
  %s802 = scalar_lea.vmem [#allocation1], 2
  %v803 = vld [vmem:[%s802] ss:$9 sm:$0xff]
  %s805 = scalar_lea.vmem %s3, 2
  %806 = vst.msk [vmem:[%s805] ss:$8 sm:$0x3] %vm59, %v803
  %807 = vst.msk [vmem:[%s805] ss:$8 sm:$0x0] %vm59, %v803
  %808 = vrot.lane.b32.xlu0 %v18, 110
  %v809 = vpop.permute.xlu0 %808
  %810 = vrot.lane.b32.xlu0 %v19, 110
  %v811 = vpop.permute.xlu0 %810
  %v812 = vrot.slane %v809, 4
  %v813 = vrot.slane %v811, 4
  %v814 = vsel %vm33, %v812, %v813
  %vm815 = vcmask 900096
  %v816 = vsel %vm815, %v809, %v814
  %v818 = vmul.f32 %v16, %v816
  %820 = vst [vmem:[#allocation1] ss:$2 sm:$0xff] %v818
  %v821 = vld.sshfl [vmem:[#allocation1] sm:$0xff pattern:$0x75316420]
  %v822 = vld.sshfl [vmem:[#allocation1 + $0x8] sm:$0xff pattern:$0x75316420]
  %v825 = vsel %vm33, %v821, 0.0
  %v826 = vrot.slane %v825, 4
  %v827 = vadd.f32 %v825, %v826
  %v828 = vrot.slane %v827, 2
  %v829 = vadd.f32 %v827, %v828
  %v830 = vrot.slane %v829, 1
  %v831 = vadd.f32 %v829, %v830
  %v832 = vsel %vm33, %v822, 0.0
  %v833 = vrot.slane %v832, 4
  %v834 = vadd.f32 %v832, %v833
  %v835 = vrot.slane %v834, 2
  %v836 = vadd.f32 %v834, %v835
  %v837 = vrot.slane %v836, 1
  %v838 = vadd.f32 %v836, %v837
  %v839 = vmul.f32 %v831, %v22
  %v840 = vmul.f32 %v838, %v23
  %843 = vst [vmem:[#allocation1] sm:$0xff] %v839
  %844 = vst [vmem:[#allocation1 + $0x9] sm:$0xff] %v840
  %s845 = scalar_lea.vmem [#allocation1], 2
  %v846 = vld [vmem:[%s845] ss:$9 sm:$0xff]
  %s848 = scalar_lea.vmem %s3, 19
  %849 = vst.msk [vmem:[%s848] ss:$8 sm:$0x3] %vm59, %v846
  %850 = vst.msk [vmem:[%s848] ss:$8 sm:$0x0] %vm59, %v846
  %851 = vrot.lane.b32.xlu0 %v18, 94
  %v852 = vpop.permute.xlu0 %851
  %853 = vrot.lane.b32.xlu0 %v19, 94
  %v854 = vpop.permute.xlu0 %853
  %v855 = vrot.slane %v852, 4
  %v856 = vrot.slane %v854, 4
  %v857 = vsel %vm33, %v855, %v856
  %vm858 = vcmask 769024
  %v859 = vsel %vm858, %v852, %v857
  %v861 = vmul.f32 %v16, %v859
  %863 = vst [vmem:[#allocation1] ss:$2 sm:$0xff] %v861
  %v864 = vld.sshfl [vmem:[#allocation1] sm:$0xff pattern:$0x75316420]
  %v865 = vld.sshfl [vmem:[#allocation1 + $0x8] sm:$0xff pattern:$0x75316420]
  %v868 = vsel %vm33, %v864, 0.0
  %v869 = vrot.slane %v868, 4
  %v870 = vadd.f32 %v868, %v869
  %v871 = vrot.slane %v870, 2
  %v872 = vadd.f32 %v870, %v871
  %v873 = vrot.slane %v872, 1
  %v874 = vadd.f32 %v872, %v873
  %v875 = vsel %vm33, %v865, 0.0
  %v876 = vrot.slane %v875, 4
  %v877 = vadd.f32 %v875, %v876
  %v878 = vrot.slane %v877, 2
  %v879 = vadd.f32 %v877, %v878
  %v880 = vrot.slane %v879, 1
  %v881 = vadd.f32 %v879, %v880
  %v882 = vmul.f32 %v874, %v22
  %v883 = vmul.f32 %v881, %v23
  %886 = vst [vmem:[#allocation1] sm:$0xff] %v882
  %887 = vst [vmem:[#allocation1 + $0x9] sm:$0xff] %v883
  %s888 = scalar_lea.vmem [#allocation1], 2
  %v889 = vld [vmem:[%s888] ss:$9 sm:$0xff]
  %s891 = scalar_lea.vmem %s3, 36
  %892 = vst.msk [vmem:[%s891] ss:$8 sm:$0x3] %vm59, %v889
  %893 = vst.msk [vmem:[%s891] ss:$8 sm:$0x0] %vm59, %v889
  %894 = vrot.lane.b32.xlu0 %v18, 78
  %v895 = vpop.permute.xlu0 %894
  %896 = vrot.lane.b32.xlu0 %v19, 78
  %v897 = vpop.permute.xlu0 %896
  %v898 = vrot.slane %v895, 4
  %v899 = vrot.slane %v897, 4
  %v900 = vsel %vm33, %v898, %v899
  %vm901 = vcmask 637952
  %v902 = vsel %vm901, %v895, %v900
  %v904 = vmul.f32 %v16, %v902
  %906 = vst [vmem:[#allocation1] ss:$2 sm:$0xff] %v904
  %v907 = vld.sshfl [vmem:[#allocation1] sm:$0xff pattern:$0x75316420]
  %v908 = vld.sshfl [vmem:[#allocation1 + $0x8] sm:$0xff pattern:$0x75316420]
  %v911 = vsel %vm33, %v907, 0.0
  %v912 = vrot.slane %v911, 4
  %v913 = vadd.f32 %v911, %v912
  %v914 = vrot.slane %v913, 2
  %v915 = vadd.f32 %v913, %v914
  %v916 = vrot.slane %v915, 1
  %v917 = vadd.f32 %v915, %v916
  %v918 = vsel %vm33, %v908, 0.0
  %v919 = vrot.slane %v918, 4
  %v920 = vadd.f32 %v918, %v919
  %v921 = vrot.slane %v920, 2
  %v922 = vadd.f32 %v920, %v921
  %v923 = vrot.slane %v922, 1
  %v924 = vadd.f32 %v922, %v923
  %v925 = vmul.f32 %v917, %v22
  %v926 = vmul.f32 %v924, %v23
  %929 = vst [vmem:[#allocation1] sm:$0xff] %v925
  %930 = vst [vmem:[#allocation1 + $0x9] sm:$0xff] %v926
  %s931 = scalar_lea.vmem [#allocation1], 2
  %v932 = vld [vmem:[%s931] ss:$9 sm:$0xff]
  %s934 = scalar_lea.vmem %s3, 53
  %935 = vst.msk [vmem:[%s934] ss:$8 sm:$0x3] %vm59, %v932
  %936 = vst.msk [vmem:[%s934] ss:$8 sm:$0x0] %vm59, %v932
  %937 = vrot.lane.b32.xlu0 %v18, 62
  %v938 = vpop.permute.xlu0 %937
  %939 = vrot.lane.b32.xlu0 %v19, 62
  %v940 = vpop.permute.xlu0 %939
  %v941 = vrot.slane %v938, 4
  %v942 = vrot.slane %v940, 4
  %v943 = vsel %vm33, %v941, %v942
  %vm944 = vcmask 506880
  %v945 = vsel %vm944, %v938, %v943
  %v947 = vmul.f32 %v16, %v945
  %949 = vst [vmem:[#allocation1] ss:$2 sm:$0xff] %v947
  %v950 = vld.sshfl [vmem:[#allocation1] sm:$0xff pattern:$0x75316420]
  %v951 = vld.sshfl [vmem:[#allocation1 + $0x8] sm:$0xff pattern:$0x75316420]
  %v954 = vsel %vm33, %v950, 0.0
  %v955 = vrot.slane %v954, 4
  %v956 = vadd.f32 %v954, %v955
  %v957 = vrot.slane %v956, 2
  %v958 = vadd.f32 %v956, %v957
  %v959 = vrot.slane %v958, 1
  %v960 = vadd.f32 %v958, %v959
  %v961 = vsel %vm33, %v951, 0.0
  %v962 = vrot.slane %v961, 4
  %v963 = vadd.f32 %v961, %v962
  %v964 = vrot.slane %v963, 2
  %v965 = vadd.f32 %v963, %v964
  %v966 = vrot.slane %v965, 1
  %v967 = vadd.f32 %v965, %v966
  %v968 = vmul.f32 %v960, %v22
  %v969 = vmul.f32 %v967, %v23
  %972 = vst [vmem:[#allocation1] sm:$0xff] %v968
  %973 = vst [vmem:[#allocation1 + $0x9] sm:$0xff] %v969
  %s974 = scalar_lea.vmem [#allocation1], 2
  %v975 = vld [vmem:[%s974] ss:$9 sm:$0xff]
  %s977 = scalar_lea.vmem %s3, 70
  %978 = vst.msk [vmem:[%s977] ss:$8 sm:$0x3] %vm59, %v975
  %979 = vst.msk [vmem:[%s977] ss:$8 sm:$0x0] %vm59, %v975
  %980 = vrot.lane.b32.xlu0 %v18, 46
  %v981 = vpop.permute.xlu0 %980
  %982 = vrot.lane.b32.xlu0 %v19, 46
  %v983 = vpop.permute.xlu0 %982
  %v984 = vrot.slane %v981, 4
  %v985 = vrot.slane %v983, 4
  %v986 = vsel %vm33, %v984, %v985
  %vm987 = vcmask 375808
  %v988 = vsel %vm987, %v981, %v986
  %v990 = vmul.f32 %v16, %v988
  %992 = vst [vmem:[#allocation1] ss:$2 sm:$0xff] %v990
  %v993 = vld.sshfl [vmem:[#allocation1] sm:$0xff pattern:$0x75316420]
  %v994 = vld.sshfl [vmem:[#allocation1 + $0x8] sm:$0xff pattern:$0x75316420]
  %v997 = vsel %vm33, %v993, 0.0
  %v998 = vrot.slane %v997, 4
  %v999 = vadd.f32 %v997, %v998
  %v1000 = vrot.slane %v999, 2
  %v1001 = vadd.f32 %v999, %v1000
  %v1002 = vrot.slane %v1001, 1
  %v1003 = vadd.f32 %v1001, %v1002
  %v1004 = vsel %vm33, %v994, 0.0
  %v1005 = vrot.slane %v1004, 4
  %v1006 = vadd.f32 %v1004, %v1005
  %v1007 = vrot.slane %v1006, 2
  %v1008 = vadd.f32 %v1006, %v1007
  %v1009 = vrot.slane %v1008, 1
  %v1010 = vadd.f32 %v1008, %v1009
  %v1011 = vmul.f32 %v1003, %v22
  %v1012 = vmul.f32 %v1010, %v23
  %1015 = vst [vmem:[#allocation1] sm:$0xff] %v1011
  %1016 = vst [vmem:[#allocation1 + $0x9] sm:$0xff] %v1012
  %s1017 = scalar_lea.vmem [#allocation1], 2
  %v1018 = vld [vmem:[%s1017] ss:$9 sm:$0xff]
  %s1020 = scalar_lea.vmem %s3, 87
  %1021 = vst.msk [vmem:[%s1020] ss:$8 sm:$0x3] %vm59, %v1018
  %1022 = vst.msk [vmem:[%s1020] ss:$8 sm:$0x0] %vm59, %v1018
  %1023 = vrot.lane.b32.xlu0 %v18, 30
  %v1024 = vpop.permute.xlu0 %1023
  %1025 = vrot.lane.b32.xlu0 %v19, 30
  %v1026 = vpop.permute.xlu0 %1025
  %v1027 = vrot.slane %v1024, 4
  %v1028 = vrot.slane %v1026, 4
  %v1029 = vsel %vm33, %v1027, %v1028
  %vm1030 = vcmask 244736
  %v1031 = vsel %vm1030, %v1024, %v1029
  %v1033 = vmul.f32 %v16, %v1031
  %1035 = vst [vmem:[#allocation1] ss:$2 sm:$0xff] %v1033
  %v1036 = vld.sshfl [vmem:[#allocation1] sm:$0xff pattern:$0x75316420]
  %v1037 = vld.sshfl [vmem:[#allocation1 + $0x8] sm:$0xff pattern:$0x75316420]
  %v1040 = vsel %vm33, %v1036, 0.0
  %v1041 = vrot.slane %v1040, 4
  %v1042 = vadd.f32 %v1040, %v1041
  %v1043 = vrot.slane %v1042, 2
  %v1044 = vadd.f32 %v1042, %v1043
  %v1045 = vrot.slane %v1044, 1
  %v1046 = vadd.f32 %v1044, %v1045
  %v1047 = vsel %vm33, %v1037, 0.0
  %v1048 = vrot.slane %v1047, 4
  %v1049 = vadd.f32 %v1047, %v1048
  %v1050 = vrot.slane %v1049, 2
  %v1051 = vadd.f32 %v1049, %v1050
  %v1052 = vrot.slane %v1051, 1
  %v1053 = vadd.f32 %v1051, %v1052
  %v1054 = vmul.f32 %v1046, %v22
  %v1055 = vmul.f32 %v1053, %v23
  %1058 = vst [vmem:[#allocation1] sm:$0xff] %v1054
  %1059 = vst [vmem:[#allocation1 + $0x9] sm:$0xff] %v1055
  %s1060 = scalar_lea.vmem [#allocation1], 2
  %v1061 = vld [vmem:[%s1060] ss:$9 sm:$0xff]
  %s1063 = scalar_lea.vmem %s3, 112
  %1064 = vst.msk [vmem:[%s1063] ss:$8 sm:$0x3] %vm59, %v1061
  %1065 = vst.msk [vmem:[%s1063] ss:$8 sm:$0x0] %vm59, %v1061
  %1066 = vrot.lane.b32.xlu0 %v18, 14
  %v1067 = vpop.permute.xlu0 %1066
  %1068 = vrot.lane.b32.xlu0 %v19, 14
  %v1069 = vpop.permute.xlu0 %1068
  %v1070 = vrot.slane %v1067, 4
  %v1071 = vrot.slane %v1069, 4
  %v1072 = vsel %vm33, %v1070, %v1071
  %vm1073 = vcmask 113664
  %v1074 = vsel %vm1073, %v1067, %v1072
  %v1076 = vmul.f32 %v16, %v1074
  %1078 = vst [vmem:[#allocation1] ss:$2 sm:$0xff] %v1076
  %v1079 = vld.sshfl [vmem:[#allocation1] sm:$0xff pattern:$0x75316420]
  %v1080 = vld.sshfl [vmem:[#allocation1 + $0x8] sm:$0xff pattern:$0x75316420]
  %v1083 = vsel %vm33, %v1079, 0.0
  %v1084 = vrot.slane %v1083, 4
  %v1085 = vadd.f32 %v1083, %v1084
  %v1086 = vrot.slane %v1085, 2
  %v1087 = vadd.f32 %v1085, %v1086
  %v1088 = vrot.slane %v1087, 1
  %v1089 = vadd.f32 %v1087, %v1088
  %v1090 = vsel %vm33, %v1080, 0.0
  %v1091 = vrot.slane %v1090, 4
  %v1092 = vadd.f32 %v1090, %v1091
  %v1093 = vrot.slane %v1092, 2
  %v1094 = vadd.f32 %v1092, %v1093
  %v1095 = vrot.slane %v1094, 1
  %v1096 = vadd.f32 %v1094, %v1095
  %v1097 = vmul.f32 %v1089, %v22
  %v1098 = vmul.f32 %v1096, %v23
  %1101 = vst [vmem:[#allocation1] sm:$0xff] %v1097
  %1102 = vst [vmem:[#allocation1 + $0x9] sm:$0xff] %v1098
  %s1103 = scalar_lea.vmem [#allocation1], 2
  %v1104 = vld [vmem:[%s1103] ss:$9 sm:$0xff]
  %s1106 = scalar_lea.vmem %s3, 129
  %1107 = vst.msk [vmem:[%s1106] ss:$8 sm:$0x3] %vm59, %v1104
  %1108 = vst.msk [vmem:[%s1106] ss:$8 sm:$0x0] %vm59, %v1104
  %v1109 = vsel %vm772, %v771, %v768
  %v1111 = vmul.f32 %v16, %v1109
  %1113 = vst [vmem:[#allocation1] ss:$2 sm:$0xff] %v1111
  %v1114 = vld.sshfl [vmem:[#allocation1] sm:$0xff pattern:$0x75316420]
  %v1115 = vld.sshfl [vmem:[#allocation1 + $0x8] sm:$0xff pattern:$0x75316420]
  %v1118 = vsel %vm33, %v1114, 0.0
  %v1119 = vrot.slane %v1118, 4
  %v1120 = vadd.f32 %v1118, %v1119
  %v1121 = vrot.slane %v1120, 2
  %v1122 = vadd.f32 %v1120, %v1121
  %v1123 = vrot.slane %v1122, 1
  %v1124 = vadd.f32 %v1122, %v1123
  %v1125 = vsel %vm33, %v1115, 0.0
  %v1126 = vrot.slane %v1125, 4
  %v1127 = vadd.f32 %v1125, %v1126
  %v1128 = vrot.slane %v1127, 2
  %v1129 = vadd.f32 %v1127, %v1128
  %v1130 = vrot.slane %v1129, 1
  %v1131 = vadd.f32 %v1129, %v1130
  %v1132 = vmul.f32 %v1124, %v22
  %v1133 = vmul.f32 %v1131, %v23
  %1136 = vst [vmem:[#allocation1] sm:$0xff] %v1132
  %1137 = vst [vmem:[#allocation1 + $0x9] sm:$0xff] %v1133
  %s1138 = scalar_lea.vmem [#allocation1], 2
  %v1139 = vld [vmem:[%s1138] ss:$9 sm:$0xff]
  %s1141 = scalar_lea.vmem %s3, 146
  %1142 = vst.msk [vmem:[%s1141] ss:$8 sm:$0x3] %vm59, %v1139
  %1143 = vst.msk [vmem:[%s1141] ss:$8 sm:$0x0] %vm59, %v1139
  %1144 = vrot.lane.b32.xlu0 %v18, 125
  %v1145 = vpop.permute.xlu0 %1144
  %1146 = vrot.lane.b32.xlu0 %v19, 125
  %v1147 = vpop.permute.xlu0 %1146
  %v1148 = vrot.slane %v1145, 4
  %v1149 = vrot.slane %v1147, 4
  %v1150 = vsel %vm33, %v1148, %v1149
  %vm1151 = vcmask 1022976
  %v1152 = vsel %vm1151, %v1145, %v1150
  %v1154 = vmul.f32 %v16, %v1152
  %1156 = vst [vmem:[#allocation1] ss:$2 sm:$0xff] %v1154
  %v1157 = vld.sshfl [vmem:[#allocation1] sm:$0xff pattern:$0x75316420]
  %v1158 = vld.sshfl [vmem:[#allocation1 + $0x8] sm:$0xff pattern:$0x75316420]
  %v1161 = vsel %vm33, %v1157, 0.0
  %v1162 = vrot.slane %v1161, 4
  %v1163 = vadd.f32 %v1161, %v1162
  %v1164 = vrot.slane %v1163, 2
  %v1165 = vadd.f32 %v1163, %v1164
  %v1166 = vrot.slane %v1165, 1
  %v1167 = vadd.f32 %v1165, %v1166
  %v1168 = vsel %vm33, %v1158, 0.0
  %v1169 = vrot.slane %v1168, 4
  %v1170 = vadd.f32 %v1168, %v1169
  %v1171 = vrot.slane %v1170, 2
  %v1172 = vadd.f32 %v1170, %v1171
  %v1173 = vrot.slane %v1172, 1
  %v1174 = vadd.f32 %v1172, %v1173
  %v1175 = vmul.f32 %v1167, %v22
  %v1176 = vmul.f32 %v1174, %v23
  %1179 = vst [vmem:[#allocation1] sm:$0xff] %v1175
  %1180 = vst [vmem:[#allocation1 + $0x9] sm:$0xff] %v1176
  %s1181 = scalar_lea.vmem [#allocation1], 3
  %v1182 = vld [vmem:[%s1181] ss:$9 sm:$0xff]
  %s1184 = scalar_lea.vmem %s3, 3
  %1185 = vst.msk [vmem:[%s1184] ss:$8 sm:$0x3] %vm59, %v1182
  %1186 = vst.msk [vmem:[%s1184] ss:$8 sm:$0x0] %vm59, %v1182
  %1187 = vrot.lane.b32.xlu0 %v18, 109
  %v1188 = vpop.permute.xlu0 %1187
  %1189 = vrot.lane.b32.xlu0 %v19, 109
  %v1190 = vpop.permute.xlu0 %1189
  %v1191 = vrot.slane %v1188, 4
  %v1192 = vrot.slane %v1190, 4
  %v1193 = vsel %vm33, %v1191, %v1192
  %vm1194 = vcmask 891904
  %v1195 = vsel %vm1194, %v1188, %v1193
  %v1197 = vmul.f32 %v16, %v1195
  %1199 = vst [vmem:[#allocation1] ss:$2 sm:$0xff] %v1197
  %v1200 = vld.sshfl [vmem:[#allocation1] sm:$0xff pattern:$0x75316420]
  %v1201 = vld.sshfl [vmem:[#allocation1 + $0x8] sm:$0xff pattern:$0x75316420]
  %v1204 = vsel %vm33, %v1200, 0.0
  %v1205 = vrot.slane %v1204, 4
  %v1206 = vadd.f32 %v1204, %v1205
  %v1207 = vrot.slane %v1206, 2
  %v1208 = vadd.f32 %v1206, %v1207
  %v1209 = vrot.slane %v1208, 1
  %v1210 = vadd.f32 %v1208, %v1209
  %v1211 = vsel %vm33, %v1201, 0.0
  %v1212 = vrot.slane %v1211, 4
  %v1213 = vadd.f32 %v1211, %v1212
  %v1214 = vrot.slane %v1213, 2
  %v1215 = vadd.f32 %v1213, %v1214
  %v1216 = vrot.slane %v1215, 1
  %v1217 = vadd.f32 %v1215, %v1216
  %v1218 = vmul.f32 %v1210, %v22
  %v1219 = vmul.f32 %v1217, %v23
  %1222 = vst [vmem:[#allocation1] sm:$0xff] %v1218
  %1223 = vst [vmem:[#allocation1 + $0x9] sm:$0xff] %v1219
  %s1224 = scalar_lea.vmem [#allocation1], 3
  %v1225 = vld [vmem:[%s1224] ss:$9 sm:$0xff]
  %s1227 = scalar_lea.vmem %s3, 20
  %1228 = vst.msk [vmem:[%s1227] ss:$8 sm:$0x3] %vm59, %v1225
  %1229 = vst.msk [vmem:[%s1227] ss:$8 sm:$0x0] %vm59, %v1225
  %1230 = vrot.lane.b32.xlu0 %v18, 93
  %v1231 = vpop.permute.xlu0 %1230
  %1232 = vrot.lane.b32.xlu0 %v19, 93
  %v1233 = vpop.permute.xlu0 %1232
  %v1234 = vrot.slane %v1231, 4
  %v1235 = vrot.slane %v1233, 4
  %v1236 = vsel %vm33, %v1234, %v1235
  %vm1237 = vcmask 760832
  %v1238 = vsel %vm1237, %v1231, %v1236
  %v1240 = vmul.f32 %v16, %v1238
  %1242 = vst [vmem:[#allocation1] ss:$2 sm:$0xff] %v1240
  %v1243 = vld.sshfl [vmem:[#allocation1] sm:$0xff pattern:$0x75316420]
  %v1244 = vld.sshfl [vmem:[#allocation1 + $0x8] sm:$0xff pattern:$0x75316420]
  %v1247 = vsel %vm33, %v1243, 0.0
  %v1248 = vrot.slane %v1247, 4
  %v1249 = vadd.f32 %v1247, %v1248
  %v1250 = vrot.slane %v1249, 2
  %v1251 = vadd.f32 %v1249, %v1250
  %v1252 = vrot.slane %v1251, 1
  %v1253 = vadd.f32 %v1251, %v1252
  %v1254 = vsel %vm33, %v1244, 0.0
  %v1255 = vrot.slane %v1254, 4
  %v1256 = vadd.f32 %v1254, %v1255
  %v1257 = vrot.slane %v1256, 2
  %v1258 = vadd.f32 %v1256, %v1257
  %v1259 = vrot.slane %v1258, 1
  %v1260 = vadd.f32 %v1258, %v1259
  %v1261 = vmul.f32 %v1253, %v22
  %v1262 = vmul.f32 %v1260, %v23
  %1265 = vst [vmem:[#allocation1] sm:$0xff] %v1261
  %1266 = vst [vmem:[#allocation1 + $0x9] sm:$0xff] %v1262
  %s1267 = scalar_lea.vmem [#allocation1], 3
  %v1268 = vld [vmem:[%s1267] ss:$9 sm:$0xff]
  %s1270 = scalar_lea.vmem %s3, 37
  %1271 = vst.msk [vmem:[%s1270] ss:$8 sm:$0x3] %vm59, %v1268
  %1272 = vst.msk [vmem:[%s1270] ss:$8 sm:$0x0] %vm59, %v1268
  %1273 = vrot.lane.b32.xlu0 %v18, 77
  %v1274 = vpop.permute.xlu0 %1273
  %1275 = vrot.lane.b32.xlu0 %v19, 77
  %v1276 = vpop.permute.xlu0 %1275
  %v1277 = vrot.slane %v1274, 4
  %v1278 = vrot.slane %v1276, 4
  %v1279 = vsel %vm33, %v1277, %v1278
  %vm1280 = vcmask 629760
  %v1281 = vsel %vm1280, %v1274, %v1279
  %v1283 = vmul.f32 %v16, %v1281
  %1285 = vst [vmem:[#allocation1] ss:$2 sm:$0xff] %v1283
  %v1286 = vld.sshfl [vmem:[#allocation1] sm:$0xff pattern:$0x75316420]
  %v1287 = vld.sshfl [vmem:[#allocation1 + $0x8] sm:$0xff pattern:$0x75316420]
  %v1290 = vsel %vm33, %v1286, 0.0
  %v1291 = vrot.slane %v1290, 4
  %v1292 = vadd.f32 %v1290, %v1291
  %v1293 = vrot.slane %v1292, 2
  %v1294 = vadd.f32 %v1292, %v1293
  %v1295 = vrot.slane %v1294, 1
  %v1296 = vadd.f32 %v1294, %v1295
  %v1297 = vsel %vm33, %v1287, 0.0
  %v1298 = vrot.slane %v1297, 4
  %v1299 = vadd.f32 %v1297, %v1298
  %v1300 = vrot.slane %v1299, 2
  %v1301 = vadd.f32 %v1299, %v1300
  %v1302 = vrot.slane %v1301, 1
  %v1303 = vadd.f32 %v1301, %v1302
  %v1304 = vmul.f32 %v1296, %v22
  %v1305 = vmul.f32 %v1303, %v23
  %1308 = vst [vmem:[#allocation1] sm:$0xff] %v1304
  %1309 = vst [vmem:[#allocation1 + $0x9] sm:$0xff] %v1305
  %s1310 = scalar_lea.vmem [#allocation1], 3
  %v1311 = vld [vmem:[%s1310] ss:$9 sm:$0xff]
  %s1313 = scalar_lea.vmem %s3, 54
  %1314 = vst.msk [vmem:[%s1313] ss:$8 sm:$0x3] %vm59, %v1311
  %1315 = vst.msk [vmem:[%s1313] ss:$8 sm:$0x0] %vm59, %v1311
  %1316 = vrot.lane.b32.xlu0 %v18, 61
  %v1317 = vpop.permute.xlu0 %1316
  %1318 = vrot.lane.b32.xlu0 %v19, 61
  %v1319 = vpop.permute.xlu0 %1318
  %v1320 = vrot.slane %v1317, 4
  %v1321 = vrot.slane %v1319, 4
  %v1322 = vsel %vm33, %v1320, %v1321
  %vm1323 = vcmask 498688
  %v1324 = vsel %vm1323, %v1317, %v1322
  %v1326 = vmul.f32 %v16, %v1324
  %1328 = vst [vmem:[#allocation1] ss:$2 sm:$0xff] %v1326
  %v1329 = vld.sshfl [vmem:[#allocation1] sm:$0xff pattern:$0x75316420]
  %v1330 = vld.sshfl [vmem:[#allocation1 + $0x8] sm:$0xff pattern:$0x75316420]
  %v1333 = vsel %vm33, %v1329, 0.0
  %v1334 = vrot.slane %v1333, 4
  %v1335 = vadd.f32 %v1333, %v1334
  %v1336 = vrot.slane %v1335, 2
  %v1337 = vadd.f32 %v1335, %v1336
  %v1338 = vrot.slane %v1337, 1
  %v1339 = vadd.f32 %v1337, %v1338
  %v1340 = vsel %vm33, %v1330, 0.0
  %v1341 = vrot.slane %v1340, 4
  %v1342 = vadd.f32 %v1340, %v1341
  %v1343 = vrot.slane %v1342, 2
  %v1344 = vadd.f32 %v1342, %v1343
  %v1345 = vrot.slane %v1344, 1
  %v1346 = vadd.f32 %v1344, %v1345
  %v1347 = vmul.f32 %v1339, %v22
  %v1348 = vmul.f32 %v1346, %v23
  %1351 = vst [vmem:[#allocation1] sm:$0xff] %v1347
  %1352 = vst [vmem:[#allocation1 + $0x9] sm:$0xff] %v1348
  %s1353 = scalar_lea.vmem [#allocation1], 3
  %v1354 = vld [vmem:[%s1353] ss:$9 sm:$0xff]
  %s1356 = scalar_lea.vmem %s3, 71
  %1357 = vst.msk [vmem:[%s1356] ss:$8 sm:$0x3] %vm59, %v1354
  %1358 = vst.msk [vmem:[%s1356] ss:$8 sm:$0x0] %vm59, %v1354
  %1359 = vrot.lane.b32.xlu0 %v18, 45
  %v1360 = vpop.permute.xlu0 %1359
  %1361 = vrot.lane.b32.xlu0 %v19, 45
  %v1362 = vpop.permute.xlu0 %1361
  %v1363 = vrot.slane %v1360, 4
  %v1364 = vrot.slane %v1362, 4
  %v1365 = vsel %vm33, %v1363, %v1364
  %vm1366 = vcmask 367616
  %v1367 = vsel %vm1366, %v1360, %v1365
  %v1369 = vmul.f32 %v16, %v1367
  %1371 = vst [vmem:[#allocation1] ss:$2 sm:$0xff] %v1369
  %v1372 = vld.sshfl [vmem:[#allocation1] sm:$0xff pattern:$0x75316420]
  %v1373 = vld.sshfl [vmem:[#allocation1 + $0x8] sm:$0xff pattern:$0x75316420]
  %v1376 = vsel %vm33, %v1372, 0.0
  %v1377 = vrot.slane %v1376, 4
  %v1378 = vadd.f32 %v1376, %v1377
  %v1379 = vrot.slane %v1378, 2
  %v1380 = vadd.f32 %v1378, %v1379
  %v1381 = vrot.slane %v1380, 1
  %v1382 = vadd.f32 %v1380, %v1381
  %v1383 = vsel %vm33, %v1373, 0.0
  %v1384 = vrot.slane %v1383, 4
  %v1385 = vadd.f32 %v1383, %v1384
  %v1386 = vrot.slane %v1385, 2
  %v1387 = vadd.f32 %v1385, %v1386
  %v1388 = vrot.slane %v1387, 1
  %v1389 = vadd.f32 %v1387, %v1388
  %v1390 = vmul.f32 %v1382, %v22
  %v1391 = vmul.f32 %v1389, %v23
  %1394 = vst [vmem:[#allocation1] sm:$0xff] %v1390
  %1395 = vst [vmem:[#allocation1 + $0x9] sm:$0xff] %v1391
  %s1396 = scalar_lea.vmem [#allocation1], 3
  %v1397 = vld [vmem:[%s1396] ss:$9 sm:$0xff]
  %s1399 = scalar_lea.vmem %s3, 96
  %1400 = vst.msk [vmem:[%s1399] ss:$8 sm:$0x3] %vm59, %v1397
  %1401 = vst.msk [vmem:[%s1399] ss:$8 sm:$0x0] %vm59, %v1397
  %1402 = vrot.lane.b32.xlu0 %v18, 29
  %v1403 = vpop.permute.xlu0 %1402
  %1404 = vrot.lane.b32.xlu0 %v19, 29
  %v1405 = vpop.permute.xlu0 %1404
  %v1406 = vrot.slane %v1403, 4
  %v1407 = vrot.slane %v1405, 4
  %v1408 = vsel %vm33, %v1406, %v1407
  %vm1409 = vcmask 236544
  %v1410 = vsel %vm1409, %v1403, %v1408
  %v1412 = vmul.f32 %v16, %v1410
  %1414 = vst [vmem:[#allocation1] ss:$2 sm:$0xff] %v1412
  %v1415 = vld.sshfl [vmem:[#allocation1] sm:$0xff pattern:$0x75316420]
  %v1416 = vld.sshfl [vmem:[#allocation1 + $0x8] sm:$0xff pattern:$0x75316420]
  %v1419 = vsel %vm33, %v1415, 0.0
  %v1420 = vrot.slane %v1419, 4
  %v1421 = vadd.f32 %v1419, %v1420
  %v1422 = vrot.slane %v1421, 2
  %v1423 = vadd.f32 %v1421, %v1422
  %v1424 = vrot.slane %v1423, 1
  %v1425 = vadd.f32 %v1423, %v1424
  %v1426 = vsel %vm33, %v1416, 0.0
  %v1427 = vrot.slane %v1426, 4
  %v1428 = vadd.f32 %v1426, %v1427
  %v1429 = vrot.slane %v1428, 2
  %v1430 = vadd.f32 %v1428, %v1429
  %v1431 = vrot.slane %v1430, 1
  %v1432 = vadd.f32 %v1430, %v1431
  %v1433 = vmul.f32 %v1425, %v22
  %v1434 = vmul.f32 %v1432, %v23
  %1437 = vst [vmem:[#allocation1] sm:$0xff] %v1433
  %1438 = vst [vmem:[#allocation1 + $0x9] sm:$0xff] %v1434
  %s1439 = scalar_lea.vmem [#allocation1], 3
  %v1440 = vld [vmem:[%s1439] ss:$9 sm:$0xff]
  %s1442 = scalar_lea.vmem %s3, 113
  %1443 = vst.msk [vmem:[%s1442] ss:$8 sm:$0x3] %vm59, %v1440
  %1444 = vst.msk [vmem:[%s1442] ss:$8 sm:$0x0] %vm59, %v1440
  %1445 = vrot.lane.b32.xlu0 %v18, 13
  %v1446 = vpop.permute.xlu0 %1445
  %1447 = vrot.lane.b32.xlu0 %v19, 13
  %v1448 = vpop.permute.xlu0 %1447
  %v1449 = vrot.slane %v1446, 4
  %v1450 = vrot.slane %v1448, 4
  %v1451 = vsel %vm33, %v1449, %v1450
  %vm1452 = vcmask 105472
  %v1453 = vsel %vm1452, %v1446, %v1451
  %v1455 = vmul.f32 %v16, %v1453
  %1457 = vst [vmem:[#allocation1] ss:$2 sm:$0xff] %v1455
  %v1458 = vld.sshfl [vmem:[#allocation1] sm:$0xff pattern:$0x75316420]
  %v1459 = vld.sshfl [vmem:[#allocation1 + $0x8] sm:$0xff pattern:$0x75316420]
  %v1462 = vsel %vm33, %v1458, 0.0
  %v1463 = vrot.slane %v1462, 4
  %v1464 = vadd.f32 %v1462, %v1463
  %v1465 = vrot.slane %v1464, 2
  %v1466 = vadd.f32 %v1464, %v1465
  %v1467 = vrot.slane %v1466, 1
  %v1468 = vadd.f32 %v1466, %v1467
  %v1469 = vsel %vm33, %v1459, 0.0
  %v1470 = vrot.slane %v1469, 4
  %v1471 = vadd.f32 %v1469, %v1470
  %v1472 = vrot.slane %v1471, 2
  %v1473 = vadd.f32 %v1471, %v1472
  %v1474 = vrot.slane %v1473, 1
  %v1475 = vadd.f32 %v1473, %v1474
  %v1476 = vmul.f32 %v1468, %v22
  %v1477 = vmul.f32 %v1475, %v23
  %1480 = vst [vmem:[#allocation1] sm:$0xff] %v1476
  %1481 = vst [vmem:[#allocation1 + $0x9] sm:$0xff] %v1477
  %s1482 = scalar_lea.vmem [#allocation1], 3
  %v1483 = vld [vmem:[%s1482] ss:$9 sm:$0xff]
  %s1485 = scalar_lea.vmem %s3, 130
  %1486 = vst.msk [vmem:[%s1485] ss:$8 sm:$0x3] %vm59, %v1483
  %1487 = vst.msk [vmem:[%s1485] ss:$8 sm:$0x0] %vm59, %v1483
  %v1488 = vsel %vm1151, %v1150, %v1147
  %v1490 = vmul.f32 %v16, %v1488
  %1492 = vst [vmem:[#allocation1] ss:$2 sm:$0xff] %v1490
  %v1493 = vld.sshfl [vmem:[#allocation1] sm:$0xff pattern:$0x75316420]
  %v1494 = vld.sshfl [vmem:[#allocation1 + $0x8] sm:$0xff pattern:$0x75316420]
  %v1497 = vsel %vm33, %v1493, 0.0
  %v1498 = vrot.slane %v1497, 4
  %v1499 = vadd.f32 %v1497, %v1498
  %v1500 = vrot.slane %v1499, 2
  %v1501 = vadd.f32 %v1499, %v1500
  %v1502 = vrot.slane %v1501, 1
  %v1503 = vadd.f32 %v1501, %v1502
  %v1504 = vsel %vm33, %v1494, 0.0
  %v1505 = vrot.slane %v1504, 4
  %v1506 = vadd.f32 %v1504, %v1505
  %v1507 = vrot.slane %v1506, 2
  %v1508 = vadd.f32 %v1506, %v1507
  %v1509 = vrot.slane %v1508, 1
  %v1510 = vadd.f32 %v1508, %v1509
  %v1511 = vmul.f32 %v1503, %v22
  %v1512 = vmul.f32 %v1510, %v23
  %1515 = vst [vmem:[#allocation1] sm:$0xff] %v1511
  %1516 = vst [vmem:[#allocation1 + $0x9] sm:$0xff] %v1512
  %s1517 = scalar_lea.vmem [#allocation1], 3
  %v1518 = vld [vmem:[%s1517] ss:$9 sm:$0xff]
  %s1520 = scalar_lea.vmem %s3, 147
  %1521 = vst.msk [vmem:[%s1520] ss:$8 sm:$0x3] %vm59, %v1518
  %1522 = vst.msk [vmem:[%s1520] ss:$8 sm:$0x0] %vm59, %v1518
  %1523 = vrot.lane.b32.xlu0 %v18, 124
  %v1524 = vpop.permute.xlu0 %1523
  %1525 = vrot.lane.b32.xlu0 %v19, 124
  %v1526 = vpop.permute.xlu0 %1525
  %v1527 = vrot.slane %v1524, 4
  %v1528 = vrot.slane %v1526, 4
  %v1529 = vsel %vm33, %v1527, %v1528
  %vm1530 = vcmask 1014784
  %v1531 = vsel %vm1530, %v1524, %v1529
  %v1533 = vmul.f32 %v16, %v1531
  %1535 = vst [vmem:[#allocation1] ss:$2 sm:$0xff] %v1533
  %v1536 = vld.sshfl [vmem:[#allocation1] sm:$0xff pattern:$0x75316420]
  %v1537 = vld.sshfl [vmem:[#allocation1 + $0x8] sm:$0xff pattern:$0x75316420]
  %v1540 = vsel %vm33, %v1536, 0.0
  %v1541 = vrot.slane %v1540, 4
  %v1542 = vadd.f32 %v1540, %v1541
  %v1543 = vrot.slane %v1542, 2
  %v1544 = vadd.f32 %v1542, %v1543
  %v1545 = vrot.slane %v1544, 1
  %v1546 = vadd.f32 %v1544, %v1545
  %v1547 = vsel %vm33, %v1537, 0.0
  %v1548 = vrot.slane %v1547, 4
  %v1549 = vadd.f32 %v1547, %v1548
  %v1550 = vrot.slane %v1549, 2
  %v1551 = vadd.f32 %v1549, %v1550
  %v1552 = vrot.slane %v1551, 1
  %v1553 = vadd.f32 %v1551, %v1552
  %v1554 = vmul.f32 %v1546, %v22
  %v1555 = vmul.f32 %v1553, %v23
  %1558 = vst [vmem:[#allocation1] sm:$0xff] %v1554
  %1559 = vst [vmem:[#allocation1 + $0x9] sm:$0xff] %v1555
  %s1560 = scalar_lea.vmem [#allocation1], 4
  %v1561 = vld [vmem:[%s1560] ss:$9 sm:$0xff]
  %s1563 = scalar_lea.vmem %s3, 4
  %1564 = vst.msk [vmem:[%s1563] ss:$8 sm:$0x3] %vm59, %v1561
  %1565 = vst.msk [vmem:[%s1563] ss:$8 sm:$0x0] %vm59, %v1561
  %1566 = vrot.lane.b32.xlu0 %v18, 108
  %v1567 = vpop.permute.xlu0 %1566
  %1568 = vrot.lane.b32.xlu0 %v19, 108
  %v1569 = vpop.permute.xlu0 %1568
  %v1570 = vrot.slane %v1567, 4
  %v1571 = vrot.slane %v1569, 4
  %v1572 = vsel %vm33, %v1570, %v1571
  %vm1573 = vcmask 883712
  %v1574 = vsel %vm1573, %v1567, %v1572
  %v1576 = vmul.f32 %v16, %v1574
  %1578 = vst [vmem:[#allocation1] ss:$2 sm:$0xff] %v1576
  %v1579 = vld.sshfl [vmem:[#allocation1] sm:$0xff pattern:$0x75316420]
  %v1580 = vld.sshfl [vmem:[#allocation1 + $0x8] sm:$0xff pattern:$0x75316420]
  %v1583 = vsel %vm33, %v1579, 0.0
  %v1584 = vrot.slane %v1583, 4
  %v1585 = vadd.f32 %v1583, %v1584
  %v1586 = vrot.slane %v1585, 2
  %v1587 = vadd.f32 %v1585, %v1586
  %v1588 = vrot.slane %v1587, 1
  %v1589 = vadd.f32 %v1587, %v1588
  %v1590 = vsel %vm33, %v1580, 0.0
  %v1591 = vrot.slane %v1590, 4
  %v1592 = vadd.f32 %v1590, %v1591
  %v1593 = vrot.slane %v1592, 2
  %v1594 = vadd.f32 %v1592, %v1593
  %v1595 = vrot.slane %v1594, 1
  %v1596 = vadd.f32 %v1594, %v1595
  %v1597 = vmul.f32 %v1589, %v22
  %v1598 = vmul.f32 %v1596, %v23
  %1601 = vst [vmem:[#allocation1] sm:$0xff] %v1597
  %1602 = vst [vmem:[#allocation1 + $0x9] sm:$0xff] %v1598
  %s1603 = scalar_lea.vmem [#allocation1], 4
  %v1604 = vld [vmem:[%s1603] ss:$9 sm:$0xff]
  %s1606 = scalar_lea.vmem %s3, 21
  %1607 = vst.msk [vmem:[%s1606] ss:$8 sm:$0x3] %vm59, %v1604
  %1608 = vst.msk [vmem:[%s1606] ss:$8 sm:$0x0] %vm59, %v1604
  %1609 = vrot.lane.b32.xlu0 %v18, 92
  %v1610 = vpop.permute.xlu0 %1609
  %1611 = vrot.lane.b32.xlu0 %v19, 92
  %v1612 = vpop.permute.xlu0 %1611
  %v1613 = vrot.slane %v1610, 4
  %v1614 = vrot.slane %v1612, 4
  %v1615 = vsel %vm33, %v1613, %v1614
  %vm1616 = vcmask 752640
  %v1617 = vsel %vm1616, %v1610, %v1615
  %v1619 = vmul.f32 %v16, %v1617
  %1621 = vst [vmem:[#allocation1] ss:$2 sm:$0xff] %v1619
  %v1622 = vld.sshfl [vmem:[#allocation1] sm:$0xff pattern:$0x75316420]
  %v1623 = vld.sshfl [vmem:[#allocation1 + $0x8] sm:$0xff pattern:$0x75316420]
  %v1626 = vsel %vm33, %v1622, 0.0
  %v1627 = vrot.slane %v1626, 4
  %v1628 = vadd.f32 %v1626, %v1627
  %v1629 = vrot.slane %v1628, 2
  %v1630 = vadd.f32 %v1628, %v1629
  %v1631 = vrot.slane %v1630, 1
  %v1632 = vadd.f32 %v1630, %v1631
  %v1633 = vsel %vm33, %v1623, 0.0
  %v1634 = vrot.slane %v1633, 4
  %v1635 = vadd.f32 %v1633, %v1634
  %v1636 = vrot.slane %v1635, 2
  %v1637 = vadd.f32 %v1635, %v1636
  %v1638 = vrot.slane %v1637, 1
  %v1639 = vadd.f32 %v1637, %v1638
  %v1640 = vmul.f32 %v1632, %v22
  %v1641 = vmul.f32 %v1639, %v23
  %1644 = vst [vmem:[#allocation1] sm:$0xff] %v1640
  %1645 = vst [vmem:[#allocation1 + $0x9] sm:$0xff] %v1641
  %s1646 = scalar_lea.vmem [#allocation1], 4
  %v1647 = vld [vmem:[%s1646] ss:$9 sm:$0xff]
  %s1649 = scalar_lea.vmem %s3, 38
  %1650 = vst.msk [vmem:[%s1649] ss:$8 sm:$0x3] %vm59, %v1647
  %1651 = vst.msk [vmem:[%s1649] ss:$8 sm:$0x0] %vm59, %v1647
  %1652 = vrot.lane.b32.xlu0 %v18, 76
  %v1653 = vpop.permute.xlu0 %1652
  %1654 = vrot.lane.b32.xlu0 %v19, 76
  %v1655 = vpop.permute.xlu0 %1654
  %v1656 = vrot.slane %v1653, 4
  %v1657 = vrot.slane %v1655, 4
  %v1658 = vsel %vm33, %v1656, %v1657
  %vm1659 = vcmask 621568
  %v1660 = vsel %vm1659, %v1653, %v1658
  %v1662 = vmul.f32 %v16, %v1660
  %1664 = vst [vmem:[#allocation1] ss:$2 sm:$0xff] %v1662
  %v1665 = vld.sshfl [vmem:[#allocation1] sm:$0xff pattern:$0x75316420]
  %v1666 = vld.sshfl [vmem:[#allocation1 + $0x8] sm:$0xff pattern:$0x75316420]
  %v1669 = vsel %vm33, %v1665, 0.0
  %v1670 = vrot.slane %v1669, 4
  %v1671 = vadd.f32 %v1669, %v1670
  %v1672 = vrot.slane %v1671, 2
  %v1673 = vadd.f32 %v1671, %v1672
  %v1674 = vrot.slane %v1673, 1
  %v1675 = vadd.f32 %v1673, %v1674
  %v1676 = vsel %vm33, %v1666, 0.0
  %v1677 = vrot.slane %v1676, 4
  %v1678 = vadd.f32 %v1676, %v1677
  %v1679 = vrot.slane %v1678, 2
  %v1680 = vadd.f32 %v1678, %v1679
  %v1681 = vrot.slane %v1680, 1
  %v1682 = vadd.f32 %v1680, %v1681
  %v1683 = vmul.f32 %v1675, %v22
  %v1684 = vmul.f32 %v1682, %v23
  %1687 = vst [vmem:[#allocation1] sm:$0xff] %v1683
  %1688 = vst [vmem:[#allocation1 + $0x9] sm:$0xff] %v1684
  %s1689 = scalar_lea.vmem [#allocation1], 4
  %v1690 = vld [vmem:[%s1689] ss:$9 sm:$0xff]
  %s1692 = scalar_lea.vmem %s3, 55
  %1693 = vst.msk [vmem:[%s1692] ss:$8 sm:$0x3] %vm59, %v1690
  %1694 = vst.msk [vmem:[%s1692] ss:$8 sm:$0x0] %vm59, %v1690
  %1695 = vrot.lane.b32.xlu0 %v18, 60
  %v1696 = vpop.permute.xlu0 %1695
  %1697 = vrot.lane.b32.xlu0 %v19, 60
  %v1698 = vpop.permute.xlu0 %1697
  %v1699 = vrot.slane %v1696, 4
  %v1700 = vrot.slane %v1698, 4
  %v1701 = vsel %vm33, %v1699, %v1700
  %vm1702 = vcmask 490496
  %v1703 = vsel %vm1702, %v1696, %v1701
  %v1705 = vmul.f32 %v16, %v1703
  %1707 = vst [vmem:[#allocation1] ss:$2 sm:$0xff] %v1705
  %v1708 = vld.sshfl [vmem:[#allocation1] sm:$0xff pattern:$0x75316420]
  %v1709 = vld.sshfl [vmem:[#allocation1 + $0x8] sm:$0xff pattern:$0x75316420]
  %v1712 = vsel %vm33, %v1708, 0.0
  %v1713 = vrot.slane %v1712, 4
  %v1714 = vadd.f32 %v1712, %v1713
  %v1715 = vrot.slane %v1714, 2
  %v1716 = vadd.f32 %v1714, %v1715
  %v1717 = vrot.slane %v1716, 1
  %v1718 = vadd.f32 %v1716, %v1717
  %v1719 = vsel %vm33, %v1709, 0.0
  %v1720 = vrot.slane %v1719, 4
  %v1721 = vadd.f32 %v1719, %v1720
  %v1722 = vrot.slane %v1721, 2
  %v1723 = vadd.f32 %v1721, %v1722
  %v1724 = vrot.slane %v1723, 1
  %v1725 = vadd.f32 %v1723, %v1724
  %v1726 = vmul.f32 %v1718, %v22
  %v1727 = vmul.f32 %v1725, %v23
  %1730 = vst [vmem:[#allocation1] sm:$0xff] %v1726
  %1731 = vst [vmem:[#allocation1 + $0x9] sm:$0xff] %v1727
  %s1732 = scalar_lea.vmem [#allocation1], 4
  %v1733 = vld [vmem:[%s1732] ss:$9 sm:$0xff]
  %s1735 = scalar_lea.vmem %s3, 80
  %1736 = vst.msk [vmem:[%s1735] ss:$8 sm:$0x3] %vm59, %v1733
  %1737 = vst.msk [vmem:[%s1735] ss:$8 sm:$0x0] %vm59, %v1733
  %1738 = vrot.lane.b32.xlu0 %v18, 44
  %v1739 = vpop.permute.xlu0 %1738
  %1740 = vrot.lane.b32.xlu0 %v19, 44
  %v1741 = vpop.permute.xlu0 %1740
  %v1742 = vrot.slane %v1739, 4
  %v1743 = vrot.slane %v1741, 4
  %v1744 = vsel %vm33, %v1742, %v1743
  %vm1745 = vcmask 359424
  %v1746 = vsel %vm1745, %v1739, %v1744
  %v1748 = vmul.f32 %v16, %v1746
  %1750 = vst [vmem:[#allocation1] ss:$2 sm:$0xff] %v1748
  %v1751 = vld.sshfl [vmem:[#allocation1] sm:$0xff pattern:$0x75316420]
  %v1752 = vld.sshfl [vmem:[#allocation1 + $0x8] sm:$0xff pattern:$0x75316420]
  %v1755 = vsel %vm33, %v1751, 0.0
  %v1756 = vrot.slane %v1755, 4
  %v1757 = vadd.f32 %v1755, %v1756
  %v1758 = vrot.slane %v1757, 2
  %v1759 = vadd.f32 %v1757, %v1758
  %v1760 = vrot.slane %v1759, 1
  %v1761 = vadd.f32 %v1759, %v1760
  %v1762 = vsel %vm33, %v1752, 0.0
  %v1763 = vrot.slane %v1762, 4
  %v1764 = vadd.f32 %v1762, %v1763
  %v1765 = vrot.slane %v1764, 2
  %v1766 = vadd.f32 %v1764, %v1765
  %v1767 = vrot.slane %v1766, 1
  %v1768 = vadd.f32 %v1766, %v1767
  %v1769 = vmul.f32 %v1761, %v22
  %v1770 = vmul.f32 %v1768, %v23
  %1773 = vst [vmem:[#allocation1] sm:$0xff] %v1769
  %1774 = vst [vmem:[#allocation1 + $0x9] sm:$0xff] %v1770
  %s1775 = scalar_lea.vmem [#allocation1], 4
  %v1776 = vld [vmem:[%s1775] ss:$9 sm:$0xff]
  %s1778 = scalar_lea.vmem %s3, 97
  %1779 = vst.msk [vmem:[%s1778] ss:$8 sm:$0x3] %vm59, %v1776
  %1780 = vst.msk [vmem:[%s1778] ss:$8 sm:$0x0] %vm59, %v1776
  %1781 = vrot.lane.b32.xlu0 %v18, 28
  %v1782 = vpop.permute.xlu0 %1781
  %1783 = vrot.lane.b32.xlu0 %v19, 28
  %v1784 = vpop.permute.xlu0 %1783
  %v1785 = vrot.slane %v1782, 4
  %v1786 = vrot.slane %v1784, 4
  %v1787 = vsel %vm33, %v1785, %v1786
  %vm1788 = vcmask 228352
  %v1789 = vsel %vm1788, %v1782, %v1787
  %v1791 = vmul.f32 %v16, %v1789
  %1793 = vst [vmem:[#allocation1] ss:$2 sm:$0xff] %v1791
  %v1794 = vld.sshfl [vmem:[#allocation1] sm:$0xff pattern:$0x75316420]
  %v1795 = vld.sshfl [vmem:[#allocation1 + $0x8] sm:$0xff pattern:$0x75316420]
  %v1798 = vsel %vm33, %v1794, 0.0
  %v1799 = vrot.slane %v1798, 4
  %v1800 = vadd.f32 %v1798, %v1799
  %v1801 = vrot.slane %v1800, 2
  %v1802 = vadd.f32 %v1800, %v1801
  %v1803 = vrot.slane %v1802, 1
  %v1804 = vadd.f32 %v1802, %v1803
  %v1805 = vsel %vm33, %v1795, 0.0
  %v1806 = vrot.slane %v1805, 4
  %v1807 = vadd.f32 %v1805, %v1806
  %v1808 = vrot.slane %v1807, 2
  %v1809 = vadd.f32 %v1807, %v1808
  %v1810 = vrot.slane %v1809, 1
  %v1811 = vadd.f32 %v1809, %v1810
  %v1812 = vmul.f32 %v1804, %v22
  %v1813 = vmul.f32 %v1811, %v23
  %1816 = vst [vmem:[#allocation1] sm:$0xff] %v1812
  %1817 = vst [vmem:[#allocation1 + $0x9] sm:$0xff] %v1813
  %s1818 = scalar_lea.vmem [#allocation1], 4
  %v1819 = vld [vmem:[%s1818] ss:$9 sm:$0xff]
  %s1821 = scalar_lea.vmem %s3, 114
  %1822 = vst.msk [vmem:[%s1821] ss:$8 sm:$0x3] %vm59, %v1819
  %1823 = vst.msk [vmem:[%s1821] ss:$8 sm:$0x0] %vm59, %v1819
  %1824 = vrot.lane.b32.xlu0 %v18, 12
  %v1825 = vpop.permute.xlu0 %1824
  %1826 = vrot.lane.b32.xlu0 %v19, 12
  %v1827 = vpop.permute.xlu0 %1826
  %v1828 = vrot.slane %v1825, 4
  %v1829 = vrot.slane %v1827, 4
  %v1830 = vsel %vm33, %v1828, %v1829
  %vm1831 = vcmask 97280
  %v1832 = vsel %vm1831, %v1825, %v1830
  %v1834 = vmul.f32 %v16, %v1832
  %1836 = vst [vmem:[#allocation1] ss:$2 sm:$0xff] %v1834
  %v1837 = vld.sshfl [vmem:[#allocation1] sm:$0xff pattern:$0x75316420]
  %v1838 = vld.sshfl [vmem:[#allocation1 + $0x8] sm:$0xff pattern:$0x75316420]
  %v1841 = vsel %vm33, %v1837, 0.0
  %v1842 = vrot.slane %v1841, 4
  %v1843 = vadd.f32 %v1841, %v1842
  %v1844 = vrot.slane %v1843, 2
  %v1845 = vadd.f32 %v1843, %v1844
  %v1846 = vrot.slane %v1845, 1
  %v1847 = vadd.f32 %v1845, %v1846
  %v1848 = vsel %vm33, %v1838, 0.0
  %v1849 = vrot.slane %v1848, 4
  %v1850 = vadd.f32 %v1848, %v1849
  %v1851 = vrot.slane %v1850, 2
  %v1852 = vadd.f32 %v1850, %v1851
  %v1853 = vrot.slane %v1852, 1
  %v1854 = vadd.f32 %v1852, %v1853
  %v1855 = vmul.f32 %v1847, %v22
  %v1856 = vmul.f32 %v1854, %v23
  %1859 = vst [vmem:[#allocation1] sm:$0xff] %v1855
  %1860 = vst [vmem:[#allocation1 + $0x9] sm:$0xff] %v1856
  %s1861 = scalar_lea.vmem [#allocation1], 4
  %v1862 = vld [vmem:[%s1861] ss:$9 sm:$0xff]
  %s1864 = scalar_lea.vmem %s3, 131
  %1865 = vst.msk [vmem:[%s1864] ss:$8 sm:$0x3] %vm59, %v1862
  %1866 = vst.msk [vmem:[%s1864] ss:$8 sm:$0x0] %vm59, %v1862
  %v1867 = vsel %vm1530, %v1529, %v1526
  %v1869 = vmul.f32 %v16, %v1867
  %1871 = vst [vmem:[#allocation1] ss:$2 sm:$0xff] %v1869
  %v1872 = vld.sshfl [vmem:[#allocation1] sm:$0xff pattern:$0x75316420]
  %v1873 = vld.sshfl [vmem:[#allocation1 + $0x8] sm:$0xff pattern:$0x75316420]
  %v1876 = vsel %vm33, %v1872, 0.0
  %v1877 = vrot.slane %v1876, 4
  %v1878 = vadd.f32 %v1876, %v1877
  %v1879 = vrot.slane %v1878, 2
  %v1880 = vadd.f32 %v1878, %v1879
  %v1881 = vrot.slane %v1880, 1
  %v1882 = vadd.f32 %v1880, %v1881
  %v1883 = vsel %vm33, %v1873, 0.0
  %v1884 = vrot.slane %v1883, 4
  %v1885 = vadd.f32 %v1883, %v1884
  %v1886 = vrot.slane %v1885, 2
  %v1887 = vadd.f32 %v1885, %v1886
  %v1888 = vrot.slane %v1887, 1
  %v1889 = vadd.f32 %v1887, %v1888
  %v1890 = vmul.f32 %v1882, %v22
  %v1891 = vmul.f32 %v1889, %v23
  %1894 = vst [vmem:[#allocation1] sm:$0xff] %v1890
  %1895 = vst [vmem:[#allocation1 + $0x9] sm:$0xff] %v1891
  %s1896 = scalar_lea.vmem [#allocation1], 4
  %v1897 = vld [vmem:[%s1896] ss:$9 sm:$0xff]
  %s1899 = scalar_lea.vmem %s3, 148
  %1900 = vst.msk [vmem:[%s1899] ss:$8 sm:$0x3] %vm59, %v1897
  %1901 = vst.msk [vmem:[%s1899] ss:$8 sm:$0x0] %vm59, %v1897
  %1902 = vrot.lane.b32.xlu0 %v18, 123
  %v1903 = vpop.permute.xlu0 %1902
  %1904 = vrot.lane.b32.xlu0 %v19, 123
  %v1905 = vpop.permute.xlu0 %1904
  %v1906 = vrot.slane %v1903, 4
  %v1907 = vrot.slane %v1905, 4
  %v1908 = vsel %vm33, %v1906, %v1907
  %vm1909 = vcmask 1006592
  %v1910 = vsel %vm1909, %v1903, %v1908
  %v1912 = vmul.f32 %v16, %v1910
  %1914 = vst [vmem:[#allocation1] ss:$2 sm:$0xff] %v1912
  %v1915 = vld.sshfl [vmem:[#allocation1] sm:$0xff pattern:$0x75316420]
  %v1916 = vld.sshfl [vmem:[#allocation1 + $0x8] sm:$0xff pattern:$0x75316420]
  %v1919 = vsel %vm33, %v1915, 0.0
  %v1920 = vrot.slane %v1919, 4
  %v1921 = vadd.f32 %v1919, %v1920
  %v1922 = vrot.slane %v1921, 2
  %v1923 = vadd.f32 %v1921, %v1922
  %v1924 = vrot.slane %v1923, 1
  %v1925 = vadd.f32 %v1923, %v1924
  %v1926 = vsel %vm33, %v1916, 0.0
  %v1927 = vrot.slane %v1926, 4
  %v1928 = vadd.f32 %v1926, %v1927
  %v1929 = vrot.slane %v1928, 2
  %v1930 = vadd.f32 %v1928, %v1929
  %v1931 = vrot.slane %v1930, 1
  %v1932 = vadd.f32 %v1930, %v1931
  %v1933 = vmul.f32 %v1925, %v22
  %v1934 = vmul.f32 %v1932, %v23
  %1937 = vst [vmem:[#allocation1] sm:$0xff] %v1933
  %1938 = vst [vmem:[#allocation1 + $0x9] sm:$0xff] %v1934
  %s1939 = scalar_lea.vmem [#allocation1], 5
  %v1940 = vld [vmem:[%s1939] ss:$9 sm:$0xff]
  %s1942 = scalar_lea.vmem %s3, 5
  %1943 = vst.msk [vmem:[%s1942] ss:$8 sm:$0x3] %vm59, %v1940
  %1944 = vst.msk [vmem:[%s1942] ss:$8 sm:$0x0] %vm59, %v1940
  %1945 = vrot.lane.b32.xlu0 %v18, 107
  %v1946 = vpop.permute.xlu0 %1945
  %1947 = vrot.lane.b32.xlu0 %v19, 107
  %v1948 = vpop.permute.xlu0 %1947
  %v1949 = vrot.slane %v1946, 4
  %v1950 = vrot.slane %v1948, 4
  %v1951 = vsel %vm33, %v1949, %v1950
  %vm1952 = vcmask 875520
  %v1953 = vsel %vm1952, %v1946, %v1951
  %v1955 = vmul.f32 %v16, %v1953
  %1957 = vst [vmem:[#allocation1] ss:$2 sm:$0xff] %v1955
  %v1958 = vld.sshfl [vmem:[#allocation1] sm:$0xff pattern:$0x75316420]
  %v1959 = vld.sshfl [vmem:[#allocation1 + $0x8] sm:$0xff pattern:$0x75316420]
  %v1962 = vsel %vm33, %v1958, 0.0
  %v1963 = vrot.slane %v1962, 4
  %v1964 = vadd.f32 %v1962, %v1963
  %v1965 = vrot.slane %v1964, 2
  %v1966 = vadd.f32 %v1964, %v1965
  %v1967 = vrot.slane %v1966, 1
  %v1968 = vadd.f32 %v1966, %v1967
  %v1969 = vsel %vm33, %v1959, 0.0
  %v1970 = vrot.slane %v1969, 4
  %v1971 = vadd.f32 %v1969, %v1970
  %v1972 = vrot.slane %v1971, 2
  %v1973 = vadd.f32 %v1971, %v1972
  %v1974 = vrot.slane %v1973, 1
  %v1975 = vadd.f32 %v1973, %v1974
  %v1976 = vmul.f32 %v1968, %v22
  %v1977 = vmul.f32 %v1975, %v23
  %1980 = vst [vmem:[#allocation1] sm:$0xff] %v1976
  %1981 = vst [vmem:[#allocation1 + $0x9] sm:$0xff] %v1977
  %s1982 = scalar_lea.vmem [#allocation1], 5
  %v1983 = vld [vmem:[%s1982] ss:$9 sm:$0xff]
  %s1985 = scalar_lea.vmem %s3, 22
  %1986 = vst.msk [vmem:[%s1985] ss:$8 sm:$0x3] %vm59, %v1983
  %1987 = vst.msk [vmem:[%s1985] ss:$8 sm:$0x0] %vm59, %v1983
  %1988 = vrot.lane.b32.xlu0 %v18, 91
  %v1989 = vpop.permute.xlu0 %1988
  %1990 = vrot.lane.b32.xlu0 %v19, 91
  %v1991 = vpop.permute.xlu0 %1990
  %v1992 = vrot.slane %v1989, 4
  %v1993 = vrot.slane %v1991, 4
  %v1994 = vsel %vm33, %v1992, %v1993
  %vm1995 = vcmask 744448
  %v1996 = vsel %vm1995, %v1989, %v1994
  %v1998 = vmul.f32 %v16, %v1996
  %2000 = vst [vmem:[#allocation1] ss:$2 sm:$0xff] %v1998
  %v2001 = vld.sshfl [vmem:[#allocation1] sm:$0xff pattern:$0x75316420]
  %v2002 = vld.sshfl [vmem:[#allocation1 + $0x8] sm:$0xff pattern:$0x75316420]
  %v2005 = vsel %vm33, %v2001, 0.0
  %v2006 = vrot.slane %v2005, 4
  %v2007 = vadd.f32 %v2005, %v2006
  %v2008 = vrot.slane %v2007, 2
  %v2009 = vadd.f32 %v2007, %v2008
  %v2010 = vrot.slane %v2009, 1
  %v2011 = vadd.f32 %v2009, %v2010
  %v2012 = vsel %vm33, %v2002, 0.0
  %v2013 = vrot.slane %v2012, 4
  %v2014 = vadd.f32 %v2012, %v2013
  %v2015 = vrot.slane %v2014, 2
  %v2016 = vadd.f32 %v2014, %v2015
  %v2017 = vrot.slane %v2016, 1
  %v2018 = vadd.f32 %v2016, %v2017
  %v2019 = vmul.f32 %v2011, %v22
  %v2020 = vmul.f32 %v2018, %v23
  %2023 = vst [vmem:[#allocation1] sm:$0xff] %v2019
  %2024 = vst [vmem:[#allocation1 + $0x9] sm:$0xff] %v2020
  %s2025 = scalar_lea.vmem [#allocation1], 5
  %v2026 = vld [vmem:[%s2025] ss:$9 sm:$0xff]
  %s2028 = scalar_lea.vmem %s3, 39
  %2029 = vst.msk [vmem:[%s2028] ss:$8 sm:$0x3] %vm59, %v2026
  %2030 = vst.msk [vmem:[%s2028] ss:$8 sm:$0x0] %vm59, %v2026
  %2031 = vrot.lane.b32.xlu0 %v18, 75
  %v2032 = vpop.permute.xlu0 %2031
  %2033 = vrot.lane.b32.xlu0 %v19, 75
  %v2034 = vpop.permute.xlu0 %2033
  %v2035 = vrot.slane %v2032, 4
  %v2036 = vrot.slane %v2034, 4
  %v2037 = vsel %vm33, %v2035, %v2036
  %vm2038 = vcmask 613376
  %v2039 = vsel %vm2038, %v2032, %v2037
  %v2041 = vmul.f32 %v16, %v2039
  %2043 = vst [vmem:[#allocation1] ss:$2 sm:$0xff] %v2041
  %v2044 = vld.sshfl [vmem:[#allocation1] sm:$0xff pattern:$0x75316420]
  %v2045 = vld.sshfl [vmem:[#allocation1 + $0x8] sm:$0xff pattern:$0x75316420]
  %v2048 = vsel %vm33, %v2044, 0.0
  %v2049 = vrot.slane %v2048, 4
  %v2050 = vadd.f32 %v2048, %v2049
  %v2051 = vrot.slane %v2050, 2
  %v2052 = vadd.f32 %v2050, %v2051
  %v2053 = vrot.slane %v2052, 1
  %v2054 = vadd.f32 %v2052, %v2053
  %v2055 = vsel %vm33, %v2045, 0.0
  %v2056 = vrot.slane %v2055, 4
  %v2057 = vadd.f32 %v2055, %v2056
  %v2058 = vrot.slane %v2057, 2
  %v2059 = vadd.f32 %v2057, %v2058
  %v2060 = vrot.slane %v2059, 1
  %v2061 = vadd.f32 %v2059, %v2060
  %v2062 = vmul.f32 %v2054, %v22
  %v2063 = vmul.f32 %v2061, %v23
  %2066 = vst [vmem:[#allocation1] sm:$0xff] %v2062
  %2067 = vst [vmem:[#allocation1 + $0x9] sm:$0xff] %v2063
  %s2068 = scalar_lea.vmem [#allocation1], 5
  %v2069 = vld [vmem:[%s2068] ss:$9 sm:$0xff]
  %s2071 = scalar_lea.vmem %s3, 64
  %2072 = vst.msk [vmem:[%s2071] ss:$8 sm:$0x3] %vm59, %v2069
  %2073 = vst.msk [vmem:[%s2071] ss:$8 sm:$0x0] %vm59, %v2069
  %2074 = vrot.lane.b32.xlu0 %v18, 59
  %v2075 = vpop.permute.xlu0 %2074
  %2076 = vrot.lane.b32.xlu0 %v19, 59
  %v2077 = vpop.permute.xlu0 %2076
  %v2078 = vrot.slane %v2075, 4
  %v2079 = vrot.slane %v2077, 4
  %v2080 = vsel %vm33, %v2078, %v2079
  %vm2081 = vcmask 482304
  %v2082 = vsel %vm2081, %v2075, %v2080
  %v2084 = vmul.f32 %v16, %v2082
  %2086 = vst [vmem:[#allocation1] ss:$2 sm:$0xff] %v2084
  %v2087 = vld.sshfl [vmem:[#allocation1] sm:$0xff pattern:$0x75316420]
  %v2088 = vld.sshfl [vmem:[#allocation1 + $0x8] sm:$0xff pattern:$0x75316420]
  %v2091 = vsel %vm33, %v2087, 0.0
  %v2092 = vrot.slane %v2091, 4
  %v2093 = vadd.f32 %v2091, %v2092
  %v2094 = vrot.slane %v2093, 2
  %v2095 = vadd.f32 %v2093, %v2094
  %v2096 = vrot.slane %v2095, 1
  %v2097 = vadd.f32 %v2095, %v2096
  %v2098 = vsel %vm33, %v2088, 0.0
  %v2099 = vrot.slane %v2098, 4
  %v2100 = vadd.f32 %v2098, %v2099
  %v2101 = vrot.slane %v2100, 2
  %v2102 = vadd.f32 %v2100, %v2101
  %v2103 = vrot.slane %v2102, 1
  %v2104 = vadd.f32 %v2102, %v2103
  %v2105 = vmul.f32 %v2097, %v22
  %v2106 = vmul.f32 %v2104, %v23
  %2109 = vst [vmem:[#allocation1] sm:$0xff] %v2105
  %2110 = vst [vmem:[#allocation1 + $0x9] sm:$0xff] %v2106
  %s2111 = scalar_lea.vmem [#allocation1], 5
  %v2112 = vld [vmem:[%s2111] ss:$9 sm:$0xff]
  %s2114 = scalar_lea.vmem %s3, 81
  %2115 = vst.msk [vmem:[%s2114] ss:$8 sm:$0x3] %vm59, %v2112
  %2116 = vst.msk [vmem:[%s2114] ss:$8 sm:$0x0] %vm59, %v2112
  %2117 = vrot.lane.b32.xlu0 %v18, 43
  %v2118 = vpop.permute.xlu0 %2117
  %2119 = vrot.lane.b32.xlu0 %v19, 43
  %v2120 = vpop.permute.xlu0 %2119
  %v2121 = vrot.slane %v2118, 4
  %v2122 = vrot.slane %v2120, 4
  %v2123 = vsel %vm33, %v2121, %v2122
  %vm2124 = vcmask 351232
  %v2125 = vsel %vm2124, %v2118, %v2123
  %v2127 = vmul.f32 %v16, %v2125
  %2129 = vst [vmem:[#allocation1] ss:$2 sm:$0xff] %v2127
  %v2130 = vld.sshfl [vmem:[#allocation1] sm:$0xff pattern:$0x75316420]
  %v2131 = vld.sshfl [vmem:[#allocation1 + $0x8] sm:$0xff pattern:$0x75316420]
  %v2134 = vsel %vm33, %v2130, 0.0
  %v2135 = vrot.slane %v2134, 4
  %v2136 = vadd.f32 %v2134, %v2135
  %v2137 = vrot.slane %v2136, 2
  %v2138 = vadd.f32 %v2136, %v2137
  %v2139 = vrot.slane %v2138, 1
  %v2140 = vadd.f32 %v2138, %v2139
  %v2141 = vsel %vm33, %v2131, 0.0
  %v2142 = vrot.slane %v2141, 4
  %v2143 = vadd.f32 %v2141, %v2142
  %v2144 = vrot.slane %v2143, 2
  %v2145 = vadd.f32 %v2143, %v2144
  %v2146 = vrot.slane %v2145, 1
  %v2147 = vadd.f32 %v2145, %v2146
  %v2148 = vmul.f32 %v2140, %v22
  %v2149 = vmul.f32 %v2147, %v23
  %2152 = vst [vmem:[#allocation1] sm:$0xff] %v2148
  %2153 = vst [vmem:[#allocation1 + $0x9] sm:$0xff] %v2149
  %s2154 = scalar_lea.vmem [#allocation1], 5
  %v2155 = vld [vmem:[%s2154] ss:$9 sm:$0xff]
  %s2157 = scalar_lea.vmem %s3, 98
  %2158 = vst.msk [vmem:[%s2157] ss:$8 sm:$0x3] %vm59, %v2155
  %2159 = vst.msk [vmem:[%s2157] ss:$8 sm:$0x0] %vm59, %v2155
  %2160 = vrot.lane.b32.xlu0 %v18, 27
  %v2161 = vpop.permute.xlu0 %2160
  %2162 = vrot.lane.b32.xlu0 %v19, 27
  %v2163 = vpop.permute.xlu0 %2162
  %v2164 = vrot.slane %v2161, 4
  %v2165 = vrot.slane %v2163, 4
  %v2166 = vsel %vm33, %v2164, %v2165
  %vm2167 = vcmask 220160
  %v2168 = vsel %vm2167, %v2161, %v2166
  %v2170 = vmul.f32 %v16, %v2168
  %2172 = vst [vmem:[#allocation1] ss:$2 sm:$0xff] %v2170
  %v2173 = vld.sshfl [vmem:[#allocation1] sm:$0xff pattern:$0x75316420]
  %v2174 = vld.sshfl [vmem:[#allocation1 + $0x8] sm:$0xff pattern:$0x75316420]
  %v2177 = vsel %vm33, %v2173, 0.0
  %v2178 = vrot.slane %v2177, 4
  %v2179 = vadd.f32 %v2177, %v2178
  %v2180 = vrot.slane %v2179, 2
  %v2181 = vadd.f32 %v2179, %v2180
  %v2182 = vrot.slane %v2181, 1
  %v2183 = vadd.f32 %v2181, %v2182
  %v2184 = vsel %vm33, %v2174, 0.0
  %v2185 = vrot.slane %v2184, 4
  %v2186 = vadd.f32 %v2184, %v2185
  %v2187 = vrot.slane %v2186, 2
  %v2188 = vadd.f32 %v2186, %v2187
  %v2189 = vrot.slane %v2188, 1
  %v2190 = vadd.f32 %v2188, %v2189
  %v2191 = vmul.f32 %v2183, %v22
  %v2192 = vmul.f32 %v2190, %v23
  %2195 = vst [vmem:[#allocation1] sm:$0xff] %v2191
  %2196 = vst [vmem:[#allocation1 + $0x9] sm:$0xff] %v2192
  %s2197 = scalar_lea.vmem [#allocation1], 5
  %v2198 = vld [vmem:[%s2197] ss:$9 sm:$0xff]
  %s2200 = scalar_lea.vmem %s3, 115
  %2201 = vst.msk [vmem:[%s2200] ss:$8 sm:$0x3] %vm59, %v2198
  %2202 = vst.msk [vmem:[%s2200] ss:$8 sm:$0x0] %vm59, %v2198
  %2203 = vrot.lane.b32.xlu0 %v18, 11
  %v2204 = vpop.permute.xlu0 %2203
  %2205 = vrot.lane.b32.xlu0 %v19, 11
  %v2206 = vpop.permute.xlu0 %2205
  %v2207 = vrot.slane %v2204, 4
  %v2208 = vrot.slane %v2206, 4
  %v2209 = vsel %vm33, %v2207, %v2208
  %vm2210 = vcmask 89088
  %v2211 = vsel %vm2210, %v2204, %v2209
  %v2213 = vmul.f32 %v16, %v2211
  %2215 = vst [vmem:[#allocation1] ss:$2 sm:$0xff] %v2213
  %v2216 = vld.sshfl [vmem:[#allocation1] sm:$0xff pattern:$0x75316420]
  %v2217 = vld.sshfl [vmem:[#allocation1 + $0x8] sm:$0xff pattern:$0x75316420]
  %v2220 = vsel %vm33, %v2216, 0.0
  %v2221 = vrot.slane %v2220, 4
  %v2222 = vadd.f32 %v2220, %v2221
  %v2223 = vrot.slane %v2222, 2
  %v2224 = vadd.f32 %v2222, %v2223
  %v2225 = vrot.slane %v2224, 1
  %v2226 = vadd.f32 %v2224, %v2225
  %v2227 = vsel %vm33, %v2217, 0.0
  %v2228 = vrot.slane %v2227, 4
  %v2229 = vadd.f32 %v2227, %v2228
  %v2230 = vrot.slane %v2229, 2
  %v2231 = vadd.f32 %v2229, %v2230
  %v2232 = vrot.slane %v2231, 1
  %v2233 = vadd.f32 %v2231, %v2232
  %v2234 = vmul.f32 %v2226, %v22
  %v2235 = vmul.f32 %v2233, %v23
  %2238 = vst [vmem:[#allocation1] sm:$0xff] %v2234
  %2239 = vst [vmem:[#allocation1 + $0x9] sm:$0xff] %v2235
  %s2240 = scalar_lea.vmem [#allocation1], 5
  %v2241 = vld [vmem:[%s2240] ss:$9 sm:$0xff]
  %s2243 = scalar_lea.vmem %s3, 132
  %2244 = vst.msk [vmem:[%s2243] ss:$8 sm:$0x3] %vm59, %v2241
  %2245 = vst.msk [vmem:[%s2243] ss:$8 sm:$0x0] %vm59, %v2241
  %v2246 = vsel %vm1909, %v1908, %v1905
  %v2248 = vmul.f32 %v16, %v2246
  %2250 = vst [vmem:[#allocation1] ss:$2 sm:$0xff] %v2248
  %v2251 = vld.sshfl [vmem:[#allocation1] sm:$0xff pattern:$0x75316420]
  %v2252 = vld.sshfl [vmem:[#allocation1 + $0x8] sm:$0xff pattern:$0x75316420]
  %v2255 = vsel %vm33, %v2251, 0.0
  %v2256 = vrot.slane %v2255, 4
  %v2257 = vadd.f32 %v2255, %v2256
  %v2258 = vrot.slane %v2257, 2
  %v2259 = vadd.f32 %v2257, %v2258
  %v2260 = vrot.slane %v2259, 1
  %v2261 = vadd.f32 %v2259, %v2260
  %v2262 = vsel %vm33, %v2252, 0.0
  %v2263 = vrot.slane %v2262, 4
  %v2264 = vadd.f32 %v2262, %v2263
  %v2265 = vrot.slane %v2264, 2
  %v2266 = vadd.f32 %v2264, %v2265
  %v2267 = vrot.slane %v2266, 1
  %v2268 = vadd.f32 %v2266, %v2267
  %v2269 = vmul.f32 %v2261, %v22
  %v2270 = vmul.f32 %v2268, %v23
  %2273 = vst [vmem:[#allocation1] sm:$0xff] %v2269
  %2274 = vst [vmem:[#allocation1 + $0x9] sm:$0xff] %v2270
  %s2275 = scalar_lea.vmem [#allocation1], 5
  %v2276 = vld [vmem:[%s2275] ss:$9 sm:$0xff]
  %s2278 = scalar_lea.vmem %s3, 149
  %2279 = vst.msk [vmem:[%s2278] ss:$8 sm:$0x3] %vm59, %v2276
  %2280 = vst.msk [vmem:[%s2278] ss:$8 sm:$0x0] %vm59, %v2276
  %2281 = vrot.lane.b32.xlu0 %v18, 122
  %v2282 = vpop.permute.xlu0 %2281
  %2283 = vrot.lane.b32.xlu0 %v19, 122
  %v2284 = vpop.permute.xlu0 %2283
  %v2285 = vrot.slane %v2282, 4
  %v2286 = vrot.slane %v2284, 4
  %v2287 = vsel %vm33, %v2285, %v2286
  %vm2288 = vcmask 998400
  %v2289 = vsel %vm2288, %v2282, %v2287
  %v2291 = vmul.f32 %v16, %v2289
  %2293 = vst [vmem:[#allocation1] ss:$2 sm:$0xff] %v2291
  %v2294 = vld.sshfl [vmem:[#allocation1] sm:$0xff pattern:$0x75316420]
  %v2295 = vld.sshfl [vmem:[#allocation1 + $0x8] sm:$0xff pattern:$0x75316420]
  %v2298 = vsel %vm33, %v2294, 0.0
  %v2299 = vrot.slane %v2298, 4
  %v2300 = vadd.f32 %v2298, %v2299
  %v2301 = vrot.slane %v2300, 2
  %v2302 = vadd.f32 %v2300, %v2301
  %v2303 = vrot.slane %v2302, 1
  %v2304 = vadd.f32 %v2302, %v2303
  %v2305 = vsel %vm33, %v2295, 0.0
  %v2306 = vrot.slane %v2305, 4
  %v2307 = vadd.f32 %v2305, %v2306
  %v2308 = vrot.slane %v2307, 2
  %v2309 = vadd.f32 %v2307, %v2308
  %v2310 = vrot.slane %v2309, 1
  %v2311 = vadd.f32 %v2309, %v2310
  %v2312 = vmul.f32 %v2304, %v22
  %v2313 = vmul.f32 %v2311, %v23
  %2316 = vst [vmem:[#allocation1] sm:$0xff] %v2312
  %2317 = vst [vmem:[#allocation1 + $0x9] sm:$0xff] %v2313
  %s2318 = scalar_lea.vmem [#allocation1], 6
  %v2319 = vld [vmem:[%s2318] ss:$9 sm:$0xff]
  %s2321 = scalar_lea.vmem %s3, 6
  %2322 = vst.msk [vmem:[%s2321] ss:$8 sm:$0x3] %vm59, %v2319
  %2323 = vst.msk [vmem:[%s2321] ss:$8 sm:$0x0] %vm59, %v2319
  %2324 = vrot.lane.b32.xlu0 %v18, 106
  %v2325 = vpop.permute.xlu0 %2324
  %2326 = vrot.lane.b32.xlu0 %v19, 106
  %v2327 = vpop.permute.xlu0 %2326
  %v2328 = vrot.slane %v2325, 4
  %v2329 = vrot.slane %v2327, 4
  %v2330 = vsel %vm33, %v2328, %v2329
  %vm2331 = vcmask 867328
  %v2332 = vsel %vm2331, %v2325, %v2330
  %v2334 = vmul.f32 %v16, %v2332
  %2336 = vst [vmem:[#allocation1] ss:$2 sm:$0xff] %v2334
  %v2337 = vld.sshfl [vmem:[#allocation1] sm:$0xff pattern:$0x75316420]
  %v2338 = vld.sshfl [vmem:[#allocation1 + $0x8] sm:$0xff pattern:$0x75316420]
  %v2341 = vsel %vm33, %v2337, 0.0
  %v2342 = vrot.slane %v2341, 4
  %v2343 = vadd.f32 %v2341, %v2342
  %v2344 = vrot.slane %v2343, 2
  %v2345 = vadd.f32 %v2343, %v2344
  %v2346 = vrot.slane %v2345, 1
  %v2347 = vadd.f32 %v2345, %v2346
  %v2348 = vsel %vm33, %v2338, 0.0
  %v2349 = vrot.slane %v2348, 4
  %v2350 = vadd.f32 %v2348, %v2349
  %v2351 = vrot.slane %v2350, 2
  %v2352 = vadd.f32 %v2350, %v2351
  %v2353 = vrot.slane %v2352, 1
  %v2354 = vadd.f32 %v2352, %v2353
  %v2355 = vmul.f32 %v2347, %v22
  %v2356 = vmul.f32 %v2354, %v23
  %2359 = vst [vmem:[#allocation1] sm:$0xff] %v2355
  %2360 = vst [vmem:[#allocation1 + $0x9] sm:$0xff] %v2356
  %s2361 = scalar_lea.vmem [#allocation1], 6
  %v2362 = vld [vmem:[%s2361] ss:$9 sm:$0xff]
  %s2364 = scalar_lea.vmem %s3, 23
  %2365 = vst.msk [vmem:[%s2364] ss:$8 sm:$0x3] %vm59, %v2362
  %2366 = vst.msk [vmem:[%s2364] ss:$8 sm:$0x0] %vm59, %v2362
  %2367 = vrot.lane.b32.xlu0 %v18, 90
  %v2368 = vpop.permute.xlu0 %2367
  %2369 = vrot.lane.b32.xlu0 %v19, 90
  %v2370 = vpop.permute.xlu0 %2369
  %v2371 = vrot.slane %v2368, 4
  %v2372 = vrot.slane %v2370, 4
  %v2373 = vsel %vm33, %v2371, %v2372
  %vm2374 = vcmask 736256
  %v2375 = vsel %vm2374, %v2368, %v2373
  %v2377 = vmul.f32 %v16, %v2375
  %2379 = vst [vmem:[#allocation1] ss:$2 sm:$0xff] %v2377
  %v2380 = vld.sshfl [vmem:[#allocation1] sm:$0xff pattern:$0x75316420]
  %v2381 = vld.sshfl [vmem:[#allocation1 + $0x8] sm:$0xff pattern:$0x75316420]
  %v2384 = vsel %vm33, %v2380, 0.0
  %v2385 = vrot.slane %v2384, 4
  %v2386 = vadd.f32 %v2384, %v2385
  %v2387 = vrot.slane %v2386, 2
  %v2388 = vadd.f32 %v2386, %v2387
  %v2389 = vrot.slane %v2388, 1
  %v2390 = vadd.f32 %v2388, %v2389
  %v2391 = vsel %vm33, %v2381, 0.0
  %v2392 = vrot.slane %v2391, 4
  %v2393 = vadd.f32 %v2391, %v2392
  %v2394 = vrot.slane %v2393, 2
  %v2395 = vadd.f32 %v2393, %v2394
  %v2396 = vrot.slane %v2395, 1
  %v2397 = vadd.f32 %v2395, %v2396
  %v2398 = vmul.f32 %v2390, %v22
  %v2399 = vmul.f32 %v2397, %v23
  %2402 = vst [vmem:[#allocation1] sm:$0xff] %v2398
  %2403 = vst [vmem:[#allocation1 + $0x9] sm:$0xff] %v2399
  %s2404 = scalar_lea.vmem [#allocation1], 6
  %v2405 = vld [vmem:[%s2404] ss:$9 sm:$0xff]
  %s2407 = scalar_lea.vmem %s3, 48
  %2408 = vst.msk [vmem:[%s2407] ss:$8 sm:$0x3] %vm59, %v2405
  %2409 = vst.msk [vmem:[%s2407] ss:$8 sm:$0x0] %vm59, %v2405
  %2410 = vrot.lane.b32.xlu0 %v18, 74
  %v2411 = vpop.permute.xlu0 %2410
  %2412 = vrot.lane.b32.xlu0 %v19, 74
  %v2413 = vpop.permute.xlu0 %2412
  %v2414 = vrot.slane %v2411, 4
  %v2415 = vrot.slane %v2413, 4
  %v2416 = vsel %vm33, %v2414, %v2415
  %vm2417 = vcmask 605184
  %v2418 = vsel %vm2417, %v2411, %v2416
  %v2420 = vmul.f32 %v16, %v2418
  %2422 = vst [vmem:[#allocation1] ss:$2 sm:$0xff] %v2420
  %v2423 = vld.sshfl [vmem:[#allocation1] sm:$0xff pattern:$0x75316420]
  %v2424 = vld.sshfl [vmem:[#allocation1 + $0x8] sm:$0xff pattern:$0x75316420]
  %v2427 = vsel %vm33, %v2423, 0.0
  %v2428 = vrot.slane %v2427, 4
  %v2429 = vadd.f32 %v2427, %v2428
  %v2430 = vrot.slane %v2429, 2
  %v2431 = vadd.f32 %v2429, %v2430
  %v2432 = vrot.slane %v2431, 1
  %v2433 = vadd.f32 %v2431, %v2432
  %v2434 = vsel %vm33, %v2424, 0.0
  %v2435 = vrot.slane %v2434, 4
  %v2436 = vadd.f32 %v2434, %v2435
  %v2437 = vrot.slane %v2436, 2
  %v2438 = vadd.f32 %v2436, %v2437
  %v2439 = vrot.slane %v2438, 1
  %v2440 = vadd.f32 %v2438, %v2439
  %v2441 = vmul.f32 %v2433, %v22
  %v2442 = vmul.f32 %v2440, %v23
  %2445 = vst [vmem:[#allocation1] sm:$0xff] %v2441
  %2446 = vst [vmem:[#allocation1 + $0x9] sm:$0xff] %v2442
  %s2447 = scalar_lea.vmem [#allocation1], 6
  %v2448 = vld [vmem:[%s2447] ss:$9 sm:$0xff]
  %s2450 = scalar_lea.vmem %s3, 65
  %2451 = vst.msk [vmem:[%s2450] ss:$8 sm:$0x3] %vm59, %v2448
  %2452 = vst.msk [vmem:[%s2450] ss:$8 sm:$0x0] %vm59, %v2448
  %2453 = vrot.lane.b32.xlu0 %v18, 58
  %v2454 = vpop.permute.xlu0 %2453
  %2455 = vrot.lane.b32.xlu0 %v19, 58
  %v2456 = vpop.permute.xlu0 %2455
  %v2457 = vrot.slane %v2454, 4
  %v2458 = vrot.slane %v2456, 4
  %v2459 = vsel %vm33, %v2457, %v2458
  %vm2460 = vcmask 474112
  %v2461 = vsel %vm2460, %v2454, %v2459
  %v2463 = vmul.f32 %v16, %v2461
  %2465 = vst [vmem:[#allocation1] ss:$2 sm:$0xff] %v2463
  %v2466 = vld.sshfl [vmem:[#allocation1] sm:$0xff pattern:$0x75316420]
  %v2467 = vld.sshfl [vmem:[#allocation1 + $0x8] sm:$0xff pattern:$0x75316420]
  %v2470 = vsel %vm33, %v2466, 0.0
  %v2471 = vrot.slane %v2470, 4
  %v2472 = vadd.f32 %v2470, %v2471
  %v2473 = vrot.slane %v2472, 2
  %v2474 = vadd.f32 %v2472, %v2473
  %v2475 = vrot.slane %v2474, 1
  %v2476 = vadd.f32 %v2474, %v2475
  %v2477 = vsel %vm33, %v2467, 0.0
  %v2478 = vrot.slane %v2477, 4
  %v2479 = vadd.f32 %v2477, %v2478
  %v2480 = vrot.slane %v2479, 2
  %v2481 = vadd.f32 %v2479, %v2480
  %v2482 = vrot.slane %v2481, 1
  %v2483 = vadd.f32 %v2481, %v2482
  %v2484 = vmul.f32 %v2476, %v22
  %v2485 = vmul.f32 %v2483, %v23
  %2488 = vst [vmem:[#allocation1] sm:$0xff] %v2484
  %2489 = vst [vmem:[#allocation1 + $0x9] sm:$0xff] %v2485
  %s2490 = scalar_lea.vmem [#allocation1], 6
  %v2491 = vld [vmem:[%s2490] ss:$9 sm:$0xff]
  %s2493 = scalar_lea.vmem %s3, 82
  %2494 = vst.msk [vmem:[%s2493] ss:$8 sm:$0x3] %vm59, %v2491
  %2495 = vst.msk [vmem:[%s2493] ss:$8 sm:$0x0] %vm59, %v2491
  %2496 = vrot.lane.b32.xlu0 %v18, 42
  %v2497 = vpop.permute.xlu0 %2496
  %2498 = vrot.lane.b32.xlu0 %v19, 42
  %v2499 = vpop.permute.xlu0 %2498
  %v2500 = vrot.slane %v2497, 4
  %v2501 = vrot.slane %v2499, 4
  %v2502 = vsel %vm33, %v2500, %v2501
  %vm2503 = vcmask 343040
  %v2504 = vsel %vm2503, %v2497, %v2502
  %v2506 = vmul.f32 %v16, %v2504
  %2508 = vst [vmem:[#allocation1] ss:$2 sm:$0xff] %v2506
  %v2509 = vld.sshfl [vmem:[#allocation1] sm:$0xff pattern:$0x75316420]
  %v2510 = vld.sshfl [vmem:[#allocation1 + $0x8] sm:$0xff pattern:$0x75316420]
  %v2513 = vsel %vm33, %v2509, 0.0
  %v2514 = vrot.slane %v2513, 4
  %v2515 = vadd.f32 %v2513, %v2514
  %v2516 = vrot.slane %v2515, 2
  %v2517 = vadd.f32 %v2515, %v2516
  %v2518 = vrot.slane %v2517, 1
  %v2519 = vadd.f32 %v2517, %v2518
  %v2520 = vsel %vm33, %v2510, 0.0
  %v2521 = vrot.slane %v2520, 4
  %v2522 = vadd.f32 %v2520, %v2521
  %v2523 = vrot.slane %v2522, 2
  %v2524 = vadd.f32 %v2522, %v2523
  %v2525 = vrot.slane %v2524, 1
  %v2526 = vadd.f32 %v2524, %v2525
  %v2527 = vmul.f32 %v2519, %v22
  %v2528 = vmul.f32 %v2526, %v23
  %2531 = vst [vmem:[#allocation1] sm:$0xff] %v2527
  %2532 = vst [vmem:[#allocation1 + $0x9] sm:$0xff] %v2528
  %s2533 = scalar_lea.vmem [#allocation1], 6
  %v2534 = vld [vmem:[%s2533] ss:$9 sm:$0xff]
  %s2536 = scalar_lea.vmem %s3, 99
  %2537 = vst.msk [vmem:[%s2536] ss:$8 sm:$0x3] %vm59, %v2534
  %2538 = vst.msk [vmem:[%s2536] ss:$8 sm:$0x0] %vm59, %v2534
  %2539 = vrot.lane.b32.xlu0 %v18, 26
  %v2540 = vpop.permute.xlu0 %2539
  %2541 = vrot.lane.b32.xlu0 %v19, 26
  %v2542 = vpop.permute.xlu0 %2541
  %v2543 = vrot.slane %v2540, 4
  %v2544 = vrot.slane %v2542, 4
  %v2545 = vsel %vm33, %v2543, %v2544
  %vm2546 = vcmask 211968
  %v2547 = vsel %vm2546, %v2540, %v2545
  %v2549 = vmul.f32 %v16, %v2547
  %2551 = vst [vmem:[#allocation1] ss:$2 sm:$0xff] %v2549
  %v2552 = vld.sshfl [vmem:[#allocation1] sm:$0xff pattern:$0x75316420]
  %v2553 = vld.sshfl [vmem:[#allocation1 + $0x8] sm:$0xff pattern:$0x75316420]
  %v2556 = vsel %vm33, %v2552, 0.0
  %v2557 = vrot.slane %v2556, 4
  %v2558 = vadd.f32 %v2556, %v2557
  %v2559 = vrot.slane %v2558, 2
  %v2560 = vadd.f32 %v2558, %v2559
  %v2561 = vrot.slane %v2560, 1
  %v2562 = vadd.f32 %v2560, %v2561
  %v2563 = vsel %vm33, %v2553, 0.0
  %v2564 = vrot.slane %v2563, 4
  %v2565 = vadd.f32 %v2563, %v2564
  %v2566 = vrot.slane %v2565, 2
  %v2567 = vadd.f32 %v2565, %v2566
  %v2568 = vrot.slane %v2567, 1
  %v2569 = vadd.f32 %v2567, %v2568
  %v2570 = vmul.f32 %v2562, %v22
  %v2571 = vmul.f32 %v2569, %v23
  %2574 = vst [vmem:[#allocation1] sm:$0xff] %v2570
  %2575 = vst [vmem:[#allocation1 + $0x9] sm:$0xff] %v2571
  %s2576 = scalar_lea.vmem [#allocation1], 6
  %v2577 = vld [vmem:[%s2576] ss:$9 sm:$0xff]
  %s2579 = scalar_lea.vmem %s3, 116
  %2580 = vst.msk [vmem:[%s2579] ss:$8 sm:$0x3] %vm59, %v2577
  %2581 = vst.msk [vmem:[%s2579] ss:$8 sm:$0x0] %vm59, %v2577
  %2582 = vrot.lane.b32.xlu0 %v18, 10
  %v2583 = vpop.permute.xlu0 %2582
  %2584 = vrot.lane.b32.xlu0 %v19, 10
  %v2585 = vpop.permute.xlu0 %2584
  %v2586 = vrot.slane %v2583, 4
  %v2587 = vrot.slane %v2585, 4
  %v2588 = vsel %vm33, %v2586, %v2587
  %vm2589 = vcmask 80896
  %v2590 = vsel %vm2589, %v2583, %v2588
  %v2592 = vmul.f32 %v16, %v2590
  %2594 = vst [vmem:[#allocation1] ss:$2 sm:$0xff] %v2592
  %v2595 = vld.sshfl [vmem:[#allocation1] sm:$0xff pattern:$0x75316420]
  %v2596 = vld.sshfl [vmem:[#allocation1 + $0x8] sm:$0xff pattern:$0x75316420]
  %v2599 = vsel %vm33, %v2595, 0.0
  %v2600 = vrot.slane %v2599, 4
  %v2601 = vadd.f32 %v2599, %v2600
  %v2602 = vrot.slane %v2601, 2
  %v2603 = vadd.f32 %v2601, %v2602
  %v2604 = vrot.slane %v2603, 1
  %v2605 = vadd.f32 %v2603, %v2604
  %v2606 = vsel %vm33, %v2596, 0.0
  %v2607 = vrot.slane %v2606, 4
  %v2608 = vadd.f32 %v2606, %v2607
  %v2609 = vrot.slane %v2608, 2
  %v2610 = vadd.f32 %v2608, %v2609
  %v2611 = vrot.slane %v2610, 1
  %v2612 = vadd.f32 %v2610, %v2611
  %v2613 = vmul.f32 %v2605, %v22
  %v2614 = vmul.f32 %v2612, %v23
  %2617 = vst [vmem:[#allocation1] sm:$0xff] %v2613
  %2618 = vst [vmem:[#allocation1 + $0x9] sm:$0xff] %v2614
  %s2619 = scalar_lea.vmem [#allocation1], 6
  %v2620 = vld [vmem:[%s2619] ss:$9 sm:$0xff]
  %s2622 = scalar_lea.vmem %s3, 133
  %2623 = vst.msk [vmem:[%s2622] ss:$8 sm:$0x3] %vm59, %v2620
  %2624 = vst.msk [vmem:[%s2622] ss:$8 sm:$0x0] %vm59, %v2620
  %v2625 = vsel %vm2288, %v2287, %v2284
  %v2627 = vmul.f32 %v16, %v2625
  %2629 = vst [vmem:[#allocation1] ss:$2 sm:$0xff] %v2627
  %v2630 = vld.sshfl [vmem:[#allocation1] sm:$0xff pattern:$0x75316420]
  %v2631 = vld.sshfl [vmem:[#allocation1 + $0x8] sm:$0xff pattern:$0x75316420]
  %v2634 = vsel %vm33, %v2630, 0.0
  %v2635 = vrot.slane %v2634, 4
  %v2636 = vadd.f32 %v2634, %v2635
  %v2637 = vrot.slane %v2636, 2
  %v2638 = vadd.f32 %v2636, %v2637
  %v2639 = vrot.slane %v2638, 1
  %v2640 = vadd.f32 %v2638, %v2639
  %v2641 = vsel %vm33, %v2631, 0.0
  %v2642 = vrot.slane %v2641, 4
  %v2643 = vadd.f32 %v2641, %v2642
  %v2644 = vrot.slane %v2643, 2
  %v2645 = vadd.f32 %v2643, %v2644
  %v2646 = vrot.slane %v2645, 1
  %v2647 = vadd.f32 %v2645, %v2646
  %v2648 = vmul.f32 %v2640, %v22
  %v2649 = vmul.f32 %v2647, %v23
  %2652 = vst [vmem:[#allocation1] sm:$0xff] %v2648
  %2653 = vst [vmem:[#allocation1 + $0x9] sm:$0xff] %v2649
  %s2654 = scalar_lea.vmem [#allocation1], 6
  %v2655 = vld [vmem:[%s2654] ss:$9 sm:$0xff]
  %s2657 = scalar_lea.vmem %s3, 150
  %2658 = vst.msk [vmem:[%s2657] ss:$8 sm:$0x3] %vm59, %v2655
  %2659 = vst.msk [vmem:[%s2657] ss:$8 sm:$0x0] %vm59, %v2655
  %2660 = vrot.lane.b32.xlu0 %v18, 121
  %v2661 = vpop.permute.xlu0 %2660
  %2662 = vrot.lane.b32.xlu0 %v19, 121
  %v2663 = vpop.permute.xlu0 %2662
  %v2664 = vrot.slane %v2661, 4
  %v2665 = vrot.slane %v2663, 4
  %v2666 = vsel %vm33, %v2664, %v2665
  %vm2667 = vcmask 990208
  %v2668 = vsel %vm2667, %v2661, %v2666
  %v2670 = vmul.f32 %v16, %v2668
  %2672 = vst [vmem:[#allocation1] ss:$2 sm:$0xff] %v2670
  %v2673 = vld.sshfl [vmem:[#allocation1] sm:$0xff pattern:$0x75316420]
  %v2674 = vld.sshfl [vmem:[#allocation1 + $0x8] sm:$0xff pattern:$0x75316420]
  %v2677 = vsel %vm33, %v2673, 0.0
  %v2678 = vrot.slane %v2677, 4
  %v2679 = vadd.f32 %v2677, %v2678
  %v2680 = vrot.slane %v2679, 2
  %v2681 = vadd.f32 %v2679, %v2680
  %v2682 = vrot.slane %v2681, 1
  %v2683 = vadd.f32 %v2681, %v2682
  %v2684 = vsel %vm33, %v2674, 0.0
  %v2685 = vrot.slane %v2684, 4
  %v2686 = vadd.f32 %v2684, %v2685
  %v2687 = vrot.slane %v2686, 2
  %v2688 = vadd.f32 %v2686, %v2687
  %v2689 = vrot.slane %v2688, 1
  %v2690 = vadd.f32 %v2688, %v2689
  %v2691 = vmul.f32 %v2683, %v22
  %v2692 = vmul.f32 %v2690, %v23
  %2695 = vst [vmem:[#allocation1] sm:$0xff] %v2691
  %2696 = vst [vmem:[#allocation1 + $0x9] sm:$0xff] %v2692
  %s2697 = scalar_lea.vmem [#allocation1], 7
  %v2698 = vld [vmem:[%s2697] ss:$9 sm:$0xff]
  %s2700 = scalar_lea.vmem %s3, 7
  %2701 = vst.msk [vmem:[%s2700] ss:$8 sm:$0x3] %vm59, %v2698
  %2702 = vst.msk [vmem:[%s2700] ss:$8 sm:$0x0] %vm59, %v2698
  %2703 = vrot.lane.b32.xlu0 %v18, 105
  %v2704 = vpop.permute.xlu0 %2703
  %2705 = vrot.lane.b32.xlu0 %v19, 105
  %v2706 = vpop.permute.xlu0 %2705
  %v2707 = vrot.slane %v2704, 4
  %v2708 = vrot.slane %v2706, 4
  %v2709 = vsel %vm33, %v2707, %v2708
  %vm2710 = vcmask 859136
  %v2711 = vsel %vm2710, %v2704, %v2709
  %v2713 = vmul.f32 %v16, %v2711
  %2715 = vst [vmem:[#allocation1] ss:$2 sm:$0xff] %v2713
  %v2716 = vld.sshfl [vmem:[#allocation1] sm:$0xff pattern:$0x75316420]
  %v2717 = vld.sshfl [vmem:[#allocation1 + $0x8] sm:$0xff pattern:$0x75316420]
  %v2720 = vsel %vm33, %v2716, 0.0
  %v2721 = vrot.slane %v2720, 4
  %v2722 = vadd.f32 %v2720, %v2721
  %v2723 = vrot.slane %v2722, 2
  %v2724 = vadd.f32 %v2722, %v2723
  %v2725 = vrot.slane %v2724, 1
  %v2726 = vadd.f32 %v2724, %v2725
  %v2727 = vsel %vm33, %v2717, 0.0
  %v2728 = vrot.slane %v2727, 4
  %v2729 = vadd.f32 %v2727, %v2728
  %v2730 = vrot.slane %v2729, 2
  %v2731 = vadd.f32 %v2729, %v2730
  %v2732 = vrot.slane %v2731, 1
  %v2733 = vadd.f32 %v2731, %v2732
  %v2734 = vmul.f32 %v2726, %v22
  %v2735 = vmul.f32 %v2733, %v23
  %2738 = vst [vmem:[#allocation1] sm:$0xff] %v2734
  %2739 = vst [vmem:[#allocation1 + $0x9] sm:$0xff] %v2735
  %s2740 = scalar_lea.vmem [#allocation1], 7
  %v2741 = vld [vmem:[%s2740] ss:$9 sm:$0xff]
  %s2743 = scalar_lea.vmem %s3, 32
  %2744 = vst.msk [vmem:[%s2743] ss:$8 sm:$0x3] %vm59, %v2741
  %2745 = vst.msk [vmem:[%s2743] ss:$8 sm:$0x0] %vm59, %v2741
  %2746 = vrot.lane.b32.xlu0 %v18, 89
  %v2747 = vpop.permute.xlu0 %2746
  %2748 = vrot.lane.b32.xlu0 %v19, 89
  %v2749 = vpop.permute.xlu0 %2748
  %v2750 = vrot.slane %v2747, 4
  %v2751 = vrot.slane %v2749, 4
  %v2752 = vsel %vm33, %v2750, %v2751
  %vm2753 = vcmask 728064
  %v2754 = vsel %vm2753, %v2747, %v2752
  %v2756 = vmul.f32 %v16, %v2754
  %2758 = vst [vmem:[#allocation1] ss:$2 sm:$0xff] %v2756
  %v2759 = vld.sshfl [vmem:[#allocation1] sm:$0xff pattern:$0x75316420]
  %v2760 = vld.sshfl [vmem:[#allocation1 + $0x8] sm:$0xff pattern:$0x75316420]
  %v2763 = vsel %vm33, %v2759, 0.0
  %v2764 = vrot.slane %v2763, 4
  %v2765 = vadd.f32 %v2763, %v2764
  %v2766 = vrot.slane %v2765, 2
  %v2767 = vadd.f32 %v2765, %v2766
  %v2768 = vrot.slane %v2767, 1
  %v2769 = vadd.f32 %v2767, %v2768
  %v2770 = vsel %vm33, %v2760, 0.0
  %v2771 = vrot.slane %v2770, 4
  %v2772 = vadd.f32 %v2770, %v2771
  %v2773 = vrot.slane %v2772, 2
  %v2774 = vadd.f32 %v2772, %v2773
  %v2775 = vrot.slane %v2774, 1
  %v2776 = vadd.f32 %v2774, %v2775
  %v2777 = vmul.f32 %v2769, %v22
  %v2778 = vmul.f32 %v2776, %v23
  %2781 = vst [vmem:[#allocation1] sm:$0xff] %v2777
  %2782 = vst [vmem:[#allocation1 + $0x9] sm:$0xff] %v2778
  %s2783 = scalar_lea.vmem [#allocation1], 7
  %v2784 = vld [vmem:[%s2783] ss:$9 sm:$0xff]
  %s2786 = scalar_lea.vmem %s3, 49
  %2787 = vst.msk [vmem:[%s2786] ss:$8 sm:$0x3] %vm59, %v2784
  %2788 = vst.msk [vmem:[%s2786] ss:$8 sm:$0x0] %vm59, %v2784
  %2789 = vrot.lane.b32.xlu0 %v18, 73
  %v2790 = vpop.permute.xlu0 %2789
  %2791 = vrot.lane.b32.xlu0 %v19, 73
  %v2792 = vpop.permute.xlu0 %2791
  %v2793 = vrot.slane %v2790, 4
  %v2794 = vrot.slane %v2792, 4
  %v2795 = vsel %vm33, %v2793, %v2794
  %vm2796 = vcmask 596992
  %v2797 = vsel %vm2796, %v2790, %v2795
  %v2799 = vmul.f32 %v16, %v2797
  %2801 = vst [vmem:[#allocation1] ss:$2 sm:$0xff] %v2799
  %v2802 = vld.sshfl [vmem:[#allocation1] sm:$0xff pattern:$0x75316420]
  %v2803 = vld.sshfl [vmem:[#allocation1 + $0x8] sm:$0xff pattern:$0x75316420]
  %v2806 = vsel %vm33, %v2802, 0.0
  %v2807 = vrot.slane %v2806, 4
  %v2808 = vadd.f32 %v2806, %v2807
  %v2809 = vrot.slane %v2808, 2
  %v2810 = vadd.f32 %v2808, %v2809
  %v2811 = vrot.slane %v2810, 1
  %v2812 = vadd.f32 %v2810, %v2811
  %v2813 = vsel %vm33, %v2803, 0.0
  %v2814 = vrot.slane %v2813, 4
  %v2815 = vadd.f32 %v2813, %v2814
  %v2816 = vrot.slane %v2815, 2
  %v2817 = vadd.f32 %v2815, %v2816
  %v2818 = vrot.slane %v2817, 1
  %v2819 = vadd.f32 %v2817, %v2818
  %v2820 = vmul.f32 %v2812, %v22
  %v2821 = vmul.f32 %v2819, %v23
  %2824 = vst [vmem:[#allocation1] sm:$0xff] %v2820
  %2825 = vst [vmem:[#allocation1 + $0x9] sm:$0xff] %v2821
  %s2826 = scalar_lea.vmem [#allocation1], 7
  %v2827 = vld [vmem:[%s2826] ss:$9 sm:$0xff]
  %s2829 = scalar_lea.vmem %s3, 66
  %2830 = vst.msk [vmem:[%s2829] ss:$8 sm:$0x3] %vm59, %v2827
  %2831 = vst.msk [vmem:[%s2829] ss:$8 sm:$0x0] %vm59, %v2827
  %2832 = vrot.lane.b32.xlu0 %v18, 57
  %v2833 = vpop.permute.xlu0 %2832
  %2834 = vrot.lane.b32.xlu0 %v19, 57
  %v2835 = vpop.permute.xlu0 %2834
  %v2836 = vrot.slane %v2833, 4
  %v2837 = vrot.slane %v2835, 4
  %v2838 = vsel %vm33, %v2836, %v2837
  %vm2839 = vcmask 465920
  %v2840 = vsel %vm2839, %v2833, %v2838
  %v2842 = vmul.f32 %v16, %v2840
  %2844 = vst [vmem:[#allocation1] ss:$2 sm:$0xff] %v2842
  %v2845 = vld.sshfl [vmem:[#allocation1] sm:$0xff pattern:$0x75316420]
  %v2846 = vld.sshfl [vmem:[#allocation1 + $0x8] sm:$0xff pattern:$0x75316420]
  %v2849 = vsel %vm33, %v2845, 0.0
  %v2850 = vrot.slane %v2849, 4
  %v2851 = vadd.f32 %v2849, %v2850
  %v2852 = vrot.slane %v2851, 2
  %v2853 = vadd.f32 %v2851, %v2852
  %v2854 = vrot.slane %v2853, 1
  %v2855 = vadd.f32 %v2853, %v2854
  %v2856 = vsel %vm33, %v2846, 0.0
  %v2857 = vrot.slane %v2856, 4
  %v2858 = vadd.f32 %v2856, %v2857
  %v2859 = vrot.slane %v2858, 2
  %v2860 = vadd.f32 %v2858, %v2859
  %v2861 = vrot.slane %v2860, 1
  %v2862 = vadd.f32 %v2860, %v2861
  %v2863 = vmul.f32 %v2855, %v22
  %v2864 = vmul.f32 %v2862, %v23
  %2867 = vst [vmem:[#allocation1] sm:$0xff] %v2863
  %2868 = vst [vmem:[#allocation1 + $0x9] sm:$0xff] %v2864
  %s2869 = scalar_lea.vmem [#allocation1], 7
  %v2870 = vld [vmem:[%s2869] ss:$9 sm:$0xff]
  %s2872 = scalar_lea.vmem %s3, 83
  %2873 = vst.msk [vmem:[%s2872] ss:$8 sm:$0x3] %vm59, %v2870
  %2874 = vst.msk [vmem:[%s2872] ss:$8 sm:$0x0] %vm59, %v2870
  %2875 = vrot.lane.b32.xlu0 %v18, 41
  %v2876 = vpop.permute.xlu0 %2875
  %2877 = vrot.lane.b32.xlu0 %v19, 41
  %v2878 = vpop.permute.xlu0 %2877
  %v2879 = vrot.slane %v2876, 4
  %v2880 = vrot.slane %v2878, 4
  %v2881 = vsel %vm33, %v2879, %v2880
  %vm2882 = vcmask 334848
  %v2883 = vsel %vm2882, %v2876, %v2881
  %v2885 = vmul.f32 %v16, %v2883
  %2887 = vst [vmem:[#allocation1] ss:$2 sm:$0xff] %v2885
  %v2888 = vld.sshfl [vmem:[#allocation1] sm:$0xff pattern:$0x75316420]
  %v2889 = vld.sshfl [vmem:[#allocation1 + $0x8] sm:$0xff pattern:$0x75316420]
  %v2892 = vsel %vm33, %v2888, 0.0
  %v2893 = vrot.slane %v2892, 4
  %v2894 = vadd.f32 %v2892, %v2893
  %v2895 = vrot.slane %v2894, 2
  %v2896 = vadd.f32 %v2894, %v2895
  %v2897 = vrot.slane %v2896, 1
  %v2898 = vadd.f32 %v2896, %v2897
  %v2899 = vsel %vm33, %v2889, 0.0
  %v2900 = vrot.slane %v2899, 4
  %v2901 = vadd.f32 %v2899, %v2900
  %v2902 = vrot.slane %v2901, 2
  %v2903 = vadd.f32 %v2901, %v2902
  %v2904 = vrot.slane %v2903, 1
  %v2905 = vadd.f32 %v2903, %v2904
  %v2906 = vmul.f32 %v2898, %v22
  %v2907 = vmul.f32 %v2905, %v23
  %2910 = vst [vmem:[#allocation1] sm:$0xff] %v2906
  %2911 = vst [vmem:[#allocation1 + $0x9] sm:$0xff] %v2907
  %s2912 = scalar_lea.vmem [#allocation1], 7
  %v2913 = vld [vmem:[%s2912] ss:$9 sm:$0xff]
  %s2915 = scalar_lea.vmem %s3, 100
  %2916 = vst.msk [vmem:[%s2915] ss:$8 sm:$0x3] %vm59, %v2913
  %2917 = vst.msk [vmem:[%s2915] ss:$8 sm:$0x0] %vm59, %v2913
  %2918 = vrot.lane.b32.xlu0 %v18, 25
  %v2919 = vpop.permute.xlu0 %2918
  %2920 = vrot.lane.b32.xlu0 %v19, 25
  %v2921 = vpop.permute.xlu0 %2920
  %v2922 = vrot.slane %v2919, 4
  %v2923 = vrot.slane %v2921, 4
  %v2924 = vsel %vm33, %v2922, %v2923
  %vm2925 = vcmask 203776
  %v2926 = vsel %vm2925, %v2919, %v2924
  %v2928 = vmul.f32 %v16, %v2926
  %2930 = vst [vmem:[#allocation1] ss:$2 sm:$0xff] %v2928
  %v2931 = vld.sshfl [vmem:[#allocation1] sm:$0xff pattern:$0x75316420]
  %v2932 = vld.sshfl [vmem:[#allocation1 + $0x8] sm:$0xff pattern:$0x75316420]
  %v2935 = vsel %vm33, %v2931, 0.0
  %v2936 = vrot.slane %v2935, 4
  %v2937 = vadd.f32 %v2935, %v2936
  %v2938 = vrot.slane %v2937, 2
  %v2939 = vadd.f32 %v2937, %v2938
  %v2940 = vrot.slane %v2939, 1
  %v2941 = vadd.f32 %v2939, %v2940
  %v2942 = vsel %vm33, %v2932, 0.0
  %v2943 = vrot.slane %v2942, 4
  %v2944 = vadd.f32 %v2942, %v2943
  %v2945 = vrot.slane %v2944, 2
  %v2946 = vadd.f32 %v2944, %v2945
  %v2947 = vrot.slane %v2946, 1
  %v2948 = vadd.f32 %v2946, %v2947
  %v2949 = vmul.f32 %v2941, %v22
  %v2950 = vmul.f32 %v2948, %v23
  %2953 = vst [vmem:[#allocation1] sm:$0xff] %v2949
  %2954 = vst [vmem:[#allocation1 + $0x9] sm:$0xff] %v2950
  %s2955 = scalar_lea.vmem [#allocation1], 7
  %v2956 = vld [vmem:[%s2955] ss:$9 sm:$0xff]
  %s2958 = scalar_lea.vmem %s3, 117
  %2959 = vst.msk [vmem:[%s2958] ss:$8 sm:$0x3] %vm59, %v2956
  %2960 = vst.msk [vmem:[%s2958] ss:$8 sm:$0x0] %vm59, %v2956
  %2961 = vrot.lane.b32.xlu0 %v18, 9
  %v2962 = vpop.permute.xlu0 %2961
  %2963 = vrot.lane.b32.xlu0 %v19, 9
  %v2964 = vpop.permute.xlu0 %2963
  %v2965 = vrot.slane %v2962, 4
  %v2966 = vrot.slane %v2964, 4
  %v2967 = vsel %vm33, %v2965, %v2966
  %vm2968 = vcmask 72704
  %v2969 = vsel %vm2968, %v2962, %v2967
  %v2971 = vmul.f32 %v16, %v2969
  %2973 = vst [vmem:[#allocation1] ss:$2 sm:$0xff] %v2971
  %v2974 = vld.sshfl [vmem:[#allocation1] sm:$0xff pattern:$0x75316420]
  %v2975 = vld.sshfl [vmem:[#allocation1 + $0x8] sm:$0xff pattern:$0x75316420]
  %v2978 = vsel %vm33, %v2974, 0.0
  %v2979 = vrot.slane %v2978, 4
  %v2980 = vadd.f32 %v2978, %v2979
  %v2981 = vrot.slane %v2980, 2
  %v2982 = vadd.f32 %v2980, %v2981
  %v2983 = vrot.slane %v2982, 1
  %v2984 = vadd.f32 %v2982, %v2983
  %v2985 = vsel %vm33, %v2975, 0.0
  %v2986 = vrot.slane %v2985, 4
  %v2987 = vadd.f32 %v2985, %v2986
  %v2988 = vrot.slane %v2987, 2
  %v2989 = vadd.f32 %v2987, %v2988
  %v2990 = vrot.slane %v2989, 1
  %v2991 = vadd.f32 %v2989, %v2990
  %v2992 = vmul.f32 %v2984, %v22
  %v2993 = vmul.f32 %v2991, %v23
  %2996 = vst [vmem:[#allocation1] sm:$0xff] %v2992
  %2997 = vst [vmem:[#allocation1 + $0x9] sm:$0xff] %v2993
  %s2998 = scalar_lea.vmem [#allocation1], 7
  %v2999 = vld [vmem:[%s2998] ss:$9 sm:$0xff]
  %s3001 = scalar_lea.vmem %s3, 134
  %3002 = vst.msk [vmem:[%s3001] ss:$8 sm:$0x3] %vm59, %v2999
  %3003 = vst.msk [vmem:[%s3001] ss:$8 sm:$0x0] %vm59, %v2999
  %v3004 = vsel %vm2667, %v2666, %v2663
  %v3006 = vmul.f32 %v16, %v3004
  %3008 = vst [vmem:[#allocation1] ss:$2 sm:$0xff] %v3006
  %v3009 = vld.sshfl [vmem:[#allocation1] sm:$0xff pattern:$0x75316420]
  %v3010 = vld.sshfl [vmem:[#allocation1 + $0x8] sm:$0xff pattern:$0x75316420]
  %v3013 = vsel %vm33, %v3009, 0.0
  %v3014 = vrot.slane %v3013, 4
  %v3015 = vadd.f32 %v3013, %v3014
  %v3016 = vrot.slane %v3015, 2
  %v3017 = vadd.f32 %v3015, %v3016
  %v3018 = vrot.slane %v3017, 1
  %v3019 = vadd.f32 %v3017, %v3018
  %v3020 = vsel %vm33, %v3010, 0.0
  %v3021 = vrot.slane %v3020, 4
  %v3022 = vadd.f32 %v3020, %v3021
  %v3023 = vrot.slane %v3022, 2
  %v3024 = vadd.f32 %v3022, %v3023
  %v3025 = vrot.slane %v3024, 1
  %v3026 = vadd.f32 %v3024, %v3025
  %v3027 = vmul.f32 %v3019, %v22
  %v3028 = vmul.f32 %v3026, %v23
  %3031 = vst [vmem:[#allocation1] sm:$0xff] %v3027
  %3032 = vst [vmem:[#allocation1 + $0x9] sm:$0xff] %v3028
  %s3033 = scalar_lea.vmem [#allocation1], 7
  %v3034 = vld [vmem:[%s3033] ss:$9 sm:$0xff]
  %s3036 = scalar_lea.vmem %s3, 151
  %3037 = vst.msk [vmem:[%s3036] ss:$8 sm:$0x3] %vm59, %v3034
  %3038 = vst.msk [vmem:[%s3036] ss:$8 sm:$0x0] %vm59, %v3034
  %3039 = vrot.lane.b32.xlu0 %v18, 120
  %v3040 = vpop.permute.xlu0 %3039
  %3041 = vrot.lane.b32.xlu0 %v19, 120
  %v3042 = vpop.permute.xlu0 %3041
  %v3043 = vrot.slane %v3040, 4
  %v3044 = vrot.slane %v3042, 4
  %v3045 = vsel %vm33, %v3043, %v3044
  %vm3046 = vcmask 982016
  %v3047 = vsel %vm3046, %v3040, %v3045
  %v3049 = vmul.f32 %v16, %v3047
  %3051 = vst [vmem:[#allocation1] ss:$2 sm:$0xff] %v3049
  %v3052 = vld.sshfl [vmem:[#allocation1] sm:$0xff pattern:$0x75316420]
  %v3053 = vld.sshfl [vmem:[#allocation1 + $0x8] sm:$0xff pattern:$0x75316420]
  %v3056 = vsel %vm33, %v3052, 0.0
  %v3057 = vrot.slane %v3056, 4
  %v3058 = vadd.f32 %v3056, %v3057
  %v3059 = vrot.slane %v3058, 2
  %v3060 = vadd.f32 %v3058, %v3059
  %v3061 = vrot.slane %v3060, 1
  %v3062 = vadd.f32 %v3060, %v3061
  %v3063 = vsel %vm33, %v3053, 0.0
  %v3064 = vrot.slane %v3063, 4
  %v3065 = vadd.f32 %v3063, %v3064
  %v3066 = vrot.slane %v3065, 2
  %v3067 = vadd.f32 %v3065, %v3066
  %v3068 = vrot.slane %v3067, 1
  %v3069 = vadd.f32 %v3067, %v3068
  %v3070 = vmul.f32 %v3062, %v24
  %v3071 = vmul.f32 %v3069, %v25
  %v3074 = vrot.slane %v3071, 7
  %v3075 = vsel %vm53, %v3070, %v3074
  %s3077 = scalar_lea.vmem %s3, 16
  %3078 = vst.msk [vmem:[%s3077] ss:$8 sm:$0x3] %vm59, %v3075
  %3079 = vst.msk [vmem:[%s3077] ss:$8 sm:$0x0] %vm59, %v3075
  %3080 = vrot.lane.b32.xlu0 %v18, 104
  %v3081 = vpop.permute.xlu0 %3080
  %3082 = vrot.lane.b32.xlu0 %v19, 104
  %v3083 = vpop.permute.xlu0 %3082
  %v3084 = vrot.slane %v3081, 4
  %v3085 = vrot.slane %v3083, 4
  %v3086 = vsel %vm33, %v3084, %v3085
  %vm3087 = vcmask 850944
  %v3088 = vsel %vm3087, %v3081, %v3086
  %v3090 = vmul.f32 %v16, %v3088
  %3092 = vst [vmem:[#allocation1] ss:$2 sm:$0xff] %v3090
  %v3093 = vld.sshfl [vmem:[#allocation1] sm:$0xff pattern:$0x75316420]
  %v3094 = vld.sshfl [vmem:[#allocation1 + $0x8] sm:$0xff pattern:$0x75316420]
  %v3097 = vsel %vm33, %v3093, 0.0
  %v3098 = vrot.slane %v3097, 4
  %v3099 = vadd.f32 %v3097, %v3098
  %v3100 = vrot.slane %v3099, 2
  %v3101 = vadd.f32 %v3099, %v3100
  %v3102 = vrot.slane %v3101, 1
  %v3103 = vadd.f32 %v3101, %v3102
  %v3104 = vsel %vm33, %v3094, 0.0
  %v3105 = vrot.slane %v3104, 4
  %v3106 = vadd.f32 %v3104, %v3105
  %v3107 = vrot.slane %v3106, 2
  %v3108 = vadd.f32 %v3106, %v3107
  %v3109 = vrot.slane %v3108, 1
  %v3110 = vadd.f32 %v3108, %v3109
  %v3111 = vmul.f32 %v3103, %v24
  %v3112 = vmul.f32 %v3110, %v25
  %v3115 = vrot.slane %v3112, 7
  %v3116 = vsel %vm53, %v3111, %v3115
  %s3118 = scalar_lea.vmem %s3, 33
  %3119 = vst.msk [vmem:[%s3118] ss:$8 sm:$0x3] %vm59, %v3116
  %3120 = vst.msk [vmem:[%s3118] ss:$8 sm:$0x0] %vm59, %v3116
  %3121 = vrot.lane.b32.xlu0 %v18, 88
  %v3122 = vpop.permute.xlu0 %3121
  %3123 = vrot.lane.b32.xlu0 %v19, 88
  %v3124 = vpop.permute.xlu0 %3123
  %v3125 = vrot.slane %v3122, 4
  %v3126 = vrot.slane %v3124, 4
  %v3127 = vsel %vm33, %v3125, %v3126
  %vm3128 = vcmask 719872
  %v3129 = vsel %vm3128, %v3122, %v3127
  %v3131 = vmul.f32 %v16, %v3129
  %3133 = vst [vmem:[#allocation1] ss:$2 sm:$0xff] %v3131
  %v3134 = vld.sshfl [vmem:[#allocation1] sm:$0xff pattern:$0x75316420]
  %v3135 = vld.sshfl [vmem:[#allocation1 + $0x8] sm:$0xff pattern:$0x75316420]
  %v3138 = vsel %vm33, %v3134, 0.0
  %v3139 = vrot.slane %v3138, 4
  %v3140 = vadd.f32 %v3138, %v3139
  %v3141 = vrot.slane %v3140, 2
  %v3142 = vadd.f32 %v3140, %v3141
  %v3143 = vrot.slane %v3142, 1
  %v3144 = vadd.f32 %v3142, %v3143
  %v3145 = vsel %vm33, %v3135, 0.0
  %v3146 = vrot.slane %v3145, 4
  %v3147 = vadd.f32 %v3145, %v3146
  %v3148 = vrot.slane %v3147, 2
  %v3149 = vadd.f32 %v3147, %v3148
  %v3150 = vrot.slane %v3149, 1
  %v3151 = vadd.f32 %v3149, %v3150
  %v3152 = vmul.f32 %v3144, %v24
  %v3153 = vmul.f32 %v3151, %v25
  %v3156 = vrot.slane %v3153, 7
  %v3157 = vsel %vm53, %v3152, %v3156
  %s3159 = scalar_lea.vmem %s3, 50
  %3160 = vst.msk [vmem:[%s3159] ss:$8 sm:$0x3] %vm59, %v3157
  %3161 = vst.msk [vmem:[%s3159] ss:$8 sm:$0x0] %vm59, %v3157
  %3162 = vrot.lane.b32.xlu0 %v18, 72
  %v3163 = vpop.permute.xlu0 %3162
  %3164 = vrot.lane.b32.xlu0 %v19, 72
  %v3165 = vpop.permute.xlu0 %3164
  %v3166 = vrot.slane %v3163, 4
  %v3167 = vrot.slane %v3165, 4
  %v3168 = vsel %vm33, %v3166, %v3167
  %vm3169 = vcmask 588800
  %v3170 = vsel %vm3169, %v3163, %v3168
  %v3172 = vmul.f32 %v16, %v3170
  %3174 = vst [vmem:[#allocation1] ss:$2 sm:$0xff] %v3172
  %v3175 = vld.sshfl [vmem:[#allocation1] sm:$0xff pattern:$0x75316420]
  %v3176 = vld.sshfl [vmem:[#allocation1 + $0x8] sm:$0xff pattern:$0x75316420]
  %v3179 = vsel %vm33, %v3175, 0.0
  %v3180 = vrot.slane %v3179, 4
  %v3181 = vadd.f32 %v3179, %v3180
  %v3182 = vrot.slane %v3181, 2
  %v3183 = vadd.f32 %v3181, %v3182
  %v3184 = vrot.slane %v3183, 1
  %v3185 = vadd.f32 %v3183, %v3184
  %v3186 = vsel %vm33, %v3176, 0.0
  %v3187 = vrot.slane %v3186, 4
  %v3188 = vadd.f32 %v3186, %v3187
  %v3189 = vrot.slane %v3188, 2
  %v3190 = vadd.f32 %v3188, %v3189
  %v3191 = vrot.slane %v3190, 1
  %v3192 = vadd.f32 %v3190, %v3191
  %v3193 = vmul.f32 %v3185, %v24
  %v3194 = vmul.f32 %v3192, %v25
  %v3197 = vrot.slane %v3194, 7
  %v3198 = vsel %vm53, %v3193, %v3197
  %s3200 = scalar_lea.vmem %s3, 67
  %3201 = vst.msk [vmem:[%s3200] ss:$8 sm:$0x3] %vm59, %v3198
  %3202 = vst.msk [vmem:[%s3200] ss:$8 sm:$0x0] %vm59, %v3198
  %3203 = vrot.lane.b32.xlu0 %v18, 56
  %v3204 = vpop.permute.xlu0 %3203
  %3205 = vrot.lane.b32.xlu0 %v19, 56
  %v3206 = vpop.permute.xlu0 %3205
  %v3207 = vrot.slane %v3204, 4
  %v3208 = vrot.slane %v3206, 4
  %v3209 = vsel %vm33, %v3207, %v3208
  %vm3210 = vcmask 457728
  %v3211 = vsel %vm3210, %v3204, %v3209
  %v3213 = vmul.f32 %v16, %v3211
  %3215 = vst [vmem:[#allocation1] ss:$2 sm:$0xff] %v3213
  %v3216 = vld.sshfl [vmem:[#allocation1] sm:$0xff pattern:$0x75316420]
  %v3217 = vld.sshfl [vmem:[#allocation1 + $0x8] sm:$0xff pattern:$0x75316420]
  %v3220 = vsel %vm33, %v3216, 0.0
  %v3221 = vrot.slane %v3220, 4
  %v3222 = vadd.f32 %v3220, %v3221
  %v3223 = vrot.slane %v3222, 2
  %v3224 = vadd.f32 %v3222, %v3223
  %v3225 = vrot.slane %v3224, 1
  %v3226 = vadd.f32 %v3224, %v3225
  %v3227 = vsel %vm33, %v3217, 0.0
  %v3228 = vrot.slane %v3227, 4
  %v3229 = vadd.f32 %v3227, %v3228
  %v3230 = vrot.slane %v3229, 2
  %v3231 = vadd.f32 %v3229, %v3230
  %v3232 = vrot.slane %v3231, 1
  %v3233 = vadd.f32 %v3231, %v3232
  %v3234 = vmul.f32 %v3226, %v24
  %v3235 = vmul.f32 %v3233, %v25
  %v3238 = vrot.slane %v3235, 7
  %v3239 = vsel %vm53, %v3234, %v3238
  %s3241 = scalar_lea.vmem %s3, 84
  %3242 = vst.msk [vmem:[%s3241] ss:$8 sm:$0x3] %vm59, %v3239
  %3243 = vst.msk [vmem:[%s3241] ss:$8 sm:$0x0] %vm59, %v3239
  %3244 = vrot.lane.b32.xlu0 %v18, 40
  %v3245 = vpop.permute.xlu0 %3244
  %3246 = vrot.lane.b32.xlu0 %v19, 40
  %v3247 = vpop.permute.xlu0 %3246
  %v3248 = vrot.slane %v3245, 4
  %v3249 = vrot.slane %v3247, 4
  %v3250 = vsel %vm33, %v3248, %v3249
  %vm3251 = vcmask 326656
  %v3252 = vsel %vm3251, %v3245, %v3250
  %v3254 = vmul.f32 %v16, %v3252
  %3256 = vst [vmem:[#allocation1] ss:$2 sm:$0xff] %v3254
  %v3257 = vld.sshfl [vmem:[#allocation1] sm:$0xff pattern:$0x75316420]
  %v3258 = vld.sshfl [vmem:[#allocation1 + $0x8] sm:$0xff pattern:$0x75316420]
  %v3261 = vsel %vm33, %v3257, 0.0
  %v3262 = vrot.slane %v3261, 4
  %v3263 = vadd.f32 %v3261, %v3262
  %v3264 = vrot.slane %v3263, 2
  %v3265 = vadd.f32 %v3263, %v3264
  %v3266 = vrot.slane %v3265, 1
  %v3267 = vadd.f32 %v3265, %v3266
  %v3268 = vsel %vm33, %v3258, 0.0
  %v3269 = vrot.slane %v3268, 4
  %v3270 = vadd.f32 %v3268, %v3269
  %v3271 = vrot.slane %v3270, 2
  %v3272 = vadd.f32 %v3270, %v3271
  %v3273 = vrot.slane %v3272, 1
  %v3274 = vadd.f32 %v3272, %v3273
  %v3275 = vmul.f32 %v3267, %v24
  %v3276 = vmul.f32 %v3274, %v25
  %v3279 = vrot.slane %v3276, 7
  %v3280 = vsel %vm53, %v3275, %v3279
  %s3282 = scalar_lea.vmem %s3, 101
  %3283 = vst.msk [vmem:[%s3282] ss:$8 sm:$0x3] %vm59, %v3280
  %3284 = vst.msk [vmem:[%s3282] ss:$8 sm:$0x0] %vm59, %v3280
  %3285 = vrot.lane.b32.xlu0 %v18, 24
  %v3286 = vpop.permute.xlu0 %3285
  %3287 = vrot.lane.b32.xlu0 %v19, 24
  %v3288 = vpop.permute.xlu0 %3287
  %v3289 = vrot.slane %v3286, 4
  %v3290 = vrot.slane %v3288, 4
  %v3291 = vsel %vm33, %v3289, %v3290
  %vm3292 = vcmask 195584
  %v3293 = vsel %vm3292, %v3286, %v3291
  %v3295 = vmul.f32 %v16, %v3293
  %3297 = vst [vmem:[#allocation1] ss:$2 sm:$0xff] %v3295
  %v3298 = vld.sshfl [vmem:[#allocation1] sm:$0xff pattern:$0x75316420]
  %v3299 = vld.sshfl [vmem:[#allocation1 + $0x8] sm:$0xff pattern:$0x75316420]
  %v3302 = vsel %vm33, %v3298, 0.0
  %v3303 = vrot.slane %v3302, 4
  %v3304 = vadd.f32 %v3302, %v3303
  %v3305 = vrot.slane %v3304, 2
  %v3306 = vadd.f32 %v3304, %v3305
  %v3307 = vrot.slane %v3306, 1
  %v3308 = vadd.f32 %v3306, %v3307
  %v3309 = vsel %vm33, %v3299, 0.0
  %v3310 = vrot.slane %v3309, 4
  %v3311 = vadd.f32 %v3309, %v3310
  %v3312 = vrot.slane %v3311, 2
  %v3313 = vadd.f32 %v3311, %v3312
  %v3314 = vrot.slane %v3313, 1
  %v3315 = vadd.f32 %v3313, %v3314
  %v3316 = vmul.f32 %v3308, %v24
  %v3317 = vmul.f32 %v3315, %v25
  %v3320 = vrot.slane %v3317, 7
  %v3321 = vsel %vm53, %v3316, %v3320
  %s3323 = scalar_lea.vmem %s3, 118
  %3324 = vst.msk [vmem:[%s3323] ss:$8 sm:$0x3] %vm59, %v3321
  %3325 = vst.msk [vmem:[%s3323] ss:$8 sm:$0x0] %vm59, %v3321
  %3326 = vrot.lane.b32.xlu0 %v18, 8
  %v3327 = vpop.permute.xlu0 %3326
  %3328 = vrot.lane.b32.xlu0 %v19, 8
  %v3329 = vpop.permute.xlu0 %3328
  %v3330 = vrot.slane %v3327, 4
  %v3331 = vrot.slane %v3329, 4
  %v3332 = vsel %vm33, %v3330, %v3331
  %vm3333 = vcmask 64512
  %v3334 = vsel %vm3333, %v3327, %v3332
  %v3336 = vmul.f32 %v16, %v3334
  %3338 = vst [vmem:[#allocation1] ss:$2 sm:$0xff] %v3336
  %v3339 = vld.sshfl [vmem:[#allocation1] sm:$0xff pattern:$0x75316420]
  %v3340 = vld.sshfl [vmem:[#allocation1 + $0x8] sm:$0xff pattern:$0x75316420]
  %v3343 = vsel %vm33, %v3339, 0.0
  %v3344 = vrot.slane %v3343, 4
  %v3345 = vadd.f32 %v3343, %v3344
  %v3346 = vrot.slane %v3345, 2
  %v3347 = vadd.f32 %v3345, %v3346
  %v3348 = vrot.slane %v3347, 1
  %v3349 = vadd.f32 %v3347, %v3348
  %v3350 = vsel %vm33, %v3340, 0.0
  %v3351 = vrot.slane %v3350, 4
  %v3352 = vadd.f32 %v3350, %v3351
  %v3353 = vrot.slane %v3352, 2
  %v3354 = vadd.f32 %v3352, %v3353
  %v3355 = vrot.slane %v3354, 1
  %v3356 = vadd.f32 %v3354, %v3355
  %v3357 = vmul.f32 %v3349, %v24
  %v3358 = vmul.f32 %v3356, %v25
  %v3361 = vrot.slane %v3358, 7
  %v3362 = vsel %vm53, %v3357, %v3361
  %s3364 = scalar_lea.vmem %s3, 135
  %3365 = vst.msk [vmem:[%s3364] ss:$8 sm:$0x3] %vm59, %v3362
  %3366 = vst.msk [vmem:[%s3364] ss:$8 sm:$0x0] %vm59, %v3362
  %v3367 = vsel %vm3046, %v3045, %v3042
  %v3369 = vmul.f32 %v16, %v3367
  %3371 = vst [vmem:[#allocation1] ss:$2 sm:$0xff] %v3369
  %v3372 = vld.sshfl [vmem:[#allocation1] sm:$0xff pattern:$0x75316420]
  %v3373 = vld.sshfl [vmem:[#allocation1 + $0x8] sm:$0xff pattern:$0x75316420]
  %v3376 = vsel %vm33, %v3372, 0.0
  %v3377 = vrot.slane %v3376, 4
  %v3378 = vadd.f32 %v3376, %v3377
  %v3379 = vrot.slane %v3378, 2
  %v3380 = vadd.f32 %v3378, %v3379
  %v3381 = vrot.slane %v3380, 1
  %v3382 = vadd.f32 %v3380, %v3381
  %v3383 = vsel %vm33, %v3373, 0.0
  %v3384 = vrot.slane %v3383, 4
  %v3385 = vadd.f32 %v3383, %v3384
  %v3386 = vrot.slane %v3385, 2
  %v3387 = vadd.f32 %v3385, %v3386
  %v3388 = vrot.slane %v3387, 1
  %v3389 = vadd.f32 %v3387, %v3388
  %v3390 = vmul.f32 %v3382, %v24
  %v3391 = vmul.f32 %v3389, %v25
  %v3394 = vrot.slane %v3391, 7
  %v3395 = vsel %vm53, %v3390, %v3394
  %s3397 = scalar_lea.vmem %s3, 160
  %3398 = vst.msk [vmem:[%s3397] ss:$8 sm:$0x3] %vm59, %v3395
  %3399 = vst.msk [vmem:[%s3397] ss:$8 sm:$0x0] %vm59, %v3395
  %v3400 = vmul.f32 %v17, %v20
  %3402 = vst [vmem:[#allocation1] ss:$2 sm:$0xff] %v3400
  %v3403 = vld.sshfl [vmem:[#allocation1] sm:$0xff pattern:$0x75316420]
  %v3404 = vld.sshfl [vmem:[#allocation1 + $0x8] sm:$0xff pattern:$0x75316420]
  %v3407 = vsel %vm33, %v3403, 0.0
  %v3408 = vrot.slane %v3407, 4
  %v3409 = vadd.f32 %v3407, %v3408
  %v3410 = vrot.slane %v3409, 2
  %v3411 = vadd.f32 %v3409, %v3410
  %v3412 = vrot.slane %v3411, 1
  %v3413 = vadd.f32 %v3411, %v3412
  %v3414 = vsel %vm33, %v3404, 0.0
  %v3415 = vrot.slane %v3414, 4
  %v3416 = vadd.f32 %v3414, %v3415
  %v3417 = vrot.slane %v3416, 2
  %v3418 = vadd.f32 %v3416, %v3417
  %v3419 = vrot.slane %v3418, 1
  %v3420 = vadd.f32 %v3418, %v3419
  %v3421 = vmul.f32 %v3413, %v22
  %v3422 = vmul.f32 %v3420, %v23
  %v3425 = vrot.slane %v3422, 7
  %v3426 = vsel %vm53, %v3421, %v3425
  %s3428 = scalar_lea.vmem %s3, 176
  %3429 = vst.msk [vmem:[%s3428] ss:$8 sm:$0x3] %vm59, %v3426
  %3430 = vst.msk [vmem:[%s3428] ss:$8 sm:$0x0] %vm59, %v3426
  %3433 = vrot.lane.b32.xlu0 %v20, 112
  %v3434 = vpop.permute.xlu0 %3433
  %3435 = vrot.lane.b32.xlu0 %v21, 112
  %v3436 = vpop.permute.xlu0 %3435
  %v3437 = vrot.slane %v3434, 4
  %v3438 = vrot.slane %v3436, 4
  %v3439 = vsel %vm33, %v3437, %v3438
  %v3440 = vsel %vm71, %v3434, %v3439
  %v3442 = vmul.f32 %v17, %v3440
  %3444 = vst [vmem:[#allocation1] ss:$2 sm:$0xff] %v3442
  %v3445 = vld.sshfl [vmem:[#allocation1] sm:$0xff pattern:$0x75316420]
  %v3446 = vld.sshfl [vmem:[#allocation1 + $0x8] sm:$0xff pattern:$0x75316420]
  %v3449 = vsel %vm33, %v3445, 0.0
  %v3450 = vrot.slane %v3449, 4
  %v3451 = vadd.f32 %v3449, %v3450
  %v3452 = vrot.slane %v3451, 2
  %v3453 = vadd.f32 %v3451, %v3452
  %v3454 = vrot.slane %v3453, 1
  %v3455 = vadd.f32 %v3453, %v3454
  %v3456 = vsel %vm33, %v3446, 0.0
  %v3457 = vrot.slane %v3456, 4
  %v3458 = vadd.f32 %v3456, %v3457
  %v3459 = vrot.slane %v3458, 2
  %v3460 = vadd.f32 %v3458, %v3459
  %v3461 = vrot.slane %v3460, 1
  %v3462 = vadd.f32 %v3460, %v3461
  %v3463 = vmul.f32 %v3455, %v22
  %v3464 = vmul.f32 %v3462, %v23
  %v3467 = vrot.slane %v3464, 7
  %v3468 = vsel %vm53, %v3463, %v3467
  %s3470 = scalar_lea.vmem %s3428, 17
  %3471 = vst.msk [vmem:[%s3470] ss:$8 sm:$0x3] %vm59, %v3468
  %3472 = vst.msk [vmem:[%s3470] ss:$8 sm:$0x0] %vm59, %v3468
  %3473 = vrot.lane.b32.xlu0 %v20, 96
  %v3474 = vpop.permute.xlu0 %3473
  %3475 = vrot.lane.b32.xlu0 %v21, 96
  %v3476 = vpop.permute.xlu0 %3475
  %v3477 = vrot.slane %v3474, 4
  %v3478 = vrot.slane %v3476, 4
  %v3479 = vsel %vm33, %v3477, %v3478
  %v3480 = vsel %vm112, %v3474, %v3479
  %v3482 = vmul.f32 %v17, %v3480
  %3484 = vst [vmem:[#allocation1] ss:$2 sm:$0xff] %v3482
  %v3485 = vld.sshfl [vmem:[#allocation1] sm:$0xff pattern:$0x75316420]
  %v3486 = vld.sshfl [vmem:[#allocation1 + $0x8] sm:$0xff pattern:$0x75316420]
  %v3489 = vsel %vm33, %v3485, 0.0
  %v3490 = vrot.slane %v3489, 4
  %v3491 = vadd.f32 %v3489, %v3490
  %v3492 = vrot.slane %v3491, 2
  %v3493 = vadd.f32 %v3491, %v3492
  %v3494 = vrot.slane %v3493, 1
  %v3495 = vadd.f32 %v3493, %v3494
  %v3496 = vsel %vm33, %v3486, 0.0
  %v3497 = vrot.slane %v3496, 4
  %v3498 = vadd.f32 %v3496, %v3497
  %v3499 = vrot.slane %v3498, 2
  %v3500 = vadd.f32 %v3498, %v3499
  %v3501 = vrot.slane %v3500, 1
  %v3502 = vadd.f32 %v3500, %v3501
  %v3503 = vmul.f32 %v3495, %v22
  %v3504 = vmul.f32 %v3502, %v23
  %v3507 = vrot.slane %v3504, 7
  %v3508 = vsel %vm53, %v3503, %v3507
  %s3510 = scalar_lea.vmem %s3428, 34
  %3511 = vst.msk [vmem:[%s3510] ss:$8 sm:$0x3] %vm59, %v3508
  %3512 = vst.msk [vmem:[%s3510] ss:$8 sm:$0x0] %vm59, %v3508
  %3513 = vrot.lane.b32.xlu0 %v20, 80
  %v3514 = vpop.permute.xlu0 %3513
  %3515 = vrot.lane.b32.xlu0 %v21, 80
  %v3516 = vpop.permute.xlu0 %3515
  %v3517 = vrot.slane %v3514, 4
  %v3518 = vrot.slane %v3516, 4
  %v3519 = vsel %vm33, %v3517, %v3518
  %v3520 = vsel %vm153, %v3514, %v3519
  %v3522 = vmul.f32 %v17, %v3520
  %3524 = vst [vmem:[#allocation1] ss:$2 sm:$0xff] %v3522
  %v3525 = vld.sshfl [vmem:[#allocation1] sm:$0xff pattern:$0x75316420]
  %v3526 = vld.sshfl [vmem:[#allocation1 + $0x8] sm:$0xff pattern:$0x75316420]
  %v3529 = vsel %vm33, %v3525, 0.0
  %v3530 = vrot.slane %v3529, 4
  %v3531 = vadd.f32 %v3529, %v3530
  %v3532 = vrot.slane %v3531, 2
  %v3533 = vadd.f32 %v3531, %v3532
  %v3534 = vrot.slane %v3533, 1
  %v3535 = vadd.f32 %v3533, %v3534
  %v3536 = vsel %vm33, %v3526, 0.0
  %v3537 = vrot.slane %v3536, 4
  %v3538 = vadd.f32 %v3536, %v3537
  %v3539 = vrot.slane %v3538, 2
  %v3540 = vadd.f32 %v3538, %v3539
  %v3541 = vrot.slane %v3540, 1
  %v3542 = vadd.f32 %v3540, %v3541
  %v3543 = vmul.f32 %v3535, %v22
  %v3544 = vmul.f32 %v3542, %v23
  %v3547 = vrot.slane %v3544, 7
  %v3548 = vsel %vm53, %v3543, %v3547
  %s3550 = scalar_lea.vmem %s3428, 51
  %3551 = vst.msk [vmem:[%s3550] ss:$8 sm:$0x3] %vm59, %v3548
  %3552 = vst.msk [vmem:[%s3550] ss:$8 sm:$0x0] %vm59, %v3548
  %3553 = vrot.lane.b32.xlu0 %v20, 64
  %v3554 = vpop.permute.xlu0 %3553
  %3555 = vrot.lane.b32.xlu0 %v21, 64
  %v3556 = vpop.permute.xlu0 %3555
  %v3557 = vrot.slane %v3554, 4
  %v3558 = vrot.slane %v3556, 4
  %v3559 = vsel %vm33, %v3557, %v3558
  %v3560 = vsel %vm194, %v3554, %v3559
  %v3562 = vmul.f32 %v17, %v3560
  %3564 = vst [vmem:[#allocation1] ss:$2 sm:$0xff] %v3562
  %v3565 = vld.sshfl [vmem:[#allocation1] sm:$0xff pattern:$0x75316420]
  %v3566 = vld.sshfl [vmem:[#allocation1 + $0x8] sm:$0xff pattern:$0x75316420]
  %v3569 = vsel %vm33, %v3565, 0.0
  %v3570 = vrot.slane %v3569, 4
  %v3571 = vadd.f32 %v3569, %v3570
  %v3572 = vrot.slane %v3571, 2
  %v3573 = vadd.f32 %v3571, %v3572
  %v3574 = vrot.slane %v3573, 1
  %v3575 = vadd.f32 %v3573, %v3574
  %v3576 = vsel %vm33, %v3566, 0.0
  %v3577 = vrot.slane %v3576, 4
  %v3578 = vadd.f32 %v3576, %v3577
  %v3579 = vrot.slane %v3578, 2
  %v3580 = vadd.f32 %v3578, %v3579
  %v3581 = vrot.slane %v3580, 1
  %v3582 = vadd.f32 %v3580, %v3581
  %v3583 = vmul.f32 %v3575, %v22
  %v3584 = vmul.f32 %v3582, %v23
  %v3587 = vrot.slane %v3584, 7
  %v3588 = vsel %vm53, %v3583, %v3587
  %s3590 = scalar_lea.vmem %s3428, 68
  %3591 = vst.msk [vmem:[%s3590] ss:$8 sm:$0x3] %vm59, %v3588
  %3592 = vst.msk [vmem:[%s3590] ss:$8 sm:$0x0] %vm59, %v3588
  %3593 = vrot.lane.b32.xlu0 %v20, 48
  %v3594 = vpop.permute.xlu0 %3593
  %3595 = vrot.lane.b32.xlu0 %v21, 48
  %v3596 = vpop.permute.xlu0 %3595
  %v3597 = vrot.slane %v3594, 4
  %v3598 = vrot.slane %v3596, 4
  %v3599 = vsel %vm33, %v3597, %v3598
  %v3600 = vsel %vm235, %v3594, %v3599
  %v3602 = vmul.f32 %v17, %v3600
  %3604 = vst [vmem:[#allocation1] ss:$2 sm:$0xff] %v3602
  %v3605 = vld.sshfl [vmem:[#allocation1] sm:$0xff pattern:$0x75316420]
  %v3606 = vld.sshfl [vmem:[#allocation1 + $0x8] sm:$0xff pattern:$0x75316420]
  %v3609 = vsel %vm33, %v3605, 0.0
  %v3610 = vrot.slane %v3609, 4
  %v3611 = vadd.f32 %v3609, %v3610
  %v3612 = vrot.slane %v3611, 2
  %v3613 = vadd.f32 %v3611, %v3612
  %v3614 = vrot.slane %v3613, 1
  %v3615 = vadd.f32 %v3613, %v3614
  %v3616 = vsel %vm33, %v3606, 0.0
  %v3617 = vrot.slane %v3616, 4
  %v3618 = vadd.f32 %v3616, %v3617
  %v3619 = vrot.slane %v3618, 2
  %v3620 = vadd.f32 %v3618, %v3619
  %v3621 = vrot.slane %v3620, 1
  %v3622 = vadd.f32 %v3620, %v3621
  %v3623 = vmul.f32 %v3615, %v22
  %v3624 = vmul.f32 %v3622, %v23
  %v3627 = vrot.slane %v3624, 7
  %v3628 = vsel %vm53, %v3623, %v3627
  %s3630 = scalar_lea.vmem %s3428, 85
  %3631 = vst.msk [vmem:[%s3630] ss:$8 sm:$0x3] %vm59, %v3628
  %3632 = vst.msk [vmem:[%s3630] ss:$8 sm:$0x0] %vm59, %v3628
  %3633 = vrot.lane.b32.xlu0 %v20, 32
  %v3634 = vpop.permute.xlu0 %3633
  %3635 = vrot.lane.b32.xlu0 %v21, 32
  %v3636 = vpop.permute.xlu0 %3635
  %v3637 = vrot.slane %v3634, 4
  %v3638 = vrot.slane %v3636, 4
  %v3639 = vsel %vm33, %v3637, %v3638
  %v3640 = vsel %vm276, %v3634, %v3639
  %v3642 = vmul.f32 %v17, %v3640
  %3644 = vst [vmem:[#allocation1] ss:$2 sm:$0xff] %v3642
  %v3645 = vld.sshfl [vmem:[#allocation1] sm:$0xff pattern:$0x75316420]
  %v3646 = vld.sshfl [vmem:[#allocation1 + $0x8] sm:$0xff pattern:$0x75316420]
  %v3649 = vsel %vm33, %v3645, 0.0
  %v3650 = vrot.slane %v3649, 4
  %v3651 = vadd.f32 %v3649, %v3650
  %v3652 = vrot.slane %v3651, 2
  %v3653 = vadd.f32 %v3651, %v3652
  %v3654 = vrot.slane %v3653, 1
  %v3655 = vadd.f32 %v3653, %v3654
  %v3656 = vsel %vm33, %v3646, 0.0
  %v3657 = vrot.slane %v3656, 4
  %v3658 = vadd.f32 %v3656, %v3657
  %v3659 = vrot.slane %v3658, 2
  %v3660 = vadd.f32 %v3658, %v3659
  %v3661 = vrot.slane %v3660, 1
  %v3662 = vadd.f32 %v3660, %v3661
  %v3663 = vmul.f32 %v3655, %v22
  %v3664 = vmul.f32 %v3662, %v23
  %v3667 = vrot.slane %v3664, 7
  %v3668 = vsel %vm53, %v3663, %v3667
  %s3670 = scalar_lea.vmem %s3428, 102
  %3671 = vst.msk [vmem:[%s3670] ss:$8 sm:$0x3] %vm59, %v3668
  %3672 = vst.msk [vmem:[%s3670] ss:$8 sm:$0x0] %vm59, %v3668
  %3673 = vrot.lane.b32.xlu0 %v20, 16
  %v3674 = vpop.permute.xlu0 %3673
  %3675 = vrot.lane.b32.xlu0 %v21, 16
  %v3676 = vpop.permute.xlu0 %3675
  %v3677 = vrot.slane %v3674, 4
  %v3678 = vrot.slane %v3676, 4
  %v3679 = vsel %vm33, %v3677, %v3678
  %v3680 = vsel %vm317, %v3674, %v3679
  %v3682 = vmul.f32 %v17, %v3680
  %3684 = vst [vmem:[#allocation1] ss:$2 sm:$0xff] %v3682
  %v3685 = vld.sshfl [vmem:[#allocation1] sm:$0xff pattern:$0x75316420]
  %v3686 = vld.sshfl [vmem:[#allocation1 + $0x8] sm:$0xff pattern:$0x75316420]
  %v3689 = vsel %vm33, %v3685, 0.0
  %v3690 = vrot.slane %v3689, 4
  %v3691 = vadd.f32 %v3689, %v3690
  %v3692 = vrot.slane %v3691, 2
  %v3693 = vadd.f32 %v3691, %v3692
  %v3694 = vrot.slane %v3693, 1
  %v3695 = vadd.f32 %v3693, %v3694
  %v3696 = vsel %vm33, %v3686, 0.0
  %v3697 = vrot.slane %v3696, 4
  %v3698 = vadd.f32 %v3696, %v3697
  %v3699 = vrot.slane %v3698, 2
  %v3700 = vadd.f32 %v3698, %v3699
  %v3701 = vrot.slane %v3700, 1
  %v3702 = vadd.f32 %v3700, %v3701
  %v3703 = vmul.f32 %v3695, %v22
  %v3704 = vmul.f32 %v3702, %v23
  %v3707 = vrot.slane %v3704, 7
  %v3708 = vsel %vm53, %v3703, %v3707
  %s3710 = scalar_lea.vmem %s3428, 119
  %3711 = vst.msk [vmem:[%s3710] ss:$8 sm:$0x3] %vm59, %v3708
  %3712 = vst.msk [vmem:[%s3710] ss:$8 sm:$0x0] %vm59, %v3708
  %v3713 = vrot.slane %v20, 4
  %v3714 = vrot.slane %v21, 4
  %v3715 = vsel %vm33, %v3713, %v3714
  %v3717 = vmul.f32 %v17, %v3715
  %3719 = vst [vmem:[#allocation1] ss:$2 sm:$0xff] %v3717
  %v3720 = vld.sshfl [vmem:[#allocation1] sm:$0xff pattern:$0x75316420]
  %v3721 = vld.sshfl [vmem:[#allocation1 + $0x8] sm:$0xff pattern:$0x75316420]
  %v3724 = vsel %vm33, %v3720, 0.0
  %v3725 = vrot.slane %v3724, 4
  %v3726 = vadd.f32 %v3724, %v3725
  %v3727 = vrot.slane %v3726, 2
  %v3728 = vadd.f32 %v3726, %v3727
  %v3729 = vrot.slane %v3728, 1
  %v3730 = vadd.f32 %v3728, %v3729
  %v3731 = vsel %vm33, %v3721, 0.0
  %v3732 = vrot.slane %v3731, 4
  %v3733 = vadd.f32 %v3731, %v3732
  %v3734 = vrot.slane %v3733, 2
  %v3735 = vadd.f32 %v3733, %v3734
  %v3736 = vrot.slane %v3735, 1
  %v3737 = vadd.f32 %v3735, %v3736
  %v3738 = vmul.f32 %v3730, %v22
  %v3739 = vmul.f32 %v3737, %v23
  %v3742 = vrot.slane %v3739, 7
  %v3743 = vsel %vm53, %v3738, %v3742
  %s3745 = scalar_lea.vmem %s3428, 144
  %3746 = vst.msk [vmem:[%s3745] ss:$8 sm:$0x3] %vm59, %v3743
  %3747 = vst.msk [vmem:[%s3745] ss:$8 sm:$0x0] %vm59, %v3743
  %3748 = vrot.lane.b32.xlu0 %v20, 127
  %v3749 = vpop.permute.xlu0 %3748
  %3750 = vrot.lane.b32.xlu0 %v21, 127
  %v3751 = vpop.permute.xlu0 %3750
  %v3752 = vrot.slane %v3749, 4
  %v3753 = vrot.slane %v3751, 4
  %v3754 = vsel %vm33, %v3752, %v3753
  %v3755 = vsel %vm393, %v3749, %v3754
  %v3757 = vmul.f32 %v17, %v3755
  %3759 = vst [vmem:[#allocation1] ss:$2 sm:$0xff] %v3757
  %v3760 = vld.sshfl [vmem:[#allocation1] sm:$0xff pattern:$0x75316420]
  %v3761 = vld.sshfl [vmem:[#allocation1 + $0x8] sm:$0xff pattern:$0x75316420]
  %v3764 = vsel %vm33, %v3760, 0.0
  %v3765 = vrot.slane %v3764, 4
  %v3766 = vadd.f32 %v3764, %v3765
  %v3767 = vrot.slane %v3766, 2
  %v3768 = vadd.f32 %v3766, %v3767
  %v3769 = vrot.slane %v3768, 1
  %v3770 = vadd.f32 %v3768, %v3769
  %v3771 = vsel %vm33, %v3761, 0.0
  %v3772 = vrot.slane %v3771, 4
  %v3773 = vadd.f32 %v3771, %v3772
  %v3774 = vrot.slane %v3773, 2
  %v3775 = vadd.f32 %v3773, %v3774
  %v3776 = vrot.slane %v3775, 1
  %v3777 = vadd.f32 %v3775, %v3776
  %v3778 = vmul.f32 %v3770, %v22
  %v3779 = vmul.f32 %v3777, %v23
  %3782 = vst [vmem:[#allocation1] sm:$0xff] %v3778
  %3783 = vst [vmem:[#allocation1 + $0x9] sm:$0xff] %v3779
  %s3784 = scalar_lea.vmem [#allocation1], 1
  %v3785 = vld [vmem:[%s3784] ss:$9 sm:$0xff]
  %s3787 = scalar_lea.vmem %s3428, 1
  %3788 = vst.msk [vmem:[%s3787] ss:$8 sm:$0x3] %vm59, %v3785
  %3789 = vst.msk [vmem:[%s3787] ss:$8 sm:$0x0] %vm59, %v3785
  %3790 = vrot.lane.b32.xlu0 %v20, 111
  %v3791 = vpop.permute.xlu0 %3790
  %3792 = vrot.lane.b32.xlu0 %v21, 111
  %v3793 = vpop.permute.xlu0 %3792
  %v3794 = vrot.slane %v3791, 4
  %v3795 = vrot.slane %v3793, 4
  %v3796 = vsel %vm33, %v3794, %v3795
  %v3797 = vsel %vm436, %v3791, %v3796
  %v3799 = vmul.f32 %v17, %v3797
  %3801 = vst [vmem:[#allocation1] ss:$2 sm:$0xff] %v3799
  %v3802 = vld.sshfl [vmem:[#allocation1] sm:$0xff pattern:$0x75316420]
  %v3803 = vld.sshfl [vmem:[#allocation1 + $0x8] sm:$0xff pattern:$0x75316420]
  %v3806 = vsel %vm33, %v3802, 0.0
  %v3807 = vrot.slane %v3806, 4
  %v3808 = vadd.f32 %v3806, %v3807
  %v3809 = vrot.slane %v3808, 2
  %v3810 = vadd.f32 %v3808, %v3809
  %v3811 = vrot.slane %v3810, 1
  %v3812 = vadd.f32 %v3810, %v3811
  %v3813 = vsel %vm33, %v3803, 0.0
  %v3814 = vrot.slane %v3813, 4
  %v3815 = vadd.f32 %v3813, %v3814
  %v3816 = vrot.slane %v3815, 2
  %v3817 = vadd.f32 %v3815, %v3816
  %v3818 = vrot.slane %v3817, 1
  %v3819 = vadd.f32 %v3817, %v3818
  %v3820 = vmul.f32 %v3812, %v22
  %v3821 = vmul.f32 %v3819, %v23
  %3824 = vst [vmem:[#allocation1] sm:$0xff] %v3820
  %3825 = vst [vmem:[#allocation1 + $0x9] sm:$0xff] %v3821
  %s3826 = scalar_lea.vmem [#allocation1], 1
  %v3827 = vld [vmem:[%s3826] ss:$9 sm:$0xff]
  %s3829 = scalar_lea.vmem %s3428, 18
  %3830 = vst.msk [vmem:[%s3829] ss:$8 sm:$0x3] %vm59, %v3827
  %3831 = vst.msk [vmem:[%s3829] ss:$8 sm:$0x0] %vm59, %v3827
  %3832 = vrot.lane.b32.xlu0 %v20, 95
  %v3833 = vpop.permute.xlu0 %3832
  %3834 = vrot.lane.b32.xlu0 %v21, 95
  %v3835 = vpop.permute.xlu0 %3834
  %v3836 = vrot.slane %v3833, 4
  %v3837 = vrot.slane %v3835, 4
  %v3838 = vsel %vm33, %v3836, %v3837
  %v3839 = vsel %vm479, %v3833, %v3838
  %v3841 = vmul.f32 %v17, %v3839
  %3843 = vst [vmem:[#allocation1] ss:$2 sm:$0xff] %v3841
  %v3844 = vld.sshfl [vmem:[#allocation1] sm:$0xff pattern:$0x75316420]
  %v3845 = vld.sshfl [vmem:[#allocation1 + $0x8] sm:$0xff pattern:$0x75316420]
  %v3848 = vsel %vm33, %v3844, 0.0
  %v3849 = vrot.slane %v3848, 4
  %v3850 = vadd.f32 %v3848, %v3849
  %v3851 = vrot.slane %v3850, 2
  %v3852 = vadd.f32 %v3850, %v3851
  %v3853 = vrot.slane %v3852, 1
  %v3854 = vadd.f32 %v3852, %v3853
  %v3855 = vsel %vm33, %v3845, 0.0
  %v3856 = vrot.slane %v3855, 4
  %v3857 = vadd.f32 %v3855, %v3856
  %v3858 = vrot.slane %v3857, 2
  %v3859 = vadd.f32 %v3857, %v3858
  %v3860 = vrot.slane %v3859, 1
  %v3861 = vadd.f32 %v3859, %v3860
  %v3862 = vmul.f32 %v3854, %v22
  %v3863 = vmul.f32 %v3861, %v23
  %3866 = vst [vmem:[#allocation1] sm:$0xff] %v3862
  %3867 = vst [vmem:[#allocation1 + $0x9] sm:$0xff] %v3863
  %s3868 = scalar_lea.vmem [#allocation1], 1
  %v3869 = vld [vmem:[%s3868] ss:$9 sm:$0xff]
  %s3871 = scalar_lea.vmem %s3428, 35
  %3872 = vst.msk [vmem:[%s3871] ss:$8 sm:$0x3] %vm59, %v3869
  %3873 = vst.msk [vmem:[%s3871] ss:$8 sm:$0x0] %vm59, %v3869
  %3874 = vrot.lane.b32.xlu0 %v20, 79
  %v3875 = vpop.permute.xlu0 %3874
  %3876 = vrot.lane.b32.xlu0 %v21, 79
  %v3877 = vpop.permute.xlu0 %3876
  %v3878 = vrot.slane %v3875, 4
  %v3879 = vrot.slane %v3877, 4
  %v3880 = vsel %vm33, %v3878, %v3879
  %v3881 = vsel %vm522, %v3875, %v3880
  %v3883 = vmul.f32 %v17, %v3881
  %3885 = vst [vmem:[#allocation1] ss:$2 sm:$0xff] %v3883
  %v3886 = vld.sshfl [vmem:[#allocation1] sm:$0xff pattern:$0x75316420]
  %v3887 = vld.sshfl [vmem:[#allocation1 + $0x8] sm:$0xff pattern:$0x75316420]
  %v3890 = vsel %vm33, %v3886, 0.0
  %v3891 = vrot.slane %v3890, 4
  %v3892 = vadd.f32 %v3890, %v3891
  %v3893 = vrot.slane %v3892, 2
  %v3894 = vadd.f32 %v3892, %v3893
  %v3895 = vrot.slane %v3894, 1
  %v3896 = vadd.f32 %v3894, %v3895
  %v3897 = vsel %vm33, %v3887, 0.0
  %v3898 = vrot.slane %v3897, 4
  %v3899 = vadd.f32 %v3897, %v3898
  %v3900 = vrot.slane %v3899, 2
  %v3901 = vadd.f32 %v3899, %v3900
  %v3902 = vrot.slane %v3901, 1
  %v3903 = vadd.f32 %v3901, %v3902
  %v3904 = vmul.f32 %v3896, %v22
  %v3905 = vmul.f32 %v3903, %v23
  %3908 = vst [vmem:[#allocation1] sm:$0xff] %v3904
  %3909 = vst [vmem:[#allocation1 + $0x9] sm:$0xff] %v3905
  %s3910 = scalar_lea.vmem [#allocation1], 1
  %v3911 = vld [vmem:[%s3910] ss:$9 sm:$0xff]
  %s3913 = scalar_lea.vmem %s3428, 52
  %3914 = vst.msk [vmem:[%s3913] ss:$8 sm:$0x3] %vm59, %v3911
  %3915 = vst.msk [vmem:[%s3913] ss:$8 sm:$0x0] %vm59, %v3911
  %3916 = vrot.lane.b32.xlu0 %v20, 63
  %v3917 = vpop.permute.xlu0 %3916
  %3918 = vrot.lane.b32.xlu0 %v21, 63
  %v3919 = vpop.permute.xlu0 %3918
  %v3920 = vrot.slane %v3917, 4
  %v3921 = vrot.slane %v3919, 4
  %v3922 = vsel %vm33, %v3920, %v3921
  %v3923 = vsel %vm565, %v3917, %v3922
  %v3925 = vmul.f32 %v17, %v3923
  %3927 = vst [vmem:[#allocation1] ss:$2 sm:$0xff] %v3925
  %v3928 = vld.sshfl [vmem:[#allocation1] sm:$0xff pattern:$0x75316420]
  %v3929 = vld.sshfl [vmem:[#allocation1 + $0x8] sm:$0xff pattern:$0x75316420]
  %v3932 = vsel %vm33, %v3928, 0.0
  %v3933 = vrot.slane %v3932, 4
  %v3934 = vadd.f32 %v3932, %v3933
  %v3935 = vrot.slane %v3934, 2
  %v3936 = vadd.f32 %v3934, %v3935
  %v3937 = vrot.slane %v3936, 1
  %v3938 = vadd.f32 %v3936, %v3937
  %v3939 = vsel %vm33, %v3929, 0.0
  %v3940 = vrot.slane %v3939, 4
  %v3941 = vadd.f32 %v3939, %v3940
  %v3942 = vrot.slane %v3941, 2
  %v3943 = vadd.f32 %v3941, %v3942
  %v3944 = vrot.slane %v3943, 1
  %v3945 = vadd.f32 %v3943, %v3944
  %v3946 = vmul.f32 %v3938, %v22
  %v3947 = vmul.f32 %v3945, %v23
  %3950 = vst [vmem:[#allocation1] sm:$0xff] %v3946
  %3951 = vst [vmem:[#allocation1 + $0x9] sm:$0xff] %v3947
  %s3952 = scalar_lea.vmem [#allocation1], 1
  %v3953 = vld [vmem:[%s3952] ss:$9 sm:$0xff]
  %s3955 = scalar_lea.vmem %s3428, 69
  %3956 = vst.msk [vmem:[%s3955] ss:$8 sm:$0x3] %vm59, %v3953
  %3957 = vst.msk [vmem:[%s3955] ss:$8 sm:$0x0] %vm59, %v3953
  %3958 = vrot.lane.b32.xlu0 %v20, 47
  %v3959 = vpop.permute.xlu0 %3958
  %3960 = vrot.lane.b32.xlu0 %v21, 47
  %v3961 = vpop.permute.xlu0 %3960
  %v3962 = vrot.slane %v3959, 4
  %v3963 = vrot.slane %v3961, 4
  %v3964 = vsel %vm33, %v3962, %v3963
  %v3965 = vsel %vm608, %v3959, %v3964
  %v3967 = vmul.f32 %v17, %v3965
  %3969 = vst [vmem:[#allocation1] ss:$2 sm:$0xff] %v3967
  %v3970 = vld.sshfl [vmem:[#allocation1] sm:$0xff pattern:$0x75316420]
  %v3971 = vld.sshfl [vmem:[#allocation1 + $0x8] sm:$0xff pattern:$0x75316420]
  %v3974 = vsel %vm33, %v3970, 0.0
  %v3975 = vrot.slane %v3974, 4
  %v3976 = vadd.f32 %v3974, %v3975
  %v3977 = vrot.slane %v3976, 2
  %v3978 = vadd.f32 %v3976, %v3977
  %v3979 = vrot.slane %v3978, 1
  %v3980 = vadd.f32 %v3978, %v3979
  %v3981 = vsel %vm33, %v3971, 0.0
  %v3982 = vrot.slane %v3981, 4
  %v3983 = vadd.f32 %v3981, %v3982
  %v3984 = vrot.slane %v3983, 2
  %v3985 = vadd.f32 %v3983, %v3984
  %v3986 = vrot.slane %v3985, 1
  %v3987 = vadd.f32 %v3985, %v3986
  %v3988 = vmul.f32 %v3980, %v22
  %v3989 = vmul.f32 %v3987, %v23
  %3992 = vst [vmem:[#allocation1] sm:$0xff] %v3988
  %3993 = vst [vmem:[#allocation1 + $0x9] sm:$0xff] %v3989
  %s3994 = scalar_lea.vmem [#allocation1], 1
  %v3995 = vld [vmem:[%s3994] ss:$9 sm:$0xff]
  %s3997 = scalar_lea.vmem %s3428, 86
  %3998 = vst.msk [vmem:[%s3997] ss:$8 sm:$0x3] %vm59, %v3995
  %3999 = vst.msk [vmem:[%s3997] ss:$8 sm:$0x0] %vm59, %v3995
  %4000 = vrot.lane.b32.xlu0 %v20, 31
  %v4001 = vpop.permute.xlu0 %4000
  %4002 = vrot.lane.b32.xlu0 %v21, 31
  %v4003 = vpop.permute.xlu0 %4002
  %v4004 = vrot.slane %v4001, 4
  %v4005 = vrot.slane %v4003, 4
  %v4006 = vsel %vm33, %v4004, %v4005
  %v4007 = vsel %vm651, %v4001, %v4006
  %v4009 = vmul.f32 %v17, %v4007
  %4011 = vst [vmem:[#allocation1] ss:$2 sm:$0xff] %v4009
  %v4012 = vld.sshfl [vmem:[#allocation1] sm:$0xff pattern:$0x75316420]
  %v4013 = vld.sshfl [vmem:[#allocation1 + $0x8] sm:$0xff pattern:$0x75316420]
  %v4016 = vsel %vm33, %v4012, 0.0
  %v4017 = vrot.slane %v4016, 4
  %v4018 = vadd.f32 %v4016, %v4017
  %v4019 = vrot.slane %v4018, 2
  %v4020 = vadd.f32 %v4018, %v4019
  %v4021 = vrot.slane %v4020, 1
  %v4022 = vadd.f32 %v4020, %v4021
  %v4023 = vsel %vm33, %v4013, 0.0
  %v4024 = vrot.slane %v4023, 4
  %v4025 = vadd.f32 %v4023, %v4024
  %v4026 = vrot.slane %v4025, 2
  %v4027 = vadd.f32 %v4025, %v4026
  %v4028 = vrot.slane %v4027, 1
  %v4029 = vadd.f32 %v4027, %v4028
  %v4030 = vmul.f32 %v4022, %v22
  %v4031 = vmul.f32 %v4029, %v23
  %4034 = vst [vmem:[#allocation1] sm:$0xff] %v4030
  %4035 = vst [vmem:[#allocation1 + $0x9] sm:$0xff] %v4031
  %s4036 = scalar_lea.vmem [#allocation1], 1
  %v4037 = vld [vmem:[%s4036] ss:$9 sm:$0xff]
  %s4039 = scalar_lea.vmem %s3428, 103
  %4040 = vst.msk [vmem:[%s4039] ss:$8 sm:$0x3] %vm59, %v4037
  %4041 = vst.msk [vmem:[%s4039] ss:$8 sm:$0x0] %vm59, %v4037
  %4042 = vrot.lane.b32.xlu0 %v20, 15
  %v4043 = vpop.permute.xlu0 %4042
  %4044 = vrot.lane.b32.xlu0 %v21, 15
  %v4045 = vpop.permute.xlu0 %4044
  %v4046 = vrot.slane %v4043, 4
  %v4047 = vrot.slane %v4045, 4
  %v4048 = vsel %vm33, %v4046, %v4047
  %v4049 = vsel %vm694, %v4043, %v4048
  %v4051 = vmul.f32 %v17, %v4049
  %4053 = vst [vmem:[#allocation1] ss:$2 sm:$0xff] %v4051
  %v4054 = vld.sshfl [vmem:[#allocation1] sm:$0xff pattern:$0x75316420]
  %v4055 = vld.sshfl [vmem:[#allocation1 + $0x8] sm:$0xff pattern:$0x75316420]
  %v4058 = vsel %vm33, %v4054, 0.0
  %v4059 = vrot.slane %v4058, 4
  %v4060 = vadd.f32 %v4058, %v4059
  %v4061 = vrot.slane %v4060, 2
  %v4062 = vadd.f32 %v4060, %v4061
  %v4063 = vrot.slane %v4062, 1
  %v4064 = vadd.f32 %v4062, %v4063
  %v4065 = vsel %vm33, %v4055, 0.0
  %v4066 = vrot.slane %v4065, 4
  %v4067 = vadd.f32 %v4065, %v4066
  %v4068 = vrot.slane %v4067, 2
  %v4069 = vadd.f32 %v4067, %v4068
  %v4070 = vrot.slane %v4069, 1
  %v4071 = vadd.f32 %v4069, %v4070
  %v4072 = vmul.f32 %v4064, %v22
  %v4073 = vmul.f32 %v4071, %v23
  %4076 = vst [vmem:[#allocation1] sm:$0xff] %v4072
  %4077 = vst [vmem:[#allocation1 + $0x9] sm:$0xff] %v4073
  %s4078 = scalar_lea.vmem [#allocation1], 1
  %v4079 = vld [vmem:[%s4078] ss:$9 sm:$0xff]
  %s4081 = scalar_lea.vmem %s3428, 128
  %4082 = vst.msk [vmem:[%s4081] ss:$8 sm:$0x3] %vm59, %v4079
  %4083 = vst.msk [vmem:[%s4081] ss:$8 sm:$0x0] %vm59, %v4079
  %v4084 = vsel %vm393, %v3754, %v3751
  %v4086 = vmul.f32 %v17, %v4084
  %4088 = vst [vmem:[#allocation1] ss:$2 sm:$0xff] %v4086
  %v4089 = vld.sshfl [vmem:[#allocation1] sm:$0xff pattern:$0x75316420]
  %v4090 = vld.sshfl [vmem:[#allocation1 + $0x8] sm:$0xff pattern:$0x75316420]
  %v4093 = vsel %vm33, %v4089, 0.0
  %v4094 = vrot.slane %v4093, 4
  %v4095 = vadd.f32 %v4093, %v4094
  %v4096 = vrot.slane %v4095, 2
  %v4097 = vadd.f32 %v4095, %v4096
  %v4098 = vrot.slane %v4097, 1
  %v4099 = vadd.f32 %v4097, %v4098
  %v4100 = vsel %vm33, %v4090, 0.0
  %v4101 = vrot.slane %v4100, 4
  %v4102 = vadd.f32 %v4100, %v4101
  %v4103 = vrot.slane %v4102, 2
  %v4104 = vadd.f32 %v4102, %v4103
  %v4105 = vrot.slane %v4104, 1
  %v4106 = vadd.f32 %v4104, %v4105
  %v4107 = vmul.f32 %v4099, %v22
  %v4108 = vmul.f32 %v4106, %v23
  %4111 = vst [vmem:[#allocation1] sm:$0xff] %v4107
  %4112 = vst [vmem:[#allocation1 + $0x9] sm:$0xff] %v4108
  %s4113 = scalar_lea.vmem [#allocation1], 1
  %v4114 = vld [vmem:[%s4113] ss:$9 sm:$0xff]
  %s4116 = scalar_lea.vmem %s3428, 145
  %4117 = vst.msk [vmem:[%s4116] ss:$8 sm:$0x3] %vm59, %v4114
  %4118 = vst.msk [vmem:[%s4116] ss:$8 sm:$0x0] %vm59, %v4114
  %4119 = vrot.lane.b32.xlu0 %v20, 126
  %v4120 = vpop.permute.xlu0 %4119
  %4121 = vrot.lane.b32.xlu0 %v21, 126
  %v4122 = vpop.permute.xlu0 %4121
  %v4123 = vrot.slane %v4120, 4
  %v4124 = vrot.slane %v4122, 4
  %v4125 = vsel %vm33, %v4123, %v4124
  %v4126 = vsel %vm772, %v4120, %v4125
  %v4128 = vmul.f32 %v17, %v4126
  %4130 = vst [vmem:[#allocation1] ss:$2 sm:$0xff] %v4128
  %v4131 = vld.sshfl [vmem:[#allocation1] sm:$0xff pattern:$0x75316420]
  %v4132 = vld.sshfl [vmem:[#allocation1 + $0x8] sm:$0xff pattern:$0x75316420]
  %v4135 = vsel %vm33, %v4131, 0.0
  %v4136 = vrot.slane %v4135, 4
  %v4137 = vadd.f32 %v4135, %v4136
  %v4138 = vrot.slane %v4137, 2
  %v4139 = vadd.f32 %v4137, %v4138
  %v4140 = vrot.slane %v4139, 1
  %v4141 = vadd.f32 %v4139, %v4140
  %v4142 = vsel %vm33, %v4132, 0.0
  %v4143 = vrot.slane %v4142, 4
  %v4144 = vadd.f32 %v4142, %v4143
  %v4145 = vrot.slane %v4144, 2
  %v4146 = vadd.f32 %v4144, %v4145
  %v4147 = vrot.slane %v4146, 1
  %v4148 = vadd.f32 %v4146, %v4147
  %v4149 = vmul.f32 %v4141, %v22
  %v4150 = vmul.f32 %v4148, %v23
  %4153 = vst [vmem:[#allocation1] sm:$0xff] %v4149
  %4154 = vst [vmem:[#allocation1 + $0x9] sm:$0xff] %v4150
  %s4155 = scalar_lea.vmem [#allocation1], 2
  %v4156 = vld [vmem:[%s4155] ss:$9 sm:$0xff]
  %s4158 = scalar_lea.vmem %s3428, 2
  %4159 = vst.msk [vmem:[%s4158] ss:$8 sm:$0x3] %vm59, %v4156
  %4160 = vst.msk [vmem:[%s4158] ss:$8 sm:$0x0] %vm59, %v4156
  %4161 = vrot.lane.b32.xlu0 %v20, 110
  %v4162 = vpop.permute.xlu0 %4161
  %4163 = vrot.lane.b32.xlu0 %v21, 110
  %v4164 = vpop.permute.xlu0 %4163
  %v4165 = vrot.slane %v4162, 4
  %v4166 = vrot.slane %v4164, 4
  %v4167 = vsel %vm33, %v4165, %v4166
  %v4168 = vsel %vm815, %v4162, %v4167
  %v4170 = vmul.f32 %v17, %v4168
  %4172 = vst [vmem:[#allocation1] ss:$2 sm:$0xff] %v4170
  %v4173 = vld.sshfl [vmem:[#allocation1] sm:$0xff pattern:$0x75316420]
  %v4174 = vld.sshfl [vmem:[#allocation1 + $0x8] sm:$0xff pattern:$0x75316420]
  %v4177 = vsel %vm33, %v4173, 0.0
  %v4178 = vrot.slane %v4177, 4
  %v4179 = vadd.f32 %v4177, %v4178
  %v4180 = vrot.slane %v4179, 2
  %v4181 = vadd.f32 %v4179, %v4180
  %v4182 = vrot.slane %v4181, 1
  %v4183 = vadd.f32 %v4181, %v4182
  %v4184 = vsel %vm33, %v4174, 0.0
  %v4185 = vrot.slane %v4184, 4
  %v4186 = vadd.f32 %v4184, %v4185
  %v4187 = vrot.slane %v4186, 2
  %v4188 = vadd.f32 %v4186, %v4187
  %v4189 = vrot.slane %v4188, 1
  %v4190 = vadd.f32 %v4188, %v4189
  %v4191 = vmul.f32 %v4183, %v22
  %v4192 = vmul.f32 %v4190, %v23
  %4195 = vst [vmem:[#allocation1] sm:$0xff] %v4191
  %4196 = vst [vmem:[#allocation1 + $0x9] sm:$0xff] %v4192
  %s4197 = scalar_lea.vmem [#allocation1], 2
  %v4198 = vld [vmem:[%s4197] ss:$9 sm:$0xff]
  %s4200 = scalar_lea.vmem %s3428, 19
  %4201 = vst.msk [vmem:[%s4200] ss:$8 sm:$0x3] %vm59, %v4198
  %4202 = vst.msk [vmem:[%s4200] ss:$8 sm:$0x0] %vm59, %v4198
  %4203 = vrot.lane.b32.xlu0 %v20, 94
  %v4204 = vpop.permute.xlu0 %4203
  %4205 = vrot.lane.b32.xlu0 %v21, 94
  %v4206 = vpop.permute.xlu0 %4205
  %v4207 = vrot.slane %v4204, 4
  %v4208 = vrot.slane %v4206, 4
  %v4209 = vsel %vm33, %v4207, %v4208
  %v4210 = vsel %vm858, %v4204, %v4209
  %v4212 = vmul.f32 %v17, %v4210
  %4214 = vst [vmem:[#allocation1] ss:$2 sm:$0xff] %v4212
  %v4215 = vld.sshfl [vmem:[#allocation1] sm:$0xff pattern:$0x75316420]
  %v4216 = vld.sshfl [vmem:[#allocation1 + $0x8] sm:$0xff pattern:$0x75316420]
  %v4219 = vsel %vm33, %v4215, 0.0
  %v4220 = vrot.slane %v4219, 4
  %v4221 = vadd.f32 %v4219, %v4220
  %v4222 = vrot.slane %v4221, 2
  %v4223 = vadd.f32 %v4221, %v4222
  %v4224 = vrot.slane %v4223, 1
  %v4225 = vadd.f32 %v4223, %v4224
  %v4226 = vsel %vm33, %v4216, 0.0
  %v4227 = vrot.slane %v4226, 4
  %v4228 = vadd.f32 %v4226, %v4227
  %v4229 = vrot.slane %v4228, 2
  %v4230 = vadd.f32 %v4228, %v4229
  %v4231 = vrot.slane %v4230, 1
  %v4232 = vadd.f32 %v4230, %v4231
  %v4233 = vmul.f32 %v4225, %v22
  %v4234 = vmul.f32 %v4232, %v23
  %4237 = vst [vmem:[#allocation1] sm:$0xff] %v4233
  %4238 = vst [vmem:[#allocation1 + $0x9] sm:$0xff] %v4234
  %s4239 = scalar_lea.vmem [#allocation1], 2
  %v4240 = vld [vmem:[%s4239] ss:$9 sm:$0xff]
  %s4242 = scalar_lea.vmem %s3428, 36
  %4243 = vst.msk [vmem:[%s4242] ss:$8 sm:$0x3] %vm59, %v4240
  %4244 = vst.msk [vmem:[%s4242] ss:$8 sm:$0x0] %vm59, %v4240
  %4245 = vrot.lane.b32.xlu0 %v20, 78
  %v4246 = vpop.permute.xlu0 %4245
  %4247 = vrot.lane.b32.xlu0 %v21, 78
  %v4248 = vpop.permute.xlu0 %4247
  %v4249 = vrot.slane %v4246, 4
  %v4250 = vrot.slane %v4248, 4
  %v4251 = vsel %vm33, %v4249, %v4250
  %v4252 = vsel %vm901, %v4246, %v4251
  %v4254 = vmul.f32 %v17, %v4252
  %4256 = vst [vmem:[#allocation1] ss:$2 sm:$0xff] %v4254
  %v4257 = vld.sshfl [vmem:[#allocation1] sm:$0xff pattern:$0x75316420]
  %v4258 = vld.sshfl [vmem:[#allocation1 + $0x8] sm:$0xff pattern:$0x75316420]
  %v4261 = vsel %vm33, %v4257, 0.0
  %v4262 = vrot.slane %v4261, 4
  %v4263 = vadd.f32 %v4261, %v4262
  %v4264 = vrot.slane %v4263, 2
  %v4265 = vadd.f32 %v4263, %v4264
  %v4266 = vrot.slane %v4265, 1
  %v4267 = vadd.f32 %v4265, %v4266
  %v4268 = vsel %vm33, %v4258, 0.0
  %v4269 = vrot.slane %v4268, 4
  %v4270 = vadd.f32 %v4268, %v4269
  %v4271 = vrot.slane %v4270, 2
  %v4272 = vadd.f32 %v4270, %v4271
  %v4273 = vrot.slane %v4272, 1
  %v4274 = vadd.f32 %v4272, %v4273
  %v4275 = vmul.f32 %v4267, %v22
  %v4276 = vmul.f32 %v4274, %v23
  %4279 = vst [vmem:[#allocation1] sm:$0xff] %v4275
  %4280 = vst [vmem:[#allocation1 + $0x9] sm:$0xff] %v4276
  %s4281 = scalar_lea.vmem [#allocation1], 2
  %v4282 = vld [vmem:[%s4281] ss:$9 sm:$0xff]
  %s4284 = scalar_lea.vmem %s3428, 53
  %4285 = vst.msk [vmem:[%s4284] ss:$8 sm:$0x3] %vm59, %v4282
  %4286 = vst.msk [vmem:[%s4284] ss:$8 sm:$0x0] %vm59, %v4282
  %4287 = vrot.lane.b32.xlu0 %v20, 62
  %v4288 = vpop.permute.xlu0 %4287
  %4289 = vrot.lane.b32.xlu0 %v21, 62
  %v4290 = vpop.permute.xlu0 %4289
  %v4291 = vrot.slane %v4288, 4
  %v4292 = vrot.slane %v4290, 4
  %v4293 = vsel %vm33, %v4291, %v4292
  %v4294 = vsel %vm944, %v4288, %v4293
  %v4296 = vmul.f32 %v17, %v4294
  %4298 = vst [vmem:[#allocation1] ss:$2 sm:$0xff] %v4296
  %v4299 = vld.sshfl [vmem:[#allocation1] sm:$0xff pattern:$0x75316420]
  %v4300 = vld.sshfl [vmem:[#allocation1 + $0x8] sm:$0xff pattern:$0x75316420]
  %v4303 = vsel %vm33, %v4299, 0.0
  %v4304 = vrot.slane %v4303, 4
  %v4305 = vadd.f32 %v4303, %v4304
  %v4306 = vrot.slane %v4305, 2
  %v4307 = vadd.f32 %v4305, %v4306
  %v4308 = vrot.slane %v4307, 1
  %v4309 = vadd.f32 %v4307, %v4308
  %v4310 = vsel %vm33, %v4300, 0.0
  %v4311 = vrot.slane %v4310, 4
  %v4312 = vadd.f32 %v4310, %v4311
  %v4313 = vrot.slane %v4312, 2
  %v4314 = vadd.f32 %v4312, %v4313
  %v4315 = vrot.slane %v4314, 1
  %v4316 = vadd.f32 %v4314, %v4315
  %v4317 = vmul.f32 %v4309, %v22
  %v4318 = vmul.f32 %v4316, %v23
  %4321 = vst [vmem:[#allocation1] sm:$0xff] %v4317
  %4322 = vst [vmem:[#allocation1 + $0x9] sm:$0xff] %v4318
  %s4323 = scalar_lea.vmem [#allocation1], 2
  %v4324 = vld [vmem:[%s4323] ss:$9 sm:$0xff]
  %s4326 = scalar_lea.vmem %s3428, 70
  %4327 = vst.msk [vmem:[%s4326] ss:$8 sm:$0x3] %vm59, %v4324
  %4328 = vst.msk [vmem:[%s4326] ss:$8 sm:$0x0] %vm59, %v4324
  %4329 = vrot.lane.b32.xlu0 %v20, 46
  %v4330 = vpop.permute.xlu0 %4329
  %4331 = vrot.lane.b32.xlu0 %v21, 46
  %v4332 = vpop.permute.xlu0 %4331
  %v4333 = vrot.slane %v4330, 4
  %v4334 = vrot.slane %v4332, 4
  %v4335 = vsel %vm33, %v4333, %v4334
  %v4336 = vsel %vm987, %v4330, %v4335
  %v4338 = vmul.f32 %v17, %v4336
  %4340 = vst [vmem:[#allocation1] ss:$2 sm:$0xff] %v4338
  %v4341 = vld.sshfl [vmem:[#allocation1] sm:$0xff pattern:$0x75316420]
  %v4342 = vld.sshfl [vmem:[#allocation1 + $0x8] sm:$0xff pattern:$0x75316420]
  %v4345 = vsel %vm33, %v4341, 0.0
  %v4346 = vrot.slane %v4345, 4
  %v4347 = vadd.f32 %v4345, %v4346
  %v4348 = vrot.slane %v4347, 2
  %v4349 = vadd.f32 %v4347, %v4348
  %v4350 = vrot.slane %v4349, 1
  %v4351 = vadd.f32 %v4349, %v4350
  %v4352 = vsel %vm33, %v4342, 0.0
  %v4353 = vrot.slane %v4352, 4
  %v4354 = vadd.f32 %v4352, %v4353
  %v4355 = vrot.slane %v4354, 2
  %v4356 = vadd.f32 %v4354, %v4355
  %v4357 = vrot.slane %v4356, 1
  %v4358 = vadd.f32 %v4356, %v4357
  %v4359 = vmul.f32 %v4351, %v22
  %v4360 = vmul.f32 %v4358, %v23
  %4363 = vst [vmem:[#allocation1] sm:$0xff] %v4359
  %4364 = vst [vmem:[#allocation1 + $0x9] sm:$0xff] %v4360
  %s4365 = scalar_lea.vmem [#allocation1], 2
  %v4366 = vld [vmem:[%s4365] ss:$9 sm:$0xff]
  %s4368 = scalar_lea.vmem %s3428, 87
  %4369 = vst.msk [vmem:[%s4368] ss:$8 sm:$0x3] %vm59, %v4366
  %4370 = vst.msk [vmem:[%s4368] ss:$8 sm:$0x0] %vm59, %v4366
  %4371 = vrot.lane.b32.xlu0 %v20, 30
  %v4372 = vpop.permute.xlu0 %4371
  %4373 = vrot.lane.b32.xlu0 %v21, 30
  %v4374 = vpop.permute.xlu0 %4373
  %v4375 = vrot.slane %v4372, 4
  %v4376 = vrot.slane %v4374, 4
  %v4377 = vsel %vm33, %v4375, %v4376
  %v4378 = vsel %vm1030, %v4372, %v4377
  %v4380 = vmul.f32 %v17, %v4378
  %4382 = vst [vmem:[#allocation1] ss:$2 sm:$0xff] %v4380
  %v4383 = vld.sshfl [vmem:[#allocation1] sm:$0xff pattern:$0x75316420]
  %v4384 = vld.sshfl [vmem:[#allocation1 + $0x8] sm:$0xff pattern:$0x75316420]
  %v4387 = vsel %vm33, %v4383, 0.0
  %v4388 = vrot.slane %v4387, 4
  %v4389 = vadd.f32 %v4387, %v4388
  %v4390 = vrot.slane %v4389, 2
  %v4391 = vadd.f32 %v4389, %v4390
  %v4392 = vrot.slane %v4391, 1
  %v4393 = vadd.f32 %v4391, %v4392
  %v4394 = vsel %vm33, %v4384, 0.0
  %v4395 = vrot.slane %v4394, 4
  %v4396 = vadd.f32 %v4394, %v4395
  %v4397 = vrot.slane %v4396, 2
  %v4398 = vadd.f32 %v4396, %v4397
  %v4399 = vrot.slane %v4398, 1
  %v4400 = vadd.f32 %v4398, %v4399
  %v4401 = vmul.f32 %v4393, %v22
  %v4402 = vmul.f32 %v4400, %v23
  %4405 = vst [vmem:[#allocation1] sm:$0xff] %v4401
  %4406 = vst [vmem:[#allocation1 + $0x9] sm:$0xff] %v4402
  %s4407 = scalar_lea.vmem [#allocation1], 2
  %v4408 = vld [vmem:[%s4407] ss:$9 sm:$0xff]
  %s4410 = scalar_lea.vmem %s3428, 112
  %4411 = vst.msk [vmem:[%s4410] ss:$8 sm:$0x3] %vm59, %v4408
  %4412 = vst.msk [vmem:[%s4410] ss:$8 sm:$0x0] %vm59, %v4408
  %4413 = vrot.lane.b32.xlu0 %v20, 14
  %v4414 = vpop.permute.xlu0 %4413
  %4415 = vrot.lane.b32.xlu0 %v21, 14
  %v4416 = vpop.permute.xlu0 %4415
  %v4417 = vrot.slane %v4414, 4
  %v4418 = vrot.slane %v4416, 4
  %v4419 = vsel %vm33, %v4417, %v4418
  %v4420 = vsel %vm1073, %v4414, %v4419
  %v4422 = vmul.f32 %v17, %v4420
  %4424 = vst [vmem:[#allocation1] ss:$2 sm:$0xff] %v4422
  %v4425 = vld.sshfl [vmem:[#allocation1] sm:$0xff pattern:$0x75316420]
  %v4426 = vld.sshfl [vmem:[#allocation1 + $0x8] sm:$0xff pattern:$0x75316420]
  %v4429 = vsel %vm33, %v4425, 0.0
  %v4430 = vrot.slane %v4429, 4
  %v4431 = vadd.f32 %v4429, %v4430
  %v4432 = vrot.slane %v4431, 2
  %v4433 = vadd.f32 %v4431, %v4432
  %v4434 = vrot.slane %v4433, 1
  %v4435 = vadd.f32 %v4433, %v4434
  %v4436 = vsel %vm33, %v4426, 0.0
  %v4437 = vrot.slane %v4436, 4
  %v4438 = vadd.f32 %v4436, %v4437
  %v4439 = vrot.slane %v4438, 2
  %v4440 = vadd.f32 %v4438, %v4439
  %v4441 = vrot.slane %v4440, 1
  %v4442 = vadd.f32 %v4440, %v4441
  %v4443 = vmul.f32 %v4435, %v22
  %v4444 = vmul.f32 %v4442, %v23
  %4447 = vst [vmem:[#allocation1] sm:$0xff] %v4443
  %4448 = vst [vmem:[#allocation1 + $0x9] sm:$0xff] %v4444
  %s4449 = scalar_lea.vmem [#allocation1], 2
  %v4450 = vld [vmem:[%s4449] ss:$9 sm:$0xff]
  %s4452 = scalar_lea.vmem %s3428, 129
  %4453 = vst.msk [vmem:[%s4452] ss:$8 sm:$0x3] %vm59, %v4450
  %4454 = vst.msk [vmem:[%s4452] ss:$8 sm:$0x0] %vm59, %v4450
  %v4455 = vsel %vm772, %v4125, %v4122
  %v4457 = vmul.f32 %v17, %v4455
  %4459 = vst [vmem:[#allocation1] ss:$2 sm:$0xff] %v4457
  %v4460 = vld.sshfl [vmem:[#allocation1] sm:$0xff pattern:$0x75316420]
  %v4461 = vld.sshfl [vmem:[#allocation1 + $0x8] sm:$0xff pattern:$0x75316420]
  %v4464 = vsel %vm33, %v4460, 0.0
  %v4465 = vrot.slane %v4464, 4
  %v4466 = vadd.f32 %v4464, %v4465
  %v4467 = vrot.slane %v4466, 2
  %v4468 = vadd.f32 %v4466, %v4467
  %v4469 = vrot.slane %v4468, 1
  %v4470 = vadd.f32 %v4468, %v4469
  %v4471 = vsel %vm33, %v4461, 0.0
  %v4472 = vrot.slane %v4471, 4
  %v4473 = vadd.f32 %v4471, %v4472
  %v4474 = vrot.slane %v4473, 2
  %v4475 = vadd.f32 %v4473, %v4474
  %v4476 = vrot.slane %v4475, 1
  %v4477 = vadd.f32 %v4475, %v4476
  %v4478 = vmul.f32 %v4470, %v22
  %v4479 = vmul.f32 %v4477, %v23
  %4482 = vst [vmem:[#allocation1] sm:$0xff] %v4478
  %4483 = vst [vmem:[#allocation1 + $0x9] sm:$0xff] %v4479
  %s4484 = scalar_lea.vmem [#allocation1], 2
  %v4485 = vld [vmem:[%s4484] ss:$9 sm:$0xff]
  %s4487 = scalar_lea.vmem %s3428, 146
  %4488 = vst.msk [vmem:[%s4487] ss:$8 sm:$0x3] %vm59, %v4485
  %4489 = vst.msk [vmem:[%s4487] ss:$8 sm:$0x0] %vm59, %v4485
  %4490 = vrot.lane.b32.xlu0 %v20, 125
  %v4491 = vpop.permute.xlu0 %4490
  %4492 = vrot.lane.b32.xlu0 %v21, 125
  %v4493 = vpop.permute.xlu0 %4492
  %v4494 = vrot.slane %v4491, 4
  %v4495 = vrot.slane %v4493, 4
  %v4496 = vsel %vm33, %v4494, %v4495
  %v4497 = vsel %vm1151, %v4491, %v4496
  %v4499 = vmul.f32 %v17, %v4497
  %4501 = vst [vmem:[#allocation1] ss:$2 sm:$0xff] %v4499
  %v4502 = vld.sshfl [vmem:[#allocation1] sm:$0xff pattern:$0x75316420]
  %v4503 = vld.sshfl [vmem:[#allocation1 + $0x8] sm:$0xff pattern:$0x75316420]
  %v4506 = vsel %vm33, %v4502, 0.0
  %v4507 = vrot.slane %v4506, 4
  %v4508 = vadd.f32 %v4506, %v4507
  %v4509 = vrot.slane %v4508, 2
  %v4510 = vadd.f32 %v4508, %v4509
  %v4511 = vrot.slane %v4510, 1
  %v4512 = vadd.f32 %v4510, %v4511
  %v4513 = vsel %vm33, %v4503, 0.0
  %v4514 = vrot.slane %v4513, 4
  %v4515 = vadd.f32 %v4513, %v4514
  %v4516 = vrot.slane %v4515, 2
  %v4517 = vadd.f32 %v4515, %v4516
  %v4518 = vrot.slane %v4517, 1
  %v4519 = vadd.f32 %v4517, %v4518
  %v4520 = vmul.f32 %v4512, %v22
  %v4521 = vmul.f32 %v4519, %v23
  %4524 = vst [vmem:[#allocation1] sm:$0xff] %v4520
  %4525 = vst [vmem:[#allocation1 + $0x9] sm:$0xff] %v4521
  %s4526 = scalar_lea.vmem [#allocation1], 3
  %v4527 = vld [vmem:[%s4526] ss:$9 sm:$0xff]
  %s4529 = scalar_lea.vmem %s3428, 3
  %4530 = vst.msk [vmem:[%s4529] ss:$8 sm:$0x3] %vm59, %v4527
  %4531 = vst.msk [vmem:[%s4529] ss:$8 sm:$0x0] %vm59, %v4527
  %4532 = vrot.lane.b32.xlu0 %v20, 109
  %v4533 = vpop.permute.xlu0 %4532
  %4534 = vrot.lane.b32.xlu0 %v21, 109
  %v4535 = vpop.permute.xlu0 %4534
  %v4536 = vrot.slane %v4533, 4
  %v4537 = vrot.slane %v4535, 4
  %v4538 = vsel %vm33, %v4536, %v4537
  %v4539 = vsel %vm1194, %v4533, %v4538
  %v4541 = vmul.f32 %v17, %v4539
  %4543 = vst [vmem:[#allocation1] ss:$2 sm:$0xff] %v4541
  %v4544 = vld.sshfl [vmem:[#allocation1] sm:$0xff pattern:$0x75316420]
  %v4545 = vld.sshfl [vmem:[#allocation1 + $0x8] sm:$0xff pattern:$0x75316420]
  %v4548 = vsel %vm33, %v4544, 0.0
  %v4549 = vrot.slane %v4548, 4
  %v4550 = vadd.f32 %v4548, %v4549
  %v4551 = vrot.slane %v4550, 2
  %v4552 = vadd.f32 %v4550, %v4551
  %v4553 = vrot.slane %v4552, 1
  %v4554 = vadd.f32 %v4552, %v4553
  %v4555 = vsel %vm33, %v4545, 0.0
  %v4556 = vrot.slane %v4555, 4
  %v4557 = vadd.f32 %v4555, %v4556
  %v4558 = vrot.slane %v4557, 2
  %v4559 = vadd.f32 %v4557, %v4558
  %v4560 = vrot.slane %v4559, 1
  %v4561 = vadd.f32 %v4559, %v4560
  %v4562 = vmul.f32 %v4554, %v22
  %v4563 = vmul.f32 %v4561, %v23
  %4566 = vst [vmem:[#allocation1] sm:$0xff] %v4562
  %4567 = vst [vmem:[#allocation1 + $0x9] sm:$0xff] %v4563
  %s4568 = scalar_lea.vmem [#allocation1], 3
  %v4569 = vld [vmem:[%s4568] ss:$9 sm:$0xff]
  %s4571 = scalar_lea.vmem %s3428, 20
  %4572 = vst.msk [vmem:[%s4571] ss:$8 sm:$0x3] %vm59, %v4569
  %4573 = vst.msk [vmem:[%s4571] ss:$8 sm:$0x0] %vm59, %v4569
  %4574 = vrot.lane.b32.xlu0 %v20, 93
  %v4575 = vpop.permute.xlu0 %4574
  %4576 = vrot.lane.b32.xlu0 %v21, 93
  %v4577 = vpop.permute.xlu0 %4576
  %v4578 = vrot.slane %v4575, 4
  %v4579 = vrot.slane %v4577, 4
  %v4580 = vsel %vm33, %v4578, %v4579
  %v4581 = vsel %vm1237, %v4575, %v4580
  %v4583 = vmul.f32 %v17, %v4581
  %4585 = vst [vmem:[#allocation1] ss:$2 sm:$0xff] %v4583
  %v4586 = vld.sshfl [vmem:[#allocation1] sm:$0xff pattern:$0x75316420]
  %v4587 = vld.sshfl [vmem:[#allocation1 + $0x8] sm:$0xff pattern:$0x75316420]
  %v4590 = vsel %vm33, %v4586, 0.0
  %v4591 = vrot.slane %v4590, 4
  %v4592 = vadd.f32 %v4590, %v4591
  %v4593 = vrot.slane %v4592, 2
  %v4594 = vadd.f32 %v4592, %v4593
  %v4595 = vrot.slane %v4594, 1
  %v4596 = vadd.f32 %v4594, %v4595
  %v4597 = vsel %vm33, %v4587, 0.0
  %v4598 = vrot.slane %v4597, 4
  %v4599 = vadd.f32 %v4597, %v4598
  %v4600 = vrot.slane %v4599, 2
  %v4601 = vadd.f32 %v4599, %v4600
  %v4602 = vrot.slane %v4601, 1
  %v4603 = vadd.f32 %v4601, %v4602
  %v4604 = vmul.f32 %v4596, %v22
  %v4605 = vmul.f32 %v4603, %v23
  %4608 = vst [vmem:[#allocation1] sm:$0xff] %v4604
  %4609 = vst [vmem:[#allocation1 + $0x9] sm:$0xff] %v4605
  %s4610 = scalar_lea.vmem [#allocation1], 3
  %v4611 = vld [vmem:[%s4610] ss:$9 sm:$0xff]
  %s4613 = scalar_lea.vmem %s3428, 37
  %4614 = vst.msk [vmem:[%s4613] ss:$8 sm:$0x3] %vm59, %v4611
  %4615 = vst.msk [vmem:[%s4613] ss:$8 sm:$0x0] %vm59, %v4611
  %4616 = vrot.lane.b32.xlu0 %v20, 77
  %v4617 = vpop.permute.xlu0 %4616
  %4618 = vrot.lane.b32.xlu0 %v21, 77
  %v4619 = vpop.permute.xlu0 %4618
  %v4620 = vrot.slane %v4617, 4
  %v4621 = vrot.slane %v4619, 4
  %v4622 = vsel %vm33, %v4620, %v4621
  %v4623 = vsel %vm1280, %v4617, %v4622
  %v4625 = vmul.f32 %v17, %v4623
  %4627 = vst [vmem:[#allocation1] ss:$2 sm:$0xff] %v4625
  %v4628 = vld.sshfl [vmem:[#allocation1] sm:$0xff pattern:$0x75316420]
  %v4629 = vld.sshfl [vmem:[#allocation1 + $0x8] sm:$0xff pattern:$0x75316420]
  %v4632 = vsel %vm33, %v4628, 0.0
  %v4633 = vrot.slane %v4632, 4
  %v4634 = vadd.f32 %v4632, %v4633
  %v4635 = vrot.slane %v4634, 2
  %v4636 = vadd.f32 %v4634, %v4635
  %v4637 = vrot.slane %v4636, 1
  %v4638 = vadd.f32 %v4636, %v4637
  %v4639 = vsel %vm33, %v4629, 0.0
  %v4640 = vrot.slane %v4639, 4
  %v4641 = vadd.f32 %v4639, %v4640
  %v4642 = vrot.slane %v4641, 2
  %v4643 = vadd.f32 %v4641, %v4642
  %v4644 = vrot.slane %v4643, 1
  %v4645 = vadd.f32 %v4643, %v4644
  %v4646 = vmul.f32 %v4638, %v22
  %v4647 = vmul.f32 %v4645, %v23
  %4650 = vst [vmem:[#allocation1] sm:$0xff] %v4646
  %4651 = vst [vmem:[#allocation1 + $0x9] sm:$0xff] %v4647
  %s4652 = scalar_lea.vmem [#allocation1], 3
  %v4653 = vld [vmem:[%s4652] ss:$9 sm:$0xff]
  %s4655 = scalar_lea.vmem %s3428, 54
  %4656 = vst.msk [vmem:[%s4655] ss:$8 sm:$0x3] %vm59, %v4653
  %4657 = vst.msk [vmem:[%s4655] ss:$8 sm:$0x0] %vm59, %v4653
  %4658 = vrot.lane.b32.xlu0 %v20, 61
  %v4659 = vpop.permute.xlu0 %4658
  %4660 = vrot.lane.b32.xlu0 %v21, 61
  %v4661 = vpop.permute.xlu0 %4660
  %v4662 = vrot.slane %v4659, 4
  %v4663 = vrot.slane %v4661, 4
  %v4664 = vsel %vm33, %v4662, %v4663
  %v4665 = vsel %vm1323, %v4659, %v4664
  %v4667 = vmul.f32 %v17, %v4665
  %4669 = vst [vmem:[#allocation1] ss:$2 sm:$0xff] %v4667
  %v4670 = vld.sshfl [vmem:[#allocation1] sm:$0xff pattern:$0x75316420]
  %v4671 = vld.sshfl [vmem:[#allocation1 + $0x8] sm:$0xff pattern:$0x75316420]
  %v4674 = vsel %vm33, %v4670, 0.0
  %v4675 = vrot.slane %v4674, 4
  %v4676 = vadd.f32 %v4674, %v4675
  %v4677 = vrot.slane %v4676, 2
  %v4678 = vadd.f32 %v4676, %v4677
  %v4679 = vrot.slane %v4678, 1
  %v4680 = vadd.f32 %v4678, %v4679
  %v4681 = vsel %vm33, %v4671, 0.0
  %v4682 = vrot.slane %v4681, 4
  %v4683 = vadd.f32 %v4681, %v4682
  %v4684 = vrot.slane %v4683, 2
  %v4685 = vadd.f32 %v4683, %v4684
  %v4686 = vrot.slane %v4685, 1
  %v4687 = vadd.f32 %v4685, %v4686
  %v4688 = vmul.f32 %v4680, %v22
  %v4689 = vmul.f32 %v4687, %v23
  %4692 = vst [vmem:[#allocation1] sm:$0xff] %v4688
  %4693 = vst [vmem:[#allocation1 + $0x9] sm:$0xff] %v4689
  %s4694 = scalar_lea.vmem [#allocation1], 3
  %v4695 = vld [vmem:[%s4694] ss:$9 sm:$0xff]
  %s4697 = scalar_lea.vmem %s3428, 71
  %4698 = vst.msk [vmem:[%s4697] ss:$8 sm:$0x3] %vm59, %v4695
  %4699 = vst.msk [vmem:[%s4697] ss:$8 sm:$0x0] %vm59, %v4695
  %4700 = vrot.lane.b32.xlu0 %v20, 45
  %v4701 = vpop.permute.xlu0 %4700
  %4702 = vrot.lane.b32.xlu0 %v21, 45
  %v4703 = vpop.permute.xlu0 %4702
  %v4704 = vrot.slane %v4701, 4
  %v4705 = vrot.slane %v4703, 4
  %v4706 = vsel %vm33, %v4704, %v4705
  %v4707 = vsel %vm1366, %v4701, %v4706
  %v4709 = vmul.f32 %v17, %v4707
  %4711 = vst [vmem:[#allocation1] ss:$2 sm:$0xff] %v4709
  %v4712 = vld.sshfl [vmem:[#allocation1] sm:$0xff pattern:$0x75316420]
  %v4713 = vld.sshfl [vmem:[#allocation1 + $0x8] sm:$0xff pattern:$0x75316420]
  %v4716 = vsel %vm33, %v4712, 0.0
  %v4717 = vrot.slane %v4716, 4
  %v4718 = vadd.f32 %v4716, %v4717
  %v4719 = vrot.slane %v4718, 2
  %v4720 = vadd.f32 %v4718, %v4719
  %v4721 = vrot.slane %v4720, 1
  %v4722 = vadd.f32 %v4720, %v4721
  %v4723 = vsel %vm33, %v4713, 0.0
  %v4724 = vrot.slane %v4723, 4
  %v4725 = vadd.f32 %v4723, %v4724
  %v4726 = vrot.slane %v4725, 2
  %v4727 = vadd.f32 %v4725, %v4726
  %v4728 = vrot.slane %v4727, 1
  %v4729 = vadd.f32 %v4727, %v4728
  %v4730 = vmul.f32 %v4722, %v22
  %v4731 = vmul.f32 %v4729, %v23
  %4734 = vst [vmem:[#allocation1] sm:$0xff] %v4730
  %4735 = vst [vmem:[#allocation1 + $0x9] sm:$0xff] %v4731
  %s4736 = scalar_lea.vmem [#allocation1], 3
  %v4737 = vld [vmem:[%s4736] ss:$9 sm:$0xff]
  %s4739 = scalar_lea.vmem %s3428, 96
  %4740 = vst.msk [vmem:[%s4739] ss:$8 sm:$0x3] %vm59, %v4737
  %4741 = vst.msk [vmem:[%s4739] ss:$8 sm:$0x0] %vm59, %v4737
  %4742 = vrot.lane.b32.xlu0 %v20, 29
  %v4743 = vpop.permute.xlu0 %4742
  %4744 = vrot.lane.b32.xlu0 %v21, 29
  %v4745 = vpop.permute.xlu0 %4744
  %v4746 = vrot.slane %v4743, 4
  %v4747 = vrot.slane %v4745, 4
  %v4748 = vsel %vm33, %v4746, %v4747
  %v4749 = vsel %vm1409, %v4743, %v4748
  %v4751 = vmul.f32 %v17, %v4749
  %4753 = vst [vmem:[#allocation1] ss:$2 sm:$0xff] %v4751
  %v4754 = vld.sshfl [vmem:[#allocation1] sm:$0xff pattern:$0x75316420]
  %v4755 = vld.sshfl [vmem:[#allocation1 + $0x8] sm:$0xff pattern:$0x75316420]
  %v4758 = vsel %vm33, %v4754, 0.0
  %v4759 = vrot.slane %v4758, 4
  %v4760 = vadd.f32 %v4758, %v4759
  %v4761 = vrot.slane %v4760, 2
  %v4762 = vadd.f32 %v4760, %v4761
  %v4763 = vrot.slane %v4762, 1
  %v4764 = vadd.f32 %v4762, %v4763
  %v4765 = vsel %vm33, %v4755, 0.0
  %v4766 = vrot.slane %v4765, 4
  %v4767 = vadd.f32 %v4765, %v4766
  %v4768 = vrot.slane %v4767, 2
  %v4769 = vadd.f32 %v4767, %v4768
  %v4770 = vrot.slane %v4769, 1
  %v4771 = vadd.f32 %v4769, %v4770
  %v4772 = vmul.f32 %v4764, %v22
  %v4773 = vmul.f32 %v4771, %v23
  %4776 = vst [vmem:[#allocation1] sm:$0xff] %v4772
  %4777 = vst [vmem:[#allocation1 + $0x9] sm:$0xff] %v4773
  %s4778 = scalar_lea.vmem [#allocation1], 3
  %v4779 = vld [vmem:[%s4778] ss:$9 sm:$0xff]
  %s4781 = scalar_lea.vmem %s3428, 113
  %4782 = vst.msk [vmem:[%s4781] ss:$8 sm:$0x3] %vm59, %v4779
  %4783 = vst.msk [vmem:[%s4781] ss:$8 sm:$0x0] %vm59, %v4779
  %4784 = vrot.lane.b32.xlu0 %v20, 13
  %v4785 = vpop.permute.xlu0 %4784
  %4786 = vrot.lane.b32.xlu0 %v21, 13
  %v4787 = vpop.permute.xlu0 %4786
  %v4788 = vrot.slane %v4785, 4
  %v4789 = vrot.slane %v4787, 4
  %v4790 = vsel %vm33, %v4788, %v4789
  %v4791 = vsel %vm1452, %v4785, %v4790
  %v4793 = vmul.f32 %v17, %v4791
  %4795 = vst [vmem:[#allocation1] ss:$2 sm:$0xff] %v4793
  %v4796 = vld.sshfl [vmem:[#allocation1] sm:$0xff pattern:$0x75316420]
  %v4797 = vld.sshfl [vmem:[#allocation1 + $0x8] sm:$0xff pattern:$0x75316420]
  %v4800 = vsel %vm33, %v4796, 0.0
  %v4801 = vrot.slane %v4800, 4
  %v4802 = vadd.f32 %v4800, %v4801
  %v4803 = vrot.slane %v4802, 2
  %v4804 = vadd.f32 %v4802, %v4803
  %v4805 = vrot.slane %v4804, 1
  %v4806 = vadd.f32 %v4804, %v4805
  %v4807 = vsel %vm33, %v4797, 0.0
  %v4808 = vrot.slane %v4807, 4
  %v4809 = vadd.f32 %v4807, %v4808
  %v4810 = vrot.slane %v4809, 2
  %v4811 = vadd.f32 %v4809, %v4810
  %v4812 = vrot.slane %v4811, 1
  %v4813 = vadd.f32 %v4811, %v4812
  %v4814 = vmul.f32 %v4806, %v22
  %v4815 = vmul.f32 %v4813, %v23
  %4818 = vst [vmem:[#allocation1] sm:$0xff] %v4814
  %4819 = vst [vmem:[#allocation1 + $0x9] sm:$0xff] %v4815
  %s4820 = scalar_lea.vmem [#allocation1], 3
  %v4821 = vld [vmem:[%s4820] ss:$9 sm:$0xff]
  %s4823 = scalar_lea.vmem %s3428, 130
  %4824 = vst.msk [vmem:[%s4823] ss:$8 sm:$0x3] %vm59, %v4821
  %4825 = vst.msk [vmem:[%s4823] ss:$8 sm:$0x0] %vm59, %v4821
  %v4826 = vsel %vm1151, %v4496, %v4493
  %v4828 = vmul.f32 %v17, %v4826
  %4830 = vst [vmem:[#allocation1] ss:$2 sm:$0xff] %v4828
  %v4831 = vld.sshfl [vmem:[#allocation1] sm:$0xff pattern:$0x75316420]
  %v4832 = vld.sshfl [vmem:[#allocation1 + $0x8] sm:$0xff pattern:$0x75316420]
  %v4835 = vsel %vm33, %v4831, 0.0
  %v4836 = vrot.slane %v4835, 4
  %v4837 = vadd.f32 %v4835, %v4836
  %v4838 = vrot.slane %v4837, 2
  %v4839 = vadd.f32 %v4837, %v4838
  %v4840 = vrot.slane %v4839, 1
  %v4841 = vadd.f32 %v4839, %v4840
  %v4842 = vsel %vm33, %v4832, 0.0
  %v4843 = vrot.slane %v4842, 4
  %v4844 = vadd.f32 %v4842, %v4843
  %v4845 = vrot.slane %v4844, 2
  %v4846 = vadd.f32 %v4844, %v4845
  %v4847 = vrot.slane %v4846, 1
  %v4848 = vadd.f32 %v4846, %v4847
  %v4849 = vmul.f32 %v4841, %v22
  %v4850 = vmul.f32 %v4848, %v23
  %4853 = vst [vmem:[#allocation1] sm:$0xff] %v4849
  %4854 = vst [vmem:[#allocation1 + $0x9] sm:$0xff] %v4850
  %s4855 = scalar_lea.vmem [#allocation1], 3
  %v4856 = vld [vmem:[%s4855] ss:$9 sm:$0xff]
  %s4858 = scalar_lea.vmem %s3428, 147
  %4859 = vst.msk [vmem:[%s4858] ss:$8 sm:$0x3] %vm59, %v4856
  %4860 = vst.msk [vmem:[%s4858] ss:$8 sm:$0x0] %vm59, %v4856
  %4861 = vrot.lane.b32.xlu0 %v20, 124
  %v4862 = vpop.permute.xlu0 %4861
  %4863 = vrot.lane.b32.xlu0 %v21, 124
  %v4864 = vpop.permute.xlu0 %4863
  %v4865 = vrot.slane %v4862, 4
  %v4866 = vrot.slane %v4864, 4
  %v4867 = vsel %vm33, %v4865, %v4866
  %v4868 = vsel %vm1530, %v4862, %v4867
  %v4870 = vmul.f32 %v17, %v4868
  %4872 = vst [vmem:[#allocation1] ss:$2 sm:$0xff] %v4870
  %v4873 = vld.sshfl [vmem:[#allocation1] sm:$0xff pattern:$0x75316420]
  %v4874 = vld.sshfl [vmem:[#allocation1 + $0x8] sm:$0xff pattern:$0x75316420]
  %v4877 = vsel %vm33, %v4873, 0.0
  %v4878 = vrot.slane %v4877, 4
  %v4879 = vadd.f32 %v4877, %v4878
  %v4880 = vrot.slane %v4879, 2
  %v4881 = vadd.f32 %v4879, %v4880
  %v4882 = vrot.slane %v4881, 1
  %v4883 = vadd.f32 %v4881, %v4882
  %v4884 = vsel %vm33, %v4874, 0.0
  %v4885 = vrot.slane %v4884, 4
  %v4886 = vadd.f32 %v4884, %v4885
  %v4887 = vrot.slane %v4886, 2
  %v4888 = vadd.f32 %v4886, %v4887
  %v4889 = vrot.slane %v4888, 1
  %v4890 = vadd.f32 %v4888, %v4889
  %v4891 = vmul.f32 %v4883, %v22
  %v4892 = vmul.f32 %v4890, %v23
  %4895 = vst [vmem:[#allocation1] sm:$0xff] %v4891
  %4896 = vst [vmem:[#allocation1 + $0x9] sm:$0xff] %v4892
  %s4897 = scalar_lea.vmem [#allocation1], 4
  %v4898 = vld [vmem:[%s4897] ss:$9 sm:$0xff]
  %s4900 = scalar_lea.vmem %s3428, 4
  %4901 = vst.msk [vmem:[%s4900] ss:$8 sm:$0x3] %vm59, %v4898
  %4902 = vst.msk [vmem:[%s4900] ss:$8 sm:$0x0] %vm59, %v4898
  %4903 = vrot.lane.b32.xlu0 %v20, 108
  %v4904 = vpop.permute.xlu0 %4903
  %4905 = vrot.lane.b32.xlu0 %v21, 108
  %v4906 = vpop.permute.xlu0 %4905
  %v4907 = vrot.slane %v4904, 4
  %v4908 = vrot.slane %v4906, 4
  %v4909 = vsel %vm33, %v4907, %v4908
  %v4910 = vsel %vm1573, %v4904, %v4909
  %v4912 = vmul.f32 %v17, %v4910
  %4914 = vst [vmem:[#allocation1] ss:$2 sm:$0xff] %v4912
  %v4915 = vld.sshfl [vmem:[#allocation1] sm:$0xff pattern:$0x75316420]
  %v4916 = vld.sshfl [vmem:[#allocation1 + $0x8] sm:$0xff pattern:$0x75316420]
  %v4919 = vsel %vm33, %v4915, 0.0
  %v4920 = vrot.slane %v4919, 4
  %v4921 = vadd.f32 %v4919, %v4920
  %v4922 = vrot.slane %v4921, 2
  %v4923 = vadd.f32 %v4921, %v4922
  %v4924 = vrot.slane %v4923, 1
  %v4925 = vadd.f32 %v4923, %v4924
  %v4926 = vsel %vm33, %v4916, 0.0
  %v4927 = vrot.slane %v4926, 4
  %v4928 = vadd.f32 %v4926, %v4927
  %v4929 = vrot.slane %v4928, 2
  %v4930 = vadd.f32 %v4928, %v4929
  %v4931 = vrot.slane %v4930, 1
  %v4932 = vadd.f32 %v4930, %v4931
  %v4933 = vmul.f32 %v4925, %v22
  %v4934 = vmul.f32 %v4932, %v23
  %4937 = vst [vmem:[#allocation1] sm:$0xff] %v4933
  %4938 = vst [vmem:[#allocation1 + $0x9] sm:$0xff] %v4934
  %s4939 = scalar_lea.vmem [#allocation1], 4
  %v4940 = vld [vmem:[%s4939] ss:$9 sm:$0xff]
  %s4942 = scalar_lea.vmem %s3428, 21
  %4943 = vst.msk [vmem:[%s4942] ss:$8 sm:$0x3] %vm59, %v4940
  %4944 = vst.msk [vmem:[%s4942] ss:$8 sm:$0x0] %vm59, %v4940
  %4945 = vrot.lane.b32.xlu0 %v20, 92
  %v4946 = vpop.permute.xlu0 %4945
  %4947 = vrot.lane.b32.xlu0 %v21, 92
  %v4948 = vpop.permute.xlu0 %4947
  %v4949 = vrot.slane %v4946, 4
  %v4950 = vrot.slane %v4948, 4
  %v4951 = vsel %vm33, %v4949, %v4950
  %v4952 = vsel %vm1616, %v4946, %v4951
  %v4954 = vmul.f32 %v17, %v4952
  %4956 = vst [vmem:[#allocation1] ss:$2 sm:$0xff] %v4954
  %v4957 = vld.sshfl [vmem:[#allocation1] sm:$0xff pattern:$0x75316420]
  %v4958 = vld.sshfl [vmem:[#allocation1 + $0x8] sm:$0xff pattern:$0x75316420]
  %v4961 = vsel %vm33, %v4957, 0.0
  %v4962 = vrot.slane %v4961, 4
  %v4963 = vadd.f32 %v4961, %v4962
  %v4964 = vrot.slane %v4963, 2
  %v4965 = vadd.f32 %v4963, %v4964
  %v4966 = vrot.slane %v4965, 1
  %v4967 = vadd.f32 %v4965, %v4966
  %v4968 = vsel %vm33, %v4958, 0.0
  %v4969 = vrot.slane %v4968, 4
  %v4970 = vadd.f32 %v4968, %v4969
  %v4971 = vrot.slane %v4970, 2
  %v4972 = vadd.f32 %v4970, %v4971
  %v4973 = vrot.slane %v4972, 1
  %v4974 = vadd.f32 %v4972, %v4973
  %v4975 = vmul.f32 %v4967, %v22
  %v4976 = vmul.f32 %v4974, %v23
  %4979 = vst [vmem:[#allocation1] sm:$0xff] %v4975
  %4980 = vst [vmem:[#allocation1 + $0x9] sm:$0xff] %v4976
  %s4981 = scalar_lea.vmem [#allocation1], 4
  %v4982 = vld [vmem:[%s4981] ss:$9 sm:$0xff]
  %s4984 = scalar_lea.vmem %s3428, 38
  %4985 = vst.msk [vmem:[%s4984] ss:$8 sm:$0x3] %vm59, %v4982
  %4986 = vst.msk [vmem:[%s4984] ss:$8 sm:$0x0] %vm59, %v4982
  %4987 = vrot.lane.b32.xlu0 %v20, 76
  %v4988 = vpop.permute.xlu0 %4987
  %4989 = vrot.lane.b32.xlu0 %v21, 76
  %v4990 = vpop.permute.xlu0 %4989
  %v4991 = vrot.slane %v4988, 4
  %v4992 = vrot.slane %v4990, 4
  %v4993 = vsel %vm33, %v4991, %v4992
  %v4994 = vsel %vm1659, %v4988, %v4993
  %v4996 = vmul.f32 %v17, %v4994
  %4998 = vst [vmem:[#allocation1] ss:$2 sm:$0xff] %v4996
  %v4999 = vld.sshfl [vmem:[#allocation1] sm:$0xff pattern:$0x75316420]
  %v5000 = vld.sshfl [vmem:[#allocation1 + $0x8] sm:$0xff pattern:$0x75316420]
  %v5003 = vsel %vm33, %v4999, 0.0
  %v5004 = vrot.slane %v5003, 4
  %v5005 = vadd.f32 %v5003, %v5004
  %v5006 = vrot.slane %v5005, 2
  %v5007 = vadd.f32 %v5005, %v5006
  %v5008 = vrot.slane %v5007, 1
  %v5009 = vadd.f32 %v5007, %v5008
  %v5010 = vsel %vm33, %v5000, 0.0
  %v5011 = vrot.slane %v5010, 4
  %v5012 = vadd.f32 %v5010, %v5011
  %v5013 = vrot.slane %v5012, 2
  %v5014 = vadd.f32 %v5012, %v5013
  %v5015 = vrot.slane %v5014, 1
  %v5016 = vadd.f32 %v5014, %v5015
  %v5017 = vmul.f32 %v5009, %v22
  %v5018 = vmul.f32 %v5016, %v23
  %5021 = vst [vmem:[#allocation1] sm:$0xff] %v5017
  %5022 = vst [vmem:[#allocation1 + $0x9] sm:$0xff] %v5018
  %s5023 = scalar_lea.vmem [#allocation1], 4
  %v5024 = vld [vmem:[%s5023] ss:$9 sm:$0xff]
  %s5026 = scalar_lea.vmem %s3428, 55
  %5027 = vst.msk [vmem:[%s5026] ss:$8 sm:$0x3] %vm59, %v5024
  %5028 = vst.msk [vmem:[%s5026] ss:$8 sm:$0x0] %vm59, %v5024
  %5029 = vrot.lane.b32.xlu0 %v20, 60
  %v5030 = vpop.permute.xlu0 %5029
  %5031 = vrot.lane.b32.xlu0 %v21, 60
  %v5032 = vpop.permute.xlu0 %5031
  %v5033 = vrot.slane %v5030, 4
  %v5034 = vrot.slane %v5032, 4
  %v5035 = vsel %vm33, %v5033, %v5034
  %v5036 = vsel %vm1702, %v5030, %v5035
  %v5038 = vmul.f32 %v17, %v5036
  %5040 = vst [vmem:[#allocation1] ss:$2 sm:$0xff] %v5038
  %v5041 = vld.sshfl [vmem:[#allocation1] sm:$0xff pattern:$0x75316420]
  %v5042 = vld.sshfl [vmem:[#allocation1 + $0x8] sm:$0xff pattern:$0x75316420]
  %v5045 = vsel %vm33, %v5041, 0.0
  %v5046 = vrot.slane %v5045, 4
  %v5047 = vadd.f32 %v5045, %v5046
  %v5048 = vrot.slane %v5047, 2
  %v5049 = vadd.f32 %v5047, %v5048
  %v5050 = vrot.slane %v5049, 1
  %v5051 = vadd.f32 %v5049, %v5050
  %v5052 = vsel %vm33, %v5042, 0.0
  %v5053 = vrot.slane %v5052, 4
  %v5054 = vadd.f32 %v5052, %v5053
  %v5055 = vrot.slane %v5054, 2
  %v5056 = vadd.f32 %v5054, %v5055
  %v5057 = vrot.slane %v5056, 1
  %v5058 = vadd.f32 %v5056, %v5057
  %v5059 = vmul.f32 %v5051, %v22
  %v5060 = vmul.f32 %v5058, %v23
  %5063 = vst [vmem:[#allocation1] sm:$0xff] %v5059
  %5064 = vst [vmem:[#allocation1 + $0x9] sm:$0xff] %v5060
  %s5065 = scalar_lea.vmem [#allocation1], 4
  %v5066 = vld [vmem:[%s5065] ss:$9 sm:$0xff]
  %s5068 = scalar_lea.vmem %s3428, 80
  %5069 = vst.msk [vmem:[%s5068] ss:$8 sm:$0x3] %vm59, %v5066
  %5070 = vst.msk [vmem:[%s5068] ss:$8 sm:$0x0] %vm59, %v5066
  %5071 = vrot.lane.b32.xlu0 %v20, 44
  %v5072 = vpop.permute.xlu0 %5071
  %5073 = vrot.lane.b32.xlu0 %v21, 44
  %v5074 = vpop.permute.xlu0 %5073
  %v5075 = vrot.slane %v5072, 4
  %v5076 = vrot.slane %v5074, 4
  %v5077 = vsel %vm33, %v5075, %v5076
  %v5078 = vsel %vm1745, %v5072, %v5077
  %v5080 = vmul.f32 %v17, %v5078
  %5082 = vst [vmem:[#allocation1] ss:$2 sm:$0xff] %v5080
  %v5083 = vld.sshfl [vmem:[#allocation1] sm:$0xff pattern:$0x75316420]
  %v5084 = vld.sshfl [vmem:[#allocation1 + $0x8] sm:$0xff pattern:$0x75316420]
  %v5087 = vsel %vm33, %v5083, 0.0
  %v5088 = vrot.slane %v5087, 4
  %v5089 = vadd.f32 %v5087, %v5088
  %v5090 = vrot.slane %v5089, 2
  %v5091 = vadd.f32 %v5089, %v5090
  %v5092 = vrot.slane %v5091, 1
  %v5093 = vadd.f32 %v5091, %v5092
  %v5094 = vsel %vm33, %v5084, 0.0
  %v5095 = vrot.slane %v5094, 4
  %v5096 = vadd.f32 %v5094, %v5095
  %v5097 = vrot.slane %v5096, 2
  %v5098 = vadd.f32 %v5096, %v5097
  %v5099 = vrot.slane %v5098, 1
  %v5100 = vadd.f32 %v5098, %v5099
  %v5101 = vmul.f32 %v5093, %v22
  %v5102 = vmul.f32 %v5100, %v23
  %5105 = vst [vmem:[#allocation1] sm:$0xff] %v5101
  %5106 = vst [vmem:[#allocation1 + $0x9] sm:$0xff] %v5102
  %s5107 = scalar_lea.vmem [#allocation1], 4
  %v5108 = vld [vmem:[%s5107] ss:$9 sm:$0xff]
  %s5110 = scalar_lea.vmem %s3428, 97
  %5111 = vst.msk [vmem:[%s5110] ss:$8 sm:$0x3] %vm59, %v5108
  %5112 = vst.msk [vmem:[%s5110] ss:$8 sm:$0x0] %vm59, %v5108
  %5113 = vrot.lane.b32.xlu0 %v20, 28
  %v5114 = vpop.permute.xlu0 %5113
  %5115 = vrot.lane.b32.xlu0 %v21, 28
  %v5116 = vpop.permute.xlu0 %5115
  %v5117 = vrot.slane %v5114, 4
  %v5118 = vrot.slane %v5116, 4
  %v5119 = vsel %vm33, %v5117, %v5118
  %v5120 = vsel %vm1788, %v5114, %v5119
  %v5122 = vmul.f32 %v17, %v5120
  %5124 = vst [vmem:[#allocation1] ss:$2 sm:$0xff] %v5122
  %v5125 = vld.sshfl [vmem:[#allocation1] sm:$0xff pattern:$0x75316420]
  %v5126 = vld.sshfl [vmem:[#allocation1 + $0x8] sm:$0xff pattern:$0x75316420]
  %v5129 = vsel %vm33, %v5125, 0.0
  %v5130 = vrot.slane %v5129, 4
  %v5131 = vadd.f32 %v5129, %v5130
  %v5132 = vrot.slane %v5131, 2
  %v5133 = vadd.f32 %v5131, %v5132
  %v5134 = vrot.slane %v5133, 1
  %v5135 = vadd.f32 %v5133, %v5134
  %v5136 = vsel %vm33, %v5126, 0.0
  %v5137 = vrot.slane %v5136, 4
  %v5138 = vadd.f32 %v5136, %v5137
  %v5139 = vrot.slane %v5138, 2
  %v5140 = vadd.f32 %v5138, %v5139
  %v5141 = vrot.slane %v5140, 1
  %v5142 = vadd.f32 %v5140, %v5141
  %v5143 = vmul.f32 %v5135, %v22
  %v5144 = vmul.f32 %v5142, %v23
  %5147 = vst [vmem:[#allocation1] sm:$0xff] %v5143
  %5148 = vst [vmem:[#allocation1 + $0x9] sm:$0xff] %v5144
  %s5149 = scalar_lea.vmem [#allocation1], 4
  %v5150 = vld [vmem:[%s5149] ss:$9 sm:$0xff]
  %s5152 = scalar_lea.vmem %s3428, 114
  %5153 = vst.msk [vmem:[%s5152] ss:$8 sm:$0x3] %vm59, %v5150
  %5154 = vst.msk [vmem:[%s5152] ss:$8 sm:$0x0] %vm59, %v5150
  %5155 = vrot.lane.b32.xlu0 %v20, 12
  %v5156 = vpop.permute.xlu0 %5155
  %5157 = vrot.lane.b32.xlu0 %v21, 12
  %v5158 = vpop.permute.xlu0 %5157
  %v5159 = vrot.slane %v5156, 4
  %v5160 = vrot.slane %v5158, 4
  %v5161 = vsel %vm33, %v5159, %v5160
  %v5162 = vsel %vm1831, %v5156, %v5161
  %v5164 = vmul.f32 %v17, %v5162
  %5166 = vst [vmem:[#allocation1] ss:$2 sm:$0xff] %v5164
  %v5167 = vld.sshfl [vmem:[#allocation1] sm:$0xff pattern:$0x75316420]
  %v5168 = vld.sshfl [vmem:[#allocation1 + $0x8] sm:$0xff pattern:$0x75316420]
  %v5171 = vsel %vm33, %v5167, 0.0
  %v5172 = vrot.slane %v5171, 4
  %v5173 = vadd.f32 %v5171, %v5172
  %v5174 = vrot.slane %v5173, 2
  %v5175 = vadd.f32 %v5173, %v5174
  %v5176 = vrot.slane %v5175, 1
  %v5177 = vadd.f32 %v5175, %v5176
  %v5178 = vsel %vm33, %v5168, 0.0
  %v5179 = vrot.slane %v5178, 4
  %v5180 = vadd.f32 %v5178, %v5179
  %v5181 = vrot.slane %v5180, 2
  %v5182 = vadd.f32 %v5180, %v5181
  %v5183 = vrot.slane %v5182, 1
  %v5184 = vadd.f32 %v5182, %v5183
  %v5185 = vmul.f32 %v5177, %v22
  %v5186 = vmul.f32 %v5184, %v23
  %5189 = vst [vmem:[#allocation1] sm:$0xff] %v5185
  %5190 = vst [vmem:[#allocation1 + $0x9] sm:$0xff] %v5186
  %s5191 = scalar_lea.vmem [#allocation1], 4
  %v5192 = vld [vmem:[%s5191] ss:$9 sm:$0xff]
  %s5194 = scalar_lea.vmem %s3428, 131
  %5195 = vst.msk [vmem:[%s5194] ss:$8 sm:$0x3] %vm59, %v5192
  %5196 = vst.msk [vmem:[%s5194] ss:$8 sm:$0x0] %vm59, %v5192
  %v5197 = vsel %vm1530, %v4867, %v4864
  %v5199 = vmul.f32 %v17, %v5197
  %5201 = vst [vmem:[#allocation1] ss:$2 sm:$0xff] %v5199
  %v5202 = vld.sshfl [vmem:[#allocation1] sm:$0xff pattern:$0x75316420]
  %v5203 = vld.sshfl [vmem:[#allocation1 + $0x8] sm:$0xff pattern:$0x75316420]
  %v5206 = vsel %vm33, %v5202, 0.0
  %v5207 = vrot.slane %v5206, 4
  %v5208 = vadd.f32 %v5206, %v5207
  %v5209 = vrot.slane %v5208, 2
  %v5210 = vadd.f32 %v5208, %v5209
  %v5211 = vrot.slane %v5210, 1
  %v5212 = vadd.f32 %v5210, %v5211
  %v5213 = vsel %vm33, %v5203, 0.0
  %v5214 = vrot.slane %v5213, 4
  %v5215 = vadd.f32 %v5213, %v5214
  %v5216 = vrot.slane %v5215, 2
  %v5217 = vadd.f32 %v5215, %v5216
  %v5218 = vrot.slane %v5217, 1
  %v5219 = vadd.f32 %v5217, %v5218
  %v5220 = vmul.f32 %v5212, %v22
  %v5221 = vmul.f32 %v5219, %v23
  %5224 = vst [vmem:[#allocation1] sm:$0xff] %v5220
  %5225 = vst [vmem:[#allocation1 + $0x9] sm:$0xff] %v5221
  %s5226 = scalar_lea.vmem [#allocation1], 4
  %v5227 = vld [vmem:[%s5226] ss:$9 sm:$0xff]
  %s5229 = scalar_lea.vmem %s3428, 148
  %5230 = vst.msk [vmem:[%s5229] ss:$8 sm:$0x3] %vm59, %v5227
  %5231 = vst.msk [vmem:[%s5229] ss:$8 sm:$0x0] %vm59, %v5227
  %5232 = vrot.lane.b32.xlu0 %v20, 123
  %v5233 = vpop.permute.xlu0 %5232
  %5234 = vrot.lane.b32.xlu0 %v21, 123
  %v5235 = vpop.permute.xlu0 %5234
  %v5236 = vrot.slane %v5233, 4
  %v5237 = vrot.slane %v5235, 4
  %v5238 = vsel %vm33, %v5236, %v5237
  %v5239 = vsel %vm1909, %v5233, %v5238
  %v5241 = vmul.f32 %v17, %v5239
  %5243 = vst [vmem:[#allocation1] ss:$2 sm:$0xff] %v5241
  %v5244 = vld.sshfl [vmem:[#allocation1] sm:$0xff pattern:$0x75316420]
  %v5245 = vld.sshfl [vmem:[#allocation1 + $0x8] sm:$0xff pattern:$0x75316420]
  %v5248 = vsel %vm33, %v5244, 0.0
  %v5249 = vrot.slane %v5248, 4
  %v5250 = vadd.f32 %v5248, %v5249
  %v5251 = vrot.slane %v5250, 2
  %v5252 = vadd.f32 %v5250, %v5251
  %v5253 = vrot.slane %v5252, 1
  %v5254 = vadd.f32 %v5252, %v5253
  %v5255 = vsel %vm33, %v5245, 0.0
  %v5256 = vrot.slane %v5255, 4
  %v5257 = vadd.f32 %v5255, %v5256
  %v5258 = vrot.slane %v5257, 2
  %v5259 = vadd.f32 %v5257, %v5258
  %v5260 = vrot.slane %v5259, 1
  %v5261 = vadd.f32 %v5259, %v5260
  %v5262 = vmul.f32 %v5254, %v22
  %v5263 = vmul.f32 %v5261, %v23
  %5266 = vst [vmem:[#allocation1] sm:$0xff] %v5262
  %5267 = vst [vmem:[#allocation1 + $0x9] sm:$0xff] %v5263
  %s5268 = scalar_lea.vmem [#allocation1], 5
  %v5269 = vld [vmem:[%s5268] ss:$9 sm:$0xff]
  %s5271 = scalar_lea.vmem %s3428, 5
  %5272 = vst.msk [vmem:[%s5271] ss:$8 sm:$0x3] %vm59, %v5269
  %5273 = vst.msk [vmem:[%s5271] ss:$8 sm:$0x0] %vm59, %v5269
  %5274 = vrot.lane.b32.xlu0 %v20, 107
  %v5275 = vpop.permute.xlu0 %5274
  %5276 = vrot.lane.b32.xlu0 %v21, 107
  %v5277 = vpop.permute.xlu0 %5276
  %v5278 = vrot.slane %v5275, 4
  %v5279 = vrot.slane %v5277, 4
  %v5280 = vsel %vm33, %v5278, %v5279
  %v5281 = vsel %vm1952, %v5275, %v5280
  %v5283 = vmul.f32 %v17, %v5281
  %5285 = vst [vmem:[#allocation1] ss:$2 sm:$0xff] %v5283
  %v5286 = vld.sshfl [vmem:[#allocation1] sm:$0xff pattern:$0x75316420]
  %v5287 = vld.sshfl [vmem:[#allocation1 + $0x8] sm:$0xff pattern:$0x75316420]
  %v5290 = vsel %vm33, %v5286, 0.0
  %v5291 = vrot.slane %v5290, 4
  %v5292 = vadd.f32 %v5290, %v5291
  %v5293 = vrot.slane %v5292, 2
  %v5294 = vadd.f32 %v5292, %v5293
  %v5295 = vrot.slane %v5294, 1
  %v5296 = vadd.f32 %v5294, %v5295
  %v5297 = vsel %vm33, %v5287, 0.0
  %v5298 = vrot.slane %v5297, 4
  %v5299 = vadd.f32 %v5297, %v5298
  %v5300 = vrot.slane %v5299, 2
  %v5301 = vadd.f32 %v5299, %v5300
  %v5302 = vrot.slane %v5301, 1
  %v5303 = vadd.f32 %v5301, %v5302
  %v5304 = vmul.f32 %v5296, %v22
  %v5305 = vmul.f32 %v5303, %v23
  %5308 = vst [vmem:[#allocation1] sm:$0xff] %v5304
  %5309 = vst [vmem:[#allocation1 + $0x9] sm:$0xff] %v5305
  %s5310 = scalar_lea.vmem [#allocation1], 5
  %v5311 = vld [vmem:[%s5310] ss:$9 sm:$0xff]
  %s5313 = scalar_lea.vmem %s3428, 22
  %5314 = vst.msk [vmem:[%s5313] ss:$8 sm:$0x3] %vm59, %v5311
  %5315 = vst.msk [vmem:[%s5313] ss:$8 sm:$0x0] %vm59, %v5311
  %5316 = vrot.lane.b32.xlu0 %v20, 91
  %v5317 = vpop.permute.xlu0 %5316
  %5318 = vrot.lane.b32.xlu0 %v21, 91
  %v5319 = vpop.permute.xlu0 %5318
  %v5320 = vrot.slane %v5317, 4
  %v5321 = vrot.slane %v5319, 4
  %v5322 = vsel %vm33, %v5320, %v5321
  %v5323 = vsel %vm1995, %v5317, %v5322
  %v5325 = vmul.f32 %v17, %v5323
  %5327 = vst [vmem:[#allocation1] ss:$2 sm:$0xff] %v5325
  %v5328 = vld.sshfl [vmem:[#allocation1] sm:$0xff pattern:$0x75316420]
  %v5329 = vld.sshfl [vmem:[#allocation1 + $0x8] sm:$0xff pattern:$0x75316420]
  %v5332 = vsel %vm33, %v5328, 0.0
  %v5333 = vrot.slane %v5332, 4
  %v5334 = vadd.f32 %v5332, %v5333
  %v5335 = vrot.slane %v5334, 2
  %v5336 = vadd.f32 %v5334, %v5335
  %v5337 = vrot.slane %v5336, 1
  %v5338 = vadd.f32 %v5336, %v5337
  %v5339 = vsel %vm33, %v5329, 0.0
  %v5340 = vrot.slane %v5339, 4
  %v5341 = vadd.f32 %v5339, %v5340
  %v5342 = vrot.slane %v5341, 2
  %v5343 = vadd.f32 %v5341, %v5342
  %v5344 = vrot.slane %v5343, 1
  %v5345 = vadd.f32 %v5343, %v5344
  %v5346 = vmul.f32 %v5338, %v22
  %v5347 = vmul.f32 %v5345, %v23
  %5350 = vst [vmem:[#allocation1] sm:$0xff] %v5346
  %5351 = vst [vmem:[#allocation1 + $0x9] sm:$0xff] %v5347
  %s5352 = scalar_lea.vmem [#allocation1], 5
  %v5353 = vld [vmem:[%s5352] ss:$9 sm:$0xff]
  %s5355 = scalar_lea.vmem %s3428, 39
  %5356 = vst.msk [vmem:[%s5355] ss:$8 sm:$0x3] %vm59, %v5353
  %5357 = vst.msk [vmem:[%s5355] ss:$8 sm:$0x0] %vm59, %v5353
  %5358 = vrot.lane.b32.xlu0 %v20, 75
  %v5359 = vpop.permute.xlu0 %5358
  %5360 = vrot.lane.b32.xlu0 %v21, 75
  %v5361 = vpop.permute.xlu0 %5360
  %v5362 = vrot.slane %v5359, 4
  %v5363 = vrot.slane %v5361, 4
  %v5364 = vsel %vm33, %v5362, %v5363
  %v5365 = vsel %vm2038, %v5359, %v5364
  %v5367 = vmul.f32 %v17, %v5365
  %5369 = vst [vmem:[#allocation1] ss:$2 sm:$0xff] %v5367
  %v5370 = vld.sshfl [vmem:[#allocation1] sm:$0xff pattern:$0x75316420]
  %v5371 = vld.sshfl [vmem:[#allocation1 + $0x8] sm:$0xff pattern:$0x75316420]
  %v5374 = vsel %vm33, %v5370, 0.0
  %v5375 = vrot.slane %v5374, 4
  %v5376 = vadd.f32 %v5374, %v5375
  %v5377 = vrot.slane %v5376, 2
  %v5378 = vadd.f32 %v5376, %v5377
  %v5379 = vrot.slane %v5378, 1
  %v5380 = vadd.f32 %v5378, %v5379
  %v5381 = vsel %vm33, %v5371, 0.0
  %v5382 = vrot.slane %v5381, 4
  %v5383 = vadd.f32 %v5381, %v5382
  %v5384 = vrot.slane %v5383, 2
  %v5385 = vadd.f32 %v5383, %v5384
  %v5386 = vrot.slane %v5385, 1
  %v5387 = vadd.f32 %v5385, %v5386
  %v5388 = vmul.f32 %v5380, %v22
  %v5389 = vmul.f32 %v5387, %v23
  %5392 = vst [vmem:[#allocation1] sm:$0xff] %v5388
  %5393 = vst [vmem:[#allocation1 + $0x9] sm:$0xff] %v5389
  %s5394 = scalar_lea.vmem [#allocation1], 5
  %v5395 = vld [vmem:[%s5394] ss:$9 sm:$0xff]
  %s5397 = scalar_lea.vmem %s3428, 64
  %5398 = vst.msk [vmem:[%s5397] ss:$8 sm:$0x3] %vm59, %v5395
  %5399 = vst.msk [vmem:[%s5397] ss:$8 sm:$0x0] %vm59, %v5395
  %5400 = vrot.lane.b32.xlu0 %v20, 59
  %v5401 = vpop.permute.xlu0 %5400
  %5402 = vrot.lane.b32.xlu0 %v21, 59
  %v5403 = vpop.permute.xlu0 %5402
  %v5404 = vrot.slane %v5401, 4
  %v5405 = vrot.slane %v5403, 4
  %v5406 = vsel %vm33, %v5404, %v5405
  %v5407 = vsel %vm2081, %v5401, %v5406
  %v5409 = vmul.f32 %v17, %v5407
  %5411 = vst [vmem:[#allocation1] ss:$2 sm:$0xff] %v5409
  %v5412 = vld.sshfl [vmem:[#allocation1] sm:$0xff pattern:$0x75316420]
  %v5413 = vld.sshfl [vmem:[#allocation1 + $0x8] sm:$0xff pattern:$0x75316420]
  %v5416 = vsel %vm33, %v5412, 0.0
  %v5417 = vrot.slane %v5416, 4
  %v5418 = vadd.f32 %v5416, %v5417
  %v5419 = vrot.slane %v5418, 2
  %v5420 = vadd.f32 %v5418, %v5419
  %v5421 = vrot.slane %v5420, 1
  %v5422 = vadd.f32 %v5420, %v5421
  %v5423 = vsel %vm33, %v5413, 0.0
  %v5424 = vrot.slane %v5423, 4
  %v5425 = vadd.f32 %v5423, %v5424
  %v5426 = vrot.slane %v5425, 2
  %v5427 = vadd.f32 %v5425, %v5426
  %v5428 = vrot.slane %v5427, 1
  %v5429 = vadd.f32 %v5427, %v5428
  %v5430 = vmul.f32 %v5422, %v22
  %v5431 = vmul.f32 %v5429, %v23
  %5434 = vst [vmem:[#allocation1] sm:$0xff] %v5430
  %5435 = vst [vmem:[#allocation1 + $0x9] sm:$0xff] %v5431
  %s5436 = scalar_lea.vmem [#allocation1], 5
  %v5437 = vld [vmem:[%s5436] ss:$9 sm:$0xff]
  %s5439 = scalar_lea.vmem %s3428, 81
  %5440 = vst.msk [vmem:[%s5439] ss:$8 sm:$0x3] %vm59, %v5437
  %5441 = vst.msk [vmem:[%s5439] ss:$8 sm:$0x0] %vm59, %v5437
  %5442 = vrot.lane.b32.xlu0 %v20, 43
  %v5443 = vpop.permute.xlu0 %5442
  %5444 = vrot.lane.b32.xlu0 %v21, 43
  %v5445 = vpop.permute.xlu0 %5444
  %v5446 = vrot.slane %v5443, 4
  %v5447 = vrot.slane %v5445, 4
  %v5448 = vsel %vm33, %v5446, %v5447
  %v5449 = vsel %vm2124, %v5443, %v5448
  %v5451 = vmul.f32 %v17, %v5449
  %5453 = vst [vmem:[#allocation1] ss:$2 sm:$0xff] %v5451
  %v5454 = vld.sshfl [vmem:[#allocation1] sm:$0xff pattern:$0x75316420]
  %v5455 = vld.sshfl [vmem:[#allocation1 + $0x8] sm:$0xff pattern:$0x75316420]
  %v5458 = vsel %vm33, %v5454, 0.0
  %v5459 = vrot.slane %v5458, 4
  %v5460 = vadd.f32 %v5458, %v5459
  %v5461 = vrot.slane %v5460, 2
  %v5462 = vadd.f32 %v5460, %v5461
  %v5463 = vrot.slane %v5462, 1
  %v5464 = vadd.f32 %v5462, %v5463
  %v5465 = vsel %vm33, %v5455, 0.0
  %v5466 = vrot.slane %v5465, 4
  %v5467 = vadd.f32 %v5465, %v5466
  %v5468 = vrot.slane %v5467, 2
  %v5469 = vadd.f32 %v5467, %v5468
  %v5470 = vrot.slane %v5469, 1
  %v5471 = vadd.f32 %v5469, %v5470
  %v5472 = vmul.f32 %v5464, %v22
  %v5473 = vmul.f32 %v5471, %v23
  %5476 = vst [vmem:[#allocation1] sm:$0xff] %v5472
  %5477 = vst [vmem:[#allocation1 + $0x9] sm:$0xff] %v5473
  %s5478 = scalar_lea.vmem [#allocation1], 5
  %v5479 = vld [vmem:[%s5478] ss:$9 sm:$0xff]
  %s5481 = scalar_lea.vmem %s3428, 98
  %5482 = vst.msk [vmem:[%s5481] ss:$8 sm:$0x3] %vm59, %v5479
  %5483 = vst.msk [vmem:[%s5481] ss:$8 sm:$0x0] %vm59, %v5479
  %5484 = vrot.lane.b32.xlu0 %v20, 27
  %v5485 = vpop.permute.xlu0 %5484
  %5486 = vrot.lane.b32.xlu0 %v21, 27
  %v5487 = vpop.permute.xlu0 %5486
  %v5488 = vrot.slane %v5485, 4
  %v5489 = vrot.slane %v5487, 4
  %v5490 = vsel %vm33, %v5488, %v5489
  %v5491 = vsel %vm2167, %v5485, %v5490
  %v5493 = vmul.f32 %v17, %v5491
  %5495 = vst [vmem:[#allocation1] ss:$2 sm:$0xff] %v5493
  %v5496 = vld.sshfl [vmem:[#allocation1] sm:$0xff pattern:$0x75316420]
  %v5497 = vld.sshfl [vmem:[#allocation1 + $0x8] sm:$0xff pattern:$0x75316420]
  %v5500 = vsel %vm33, %v5496, 0.0
  %v5501 = vrot.slane %v5500, 4
  %v5502 = vadd.f32 %v5500, %v5501
  %v5503 = vrot.slane %v5502, 2
  %v5504 = vadd.f32 %v5502, %v5503
  %v5505 = vrot.slane %v5504, 1
  %v5506 = vadd.f32 %v5504, %v5505
  %v5507 = vsel %vm33, %v5497, 0.0
  %v5508 = vrot.slane %v5507, 4
  %v5509 = vadd.f32 %v5507, %v5508
  %v5510 = vrot.slane %v5509, 2
  %v5511 = vadd.f32 %v5509, %v5510
  %v5512 = vrot.slane %v5511, 1
  %v5513 = vadd.f32 %v5511, %v5512
  %v5514 = vmul.f32 %v5506, %v22
  %v5515 = vmul.f32 %v5513, %v23
  %5518 = vst [vmem:[#allocation1] sm:$0xff] %v5514
  %5519 = vst [vmem:[#allocation1 + $0x9] sm:$0xff] %v5515
  %s5520 = scalar_lea.vmem [#allocation1], 5
  %v5521 = vld [vmem:[%s5520] ss:$9 sm:$0xff]
  %s5523 = scalar_lea.vmem %s3428, 115
  %5524 = vst.msk [vmem:[%s5523] ss:$8 sm:$0x3] %vm59, %v5521
  %5525 = vst.msk [vmem:[%s5523] ss:$8 sm:$0x0] %vm59, %v5521
  %5526 = vrot.lane.b32.xlu0 %v20, 11
  %v5527 = vpop.permute.xlu0 %5526
  %5528 = vrot.lane.b32.xlu0 %v21, 11
  %v5529 = vpop.permute.xlu0 %5528
  %v5530 = vrot.slane %v5527, 4
  %v5531 = vrot.slane %v5529, 4
  %v5532 = vsel %vm33, %v5530, %v5531
  %v5533 = vsel %vm2210, %v5527, %v5532
  %v5535 = vmul.f32 %v17, %v5533
  %5537 = vst [vmem:[#allocation1] ss:$2 sm:$0xff] %v5535
  %v5538 = vld.sshfl [vmem:[#allocation1] sm:$0xff pattern:$0x75316420]
  %v5539 = vld.sshfl [vmem:[#allocation1 + $0x8] sm:$0xff pattern:$0x75316420]
  %v5542 = vsel %vm33, %v5538, 0.0
  %v5543 = vrot.slane %v5542, 4
  %v5544 = vadd.f32 %v5542, %v5543
  %v5545 = vrot.slane %v5544, 2
  %v5546 = vadd.f32 %v5544, %v5545
  %v5547 = vrot.slane %v5546, 1
  %v5548 = vadd.f32 %v5546, %v5547
  %v5549 = vsel %vm33, %v5539, 0.0
  %v5550 = vrot.slane %v5549, 4
  %v5551 = vadd.f32 %v5549, %v5550
  %v5552 = vrot.slane %v5551, 2
  %v5553 = vadd.f32 %v5551, %v5552
  %v5554 = vrot.slane %v5553, 1
  %v5555 = vadd.f32 %v5553, %v5554
  %v5556 = vmul.f32 %v5548, %v22
  %v5557 = vmul.f32 %v5555, %v23
  %5560 = vst [vmem:[#allocation1] sm:$0xff] %v5556
  %5561 = vst [vmem:[#allocation1 + $0x9] sm:$0xff] %v5557
  %s5562 = scalar_lea.vmem [#allocation1], 5
  %v5563 = vld [vmem:[%s5562] ss:$9 sm:$0xff]
  %s5565 = scalar_lea.vmem %s3428, 132
  %5566 = vst.msk [vmem:[%s5565] ss:$8 sm:$0x3] %vm59, %v5563
  %5567 = vst.msk [vmem:[%s5565] ss:$8 sm:$0x0] %vm59, %v5563
  %v5568 = vsel %vm1909, %v5238, %v5235
  %v5570 = vmul.f32 %v17, %v5568
  %5572 = vst [vmem:[#allocation1] ss:$2 sm:$0xff] %v5570
  %v5573 = vld.sshfl [vmem:[#allocation1] sm:$0xff pattern:$0x75316420]
  %v5574 = vld.sshfl [vmem:[#allocation1 + $0x8] sm:$0xff pattern:$0x75316420]
  %v5577 = vsel %vm33, %v5573, 0.0
  %v5578 = vrot.slane %v5577, 4
  %v5579 = vadd.f32 %v5577, %v5578
  %v5580 = vrot.slane %v5579, 2
  %v5581 = vadd.f32 %v5579, %v5580
  %v5582 = vrot.slane %v5581, 1
  %v5583 = vadd.f32 %v5581, %v5582
  %v5584 = vsel %vm33, %v5574, 0.0
  %v5585 = vrot.slane %v5584, 4
  %v5586 = vadd.f32 %v5584, %v5585
  %v5587 = vrot.slane %v5586, 2
  %v5588 = vadd.f32 %v5586, %v5587
  %v5589 = vrot.slane %v5588, 1
  %v5590 = vadd.f32 %v5588, %v5589
  %v5591 = vmul.f32 %v5583, %v22
  %v5592 = vmul.f32 %v5590, %v23
  %5595 = vst [vmem:[#allocation1] sm:$0xff] %v5591
  %5596 = vst [vmem:[#allocation1 + $0x9] sm:$0xff] %v5592
  %s5597 = scalar_lea.vmem [#allocation1], 5
  %v5598 = vld [vmem:[%s5597] ss:$9 sm:$0xff]
  %s5600 = scalar_lea.vmem %s3428, 149
  %5601 = vst.msk [vmem:[%s5600] ss:$8 sm:$0x3] %vm59, %v5598
  %5602 = vst.msk [vmem:[%s5600] ss:$8 sm:$0x0] %vm59, %v5598
  %5603 = vrot.lane.b32.xlu0 %v20, 122
  %v5604 = vpop.permute.xlu0 %5603
  %5605 = vrot.lane.b32.xlu0 %v21, 122
  %v5606 = vpop.permute.xlu0 %5605
  %v5607 = vrot.slane %v5604, 4
  %v5608 = vrot.slane %v5606, 4
  %v5609 = vsel %vm33, %v5607, %v5608
  %v5610 = vsel %vm2288, %v5604, %v5609
  %v5612 = vmul.f32 %v17, %v5610
  %5614 = vst [vmem:[#allocation1] ss:$2 sm:$0xff] %v5612
  %v5615 = vld.sshfl [vmem:[#allocation1] sm:$0xff pattern:$0x75316420]
  %v5616 = vld.sshfl [vmem:[#allocation1 + $0x8] sm:$0xff pattern:$0x75316420]
  %v5619 = vsel %vm33, %v5615, 0.0
  %v5620 = vrot.slane %v5619, 4
  %v5621 = vadd.f32 %v5619, %v5620
  %v5622 = vrot.slane %v5621, 2
  %v5623 = vadd.f32 %v5621, %v5622
  %v5624 = vrot.slane %v5623, 1
  %v5625 = vadd.f32 %v5623, %v5624
  %v5626 = vsel %vm33, %v5616, 0.0
  %v5627 = vrot.slane %v5626, 4
  %v5628 = vadd.f32 %v5626, %v5627
  %v5629 = vrot.slane %v5628, 2
  %v5630 = vadd.f32 %v5628, %v5629
  %v5631 = vrot.slane %v5630, 1
  %v5632 = vadd.f32 %v5630, %v5631
  %v5633 = vmul.f32 %v5625, %v22
  %v5634 = vmul.f32 %v5632, %v23
  %5637 = vst [vmem:[#allocation1] sm:$0xff] %v5633
  %5638 = vst [vmem:[#allocation1 + $0x9] sm:$0xff] %v5634
  %s5639 = scalar_lea.vmem [#allocation1], 6
  %v5640 = vld [vmem:[%s5639] ss:$9 sm:$0xff]
  %s5642 = scalar_lea.vmem %s3428, 6
  %5643 = vst.msk [vmem:[%s5642] ss:$8 sm:$0x3] %vm59, %v5640
  %5644 = vst.msk [vmem:[%s5642] ss:$8 sm:$0x0] %vm59, %v5640
  %5645 = vrot.lane.b32.xlu0 %v20, 106
  %v5646 = vpop.permute.xlu0 %5645
  %5647 = vrot.lane.b32.xlu0 %v21, 106
  %v5648 = vpop.permute.xlu0 %5647
  %v5649 = vrot.slane %v5646, 4
  %v5650 = vrot.slane %v5648, 4
  %v5651 = vsel %vm33, %v5649, %v5650
  %v5652 = vsel %vm2331, %v5646, %v5651
  %v5654 = vmul.f32 %v17, %v5652
  %5656 = vst [vmem:[#allocation1] ss:$2 sm:$0xff] %v5654
  %v5657 = vld.sshfl [vmem:[#allocation1] sm:$0xff pattern:$0x75316420]
  %v5658 = vld.sshfl [vmem:[#allocation1 + $0x8] sm:$0xff pattern:$0x75316420]
  %v5661 = vsel %vm33, %v5657, 0.0
  %v5662 = vrot.slane %v5661, 4
  %v5663 = vadd.f32 %v5661, %v5662
  %v5664 = vrot.slane %v5663, 2
  %v5665 = vadd.f32 %v5663, %v5664
  %v5666 = vrot.slane %v5665, 1
  %v5667 = vadd.f32 %v5665, %v5666
  %v5668 = vsel %vm33, %v5658, 0.0
  %v5669 = vrot.slane %v5668, 4
  %v5670 = vadd.f32 %v5668, %v5669
  %v5671 = vrot.slane %v5670, 2
  %v5672 = vadd.f32 %v5670, %v5671
  %v5673 = vrot.slane %v5672, 1
  %v5674 = vadd.f32 %v5672, %v5673
  %v5675 = vmul.f32 %v5667, %v22
  %v5676 = vmul.f32 %v5674, %v23
  %5679 = vst [vmem:[#allocation1] sm:$0xff] %v5675
  %5680 = vst [vmem:[#allocation1 + $0x9] sm:$0xff] %v5676
  %s5681 = scalar_lea.vmem [#allocation1], 6
  %v5682 = vld [vmem:[%s5681] ss:$9 sm:$0xff]
  %s5684 = scalar_lea.vmem %s3428, 23
  %5685 = vst.msk [vmem:[%s5684] ss:$8 sm:$0x3] %vm59, %v5682
  %5686 = vst.msk [vmem:[%s5684] ss:$8 sm:$0x0] %vm59, %v5682
  %5687 = vrot.lane.b32.xlu0 %v20, 90
  %v5688 = vpop.permute.xlu0 %5687
  %5689 = vrot.lane.b32.xlu0 %v21, 90
  %v5690 = vpop.permute.xlu0 %5689
  %v5691 = vrot.slane %v5688, 4
  %v5692 = vrot.slane %v5690, 4
  %v5693 = vsel %vm33, %v5691, %v5692
  %v5694 = vsel %vm2374, %v5688, %v5693
  %v5696 = vmul.f32 %v17, %v5694
  %5698 = vst [vmem:[#allocation1] ss:$2 sm:$0xff] %v5696
  %v5699 = vld.sshfl [vmem:[#allocation1] sm:$0xff pattern:$0x75316420]
  %v5700 = vld.sshfl [vmem:[#allocation1 + $0x8] sm:$0xff pattern:$0x75316420]
  %v5703 = vsel %vm33, %v5699, 0.0
  %v5704 = vrot.slane %v5703, 4
  %v5705 = vadd.f32 %v5703, %v5704
  %v5706 = vrot.slane %v5705, 2
  %v5707 = vadd.f32 %v5705, %v5706
  %v5708 = vrot.slane %v5707, 1
  %v5709 = vadd.f32 %v5707, %v5708
  %v5710 = vsel %vm33, %v5700, 0.0
  %v5711 = vrot.slane %v5710, 4
  %v5712 = vadd.f32 %v5710, %v5711
  %v5713 = vrot.slane %v5712, 2
  %v5714 = vadd.f32 %v5712, %v5713
  %v5715 = vrot.slane %v5714, 1
  %v5716 = vadd.f32 %v5714, %v5715
  %v5717 = vmul.f32 %v5709, %v22
  %v5718 = vmul.f32 %v5716, %v23
  %5721 = vst [vmem:[#allocation1] sm:$0xff] %v5717
  %5722 = vst [vmem:[#allocation1 + $0x9] sm:$0xff] %v5718
  %s5723 = scalar_lea.vmem [#allocation1], 6
  %v5724 = vld [vmem:[%s5723] ss:$9 sm:$0xff]
  %s5726 = scalar_lea.vmem %s3428, 48
  %5727 = vst.msk [vmem:[%s5726] ss:$8 sm:$0x3] %vm59, %v5724
  %5728 = vst.msk [vmem:[%s5726] ss:$8 sm:$0x0] %vm59, %v5724
  %5729 = vrot.lane.b32.xlu0 %v20, 74
  %v5730 = vpop.permute.xlu0 %5729
  %5731 = vrot.lane.b32.xlu0 %v21, 74
  %v5732 = vpop.permute.xlu0 %5731
  %v5733 = vrot.slane %v5730, 4
  %v5734 = vrot.slane %v5732, 4
  %v5735 = vsel %vm33, %v5733, %v5734
  %v5736 = vsel %vm2417, %v5730, %v5735
  %v5738 = vmul.f32 %v17, %v5736
  %5740 = vst [vmem:[#allocation1] ss:$2 sm:$0xff] %v5738
  %v5741 = vld.sshfl [vmem:[#allocation1] sm:$0xff pattern:$0x75316420]
  %v5742 = vld.sshfl [vmem:[#allocation1 + $0x8] sm:$0xff pattern:$0x75316420]
  %v5745 = vsel %vm33, %v5741, 0.0
  %v5746 = vrot.slane %v5745, 4
  %v5747 = vadd.f32 %v5745, %v5746
  %v5748 = vrot.slane %v5747, 2
  %v5749 = vadd.f32 %v5747, %v5748
  %v5750 = vrot.slane %v5749, 1
  %v5751 = vadd.f32 %v5749, %v5750
  %v5752 = vsel %vm33, %v5742, 0.0
  %v5753 = vrot.slane %v5752, 4
  %v5754 = vadd.f32 %v5752, %v5753
  %v5755 = vrot.slane %v5754, 2
  %v5756 = vadd.f32 %v5754, %v5755
  %v5757 = vrot.slane %v5756, 1
  %v5758 = vadd.f32 %v5756, %v5757
  %v5759 = vmul.f32 %v5751, %v22
  %v5760 = vmul.f32 %v5758, %v23
  %5763 = vst [vmem:[#allocation1] sm:$0xff] %v5759
  %5764 = vst [vmem:[#allocation1 + $0x9] sm:$0xff] %v5760
  %s5765 = scalar_lea.vmem [#allocation1], 6
  %v5766 = vld [vmem:[%s5765] ss:$9 sm:$0xff]
  %s5768 = scalar_lea.vmem %s3428, 65
  %5769 = vst.msk [vmem:[%s5768] ss:$8 sm:$0x3] %vm59, %v5766
  %5770 = vst.msk [vmem:[%s5768] ss:$8 sm:$0x0] %vm59, %v5766
  %5771 = vrot.lane.b32.xlu0 %v20, 58
  %v5772 = vpop.permute.xlu0 %5771
  %5773 = vrot.lane.b32.xlu0 %v21, 58
  %v5774 = vpop.permute.xlu0 %5773
  %v5775 = vrot.slane %v5772, 4
  %v5776 = vrot.slane %v5774, 4
  %v5777 = vsel %vm33, %v5775, %v5776
  %v5778 = vsel %vm2460, %v5772, %v5777
  %v5780 = vmul.f32 %v17, %v5778
  %5782 = vst [vmem:[#allocation1] ss:$2 sm:$0xff] %v5780
  %v5783 = vld.sshfl [vmem:[#allocation1] sm:$0xff pattern:$0x75316420]
  %v5784 = vld.sshfl [vmem:[#allocation1 + $0x8] sm:$0xff pattern:$0x75316420]
  %v5787 = vsel %vm33, %v5783, 0.0
  %v5788 = vrot.slane %v5787, 4
  %v5789 = vadd.f32 %v5787, %v5788
  %v5790 = vrot.slane %v5789, 2
  %v5791 = vadd.f32 %v5789, %v5790
  %v5792 = vrot.slane %v5791, 1
  %v5793 = vadd.f32 %v5791, %v5792
  %v5794 = vsel %vm33, %v5784, 0.0
  %v5795 = vrot.slane %v5794, 4
  %v5796 = vadd.f32 %v5794, %v5795
  %v5797 = vrot.slane %v5796, 2
  %v5798 = vadd.f32 %v5796, %v5797
  %v5799 = vrot.slane %v5798, 1
  %v5800 = vadd.f32 %v5798, %v5799
  %v5801 = vmul.f32 %v5793, %v22
  %v5802 = vmul.f32 %v5800, %v23
  %5805 = vst [vmem:[#allocation1] sm:$0xff] %v5801
  %5806 = vst [vmem:[#allocation1 + $0x9] sm:$0xff] %v5802
  %s5807 = scalar_lea.vmem [#allocation1], 6
  %v5808 = vld [vmem:[%s5807] ss:$9 sm:$0xff]
  %s5810 = scalar_lea.vmem %s3428, 82
  %5811 = vst.msk [vmem:[%s5810] ss:$8 sm:$0x3] %vm59, %v5808
  %5812 = vst.msk [vmem:[%s5810] ss:$8 sm:$0x0] %vm59, %v5808
  %5813 = vrot.lane.b32.xlu0 %v20, 42
  %v5814 = vpop.permute.xlu0 %5813
  %5815 = vrot.lane.b32.xlu0 %v21, 42
  %v5816 = vpop.permute.xlu0 %5815
  %v5817 = vrot.slane %v5814, 4
  %v5818 = vrot.slane %v5816, 4
  %v5819 = vsel %vm33, %v5817, %v5818
  %v5820 = vsel %vm2503, %v5814, %v5819
  %v5822 = vmul.f32 %v17, %v5820
  %5824 = vst [vmem:[#allocation1] ss:$2 sm:$0xff] %v5822
  %v5825 = vld.sshfl [vmem:[#allocation1] sm:$0xff pattern:$0x75316420]
  %v5826 = vld.sshfl [vmem:[#allocation1 + $0x8] sm:$0xff pattern:$0x75316420]
  %v5829 = vsel %vm33, %v5825, 0.0
  %v5830 = vrot.slane %v5829, 4
  %v5831 = vadd.f32 %v5829, %v5830
  %v5832 = vrot.slane %v5831, 2
  %v5833 = vadd.f32 %v5831, %v5832
  %v5834 = vrot.slane %v5833, 1
  %v5835 = vadd.f32 %v5833, %v5834
  %v5836 = vsel %vm33, %v5826, 0.0
  %v5837 = vrot.slane %v5836, 4
  %v5838 = vadd.f32 %v5836, %v5837
  %v5839 = vrot.slane %v5838, 2
  %v5840 = vadd.f32 %v5838, %v5839
  %v5841 = vrot.slane %v5840, 1
  %v5842 = vadd.f32 %v5840, %v5841
  %v5843 = vmul.f32 %v5835, %v22
  %v5844 = vmul.f32 %v5842, %v23
  %5847 = vst [vmem:[#allocation1] sm:$0xff] %v5843
  %5848 = vst [vmem:[#allocation1 + $0x9] sm:$0xff] %v5844
  %s5849 = scalar_lea.vmem [#allocation1], 6
  %v5850 = vld [vmem:[%s5849] ss:$9 sm:$0xff]
  %s5852 = scalar_lea.vmem %s3428, 99
  %5853 = vst.msk [vmem:[%s5852] ss:$8 sm:$0x3] %vm59, %v5850
  %5854 = vst.msk [vmem:[%s5852] ss:$8 sm:$0x0] %vm59, %v5850
  %5855 = vrot.lane.b32.xlu0 %v20, 26
  %v5856 = vpop.permute.xlu0 %5855
  %5857 = vrot.lane.b32.xlu0 %v21, 26
  %v5858 = vpop.permute.xlu0 %5857
  %v5859 = vrot.slane %v5856, 4
  %v5860 = vrot.slane %v5858, 4
  %v5861 = vsel %vm33, %v5859, %v5860
  %v5862 = vsel %vm2546, %v5856, %v5861
  %v5864 = vmul.f32 %v17, %v5862
  %5866 = vst [vmem:[#allocation1] ss:$2 sm:$0xff] %v5864
  %v5867 = vld.sshfl [vmem:[#allocation1] sm:$0xff pattern:$0x75316420]
  %v5868 = vld.sshfl [vmem:[#allocation1 + $0x8] sm:$0xff pattern:$0x75316420]
  %v5871 = vsel %vm33, %v5867, 0.0
  %v5872 = vrot.slane %v5871, 4
  %v5873 = vadd.f32 %v5871, %v5872
  %v5874 = vrot.slane %v5873, 2
  %v5875 = vadd.f32 %v5873, %v5874
  %v5876 = vrot.slane %v5875, 1
  %v5877 = vadd.f32 %v5875, %v5876
  %v5878 = vsel %vm33, %v5868, 0.0
  %v5879 = vrot.slane %v5878, 4
  %v5880 = vadd.f32 %v5878, %v5879
  %v5881 = vrot.slane %v5880, 2
  %v5882 = vadd.f32 %v5880, %v5881
  %v5883 = vrot.slane %v5882, 1
  %v5884 = vadd.f32 %v5882, %v5883
  %v5885 = vmul.f32 %v5877, %v22
  %v5886 = vmul.f32 %v5884, %v23
  %5889 = vst [vmem:[#allocation1] sm:$0xff] %v5885
  %5890 = vst [vmem:[#allocation1 + $0x9] sm:$0xff] %v5886
  %s5891 = scalar_lea.vmem [#allocation1], 6
  %v5892 = vld [vmem:[%s5891] ss:$9 sm:$0xff]
  %s5894 = scalar_lea.vmem %s3428, 116
  %5895 = vst.msk [vmem:[%s5894] ss:$8 sm:$0x3] %vm59, %v5892
  %5896 = vst.msk [vmem:[%s5894] ss:$8 sm:$0x0] %vm59, %v5892
  %5897 = vrot.lane.b32.xlu0 %v20, 10
  %v5898 = vpop.permute.xlu0 %5897
  %5899 = vrot.lane.b32.xlu0 %v21, 10
  %v5900 = vpop.permute.xlu0 %5899
  %v5901 = vrot.slane %v5898, 4
  %v5902 = vrot.slane %v5900, 4
  %v5903 = vsel %vm33, %v5901, %v5902
  %v5904 = vsel %vm2589, %v5898, %v5903
  %v5906 = vmul.f32 %v17, %v5904
  %5908 = vst [vmem:[#allocation1] ss:$2 sm:$0xff] %v5906
  %v5909 = vld.sshfl [vmem:[#allocation1] sm:$0xff pattern:$0x75316420]
  %v5910 = vld.sshfl [vmem:[#allocation1 + $0x8] sm:$0xff pattern:$0x75316420]
  %v5913 = vsel %vm33, %v5909, 0.0
  %v5914 = vrot.slane %v5913, 4
  %v5915 = vadd.f32 %v5913, %v5914
  %v5916 = vrot.slane %v5915, 2
  %v5917 = vadd.f32 %v5915, %v5916
  %v5918 = vrot.slane %v5917, 1
  %v5919 = vadd.f32 %v5917, %v5918
  %v5920 = vsel %vm33, %v5910, 0.0
  %v5921 = vrot.slane %v5920, 4
  %v5922 = vadd.f32 %v5920, %v5921
  %v5923 = vrot.slane %v5922, 2
  %v5924 = vadd.f32 %v5922, %v5923
  %v5925 = vrot.slane %v5924, 1
  %v5926 = vadd.f32 %v5924, %v5925
  %v5927 = vmul.f32 %v5919, %v22
  %v5928 = vmul.f32 %v5926, %v23
  %5931 = vst [vmem:[#allocation1] sm:$0xff] %v5927
  %5932 = vst [vmem:[#allocation1 + $0x9] sm:$0xff] %v5928
  %s5933 = scalar_lea.vmem [#allocation1], 6
  %v5934 = vld [vmem:[%s5933] ss:$9 sm:$0xff]
  %s5936 = scalar_lea.vmem %s3428, 133
  %5937 = vst.msk [vmem:[%s5936] ss:$8 sm:$0x3] %vm59, %v5934
  %5938 = vst.msk [vmem:[%s5936] ss:$8 sm:$0x0] %vm59, %v5934
  %v5939 = vsel %vm2288, %v5609, %v5606
  %v5941 = vmul.f32 %v17, %v5939
  %5943 = vst [vmem:[#allocation1] ss:$2 sm:$0xff] %v5941
  %v5944 = vld.sshfl [vmem:[#allocation1] sm:$0xff pattern:$0x75316420]
  %v5945 = vld.sshfl [vmem:[#allocation1 + $0x8] sm:$0xff pattern:$0x75316420]
  %v5948 = vsel %vm33, %v5944, 0.0
  %v5949 = vrot.slane %v5948, 4
  %v5950 = vadd.f32 %v5948, %v5949
  %v5951 = vrot.slane %v5950, 2
  %v5952 = vadd.f32 %v5950, %v5951
  %v5953 = vrot.slane %v5952, 1
  %v5954 = vadd.f32 %v5952, %v5953
  %v5955 = vsel %vm33, %v5945, 0.0
  %v5956 = vrot.slane %v5955, 4
  %v5957 = vadd.f32 %v5955, %v5956
  %v5958 = vrot.slane %v5957, 2
  %v5959 = vadd.f32 %v5957, %v5958
  %v5960 = vrot.slane %v5959, 1
  %v5961 = vadd.f32 %v5959, %v5960
  %v5962 = vmul.f32 %v5954, %v22
  %v5963 = vmul.f32 %v5961, %v23
  %5966 = vst [vmem:[#allocation1] sm:$0xff] %v5962
  %5967 = vst [vmem:[#allocation1 + $0x9] sm:$0xff] %v5963
  %s5968 = scalar_lea.vmem [#allocation1], 6
  %v5969 = vld [vmem:[%s5968] ss:$9 sm:$0xff]
  %s5971 = scalar_lea.vmem %s3428, 150
  %5972 = vst.msk [vmem:[%s5971] ss:$8 sm:$0x3] %vm59, %v5969
  %5973 = vst.msk [vmem:[%s5971] ss:$8 sm:$0x0] %vm59, %v5969
  %5974 = vrot.lane.b32.xlu0 %v20, 121
  %v5975 = vpop.permute.xlu0 %5974
  %5976 = vrot.lane.b32.xlu0 %v21, 121
  %v5977 = vpop.permute.xlu0 %5976
  %v5978 = vrot.slane %v5975, 4
  %v5979 = vrot.slane %v5977, 4
  %v5980 = vsel %vm33, %v5978, %v5979
  %v5981 = vsel %vm2667, %v5975, %v5980
  %v5983 = vmul.f32 %v17, %v5981
  %5985 = vst [vmem:[#allocation1] ss:$2 sm:$0xff] %v5983
  %v5986 = vld.sshfl [vmem:[#allocation1] sm:$0xff pattern:$0x75316420]
  %v5987 = vld.sshfl [vmem:[#allocation1 + $0x8] sm:$0xff pattern:$0x75316420]
  %v5990 = vsel %vm33, %v5986, 0.0
  %v5991 = vrot.slane %v5990, 4
  %v5992 = vadd.f32 %v5990, %v5991
  %v5993 = vrot.slane %v5992, 2
  %v5994 = vadd.f32 %v5992, %v5993
  %v5995 = vrot.slane %v5994, 1
  %v5996 = vadd.f32 %v5994, %v5995
  %v5997 = vsel %vm33, %v5987, 0.0
  %v5998 = vrot.slane %v5997, 4
  %v5999 = vadd.f32 %v5997, %v5998
  %v6000 = vrot.slane %v5999, 2
  %v6001 = vadd.f32 %v5999, %v6000
  %v6002 = vrot.slane %v6001, 1
  %v6003 = vadd.f32 %v6001, %v6002
  %v6004 = vmul.f32 %v5996, %v22
  %v6005 = vmul.f32 %v6003, %v23
  %6008 = vst [vmem:[#allocation1] sm:$0xff] %v6004
  %6009 = vst [vmem:[#allocation1 + $0x9] sm:$0xff] %v6005
  %s6010 = scalar_lea.vmem [#allocation1], 7
  %v6011 = vld [vmem:[%s6010] ss:$9 sm:$0xff]
  %s6013 = scalar_lea.vmem %s3428, 7
  %6014 = vst.msk [vmem:[%s6013] ss:$8 sm:$0x3] %vm59, %v6011
  %6015 = vst.msk [vmem:[%s6013] ss:$8 sm:$0x0] %vm59, %v6011
  %6016 = vrot.lane.b32.xlu0 %v20, 105
  %v6017 = vpop.permute.xlu0 %6016
  %6018 = vrot.lane.b32.xlu0 %v21, 105
  %v6019 = vpop.permute.xlu0 %6018
  %v6020 = vrot.slane %v6017, 4
  %v6021 = vrot.slane %v6019, 4
  %v6022 = vsel %vm33, %v6020, %v6021
  %v6023 = vsel %vm2710, %v6017, %v6022
  %v6025 = vmul.f32 %v17, %v6023
  %6027 = vst [vmem:[#allocation1] ss:$2 sm:$0xff] %v6025
  %v6028 = vld.sshfl [vmem:[#allocation1] sm:$0xff pattern:$0x75316420]
  %v6029 = vld.sshfl [vmem:[#allocation1 + $0x8] sm:$0xff pattern:$0x75316420]
  %v6032 = vsel %vm33, %v6028, 0.0
  %v6033 = vrot.slane %v6032, 4
  %v6034 = vadd.f32 %v6032, %v6033
  %v6035 = vrot.slane %v6034, 2
  %v6036 = vadd.f32 %v6034, %v6035
  %v6037 = vrot.slane %v6036, 1
  %v6038 = vadd.f32 %v6036, %v6037
  %v6039 = vsel %vm33, %v6029, 0.0
  %v6040 = vrot.slane %v6039, 4
  %v6041 = vadd.f32 %v6039, %v6040
  %v6042 = vrot.slane %v6041, 2
  %v6043 = vadd.f32 %v6041, %v6042
  %v6044 = vrot.slane %v6043, 1
  %v6045 = vadd.f32 %v6043, %v6044
  %v6046 = vmul.f32 %v6038, %v22
  %v6047 = vmul.f32 %v6045, %v23
  %6050 = vst [vmem:[#allocation1] sm:$0xff] %v6046
  %6051 = vst [vmem:[#allocation1 + $0x9] sm:$0xff] %v6047
  %s6052 = scalar_lea.vmem [#allocation1], 7
  %v6053 = vld [vmem:[%s6052] ss:$9 sm:$0xff]
  %s6055 = scalar_lea.vmem %s3428, 32
  %6056 = vst.msk [vmem:[%s6055] ss:$8 sm:$0x3] %vm59, %v6053
  %6057 = vst.msk [vmem:[%s6055] ss:$8 sm:$0x0] %vm59, %v6053
  %6058 = vrot.lane.b32.xlu0 %v20, 89
  %v6059 = vpop.permute.xlu0 %6058
  %6060 = vrot.lane.b32.xlu0 %v21, 89
  %v6061 = vpop.permute.xlu0 %6060
  %v6062 = vrot.slane %v6059, 4
  %v6063 = vrot.slane %v6061, 4
  %v6064 = vsel %vm33, %v6062, %v6063
  %v6065 = vsel %vm2753, %v6059, %v6064
  %v6067 = vmul.f32 %v17, %v6065
  %6069 = vst [vmem:[#allocation1] ss:$2 sm:$0xff] %v6067
  %v6070 = vld.sshfl [vmem:[#allocation1] sm:$0xff pattern:$0x75316420]
  %v6071 = vld.sshfl [vmem:[#allocation1 + $0x8] sm:$0xff pattern:$0x75316420]
  %v6074 = vsel %vm33, %v6070, 0.0
  %v6075 = vrot.slane %v6074, 4
  %v6076 = vadd.f32 %v6074, %v6075
  %v6077 = vrot.slane %v6076, 2
  %v6078 = vadd.f32 %v6076, %v6077
  %v6079 = vrot.slane %v6078, 1
  %v6080 = vadd.f32 %v6078, %v6079
  %v6081 = vsel %vm33, %v6071, 0.0
  %v6082 = vrot.slane %v6081, 4
  %v6083 = vadd.f32 %v6081, %v6082
  %v6084 = vrot.slane %v6083, 2
  %v6085 = vadd.f32 %v6083, %v6084
  %v6086 = vrot.slane %v6085, 1
  %v6087 = vadd.f32 %v6085, %v6086
  %v6088 = vmul.f32 %v6080, %v22
  %v6089 = vmul.f32 %v6087, %v23
  %6092 = vst [vmem:[#allocation1] sm:$0xff] %v6088
  %6093 = vst [vmem:[#allocation1 + $0x9] sm:$0xff] %v6089
  %s6094 = scalar_lea.vmem [#allocation1], 7
  %v6095 = vld [vmem:[%s6094] ss:$9 sm:$0xff]
  %s6097 = scalar_lea.vmem %s3428, 49
  %6098 = vst.msk [vmem:[%s6097] ss:$8 sm:$0x3] %vm59, %v6095
  %6099 = vst.msk [vmem:[%s6097] ss:$8 sm:$0x0] %vm59, %v6095
  %6100 = vrot.lane.b32.xlu0 %v20, 73
  %v6101 = vpop.permute.xlu0 %6100
  %6102 = vrot.lane.b32.xlu0 %v21, 73
  %v6103 = vpop.permute.xlu0 %6102
  %v6104 = vrot.slane %v6101, 4
  %v6105 = vrot.slane %v6103, 4
  %v6106 = vsel %vm33, %v6104, %v6105
  %v6107 = vsel %vm2796, %v6101, %v6106
  %v6109 = vmul.f32 %v17, %v6107
  %6111 = vst [vmem:[#allocation1] ss:$2 sm:$0xff] %v6109
  %v6112 = vld.sshfl [vmem:[#allocation1] sm:$0xff pattern:$0x75316420]
  %v6113 = vld.sshfl [vmem:[#allocation1 + $0x8] sm:$0xff pattern:$0x75316420]
  %v6116 = vsel %vm33, %v6112, 0.0
  %v6117 = vrot.slane %v6116, 4
  %v6118 = vadd.f32 %v6116, %v6117
  %v6119 = vrot.slane %v6118, 2
  %v6120 = vadd.f32 %v6118, %v6119
  %v6121 = vrot.slane %v6120, 1
  %v6122 = vadd.f32 %v6120, %v6121
  %v6123 = vsel %vm33, %v6113, 0.0
  %v6124 = vrot.slane %v6123, 4
  %v6125 = vadd.f32 %v6123, %v6124
  %v6126 = vrot.slane %v6125, 2
  %v6127 = vadd.f32 %v6125, %v6126
  %v6128 = vrot.slane %v6127, 1
  %v6129 = vadd.f32 %v6127, %v6128
  %v6130 = vmul.f32 %v6122, %v22
  %v6131 = vmul.f32 %v6129, %v23
  %6134 = vst [vmem:[#allocation1] sm:$0xff] %v6130
  %6135 = vst [vmem:[#allocation1 + $0x9] sm:$0xff] %v6131
  %s6136 = scalar_lea.vmem [#allocation1], 7
  %v6137 = vld [vmem:[%s6136] ss:$9 sm:$0xff]
  %s6139 = scalar_lea.vmem %s3428, 66
  %6140 = vst.msk [vmem:[%s6139] ss:$8 sm:$0x3] %vm59, %v6137
  %6141 = vst.msk [vmem:[%s6139] ss:$8 sm:$0x0] %vm59, %v6137
  %6142 = vrot.lane.b32.xlu0 %v20, 57
  %v6143 = vpop.permute.xlu0 %6142
  %6144 = vrot.lane.b32.xlu0 %v21, 57
  %v6145 = vpop.permute.xlu0 %6144
  %v6146 = vrot.slane %v6143, 4
  %v6147 = vrot.slane %v6145, 4
  %v6148 = vsel %vm33, %v6146, %v6147
  %v6149 = vsel %vm2839, %v6143, %v6148
  %v6151 = vmul.f32 %v17, %v6149
  %6153 = vst [vmem:[#allocation1] ss:$2 sm:$0xff] %v6151
  %v6154 = vld.sshfl [vmem:[#allocation1] sm:$0xff pattern:$0x75316420]
  %v6155 = vld.sshfl [vmem:[#allocation1 + $0x8] sm:$0xff pattern:$0x75316420]
  %v6158 = vsel %vm33, %v6154, 0.0
  %v6159 = vrot.slane %v6158, 4
  %v6160 = vadd.f32 %v6158, %v6159
  %v6161 = vrot.slane %v6160, 2
  %v6162 = vadd.f32 %v6160, %v6161
  %v6163 = vrot.slane %v6162, 1
  %v6164 = vadd.f32 %v6162, %v6163
  %v6165 = vsel %vm33, %v6155, 0.0
  %v6166 = vrot.slane %v6165, 4
  %v6167 = vadd.f32 %v6165, %v6166
  %v6168 = vrot.slane %v6167, 2
  %v6169 = vadd.f32 %v6167, %v6168
  %v6170 = vrot.slane %v6169, 1
  %v6171 = vadd.f32 %v6169, %v6170
  %v6172 = vmul.f32 %v6164, %v22
  %v6173 = vmul.f32 %v6171, %v23
  %6176 = vst [vmem:[#allocation1] sm:$0xff] %v6172
  %6177 = vst [vmem:[#allocation1 + $0x9] sm:$0xff] %v6173
  %s6178 = scalar_lea.vmem [#allocation1], 7
  %v6179 = vld [vmem:[%s6178] ss:$9 sm:$0xff]
  %s6181 = scalar_lea.vmem %s3428, 83
  %6182 = vst.msk [vmem:[%s6181] ss:$8 sm:$0x3] %vm59, %v6179
  %6183 = vst.msk [vmem:[%s6181] ss:$8 sm:$0x0] %vm59, %v6179
  %6184 = vrot.lane.b32.xlu0 %v20, 41
  %v6185 = vpop.permute.xlu0 %6184
  %6186 = vrot.lane.b32.xlu0 %v21, 41
  %v6187 = vpop.permute.xlu0 %6186
  %v6188 = vrot.slane %v6185, 4
  %v6189 = vrot.slane %v6187, 4
  %v6190 = vsel %vm33, %v6188, %v6189
  %v6191 = vsel %vm2882, %v6185, %v6190
  %v6193 = vmul.f32 %v17, %v6191
  %6195 = vst [vmem:[#allocation1] ss:$2 sm:$0xff] %v6193
  %v6196 = vld.sshfl [vmem:[#allocation1] sm:$0xff pattern:$0x75316420]
  %v6197 = vld.sshfl [vmem:[#allocation1 + $0x8] sm:$0xff pattern:$0x75316420]
  %v6200 = vsel %vm33, %v6196, 0.0
  %v6201 = vrot.slane %v6200, 4
  %v6202 = vadd.f32 %v6200, %v6201
  %v6203 = vrot.slane %v6202, 2
  %v6204 = vadd.f32 %v6202, %v6203
  %v6205 = vrot.slane %v6204, 1
  %v6206 = vadd.f32 %v6204, %v6205
  %v6207 = vsel %vm33, %v6197, 0.0
  %v6208 = vrot.slane %v6207, 4
  %v6209 = vadd.f32 %v6207, %v6208
  %v6210 = vrot.slane %v6209, 2
  %v6211 = vadd.f32 %v6209, %v6210
  %v6212 = vrot.slane %v6211, 1
  %v6213 = vadd.f32 %v6211, %v6212
  %v6214 = vmul.f32 %v6206, %v22
  %v6215 = vmul.f32 %v6213, %v23
  %6218 = vst [vmem:[#allocation1] sm:$0xff] %v6214
  %6219 = vst [vmem:[#allocation1 + $0x9] sm:$0xff] %v6215
  %s6220 = scalar_lea.vmem [#allocation1], 7
  %v6221 = vld [vmem:[%s6220] ss:$9 sm:$0xff]
  %s6223 = scalar_lea.vmem %s3428, 100
  %6224 = vst.msk [vmem:[%s6223] ss:$8 sm:$0x3] %vm59, %v6221
  %6225 = vst.msk [vmem:[%s6223] ss:$8 sm:$0x0] %vm59, %v6221
  %6226 = vrot.lane.b32.xlu0 %v20, 25
  %v6227 = vpop.permute.xlu0 %6226
  %6228 = vrot.lane.b32.xlu0 %v21, 25
  %v6229 = vpop.permute.xlu0 %6228
  %v6230 = vrot.slane %v6227, 4
  %v6231 = vrot.slane %v6229, 4
  %v6232 = vsel %vm33, %v6230, %v6231
  %v6233 = vsel %vm2925, %v6227, %v6232
  %v6235 = vmul.f32 %v17, %v6233
  %6237 = vst [vmem:[#allocation1] ss:$2 sm:$0xff] %v6235
  %v6238 = vld.sshfl [vmem:[#allocation1] sm:$0xff pattern:$0x75316420]
  %v6239 = vld.sshfl [vmem:[#allocation1 + $0x8] sm:$0xff pattern:$0x75316420]
  %v6242 = vsel %vm33, %v6238, 0.0
  %v6243 = vrot.slane %v6242, 4
  %v6244 = vadd.f32 %v6242, %v6243
  %v6245 = vrot.slane %v6244, 2
  %v6246 = vadd.f32 %v6244, %v6245
  %v6247 = vrot.slane %v6246, 1
  %v6248 = vadd.f32 %v6246, %v6247
  %v6249 = vsel %vm33, %v6239, 0.0
  %v6250 = vrot.slane %v6249, 4
  %v6251 = vadd.f32 %v6249, %v6250
  %v6252 = vrot.slane %v6251, 2
  %v6253 = vadd.f32 %v6251, %v6252
  %v6254 = vrot.slane %v6253, 1
  %v6255 = vadd.f32 %v6253, %v6254
  %v6256 = vmul.f32 %v6248, %v22
  %v6257 = vmul.f32 %v6255, %v23
  %6260 = vst [vmem:[#allocation1] sm:$0xff] %v6256
  %6261 = vst [vmem:[#allocation1 + $0x9] sm:$0xff] %v6257
  %s6262 = scalar_lea.vmem [#allocation1], 7
  %v6263 = vld [vmem:[%s6262] ss:$9 sm:$0xff]
  %s6265 = scalar_lea.vmem %s3428, 117
  %6266 = vst.msk [vmem:[%s6265] ss:$8 sm:$0x3] %vm59, %v6263
  %6267 = vst.msk [vmem:[%s6265] ss:$8 sm:$0x0] %vm59, %v6263
  %6268 = vrot.lane.b32.xlu0 %v20, 9
  %v6269 = vpop.permute.xlu0 %6268
  %6270 = vrot.lane.b32.xlu0 %v21, 9
  %v6271 = vpop.permute.xlu0 %6270
  %v6272 = vrot.slane %v6269, 4
  %v6273 = vrot.slane %v6271, 4
  %v6274 = vsel %vm33, %v6272, %v6273
  %v6275 = vsel %vm2968, %v6269, %v6274
  %v6277 = vmul.f32 %v17, %v6275
  %6279 = vst [vmem:[#allocation1] ss:$2 sm:$0xff] %v6277
  %v6280 = vld.sshfl [vmem:[#allocation1] sm:$0xff pattern:$0x75316420]
  %v6281 = vld.sshfl [vmem:[#allocation1 + $0x8] sm:$0xff pattern:$0x75316420]
  %v6284 = vsel %vm33, %v6280, 0.0
  %v6285 = vrot.slane %v6284, 4
  %v6286 = vadd.f32 %v6284, %v6285
  %v6287 = vrot.slane %v6286, 2
  %v6288 = vadd.f32 %v6286, %v6287
  %v6289 = vrot.slane %v6288, 1
  %v6290 = vadd.f32 %v6288, %v6289
  %v6291 = vsel %vm33, %v6281, 0.0
  %v6292 = vrot.slane %v6291, 4
  %v6293 = vadd.f32 %v6291, %v6292
  %v6294 = vrot.slane %v6293, 2
  %v6295 = vadd.f32 %v6293, %v6294
  %v6296 = vrot.slane %v6295, 1
  %v6297 = vadd.f32 %v6295, %v6296
  %v6298 = vmul.f32 %v6290, %v22
  %v6299 = vmul.f32 %v6297, %v23
  %6302 = vst [vmem:[#allocation1] sm:$0xff] %v6298
  %6303 = vst [vmem:[#allocation1 + $0x9] sm:$0xff] %v6299
  %s6304 = scalar_lea.vmem [#allocation1], 7
  %v6305 = vld [vmem:[%s6304] ss:$9 sm:$0xff]
  %s6307 = scalar_lea.vmem %s3428, 134
  %6308 = vst.msk [vmem:[%s6307] ss:$8 sm:$0x3] %vm59, %v6305
  %6309 = vst.msk [vmem:[%s6307] ss:$8 sm:$0x0] %vm59, %v6305
  %v6310 = vsel %vm2667, %v5980, %v5977
  %v6312 = vmul.f32 %v17, %v6310
  %6314 = vst [vmem:[#allocation1] ss:$2 sm:$0xff] %v6312
  %v6315 = vld.sshfl [vmem:[#allocation1] sm:$0xff pattern:$0x75316420]
  %v6316 = vld.sshfl [vmem:[#allocation1 + $0x8] sm:$0xff pattern:$0x75316420]
  %v6319 = vsel %vm33, %v6315, 0.0
  %v6320 = vrot.slane %v6319, 4
  %v6321 = vadd.f32 %v6319, %v6320
  %v6322 = vrot.slane %v6321, 2
  %v6323 = vadd.f32 %v6321, %v6322
  %v6324 = vrot.slane %v6323, 1
  %v6325 = vadd.f32 %v6323, %v6324
  %v6326 = vsel %vm33, %v6316, 0.0
  %v6327 = vrot.slane %v6326, 4
  %v6328 = vadd.f32 %v6326, %v6327
  %v6329 = vrot.slane %v6328, 2
  %v6330 = vadd.f32 %v6328, %v6329
  %v6331 = vrot.slane %v6330, 1
  %v6332 = vadd.f32 %v6330, %v6331
  %v6333 = vmul.f32 %v6325, %v22
  %v6334 = vmul.f32 %v6332, %v23
  %6337 = vst [vmem:[#allocation1] sm:$0xff] %v6333
  %6338 = vst [vmem:[#allocation1 + $0x9] sm:$0xff] %v6334
  %s6339 = scalar_lea.vmem [#allocation1], 7
  %v6340 = vld [vmem:[%s6339] ss:$9 sm:$0xff]
  %s6342 = scalar_lea.vmem %s3428, 151
  %6343 = vst.msk [vmem:[%s6342] ss:$8 sm:$0x3] %vm59, %v6340
  %6344 = vst.msk [vmem:[%s6342] ss:$8 sm:$0x0] %vm59, %v6340
  %6345 = vrot.lane.b32.xlu0 %v20, 120
  %v6346 = vpop.permute.xlu0 %6345
  %6347 = vrot.lane.b32.xlu0 %v21, 120
  %v6348 = vpop.permute.xlu0 %6347
  %v6349 = vrot.slane %v6346, 4
  %v6350 = vrot.slane %v6348, 4
  %v6351 = vsel %vm33, %v6349, %v6350
  %v6352 = vsel %vm3046, %v6346, %v6351
  %v6354 = vmul.f32 %v17, %v6352
  %6356 = vst [vmem:[#allocation1] ss:$2 sm:$0xff] %v6354
  %v6357 = vld.sshfl [vmem:[#allocation1] sm:$0xff pattern:$0x75316420]
  %v6358 = vld.sshfl [vmem:[#allocation1 + $0x8] sm:$0xff pattern:$0x75316420]
  %v6361 = vsel %vm33, %v6357, 0.0
  %v6362 = vrot.slane %v6361, 4
  %v6363 = vadd.f32 %v6361, %v6362
  %v6364 = vrot.slane %v6363, 2
  %v6365 = vadd.f32 %v6363, %v6364
  %v6366 = vrot.slane %v6365, 1
  %v6367 = vadd.f32 %v6365, %v6366
  %v6368 = vsel %vm33, %v6358, 0.0
  %v6369 = vrot.slane %v6368, 4
  %v6370 = vadd.f32 %v6368, %v6369
  %v6371 = vrot.slane %v6370, 2
  %v6372 = vadd.f32 %v6370, %v6371
  %v6373 = vrot.slane %v6372, 1
  %v6374 = vadd.f32 %v6372, %v6373
  %v6375 = vmul.f32 %v6367, %v24
  %v6376 = vmul.f32 %v6374, %v25
  %v6379 = vrot.slane %v6376, 7
  %v6380 = vsel %vm53, %v6375, %v6379
  %s6382 = scalar_lea.vmem %s3428, 16
  %6383 = vst.msk [vmem:[%s6382] ss:$8 sm:$0x3] %vm59, %v6380
  %6384 = vst.msk [vmem:[%s6382] ss:$8 sm:$0x0] %vm59, %v6380
  %6385 = vrot.lane.b32.xlu0 %v20, 104
  %v6386 = vpop.permute.xlu0 %6385
  %6387 = vrot.lane.b32.xlu0 %v21, 104
  %v6388 = vpop.permute.xlu0 %6387
  %v6389 = vrot.slane %v6386, 4
  %v6390 = vrot.slane %v6388, 4
  %v6391 = vsel %vm33, %v6389, %v6390
  %v6392 = vsel %vm3087, %v6386, %v6391
  %v6394 = vmul.f32 %v17, %v6392
  %6396 = vst [vmem:[#allocation1] ss:$2 sm:$0xff] %v6394
  %v6397 = vld.sshfl [vmem:[#allocation1] sm:$0xff pattern:$0x75316420]
  %v6398 = vld.sshfl [vmem:[#allocation1 + $0x8] sm:$0xff pattern:$0x75316420]
  %v6401 = vsel %vm33, %v6397, 0.0
  %v6402 = vrot.slane %v6401, 4
  %v6403 = vadd.f32 %v6401, %v6402
  %v6404 = vrot.slane %v6403, 2
  %v6405 = vadd.f32 %v6403, %v6404
  %v6406 = vrot.slane %v6405, 1
  %v6407 = vadd.f32 %v6405, %v6406
  %v6408 = vsel %vm33, %v6398, 0.0
  %v6409 = vrot.slane %v6408, 4
  %v6410 = vadd.f32 %v6408, %v6409
  %v6411 = vrot.slane %v6410, 2
  %v6412 = vadd.f32 %v6410, %v6411
  %v6413 = vrot.slane %v6412, 1
  %v6414 = vadd.f32 %v6412, %v6413
  %v6415 = vmul.f32 %v6407, %v24
  %v6416 = vmul.f32 %v6414, %v25
  %v6419 = vrot.slane %v6416, 7
  %v6420 = vsel %vm53, %v6415, %v6419
  %s6422 = scalar_lea.vmem %s3428, 33
  %6423 = vst.msk [vmem:[%s6422] ss:$8 sm:$0x3] %vm59, %v6420
  %6424 = vst.msk [vmem:[%s6422] ss:$8 sm:$0x0] %vm59, %v6420
  %6425 = vrot.lane.b32.xlu0 %v20, 88
  %v6426 = vpop.permute.xlu0 %6425
  %6427 = vrot.lane.b32.xlu0 %v21, 88
  %v6428 = vpop.permute.xlu0 %6427
  %v6429 = vrot.slane %v6426, 4
  %v6430 = vrot.slane %v6428, 4
  %v6431 = vsel %vm33, %v6429, %v6430
  %v6432 = vsel %vm3128, %v6426, %v6431
  %v6434 = vmul.f32 %v17, %v6432
  %6436 = vst [vmem:[#allocation1] ss:$2 sm:$0xff] %v6434
  %v6437 = vld.sshfl [vmem:[#allocation1] sm:$0xff pattern:$0x75316420]
  %v6438 = vld.sshfl [vmem:[#allocation1 + $0x8] sm:$0xff pattern:$0x75316420]
  %v6441 = vsel %vm33, %v6437, 0.0
  %v6442 = vrot.slane %v6441, 4
  %v6443 = vadd.f32 %v6441, %v6442
  %v6444 = vrot.slane %v6443, 2
  %v6445 = vadd.f32 %v6443, %v6444
  %v6446 = vrot.slane %v6445, 1
  %v6447 = vadd.f32 %v6445, %v6446
  %v6448 = vsel %vm33, %v6438, 0.0
  %v6449 = vrot.slane %v6448, 4
  %v6450 = vadd.f32 %v6448, %v6449
  %v6451 = vrot.slane %v6450, 2
  %v6452 = vadd.f32 %v6450, %v6451
  %v6453 = vrot.slane %v6452, 1
  %v6454 = vadd.f32 %v6452, %v6453
  %v6455 = vmul.f32 %v6447, %v24
  %v6456 = vmul.f32 %v6454, %v25
  %v6459 = vrot.slane %v6456, 7
  %v6460 = vsel %vm53, %v6455, %v6459
  %s6462 = scalar_lea.vmem %s3428, 50
  %6463 = vst.msk [vmem:[%s6462] ss:$8 sm:$0x3] %vm59, %v6460
  %6464 = vst.msk [vmem:[%s6462] ss:$8 sm:$0x0] %vm59, %v6460
  %6465 = vrot.lane.b32.xlu0 %v20, 72
  %v6466 = vpop.permute.xlu0 %6465
  %6467 = vrot.lane.b32.xlu0 %v21, 72
  %v6468 = vpop.permute.xlu0 %6467
  %v6469 = vrot.slane %v6466, 4
  %v6470 = vrot.slane %v6468, 4
  %v6471 = vsel %vm33, %v6469, %v6470
  %v6472 = vsel %vm3169, %v6466, %v6471
  %v6474 = vmul.f32 %v17, %v6472
  %6476 = vst [vmem:[#allocation1] ss:$2 sm:$0xff] %v6474
  %v6477 = vld.sshfl [vmem:[#allocation1] sm:$0xff pattern:$0x75316420]
  %v6478 = vld.sshfl [vmem:[#allocation1 + $0x8] sm:$0xff pattern:$0x75316420]
  %v6481 = vsel %vm33, %v6477, 0.0
  %v6482 = vrot.slane %v6481, 4
  %v6483 = vadd.f32 %v6481, %v6482
  %v6484 = vrot.slane %v6483, 2
  %v6485 = vadd.f32 %v6483, %v6484
  %v6486 = vrot.slane %v6485, 1
  %v6487 = vadd.f32 %v6485, %v6486
  %v6488 = vsel %vm33, %v6478, 0.0
  %v6489 = vrot.slane %v6488, 4
  %v6490 = vadd.f32 %v6488, %v6489
  %v6491 = vrot.slane %v6490, 2
  %v6492 = vadd.f32 %v6490, %v6491
  %v6493 = vrot.slane %v6492, 1
  %v6494 = vadd.f32 %v6492, %v6493
  %v6495 = vmul.f32 %v6487, %v24
  %v6496 = vmul.f32 %v6494, %v25
  %v6499 = vrot.slane %v6496, 7
  %v6500 = vsel %vm53, %v6495, %v6499
  %s6502 = scalar_lea.vmem %s3428, 67
  %6503 = vst.msk [vmem:[%s6502] ss:$8 sm:$0x3] %vm59, %v6500
  %6504 = vst.msk [vmem:[%s6502] ss:$8 sm:$0x0] %vm59, %v6500
  %6505 = vrot.lane.b32.xlu0 %v20, 56
  %v6506 = vpop.permute.xlu0 %6505
  %6507 = vrot.lane.b32.xlu0 %v21, 56
  %v6508 = vpop.permute.xlu0 %6507
  %v6509 = vrot.slane %v6506, 4
  %v6510 = vrot.slane %v6508, 4
  %v6511 = vsel %vm33, %v6509, %v6510
  %v6512 = vsel %vm3210, %v6506, %v6511
  %v6514 = vmul.f32 %v17, %v6512
  %6516 = vst [vmem:[#allocation1] ss:$2 sm:$0xff] %v6514
  %v6517 = vld.sshfl [vmem:[#allocation1] sm:$0xff pattern:$0x75316420]
  %v6518 = vld.sshfl [vmem:[#allocation1 + $0x8] sm:$0xff pattern:$0x75316420]
  %v6521 = vsel %vm33, %v6517, 0.0
  %v6522 = vrot.slane %v6521, 4
  %v6523 = vadd.f32 %v6521, %v6522
  %v6524 = vrot.slane %v6523, 2
  %v6525 = vadd.f32 %v6523, %v6524
  %v6526 = vrot.slane %v6525, 1
  %v6527 = vadd.f32 %v6525, %v6526
  %v6528 = vsel %vm33, %v6518, 0.0
  %v6529 = vrot.slane %v6528, 4
  %v6530 = vadd.f32 %v6528, %v6529
  %v6531 = vrot.slane %v6530, 2
  %v6532 = vadd.f32 %v6530, %v6531
  %v6533 = vrot.slane %v6532, 1
  %v6534 = vadd.f32 %v6532, %v6533
  %v6535 = vmul.f32 %v6527, %v24
  %v6536 = vmul.f32 %v6534, %v25
  %v6539 = vrot.slane %v6536, 7
  %v6540 = vsel %vm53, %v6535, %v6539
  %s6542 = scalar_lea.vmem %s3428, 84
  %6543 = vst.msk [vmem:[%s6542] ss:$8 sm:$0x3] %vm59, %v6540
  %6544 = vst.msk [vmem:[%s6542] ss:$8 sm:$0x0] %vm59, %v6540
  %6545 = vrot.lane.b32.xlu0 %v20, 40
  %v6546 = vpop.permute.xlu0 %6545
  %6547 = vrot.lane.b32.xlu0 %v21, 40
  %v6548 = vpop.permute.xlu0 %6547
  %v6549 = vrot.slane %v6546, 4
  %v6550 = vrot.slane %v6548, 4
  %v6551 = vsel %vm33, %v6549, %v6550
  %v6552 = vsel %vm3251, %v6546, %v6551
  %v6554 = vmul.f32 %v17, %v6552
  %6556 = vst [vmem:[#allocation1] ss:$2 sm:$0xff] %v6554
  %v6557 = vld.sshfl [vmem:[#allocation1] sm:$0xff pattern:$0x75316420]
  %v6558 = vld.sshfl [vmem:[#allocation1 + $0x8] sm:$0xff pattern:$0x75316420]
  %v6561 = vsel %vm33, %v6557, 0.0
  %v6562 = vrot.slane %v6561, 4
  %v6563 = vadd.f32 %v6561, %v6562
  %v6564 = vrot.slane %v6563, 2
  %v6565 = vadd.f32 %v6563, %v6564
  %v6566 = vrot.slane %v6565, 1
  %v6567 = vadd.f32 %v6565, %v6566
  %v6568 = vsel %vm33, %v6558, 0.0
  %v6569 = vrot.slane %v6568, 4
  %v6570 = vadd.f32 %v6568, %v6569
  %v6571 = vrot.slane %v6570, 2
  %v6572 = vadd.f32 %v6570, %v6571
  %v6573 = vrot.slane %v6572, 1
  %v6574 = vadd.f32 %v6572, %v6573
  %v6575 = vmul.f32 %v6567, %v24
  %v6576 = vmul.f32 %v6574, %v25
  %v6579 = vrot.slane %v6576, 7
  %v6580 = vsel %vm53, %v6575, %v6579
  %s6582 = scalar_lea.vmem %s3428, 101
  %6583 = vst.msk [vmem:[%s6582] ss:$8 sm:$0x3] %vm59, %v6580
  %6584 = vst.msk [vmem:[%s6582] ss:$8 sm:$0x0] %vm59, %v6580
  %6585 = vrot.lane.b32.xlu0 %v20, 24
  %v6586 = vpop.permute.xlu0 %6585
  %6587 = vrot.lane.b32.xlu0 %v21, 24
  %v6588 = vpop.permute.xlu0 %6587
  %v6589 = vrot.slane %v6586, 4
  %v6590 = vrot.slane %v6588, 4
  %v6591 = vsel %vm33, %v6589, %v6590
  %v6592 = vsel %vm3292, %v6586, %v6591
  %v6594 = vmul.f32 %v17, %v6592
  %6596 = vst [vmem:[#allocation1] ss:$2 sm:$0xff] %v6594
  %v6597 = vld.sshfl [vmem:[#allocation1] sm:$0xff pattern:$0x75316420]
  %v6598 = vld.sshfl [vmem:[#allocation1 + $0x8] sm:$0xff pattern:$0x75316420]
  %v6601 = vsel %vm33, %v6597, 0.0
  %v6602 = vrot.slane %v6601, 4
  %v6603 = vadd.f32 %v6601, %v6602
  %v6604 = vrot.slane %v6603, 2
  %v6605 = vadd.f32 %v6603, %v6604
  %v6606 = vrot.slane %v6605, 1
  %v6607 = vadd.f32 %v6605, %v6606
  %v6608 = vsel %vm33, %v6598, 0.0
  %v6609 = vrot.slane %v6608, 4
  %v6610 = vadd.f32 %v6608, %v6609
  %v6611 = vrot.slane %v6610, 2
  %v6612 = vadd.f32 %v6610, %v6611
  %v6613 = vrot.slane %v6612, 1
  %v6614 = vadd.f32 %v6612, %v6613
  %v6615 = vmul.f32 %v6607, %v24
  %v6616 = vmul.f32 %v6614, %v25
  %v6619 = vrot.slane %v6616, 7
  %v6620 = vsel %vm53, %v6615, %v6619
  %s6622 = scalar_lea.vmem %s3428, 118
  %6623 = vst.msk [vmem:[%s6622] ss:$8 sm:$0x3] %vm59, %v6620
  %6624 = vst.msk [vmem:[%s6622] ss:$8 sm:$0x0] %vm59, %v6620
  %6625 = vrot.lane.b32.xlu0 %v20, 8
  %v6626 = vpop.permute.xlu0 %6625
  %6627 = vrot.lane.b32.xlu0 %v21, 8
  %v6628 = vpop.permute.xlu0 %6627
  %v6629 = vrot.slane %v6626, 4
  %v6630 = vrot.slane %v6628, 4
  %v6631 = vsel %vm33, %v6629, %v6630
  %v6632 = vsel %vm3333, %v6626, %v6631
  %v6634 = vmul.f32 %v17, %v6632
  %6636 = vst [vmem:[#allocation1] ss:$2 sm:$0xff] %v6634
  %v6637 = vld.sshfl [vmem:[#allocation1] sm:$0xff pattern:$0x75316420]
  %v6638 = vld.sshfl [vmem:[#allocation1 + $0x8] sm:$0xff pattern:$0x75316420]
  %v6641 = vsel %vm33, %v6637, 0.0
  %v6642 = vrot.slane %v6641, 4
  %v6643 = vadd.f32 %v6641, %v6642
  %v6644 = vrot.slane %v6643, 2
  %v6645 = vadd.f32 %v6643, %v6644
  %v6646 = vrot.slane %v6645, 1
  %v6647 = vadd.f32 %v6645, %v6646
  %v6648 = vsel %vm33, %v6638, 0.0
  %v6649 = vrot.slane %v6648, 4
  %v6650 = vadd.f32 %v6648, %v6649
  %v6651 = vrot.slane %v6650, 2
  %v6652 = vadd.f32 %v6650, %v6651
  %v6653 = vrot.slane %v6652, 1
  %v6654 = vadd.f32 %v6652, %v6653
  %v6655 = vmul.f32 %v6647, %v24
  %v6656 = vmul.f32 %v6654, %v25
  %v6659 = vrot.slane %v6656, 7
  %v6660 = vsel %vm53, %v6655, %v6659
  %s6662 = scalar_lea.vmem %s3428, 135
  %6663 = vst.msk [vmem:[%s6662] ss:$8 sm:$0x3] %vm59, %v6660
  %6664 = vst.msk [vmem:[%s6662] ss:$8 sm:$0x0] %vm59, %v6660
  %v6665 = vsel %vm3046, %v6351, %v6348
  %v6667 = vmul.f32 %v17, %v6665
  %6669 = vst [vmem:[#allocation1] ss:$2 sm:$0xff] %v6667
  %v6670 = vld.sshfl [vmem:[#allocation1] sm:$0xff pattern:$0x75316420]
  %v6671 = vld.sshfl [vmem:[#allocation1 + $0x8] sm:$0xff pattern:$0x75316420]
  %v6674 = vsel %vm33, %v6670, 0.0
  %v6675 = vrot.slane %v6674, 4
  %v6676 = vadd.f32 %v6674, %v6675
  %v6677 = vrot.slane %v6676, 2
  %v6678 = vadd.f32 %v6676, %v6677
  %v6679 = vrot.slane %v6678, 1
  %v6680 = vadd.f32 %v6678, %v6679
  %v6681 = vsel %vm33, %v6671, 0.0
  %v6682 = vrot.slane %v6681, 4
  %v6683 = vadd.f32 %v6681, %v6682
  %v6684 = vrot.slane %v6683, 2
  %v6685 = vadd.f32 %v6683, %v6684
  %v6686 = vrot.slane %v6685, 1
  %v6687 = vadd.f32 %v6685, %v6686
  %v6688 = vmul.f32 %v6680, %v24
  %v6689 = vmul.f32 %v6687, %v25
  %v6692 = vrot.slane %v6689, 7
  %v6693 = vsel %vm53, %v6688, %v6692
  %s6695 = scalar_lea.vmem %s3428, 160
  %6696 = vst.msk [vmem:[%s6695] ss:$8 sm:$0x3] %vm59, %v6693
  %6697 = vst.msk [vmem:[%s6695] ss:$8 sm:$0x0] %vm59, %v6693
  // Predicated region
  $region14: #{corr_pallas.1} parent=0 // pred_check
    _
  $region15: #{corr_pallas.1} parent=0 // pred_check_branch
    %6699 = sbr.rel (0) target = $region17
  $region16: #{corr_pallas.1} parent=0 // pred_region
    _
  $region17: #{corr_pallas.1} parent=0 // pred_fallthru
    _
  // Predicated region
  $region18: #{corr_pallas.1} parent=0 // pred_check
    _
  $region19: #{corr_pallas.1} parent=0 // pred_check_branch
    %6701 = sbr.rel (0) target = $region21
  $region20: #{corr_pallas.1} parent=0 // pred_region
    _
  $region21: #{corr_pallas.1} parent=0 // pred_fallthru
    _

</llo_original>
